<compile_context>
chip_gen: v7x
topology: tpu7x:2x2x1
jax: 0.10.0
libtpu: 0.0.40
codegen_flags: <defaults>
</compile_context>

<pallas_src>
import functools

import jax
import jax.numpy as jnp
import numpy as np
from jax import lax
from jax.experimental import pallas as pl
from jax.experimental.pallas import tpu as pltpu


# ---------------------------------------------------------------------------
# Stage 1 kernel:  GroupNorm -> 3x3 replicate conv -> +bias -> SiLU -> +Linear(t_emb)
# ---------------------------------------------------------------------------
def _stage1_kernel(xp_ref, temb_ref, g_ref, b_ref, gmat_ref, w_ref, cb_ref,
                   wt_ref, bt_ref, o_ref, *, H, W, eps):
    cin = xp_ref.shape[-1]

    # GroupNorm statistics over the un-padded interior (per sample).
    xin = xp_ref[0, 1:H + 1, 1:W + 1, :].reshape(H * W, cin)
    s1 = jnp.sum(xin, axis=0, keepdims=True)                       # (1, Cin)
    s2 = jnp.sum(xin * xin, axis=0, keepdims=True)                 # (1, Cin)
    mean = jnp.dot(s1, gmat_ref[...], preferred_element_type=jnp.float32)
    ex2 = jnp.dot(s2, gmat_ref[...], preferred_element_type=jnp.float32)
    var = ex2 - mean * mean
    scale = g_ref[...] * lax.rsqrt(var + eps)                      # (1, Cin)
    shift = b_ref[...] - mean * scale

    # 3x3 conv on the replicate-padded, normalized input: 9 shifted matmuls.
    acc = None
    for t in range(9):
        dy, dx = divmod(t, 3)
        p = xp_ref[0, dy:dy + H, dx:dx + W, :].reshape(H * W, cin)
        pn = p * scale + shift                                     # fused GN affine
        d = jnp.dot(pn, w_ref[t], preferred_element_type=jnp.float32)
        acc = d if acc is None else acc + d
    pre = acc + cb_ref[...]                                        # conv bias
    y = pre * jax.nn.sigmoid(pre)                                  # SiLU

    # Fused t_emb projection (Linear), broadcast over all spatial positions.
    tvec = jnp.dot(temb_ref[0], wt_ref[...],
                   preferred_element_type=jnp.float32) + bt_ref[...]
    o_ref[0] = y + tvec


# ---------------------------------------------------------------------------
# Stage 2 kernel:  GroupNorm -> 3x3 replicate conv -> +bias -> SiLU -> +Conv1x1(X)
# ---------------------------------------------------------------------------
def _stage2_kernel(ap_ref, xres_ref, g_ref, b_ref, gmat_ref, w_ref, cb_ref,
                   wp_ref, bp_ref, o_ref, *, H, W, eps):
    c = ap_ref.shape[-1]

    ain = ap_ref[0, 1:H + 1, 1:W + 1, :].reshape(H * W, c)
    s1 = jnp.sum(ain, axis=0, keepdims=True)
    s2 = jnp.sum(ain * ain, axis=0, keepdims=True)
    mean = jnp.dot(s1, gmat_ref[...], preferred_element_type=jnp.float32)
    ex2 = jnp.dot(s2, gmat_ref[...], preferred_element_type=jnp.float32)
    var = ex2 - mean * mean
    scale = g_ref[...] * lax.rsqrt(var + eps)
    shift = b_ref[...] - mean * scale

    acc = None
    for t in range(9):
        dy, dx = divmod(t, 3)
        p = ap_ref[0, dy:dy + H, dx:dx + W, :].reshape(H * W, c)
        pn = p * scale + shift
        d = jnp.dot(pn, w_ref[t], preferred_element_type=jnp.float32)
        acc = d if acc is None else acc + d
    pre = acc + cb_ref[...]
    z = pre * jax.nn.sigmoid(pre)                                  # out_act = SiLU

    # Fused residual projection (1x1 conv over channels).
    res = jnp.dot(xres_ref[0], wp_ref[...],
                  preferred_element_type=jnp.float32) + bp_ref[...]
    o_ref[0] = z + res


# ---------------------------------------------------------------------------
# Wrapper
# ---------------------------------------------------------------------------
def _group_matrix(c, num_groups, n_spatial):
    """Constant (C, C) matrix: s @ M gives per-channel group means."""
    g = c // num_groups
    gid = np.arange(c) // g
    m = (gid[:, None] == gid[None, :]).astype(np.float32) / float(g * n_spatial)
    return jnp.asarray(m)


def residual_block_t_emb(X, t_emb, params, *, num_groups=32, eps=1e-5):
    B, cin, H, W = X.shape
    w1 = params["w1_oihw"]
    cout = w1.shape[0]
    tdim = t_emb.shape[1]
    assert cin % num_groups == 0 and cout % num_groups == 0   # GroupNorm path only
    assert W % 8 == 0   # keeps in-kernel (H, W, C)->(H*W, C) reshapes layout no-ops

    row = lambda v: v.reshape(1, -1)
    # torch conv weight (Cout, Cin, 3, 3) -> tap-major (9, Cin, Cout)
    w1_t = jnp.transpose(w1, (2, 3, 1, 0)).reshape(9, cin, cout)
    w2_t = jnp.transpose(params["w2_oihw"], (2, 3, 1, 0)).reshape(9, cout, cout)
    gmat1 = _group_matrix(cin, num_groups, H * W)
    gmat2 = _group_matrix(cout, num_groups, H * W)

    x_nhwc = jnp.transpose(X, (0, 2, 3, 1))                        # (B, H, W, Cin)
    xp = jnp.pad(x_nhwc, ((0, 0), (1, 1), (1, 1), (0, 0)), mode="edge")
    t3 = t_emb.reshape(B, 1, tdim)

    const2 = lambda b: (0, 0)
    const3 = lambda b: (0, 0, 0)

    a = pl.pallas_call(
        functools.partial(_stage1_kernel, H=H, W=W, eps=eps),
        grid=(B,),
        in_specs=[
            pl.BlockSpec((1, H + 2, W + 2, cin), lambda b: (b, 0, 0, 0)),
            pl.BlockSpec((1, 1, tdim), lambda b: (b, 0, 0)),
            pl.BlockSpec((1, cin), const2),       # GN1 gamma
            pl.BlockSpec((1, cin), const2),       # GN1 beta
            pl.BlockSpec((cin, cin), const2),     # group-mean matrix
            pl.BlockSpec((9, cin, cout), const3), # conv1 taps
            pl.BlockSpec((1, cout), const2),      # conv1 bias
            pl.BlockSpec((tdim, cout), const2),   # t_emb Linear weight (in, out)
            pl.BlockSpec((1, cout), const2),      # t_emb Linear bias
        ],
        out_specs=pl.BlockSpec((1, H * W, cout), lambda b: (b, 0, 0)),
        out_shape=jax.ShapeDtypeStruct((B, H * W, cout), jnp.float32),
        compiler_params=pltpu.CompilerParams(dimension_semantics=("parallel",)),
    )(xp, t3, row(params["gn1_g"]), row(params["gn1_b"]), gmat1,
      w1_t, row(params["cb1"]), params["wt"], row(params["bt"]))

    ap = jnp.pad(a.reshape(B, H, W, cout), ((0, 0), (1, 1), (1, 1), (0, 0)),
                 mode="edge")
    xres = x_nhwc.reshape(B, H * W, cin)

    out = pl.pallas_call(
        functools.partial(_stage2_kernel, H=H, W=W, eps=eps),
        grid=(B,),
        in_specs=[
            pl.BlockSpec((1, H + 2, W + 2, cout), lambda b: (b, 0, 0, 0)),
            pl.BlockSpec((1, H * W, cin), lambda b: (b, 0, 0)),
            pl.BlockSpec((1, cout), const2),        # GN2 gamma
            pl.BlockSpec((1, cout), const2),        # GN2 beta
            pl.BlockSpec((cout, cout), const2),     # group-mean matrix
            pl.BlockSpec((9, cout, cout), const3),  # conv2 taps
            pl.BlockSpec((1, cout), const2),        # conv2 bias
            pl.BlockSpec((cin, cout), const2),      # 1x1 proj weight (in, out)
            pl.BlockSpec((1, cout), const2),        # proj bias
        ],
        out_specs=pl.BlockSpec((1, H * W, cout), lambda b: (b, 0, 0)),
        out_shape=jax.ShapeDtypeStruct((B, H * W, cout), jnp.float32),
        compiler_params=pltpu.CompilerParams(dimension_semantics=("parallel",)),
    )(ap, xres, row(params["gn2_g"]), row(params["gn2_b"]), gmat2,
      w2_t, row(params["cb2"]), params["wp"], row(params["bp"]))

    return jnp.transpose(out.reshape(B, H, W, cout), (0, 3, 1, 2))


# ---------------------------------------------------------------------------
# Pure-JAX reference (mirrors the PyTorch module) and parameter init
# ---------------------------------------------------------------------------
def _reference(X, t_emb, params, *, num_groups=32, eps=1e-5):
    hp = lax.Precision.HIGHEST

    def gn(x, gamma, beta):
        B, C, H, W = x.shape
        g = C // num_groups
        xg = x.reshape(B, num_groups, g * H * W)
        m = jnp.mean(xg, axis=-1, keepdims=True)
        v = jnp.mean((xg - m) ** 2, axis=-1, keepdims=True)
        xn = ((xg - m) * lax.rsqrt(v + eps)).reshape(B, C, H, W)
        return xn * gamma.reshape(1, C, 1, 1) + beta.reshape(1, C, 1, 1)

    def conv3x3_rep(x, w_oihw, b):
        xpad = jnp.pad(x, ((0, 0), (0, 0), (1, 1), (1, 1)), mode="edge")
        y = lax.conv_general_dilated(
            xpad, w_oihw, (1, 1), "VALID",
            dimension_numbers=("NCHW", "OIHW", "NCHW"), precision=hp)
        return y + b.reshape(1, -1, 1, 1)

    silu = lambda v: v * jax.nn.sigmoid(v)
    y = silu(conv3x3_rep(gn(X, params["gn1_g"], params["gn1_b"]),
                         params["w1_oihw"], params["cb1"]))
    t = jnp.dot(t_emb, params["wt"], precision=hp) + params["bt"]
    y = y + t[:, :, None, None]
    z = silu(conv3x3_rep(gn(y, params["gn2_g"], params["gn2_b"]),
                         params["w2_oihw"], params["cb2"]))
    res = jnp.einsum("bchw,cd->bdhw", X, params["wp"], precision=hp)
    return z + res + params["bp"].reshape(1, -1, 1, 1)


def init_params(key, in_channels, channels, t_emb_dim):
    ks = jax.random.split(key, 10)
    n = lambda k, shape, s: jax.random.normal(k, shape, jnp.float32) * s
    return dict(
        gn1_g=1.0 + 0.1 * n(ks[0], (in_channels,), 1.0),
        gn1_b=0.1 * n(ks[1], (in_channels,), 1.0),
        w1_oihw=n(ks[2], (channels, in_channels, 3, 3), 0.1),
        cb1=0.05 * n(ks[3], (channels,), 1.0),
        wt=n(ks[4], (t_emb_dim, channels), 0.1),   # Linear weight, stored (in, out)
        bt=0.05 * n(ks[5], (channels,), 1.0),
        gn2_g=1.0 + 0.1 * n(ks[6], (channels,), 1.0),
        gn2_b=0.1 * n(ks[7], (channels,), 1.0),
        w2_oihw=n(ks[8], (channels, channels, 3, 3), 0.1),
        cb2=jnp.zeros((channels,), jnp.float32),
        wp=n(ks[9], (in_channels, channels), 0.1), # 1x1 proj weight, stored (in, out)
        bp=jnp.zeros((channels,), jnp.float32),
    )


if __name__ == "__main__":
    B, Cin, Cout, H, W, Tdim = 2, 32, 64, 16, 16, 64
    key = jax.random.PRNGKey(0)
    kx, kt, kp = jax.random.split(key, 3)
    X = jax.random.normal(kx, (B, Cin, H, W), jnp.float32)      # NCHW like torch
    t_emb = jax.random.normal(kt, (B, Tdim), jnp.float32)
    params = init_params(kp, Cin, Cout, Tdim)

    fwd = jax.jit(residual_block_t_emb)
    out = fwd(X, t_emb, params)
    jax.block_until_ready(out)

    ref = _reference(X, t_emb, params)
    np.testing.assert_allclose(np.asarray(out), np.asarray(ref),
                               rtol=2e-2, atol=2e-2)
    assert out.shape == (B, Cout, H, W) and out.dtype == jnp.float32
    print("KERNEL_OK")
</pallas_src>

<mosaic_0001>
module attributes {stable_mosaic.version = 11 : i64} {
  func.func @_stage1_kernel(%arg0: i32, %arg1: memref<1x18x18x32xf32, #tpu.memory_space<vmem>>, %arg2: memref<1x1x64xf32, #tpu.memory_space<vmem>>, %arg3: memref<1x32xf32, #tpu.memory_space<vmem>>, %arg4: memref<1x32xf32, #tpu.memory_space<vmem>>, %arg5: memref<32x32xf32, #tpu.memory_space<vmem>>, %arg6: memref<9x32x64xf32, #tpu.memory_space<vmem>>, %arg7: memref<1x64xf32, #tpu.memory_space<vmem>>, %arg8: memref<64x64xf32, #tpu.memory_space<vmem>>, %arg9: memref<1x64xf32, #tpu.memory_space<vmem>>, %arg10: memref<1x256x64xf32, #tpu.memory_space<vmem>>) attributes {dimension_semantics = [#tpu.dimension_semantics<parallel>], iteration_bounds = array<i64: 2>, scalar_prefetch = 0 : i64, scratch_operands = 0 : i64, tpu.core_type = #tpu.core_type<tc>, window_params = [{transform_indices = @transform_0, window_bounds = array<i64: 1, 18, 18, 32>}, {transform_indices = @transform_1, window_bounds = array<i64: 1, 1, 64>}, {pipeline_mode = #tpu.pipeline_mode<synchronous>, transform_indices = @transform_2, window_bounds = array<i64: 1, 32>}, {pipeline_mode = #tpu.pipeline_mode<synchronous>, transform_indices = @transform_3, window_bounds = array<i64: 1, 32>}, {pipeline_mode = #tpu.pipeline_mode<synchronous>, transform_indices = @transform_4, window_bounds = array<i64: 32, 32>}, {pipeline_mode = #tpu.pipeline_mode<synchronous>, transform_indices = @transform_5, window_bounds = array<i64: 9, 32, 64>}, {pipeline_mode = #tpu.pipeline_mode<synchronous>, transform_indices = @transform_6, window_bounds = array<i64: 1, 64>}, {pipeline_mode = #tpu.pipeline_mode<synchronous>, transform_indices = @transform_7, window_bounds = array<i64: 64, 64>}, {pipeline_mode = #tpu.pipeline_mode<synchronous>, transform_indices = @transform_8, window_bounds = array<i64: 1, 64>}, {transform_indices = @transform_9, window_bounds = array<i64: 1, 256, 64>}]} {
    %c0 = arith.constant 0 : index
    %c1 = arith.constant 1 : index
    %c1_0 = arith.constant 1 : index
    %c0_1 = arith.constant 0 : index
    %0 = vector.load %arg1[%c0, %c1, %c1_0, %c0_1] : memref<1x18x18x32xf32, #tpu.memory_space<vmem>>, vector<1x16x16x32xf32>
    %1 = vector.shape_cast %0 : vector<1x16x16x32xf32> to vector<16x16x32xf32>
    %2 = vector.shape_cast %1 : vector<16x16x32xf32> to vector<256x32xf32>
    %cst = arith.constant dense<0.000000e+00> : vector<32xf32>
    %3 = vector.multi_reduction <add>, %2, %cst [0] : vector<256x32xf32> to vector<32xf32>
    %4 = vector.shape_cast %3 : vector<32xf32> to vector<1x32xf32>
    %5 = arith.mulf %2, %2 : vector<256x32xf32>
    %cst_2 = arith.constant dense<0.000000e+00> : vector<32xf32>
    %6 = vector.multi_reduction <add>, %5, %cst_2 [0] : vector<256x32xf32> to vector<32xf32>
    %7 = vector.shape_cast %6 : vector<32xf32> to vector<1x32xf32>
    %c0_3 = arith.constant 0 : index
    %c0_4 = arith.constant 0 : index
    %8 = vector.load %arg5[%c0_3, %c0_4] : memref<32x32xf32, #tpu.memory_space<vmem>>, vector<32x32xf32>
    %cst_5 = arith.constant dense<0.000000e+00> : vector<1x32xf32>
    %9 = tpu.matmul %4, %8, %cst_5 {dimension_numbers = #tpu.dot_dimension_numbers<[1], [0], [0], [1], [0, 0, 1, 1], [], []>} : vector<1x32xf32>, vector<32x32xf32>, vector<1x32xf32> -> vector<1x32xf32>
    %c0_6 = arith.constant 0 : index
    %c0_7 = arith.constant 0 : index
    %10 = vector.load %arg5[%c0_6, %c0_7] : memref<32x32xf32, #tpu.memory_space<vmem>>, vector<32x32xf32>
    %cst_8 = arith.constant dense<0.000000e+00> : vector<1x32xf32>
    %11 = tpu.matmul %7, %10, %cst_8 {dimension_numbers = #tpu.dot_dimension_numbers<[1], [0], [0], [1], [0, 0, 1, 1], [], []>} : vector<1x32xf32>, vector<32x32xf32>, vector<1x32xf32> -> vector<1x32xf32>
    %12 = arith.mulf %9, %9 : vector<1x32xf32>
    %13 = arith.subf %11, %12 : vector<1x32xf32>
    %c0_9 = arith.constant 0 : index
    %c0_10 = arith.constant 0 : index
    %14 = vector.load %arg3[%c0_9, %c0_10] : memref<1x32xf32, #tpu.memory_space<vmem>>, vector<1x32xf32>
    %cst_11 = arith.constant 9.99999974E-6 : f32
    %15 = vector.broadcast %cst_11 : f32 to vector<1x32xf32>
    %16 = arith.addf %13, %15 : vector<1x32xf32>
    %17 = math.rsqrt %16 : vector<1x32xf32>
    %18 = arith.mulf %14, %17 : vector<1x32xf32>
    %c0_12 = arith.constant 0 : index
    %c0_13 = arith.constant 0 : index
    %19 = vector.load %arg4[%c0_12, %c0_13] : memref<1x32xf32, #tpu.memory_space<vmem>>, vector<1x32xf32>
    %20 = arith.mulf %9, %18 : vector<1x32xf32>
    %21 = arith.subf %19, %20 : vector<1x32xf32>
    %c0_14 = arith.constant 0 : index
    %c0_15 = arith.constant 0 : index
    %c0_16 = arith.constant 0 : index
    %c0_17 = arith.constant 0 : index
    %22 = vector.load %arg1[%c0_14, %c0_15, %c0_16, %c0_17] : memref<1x18x18x32xf32, #tpu.memory_space<vmem>>, vector<1x16x16x32xf32>
    %23 = vector.shape_cast %22 : vector<1x16x16x32xf32> to vector<16x16x32xf32>
    %24 = vector.shape_cast %23 : vector<16x16x32xf32> to vector<256x32xf32>
    %25 = vector.broadcast %18 : vector<1x32xf32> to vector<256x32xf32>
    %26 = arith.mulf %24, %25 : vector<256x32xf32>
    %27 = vector.broadcast %21 : vector<1x32xf32> to vector<256x32xf32>
    %28 = arith.addf %26, %27 : vector<256x32xf32>
    %c0_18 = arith.constant 0 : index
    %c0_19 = arith.constant 0 : index
    %c0_20 = arith.constant 0 : index
    %29 = vector.load %arg6[%c0_18, %c0_19, %c0_20] : memref<9x32x64xf32, #tpu.memory_space<vmem>>, vector<1x32x64xf32>
    %30 = vector.shape_cast %29 : vector<1x32x64xf32> to vector<32x64xf32>
    %cst_21 = arith.constant dense<0.000000e+00> : vector<256x64xf32>
    %31 = tpu.matmul %28, %30, %cst_21 {dimension_numbers = #tpu.dot_dimension_numbers<[1], [0], [0], [1], [0, 0, 1, 1], [], []>} : vector<256x32xf32>, vector<32x64xf32>, vector<256x64xf32> -> vector<256x64xf32>
    %c0_22 = arith.constant 0 : index
    %c0_23 = arith.constant 0 : index
    %c1_24 = arith.constant 1 : index
    %c0_25 = arith.constant 0 : index
    %32 = vector.load %arg1[%c0_22, %c0_23, %c1_24, %c0_25] : memref<1x18x18x32xf32, #tpu.memory_space<vmem>>, vector<1x16x16x32xf32>
    %33 = vector.shape_cast %32 : vector<1x16x16x32xf32> to vector<16x16x32xf32>
    %34 = vector.shape_cast %33 : vector<16x16x32xf32> to vector<256x32xf32>
    %35 = vector.broadcast %18 : vector<1x32xf32> to vector<256x32xf32>
    %36 = arith.mulf %34, %35 : vector<256x32xf32>
    %37 = vector.broadcast %21 : vector<1x32xf32> to vector<256x32xf32>
    %38 = arith.addf %36, %37 : vector<256x32xf32>
    %c1_26 = arith.constant 1 : index
    %c0_27 = arith.constant 0 : index
    %c0_28 = arith.constant 0 : index
    %39 = vector.load %arg6[%c1_26, %c0_27, %c0_28] : memref<9x32x64xf32, #tpu.memory_space<vmem>>, vector<1x32x64xf32>
    %40 = vector.shape_cast %39 : vector<1x32x64xf32> to vector<32x64xf32>
    %cst_29 = arith.constant dense<0.000000e+00> : vector<256x64xf32>
    %41 = tpu.matmul %38, %40, %cst_29 {dimension_numbers = #tpu.dot_dimension_numbers<[1], [0], [0], [1], [0, 0, 1, 1], [], []>} : vector<256x32xf32>, vector<32x64xf32>, vector<256x64xf32> -> vector<256x64xf32>
    %42 = arith.addf %31, %41 : vector<256x64xf32>
    %c0_30 = arith.constant 0 : index
    %c0_31 = arith.constant 0 : index
    %c2 = arith.constant 2 : index
    %c0_32 = arith.constant 0 : index
    %43 = vector.load %arg1[%c0_30, %c0_31, %c2, %c0_32] : memref<1x18x18x32xf32, #tpu.memory_space<vmem>>, vector<1x16x16x32xf32>
    %44 = vector.shape_cast %43 : vector<1x16x16x32xf32> to vector<16x16x32xf32>
    %45 = vector.shape_cast %44 : vector<16x16x32xf32> to vector<256x32xf32>
    %46 = vector.broadcast %18 : vector<1x32xf32> to vector<256x32xf32>
    %47 = arith.mulf %45, %46 : vector<256x32xf32>
    %48 = vector.broadcast %21 : vector<1x32xf32> to vector<256x32xf32>
    %49 = arith.addf %47, %48 : vector<256x32xf32>
    %c2_33 = arith.constant 2 : index
    %c0_34 = arith.constant 0 : index
    %c0_35 = arith.constant 0 : index
    %50 = vector.load %arg6[%c2_33, %c0_34, %c0_35] : memref<9x32x64xf32, #tpu.memory_space<vmem>>, vector<1x32x64xf32>
    %51 = vector.shape_cast %50 : vector<1x32x64xf32> to vector<32x64xf32>
    %cst_36 = arith.constant dense<0.000000e+00> : vector<256x64xf32>
    %52 = tpu.matmul %49, %51, %cst_36 {dimension_numbers = #tpu.dot_dimension_numbers<[1], [0], [0], [1], [0, 0, 1, 1], [], []>} : vector<256x32xf32>, vector<32x64xf32>, vector<256x64xf32> -> vector<256x64xf32>
    %53 = arith.addf %42, %52 : vector<256x64xf32>
    %c0_37 = arith.constant 0 : index
    %c1_38 = arith.constant 1 : index
    %c0_39 = arith.constant 0 : index
    %c0_40 = arith.constant 0 : index
    %54 = vector.load %arg1[%c0_37, %c1_38, %c0_39, %c0_40] : memref<1x18x18x32xf32, #tpu.memory_space<vmem>>, vector<1x16x16x32xf32>
    %55 = vector.shape_cast %54 : vector<1x16x16x32xf32> to vector<16x16x32xf32>
    %56 = vector.shape_cast %55 : vector<16x16x32xf32> to vector<256x32xf32>
    %57 = vector.broadcast %18 : vector<1x32xf32> to vector<256x32xf32>
    %58 = arith.mulf %56, %57 : vector<256x32xf32>
    %59 = vector.broadcast %21 : vector<1x32xf32> to vector<256x32xf32>
    %60 = arith.addf %58, %59 : vector<256x32xf32>
    %c3 = arith.constant 3 : index
    %c0_41 = arith.constant 0 : index
    %c0_42 = arith.constant 0 : index
    %61 = vector.load %arg6[%c3, %c0_41, %c0_42] : memref<9x32x64xf32, #tpu.memory_space<vmem>>, vector<1x32x64xf32>
    %62 = vector.shape_cast %61 : vector<1x32x64xf32> to vector<32x64xf32>
    %cst_43 = arith.constant dense<0.000000e+00> : vector<256x64xf32>
    %63 = tpu.matmul %60, %62, %cst_43 {dimension_numbers = #tpu.dot_dimension_numbers<[1], [0], [0], [1], [0, 0, 1, 1], [], []>} : vector<256x32xf32>, vector<32x64xf32>, vector<256x64xf32> -> vector<256x64xf32>
    %64 = arith.addf %53, %63 : vector<256x64xf32>
    %c0_44 = arith.constant 0 : index
    %c1_45 = arith.constant 1 : index
    %c1_46 = arith.constant 1 : index
    %c0_47 = arith.constant 0 : index
    %65 = vector.load %arg1[%c0_44, %c1_45, %c1_46, %c0_47] : memref<1x18x18x32xf32, #tpu.memory_space<vmem>>, vector<1x16x16x32xf32>
    %66 = vector.shape_cast %65 : vector<1x16x16x32xf32> to vector<16x16x32xf32>
    %67 = vector.shape_cast %66 : vector<16x16x32xf32> to vector<256x32xf32>
    %68 = vector.broadcast %18 : vector<1x32xf32> to vector<256x32xf32>
    %69 = arith.mulf %67, %68 : vector<256x32xf32>
    %70 = vector.broadcast %21 : vector<1x32xf32> to vector<256x32xf32>
    %71 = arith.addf %69, %70 : vector<256x32xf32>
    %c4 = arith.constant 4 : index
    %c0_48 = arith.constant 0 : index
    %c0_49 = arith.constant 0 : index
    %72 = vector.load %arg6[%c4, %c0_48, %c0_49] : memref<9x32x64xf32, #tpu.memory_space<vmem>>, vector<1x32x64xf32>
    %73 = vector.shape_cast %72 : vector<1x32x64xf32> to vector<32x64xf32>
    %cst_50 = arith.constant dense<0.000000e+00> : vector<256x64xf32>
    %74 = tpu.matmul %71, %73, %cst_50 {dimension_numbers = #tpu.dot_dimension_numbers<[1], [0], [0], [1], [0, 0, 1, 1], [], []>} : vector<256x32xf32>, vector<32x64xf32>, vector<256x64xf32> -> vector<256x64xf32>
    %75 = arith.addf %64, %74 : vector<256x64xf32>
    %c0_51 = arith.constant 0 : index
    %c1_52 = arith.constant 1 : index
    %c2_53 = arith.constant 2 : index
    %c0_54 = arith.constant 0 : index
    %76 = vector.load %arg1[%c0_51, %c1_52, %c2_53, %c0_54] : memref<1x18x18x32xf32, #tpu.memory_space<vmem>>, vector<1x16x16x32xf32>
    %77 = vector.shape_cast %76 : vector<1x16x16x32xf32> to vector<16x16x32xf32>
    %78 = vector.shape_cast %77 : vector<16x16x32xf32> to vector<256x32xf32>
    %79 = vector.broadcast %18 : vector<1x32xf32> to vector<256x32xf32>
    %80 = arith.mulf %78, %79 : vector<256x32xf32>
    %81 = vector.broadcast %21 : vector<1x32xf32> to vector<256x32xf32>
    %82 = arith.addf %80, %81 : vector<256x32xf32>
    %c5 = arith.constant 5 : index
    %c0_55 = arith.constant 0 : index
    %c0_56 = arith.constant 0 : index
    %83 = vector.load %arg6[%c5, %c0_55, %c0_56] : memref<9x32x64xf32, #tpu.memory_space<vmem>>, vector<1x32x64xf32>
    %84 = vector.shape_cast %83 : vector<1x32x64xf32> to vector<32x64xf32>
    %cst_57 = arith.constant dense<0.000000e+00> : vector<256x64xf32>
    %85 = tpu.matmul %82, %84, %cst_57 {dimension_numbers = #tpu.dot_dimension_numbers<[1], [0], [0], [1], [0, 0, 1, 1], [], []>} : vector<256x32xf32>, vector<32x64xf32>, vector<256x64xf32> -> vector<256x64xf32>
    %86 = arith.addf %75, %85 : vector<256x64xf32>
    %c0_58 = arith.constant 0 : index
    %c2_59 = arith.constant 2 : index
    %c0_60 = arith.constant 0 : index
    %c0_61 = arith.constant 0 : index
    %87 = vector.load %arg1[%c0_58, %c2_59, %c0_60, %c0_61] : memref<1x18x18x32xf32, #tpu.memory_space<vmem>>, vector<1x16x16x32xf32>
    %88 = vector.shape_cast %87 : vector<1x16x16x32xf32> to vector<16x16x32xf32>
    %89 = vector.shape_cast %88 : vector<16x16x32xf32> to vector<256x32xf32>
    %90 = vector.broadcast %18 : vector<1x32xf32> to vector<256x32xf32>
    %91 = arith.mulf %89, %90 : vector<256x32xf32>
    %92 = vector.broadcast %21 : vector<1x32xf32> to vector<256x32xf32>
    %93 = arith.addf %91, %92 : vector<256x32xf32>
    %c6 = arith.constant 6 : index
    %c0_62 = arith.constant 0 : index
    %c0_63 = arith.constant 0 : index
    %94 = vector.load %arg6[%c6, %c0_62, %c0_63] : memref<9x32x64xf32, #tpu.memory_space<vmem>>, vector<1x32x64xf32>
    %95 = vector.shape_cast %94 : vector<1x32x64xf32> to vector<32x64xf32>
    %cst_64 = arith.constant dense<0.000000e+00> : vector<256x64xf32>
    %96 = tpu.matmul %93, %95, %cst_64 {dimension_numbers = #tpu.dot_dimension_numbers<[1], [0], [0], [1], [0, 0, 1, 1], [], []>} : vector<256x32xf32>, vector<32x64xf32>, vector<256x64xf32> -> vector<256x64xf32>
    %97 = arith.addf %86, %96 : vector<256x64xf32>
    %c0_65 = arith.constant 0 : index
    %c2_66 = arith.constant 2 : index
    %c1_67 = arith.constant 1 : index
    %c0_68 = arith.constant 0 : index
    %98 = vector.load %arg1[%c0_65, %c2_66, %c1_67, %c0_68] : memref<1x18x18x32xf32, #tpu.memory_space<vmem>>, vector<1x16x16x32xf32>
    %99 = vector.shape_cast %98 : vector<1x16x16x32xf32> to vector<16x16x32xf32>
    %100 = vector.shape_cast %99 : vector<16x16x32xf32> to vector<256x32xf32>
    %101 = vector.broadcast %18 : vector<1x32xf32> to vector<256x32xf32>
    %102 = arith.mulf %100, %101 : vector<256x32xf32>
    %103 = vector.broadcast %21 : vector<1x32xf32> to vector<256x32xf32>
    %104 = arith.addf %102, %103 : vector<256x32xf32>
    %c7 = arith.constant 7 : index
    %c0_69 = arith.constant 0 : index
    %c0_70 = arith.constant 0 : index
    %105 = vector.load %arg6[%c7, %c0_69, %c0_70] : memref<9x32x64xf32, #tpu.memory_space<vmem>>, vector<1x32x64xf32>
    %106 = vector.shape_cast %105 : vector<1x32x64xf32> to vector<32x64xf32>
    %cst_71 = arith.constant dense<0.000000e+00> : vector<256x64xf32>
    %107 = tpu.matmul %104, %106, %cst_71 {dimension_numbers = #tpu.dot_dimension_numbers<[1], [0], [0], [1], [0, 0, 1, 1], [], []>} : vector<256x32xf32>, vector<32x64xf32>, vector<256x64xf32> -> vector<256x64xf32>
    %108 = arith.addf %97, %107 : vector<256x64xf32>
    %c0_72 = arith.constant 0 : index
    %c2_73 = arith.constant 2 : index
    %c2_74 = arith.constant 2 : index
    %c0_75 = arith.constant 0 : index
    %109 = vector.load %arg1[%c0_72, %c2_73, %c2_74, %c0_75] : memref<1x18x18x32xf32, #tpu.memory_space<vmem>>, vector<1x16x16x32xf32>
    %110 = vector.shape_cast %109 : vector<1x16x16x32xf32> to vector<16x16x32xf32>
    %111 = vector.shape_cast %110 : vector<16x16x32xf32> to vector<256x32xf32>
    %112 = vector.broadcast %18 : vector<1x32xf32> to vector<256x32xf32>
    %113 = arith.mulf %111, %112 : vector<256x32xf32>
    %114 = vector.broadcast %21 : vector<1x32xf32> to vector<256x32xf32>
    %115 = arith.addf %113, %114 : vector<256x32xf32>
    %c8 = arith.constant 8 : index
    %c0_76 = arith.constant 0 : index
    %c0_77 = arith.constant 0 : index
    %116 = vector.load %arg6[%c8, %c0_76, %c0_77] : memref<9x32x64xf32, #tpu.memory_space<vmem>>, vector<1x32x64xf32>
    %117 = vector.shape_cast %116 : vector<1x32x64xf32> to vector<32x64xf32>
    %cst_78 = arith.constant dense<0.000000e+00> : vector<256x64xf32>
    %118 = tpu.matmul %115, %117, %cst_78 {dimension_numbers = #tpu.dot_dimension_numbers<[1], [0], [0], [1], [0, 0, 1, 1], [], []>} : vector<256x32xf32>, vector<32x64xf32>, vector<256x64xf32> -> vector<256x64xf32>
    %119 = arith.addf %108, %118 : vector<256x64xf32>
    %c0_79 = arith.constant 0 : index
    %c0_80 = arith.constant 0 : index
    %120 = vector.load %arg7[%c0_79, %c0_80] : memref<1x64xf32, #tpu.memory_space<vmem>>, vector<1x64xf32>
    %121 = vector.broadcast %120 : vector<1x64xf32> to vector<256x64xf32>
    %122 = arith.addf %119, %121 : vector<256x64xf32>
    %123 = arith.negf %122 : vector<256x64xf32>
    %124 = math.exp %123 : vector<256x64xf32>
    %cst_81 = arith.constant 1.000000e+00 : f32
    %125 = vector.broadcast %cst_81 : f32 to vector<256x64xf32>
    %126 = arith.addf %125, %124 : vector<256x64xf32>
    %127 = arith.divf %125, %126 : vector<256x64xf32>
    %128 = arith.mulf %122, %127 : vector<256x64xf32>
    %c0_82 = arith.constant 0 : index
    %c0_83 = arith.constant 0 : index
    %c0_84 = arith.constant 0 : index
    %129 = vector.load %arg2[%c0_82, %c0_83, %c0_84] : memref<1x1x64xf32, #tpu.memory_space<vmem>>, vector<1x1x64xf32>
    %130 = vector.shape_cast %129 : vector<1x1x64xf32> to vector<1x64xf32>
    %c0_85 = arith.constant 0 : index
    %c0_86 = arith.constant 0 : index
    %131 = vector.load %arg8[%c0_85, %c0_86] : memref<64x64xf32, #tpu.memory_space<vmem>>, vector<64x64xf32>
    %cst_87 = arith.constant dense<0.000000e+00> : vector<1x64xf32>
    %132 = tpu.matmul %130, %131, %cst_87 {dimension_numbers = #tpu.dot_dimension_numbers<[1], [0], [0], [1], [0, 0, 1, 1], [], []>} : vector<1x64xf32>, vector<64x64xf32>, vector<1x64xf32> -> vector<1x64xf32>
    %c0_88 = arith.constant 0 : index
    %c0_89 = arith.constant 0 : index
    %133 = vector.load %arg9[%c0_88, %c0_89] : memref<1x64xf32, #tpu.memory_space<vmem>>, vector<1x64xf32>
    %134 = arith.addf %132, %133 : vector<1x64xf32>
    %135 = vector.broadcast %134 : vector<1x64xf32> to vector<256x64xf32>
    %136 = arith.addf %128, %135 : vector<256x64xf32>
    %c0_90 = arith.constant 0 : index
    %c0_91 = arith.constant 0 : index
    %c0_92 = arith.constant 0 : index
    %137 = vector.load %arg10[%c0_90, %c0_91, %c0_92] : memref<1x256x64xf32, #tpu.memory_space<vmem>>, vector<1x256x64xf32>
    %138 = vector.shape_cast %137 : vector<1x256x64xf32> to vector<256x64xf32>
    %139 = vector.shape_cast %136 : vector<256x64xf32> to vector<1x256x64xf32>
    tpu.vector_store %arg10[%c0_90, %c0_91, %c0_92], %139 {strides = array<i32>} : memref<1x256x64xf32, #tpu.memory_space<vmem>>, vector<1x256x64xf32>,
    return
  }
  func.func @transform_0(%arg0: i32) -> (i32, i32, i32, i32) {
    %c0_i32 = arith.constant 0 : i32
    %c0_i32_0 = arith.constant 0 : i32
    %c0_i32_1 = arith.constant 0 : i32
    %c0_i32_2 = arith.constant 0 : i32
    return %arg0, %c0_i32, %c0_i32_0, %c0_i32_1 : i32, i32, i32, i32
  }
  func.func @transform_1(%arg0: i32) -> (i32, i32, i32) {
    %c0_i32 = arith.constant 0 : i32
    %c0_i32_0 = arith.constant 0 : i32
    %c0_i32_1 = arith.constant 0 : i32
    return %arg0, %c0_i32, %c0_i32_0 : i32, i32, i32
  }
  func.func @transform_2(%arg0: i32) -> (i32, i32) {
    %c0_i32 = arith.constant 0 : i32
    %c0_i32_0 = arith.constant 0 : i32
    %c0_i32_1 = arith.constant 0 : i32
    return %c0_i32, %c0_i32_0 : i32, i32
  }
  func.func @transform_3(%arg0: i32) -> (i32, i32) {
    %c0_i32 = arith.constant 0 : i32
    %c0_i32_0 = arith.constant 0 : i32
    %c0_i32_1 = arith.constant 0 : i32
    return %c0_i32, %c0_i32_0 : i32, i32
  }
  func.func @transform_4(%arg0: i32) -> (i32, i32) {
    %c0_i32 = arith.constant 0 : i32
    %c0_i32_0 = arith.constant 0 : i32
    %c0_i32_1 = arith.constant 0 : i32
    return %c0_i32, %c0_i32_0 : i32, i32
  }
  func.func @transform_5(%arg0: i32) -> (i32, i32, i32) {
    %c0_i32 = arith.constant 0 : i32
    %c0_i32_0 = arith.constant 0 : i32
    %c0_i32_1 = arith.constant 0 : i32
    %c0_i32_2 = arith.constant 0 : i32
    return %c0_i32, %c0_i32_0, %c0_i32_1 : i32, i32, i32
  }
  func.func @transform_6(%arg0: i32) -> (i32, i32) {
    %c0_i32 = arith.constant 0 : i32
    %c0_i32_0 = arith.constant 0 : i32
    %c0_i32_1 = arith.constant 0 : i32
    return %c0_i32, %c0_i32_0 : i32, i32
  }
  func.func @transform_7(%arg0: i32) -> (i32, i32) {
    %c0_i32 = arith.constant 0 : i32
    %c0_i32_0 = arith.constant 0 : i32
    %c0_i32_1 = arith.constant 0 : i32
    return %c0_i32, %c0_i32_0 : i32, i32
  }
  func.func @transform_8(%arg0: i32) -> (i32, i32) {
    %c0_i32 = arith.constant 0 : i32
    %c0_i32_0 = arith.constant 0 : i32
    %c0_i32_1 = arith.constant 0 : i32
    return %c0_i32, %c0_i32_0 : i32, i32
  }
  func.func @transform_9(%arg0: i32) -> (i32, i32, i32) {
    %c0_i32 = arith.constant 0 : i32
    %c0_i32_0 = arith.constant 0 : i32
    %c0_i32_1 = arith.constant 0 : i32
    return %arg0, %c0_i32, %c0_i32_0 : i32, i32, i32
  }
}

module attributes {stable_mosaic.version = 11 : i64} {
  func.func @_stage2_kernel(%arg0: i32, %arg1: memref<1x18x18x64xf32, #tpu.memory_space<vmem>>, %arg2: memref<1x256x32xf32, #tpu.memory_space<vmem>>, %arg3: memref<1x64xf32, #tpu.memory_space<vmem>>, %arg4: memref<1x64xf32, #tpu.memory_space<vmem>>, %arg5: memref<64x64xf32, #tpu.memory_space<vmem>>, %arg6: memref<9x64x64xf32, #tpu.memory_space<vmem>>, %arg7: memref<1x64xf32, #tpu.memory_space<vmem>>, %arg8: memref<32x64xf32, #tpu.memory_space<vmem>>, %arg9: memref<1x64xf32, #tpu.memory_space<vmem>>, %arg10: memref<1x256x64xf32, #tpu.memory_space<vmem>>) attributes {dimension_semantics = [#tpu.dimension_semantics<parallel>], iteration_bounds = array<i64: 2>, scalar_prefetch = 0 : i64, scratch_operands = 0 : i64, tpu.core_type = #tpu.core_type<tc>, window_params = [{transform_indices = @transform_0, window_bounds = array<i64: 1, 18, 18, 64>}, {transform_indices = @transform_1, window_bounds = array<i64: 1, 256, 32>}, {pipeline_mode = #tpu.pipeline_mode<synchronous>, transform_indices = @transform_2, window_bounds = array<i64: 1, 64>}, {pipeline_mode = #tpu.pipeline_mode<synchronous>, transform_indices = @transform_3, window_bounds = array<i64: 1, 64>}, {pipeline_mode = #tpu.pipeline_mode<synchronous>, transform_indices = @transform_4, window_bounds = array<i64: 64, 64>}, {pipeline_mode = #tpu.pipeline_mode<synchronous>, transform_indices = @transform_5, window_bounds = array<i64: 9, 64, 64>}, {pipeline_mode = #tpu.pipeline_mode<synchronous>, transform_indices = @transform_6, window_bounds = array<i64: 1, 64>}, {pipeline_mode = #tpu.pipeline_mode<synchronous>, transform_indices = @transform_7, window_bounds = array<i64: 32, 64>}, {pipeline_mode = #tpu.pipeline_mode<synchronous>, transform_indices = @transform_8, window_bounds = array<i64: 1, 64>}, {transform_indices = @transform_9, window_bounds = array<i64: 1, 256, 64>}]} {
    %c0 = arith.constant 0 : index
    %c1 = arith.constant 1 : index
    %c1_0 = arith.constant 1 : index
    %c0_1 = arith.constant 0 : index
    %0 = vector.load %arg1[%c0, %c1, %c1_0, %c0_1] : memref<1x18x18x64xf32, #tpu.memory_space<vmem>>, vector<1x16x16x64xf32>
    %1 = vector.shape_cast %0 : vector<1x16x16x64xf32> to vector<16x16x64xf32>
    %2 = vector.shape_cast %1 : vector<16x16x64xf32> to vector<256x64xf32>
    %cst = arith.constant dense<0.000000e+00> : vector<64xf32>
    %3 = vector.multi_reduction <add>, %2, %cst [0] : vector<256x64xf32> to vector<64xf32>
    %4 = vector.shape_cast %3 : vector<64xf32> to vector<1x64xf32>
    %5 = arith.mulf %2, %2 : vector<256x64xf32>
    %cst_2 = arith.constant dense<0.000000e+00> : vector<64xf32>
    %6 = vector.multi_reduction <add>, %5, %cst_2 [0] : vector<256x64xf32> to vector<64xf32>
    %7 = vector.shape_cast %6 : vector<64xf32> to vector<1x64xf32>
    %c0_3 = arith.constant 0 : index
    %c0_4 = arith.constant 0 : index
    %8 = vector.load %arg5[%c0_3, %c0_4] : memref<64x64xf32, #tpu.memory_space<vmem>>, vector<64x64xf32>
    %cst_5 = arith.constant dense<0.000000e+00> : vector<1x64xf32>
    %9 = tpu.matmul %4, %8, %cst_5 {dimension_numbers = #tpu.dot_dimension_numbers<[1], [0], [0], [1], [0, 0, 1, 1], [], []>} : vector<1x64xf32>, vector<64x64xf32>, vector<1x64xf32> -> vector<1x64xf32>
    %c0_6 = arith.constant 0 : index
    %c0_7 = arith.constant 0 : index
    %10 = vector.load %arg5[%c0_6, %c0_7] : memref<64x64xf32, #tpu.memory_space<vmem>>, vector<64x64xf32>
    %cst_8 = arith.constant dense<0.000000e+00> : vector<1x64xf32>
    %11 = tpu.matmul %7, %10, %cst_8 {dimension_numbers = #tpu.dot_dimension_numbers<[1], [0], [0], [1], [0, 0, 1, 1], [], []>} : vector<1x64xf32>, vector<64x64xf32>, vector<1x64xf32> -> vector<1x64xf32>
    %12 = arith.mulf %9, %9 : vector<1x64xf32>
    %13 = arith.subf %11, %12 : vector<1x64xf32>
    %c0_9 = arith.constant 0 : index
    %c0_10 = arith.constant 0 : index
    %14 = vector.load %arg3[%c0_9, %c0_10] : memref<1x64xf32, #tpu.memory_space<vmem>>, vector<1x64xf32>
    %cst_11 = arith.constant 9.99999974E-6 : f32
    %15 = vector.broadcast %cst_11 : f32 to vector<1x64xf32>
    %16 = arith.addf %13, %15 : vector<1x64xf32>
    %17 = math.rsqrt %16 : vector<1x64xf32>
    %18 = arith.mulf %14, %17 : vector<1x64xf32>
    %c0_12 = arith.constant 0 : index
    %c0_13 = arith.constant 0 : index
    %19 = vector.load %arg4[%c0_12, %c0_13] : memref<1x64xf32, #tpu.memory_space<vmem>>, vector<1x64xf32>
    %20 = arith.mulf %9, %18 : vector<1x64xf32>
    %21 = arith.subf %19, %20 : vector<1x64xf32>
    %c0_14 = arith.constant 0 : index
    %c0_15 = arith.constant 0 : index
    %c0_16 = arith.constant 0 : index
    %c0_17 = arith.constant 0 : index
    %22 = vector.load %arg1[%c0_14, %c0_15, %c0_16, %c0_17] : memref<1x18x18x64xf32, #tpu.memory_space<vmem>>, vector<1x16x16x64xf32>
    %23 = vector.shape_cast %22 : vector<1x16x16x64xf32> to vector<16x16x64xf32>
    %24 = vector.shape_cast %23 : vector<16x16x64xf32> to vector<256x64xf32>
    %25 = vector.broadcast %18 : vector<1x64xf32> to vector<256x64xf32>
    %26 = arith.mulf %24, %25 : vector<256x64xf32>
    %27 = vector.broadcast %21 : vector<1x64xf32> to vector<256x64xf32>
    %28 = arith.addf %26, %27 : vector<256x64xf32>
    %c0_18 = arith.constant 0 : index
    %c0_19 = arith.constant 0 : index
    %c0_20 = arith.constant 0 : index
    %29 = vector.load %arg6[%c0_18, %c0_19, %c0_20] : memref<9x64x64xf32, #tpu.memory_space<vmem>>, vector<1x64x64xf32>
    %30 = vector.shape_cast %29 : vector<1x64x64xf32> to vector<64x64xf32>
    %cst_21 = arith.constant dense<0.000000e+00> : vector<256x64xf32>
    %31 = tpu.matmul %28, %30, %cst_21 {dimension_numbers = #tpu.dot_dimension_numbers<[1], [0], [0], [1], [0, 0, 1, 1], [], []>} : vector<256x64xf32>, vector<64x64xf32>, vector<256x64xf32> -> vector<256x64xf32>
    %c0_22 = arith.constant 0 : index
    %c0_23 = arith.constant 0 : index
    %c1_24 = arith.constant 1 : index
    %c0_25 = arith.constant 0 : index
    %32 = vector.load %arg1[%c0_22, %c0_23, %c1_24, %c0_25] : memref<1x18x18x64xf32, #tpu.memory_space<vmem>>, vector<1x16x16x64xf32>
    %33 = vector.shape_cast %32 : vector<1x16x16x64xf32> to vector<16x16x64xf32>
    %34 = vector.shape_cast %33 : vector<16x16x64xf32> to vector<256x64xf32>
    %35 = vector.broadcast %18 : vector<1x64xf32> to vector<256x64xf32>
    %36 = arith.mulf %34, %35 : vector<256x64xf32>
    %37 = vector.broadcast %21 : vector<1x64xf32> to vector<256x64xf32>
    %38 = arith.addf %36, %37 : vector<256x64xf32>
    %c1_26 = arith.constant 1 : index
    %c0_27 = arith.constant 0 : index
    %c0_28 = arith.constant 0 : index
    %39 = vector.load %arg6[%c1_26, %c0_27, %c0_28] : memref<9x64x64xf32, #tpu.memory_space<vmem>>, vector<1x64x64xf32>
    %40 = vector.shape_cast %39 : vector<1x64x64xf32> to vector<64x64xf32>
    %cst_29 = arith.constant dense<0.000000e+00> : vector<256x64xf32>
    %41 = tpu.matmul %38, %40, %cst_29 {dimension_numbers = #tpu.dot_dimension_numbers<[1], [0], [0], [1], [0, 0, 1, 1], [], []>} : vector<256x64xf32>, vector<64x64xf32>, vector<256x64xf32> -> vector<256x64xf32>
    %42 = arith.addf %31, %41 : vector<256x64xf32>
    %c0_30 = arith.constant 0 : index
    %c0_31 = arith.constant 0 : index
    %c2 = arith.constant 2 : index
    %c0_32 = arith.constant 0 : index
    %43 = vector.load %arg1[%c0_30, %c0_31, %c2, %c0_32] : memref<1x18x18x64xf32, #tpu.memory_space<vmem>>, vector<1x16x16x64xf32>
    %44 = vector.shape_cast %43 : vector<1x16x16x64xf32> to vector<16x16x64xf32>
    %45 = vector.shape_cast %44 : vector<16x16x64xf32> to vector<256x64xf32>
    %46 = vector.broadcast %18 : vector<1x64xf32> to vector<256x64xf32>
    %47 = arith.mulf %45, %46 : vector<256x64xf32>
    %48 = vector.broadcast %21 : vector<1x64xf32> to vector<256x64xf32>
    %49 = arith.addf %47, %48 : vector<256x64xf32>
    %c2_33 = arith.constant 2 : index
    %c0_34 = arith.constant 0 : index
    %c0_35 = arith.constant 0 : index
    %50 = vector.load %arg6[%c2_33, %c0_34, %c0_35] : memref<9x64x64xf32, #tpu.memory_space<vmem>>, vector<1x64x64xf32>
    %51 = vector.shape_cast %50 : vector<1x64x64xf32> to vector<64x64xf32>
    %cst_36 = arith.constant dense<0.000000e+00> : vector<256x64xf32>
    %52 = tpu.matmul %49, %51, %cst_36 {dimension_numbers = #tpu.dot_dimension_numbers<[1], [0], [0], [1], [0, 0, 1, 1], [], []>} : vector<256x64xf32>, vector<64x64xf32>, vector<256x64xf32> -> vector<256x64xf32>
    %53 = arith.addf %42, %52 : vector<256x64xf32>
    %c0_37 = arith.constant 0 : index
    %c1_38 = arith.constant 1 : index
    %c0_39 = arith.constant 0 : index
    %c0_40 = arith.constant 0 : index
    %54 = vector.load %arg1[%c0_37, %c1_38, %c0_39, %c0_40] : memref<1x18x18x64xf32, #tpu.memory_space<vmem>>, vector<1x16x16x64xf32>
    %55 = vector.shape_cast %54 : vector<1x16x16x64xf32> to vector<16x16x64xf32>
    %56 = vector.shape_cast %55 : vector<16x16x64xf32> to vector<256x64xf32>
    %57 = vector.broadcast %18 : vector<1x64xf32> to vector<256x64xf32>
    %58 = arith.mulf %56, %57 : vector<256x64xf32>
    %59 = vector.broadcast %21 : vector<1x64xf32> to vector<256x64xf32>
    %60 = arith.addf %58, %59 : vector<256x64xf32>
    %c3 = arith.constant 3 : index
    %c0_41 = arith.constant 0 : index
    %c0_42 = arith.constant 0 : index
    %61 = vector.load %arg6[%c3, %c0_41, %c0_42] : memref<9x64x64xf32, #tpu.memory_space<vmem>>, vector<1x64x64xf32>
    %62 = vector.shape_cast %61 : vector<1x64x64xf32> to vector<64x64xf32>
    %cst_43 = arith.constant dense<0.000000e+00> : vector<256x64xf32>
    %63 = tpu.matmul %60, %62, %cst_43 {dimension_numbers = #tpu.dot_dimension_numbers<[1], [0], [0], [1], [0, 0, 1, 1], [], []>} : vector<256x64xf32>, vector<64x64xf32>, vector<256x64xf32> -> vector<256x64xf32>
    %64 = arith.addf %53, %63 : vector<256x64xf32>
    %c0_44 = arith.constant 0 : index
    %c1_45 = arith.constant 1 : index
    %c1_46 = arith.constant 1 : index
    %c0_47 = arith.constant 0 : index
    %65 = vector.load %arg1[%c0_44, %c1_45, %c1_46, %c0_47] : memref<1x18x18x64xf32, #tpu.memory_space<vmem>>, vector<1x16x16x64xf32>
    %66 = vector.shape_cast %65 : vector<1x16x16x64xf32> to vector<16x16x64xf32>
    %67 = vector.shape_cast %66 : vector<16x16x64xf32> to vector<256x64xf32>
    %68 = vector.broadcast %18 : vector<1x64xf32> to vector<256x64xf32>
    %69 = arith.mulf %67, %68 : vector<256x64xf32>
    %70 = vector.broadcast %21 : vector<1x64xf32> to vector<256x64xf32>
    %71 = arith.addf %69, %70 : vector<256x64xf32>
    %c4 = arith.constant 4 : index
    %c0_48 = arith.constant 0 : index
    %c0_49 = arith.constant 0 : index
    %72 = vector.load %arg6[%c4, %c0_48, %c0_49] : memref<9x64x64xf32, #tpu.memory_space<vmem>>, vector<1x64x64xf32>
    %73 = vector.shape_cast %72 : vector<1x64x64xf32> to vector<64x64xf32>
    %cst_50 = arith.constant dense<0.000000e+00> : vector<256x64xf32>
    %74 = tpu.matmul %71, %73, %cst_50 {dimension_numbers = #tpu.dot_dimension_numbers<[1], [0], [0], [1], [0, 0, 1, 1], [], []>} : vector<256x64xf32>, vector<64x64xf32>, vector<256x64xf32> -> vector<256x64xf32>
    %75 = arith.addf %64, %74 : vector<256x64xf32>
    %c0_51 = arith.constant 0 : index
    %c1_52 = arith.constant 1 : index
    %c2_53 = arith.constant 2 : index
    %c0_54 = arith.constant 0 : index
    %76 = vector.load %arg1[%c0_51, %c1_52, %c2_53, %c0_54] : memref<1x18x18x64xf32, #tpu.memory_space<vmem>>, vector<1x16x16x64xf32>
    %77 = vector.shape_cast %76 : vector<1x16x16x64xf32> to vector<16x16x64xf32>
    %78 = vector.shape_cast %77 : vector<16x16x64xf32> to vector<256x64xf32>
    %79 = vector.broadcast %18 : vector<1x64xf32> to vector<256x64xf32>
    %80 = arith.mulf %78, %79 : vector<256x64xf32>
    %81 = vector.broadcast %21 : vector<1x64xf32> to vector<256x64xf32>
    %82 = arith.addf %80, %81 : vector<256x64xf32>
    %c5 = arith.constant 5 : index
    %c0_55 = arith.constant 0 : index
    %c0_56 = arith.constant 0 : index
    %83 = vector.load %arg6[%c5, %c0_55, %c0_56] : memref<9x64x64xf32, #tpu.memory_space<vmem>>, vector<1x64x64xf32>
    %84 = vector.shape_cast %83 : vector<1x64x64xf32> to vector<64x64xf32>
    %cst_57 = arith.constant dense<0.000000e+00> : vector<256x64xf32>
    %85 = tpu.matmul %82, %84, %cst_57 {dimension_numbers = #tpu.dot_dimension_numbers<[1], [0], [0], [1], [0, 0, 1, 1], [], []>} : vector<256x64xf32>, vector<64x64xf32>, vector<256x64xf32> -> vector<256x64xf32>
    %86 = arith.addf %75, %85 : vector<256x64xf32>
    %c0_58 = arith.constant 0 : index
    %c2_59 = arith.constant 2 : index
    %c0_60 = arith.constant 0 : index
    %c0_61 = arith.constant 0 : index
    %87 = vector.load %arg1[%c0_58, %c2_59, %c0_60, %c0_61] : memref<1x18x18x64xf32, #tpu.memory_space<vmem>>, vector<1x16x16x64xf32>
    %88 = vector.shape_cast %87 : vector<1x16x16x64xf32> to vector<16x16x64xf32>
    %89 = vector.shape_cast %88 : vector<16x16x64xf32> to vector<256x64xf32>
    %90 = vector.broadcast %18 : vector<1x64xf32> to vector<256x64xf32>
    %91 = arith.mulf %89, %90 : vector<256x64xf32>
    %92 = vector.broadcast %21 : vector<1x64xf32> to vector<256x64xf32>
    %93 = arith.addf %91, %92 : vector<256x64xf32>
    %c6 = arith.constant 6 : index
    %c0_62 = arith.constant 0 : index
    %c0_63 = arith.constant 0 : index
    %94 = vector.load %arg6[%c6, %c0_62, %c0_63] : memref<9x64x64xf32, #tpu.memory_space<vmem>>, vector<1x64x64xf32>
    %95 = vector.shape_cast %94 : vector<1x64x64xf32> to vector<64x64xf32>
    %cst_64 = arith.constant dense<0.000000e+00> : vector<256x64xf32>
    %96 = tpu.matmul %93, %95, %cst_64 {dimension_numbers = #tpu.dot_dimension_numbers<[1], [0], [0], [1], [0, 0, 1, 1], [], []>} : vector<256x64xf32>, vector<64x64xf32>, vector<256x64xf32> -> vector<256x64xf32>
    %97 = arith.addf %86, %96 : vector<256x64xf32>
    %c0_65 = arith.constant 0 : index
    %c2_66 = arith.constant 2 : index
    %c1_67 = arith.constant 1 : index
    %c0_68 = arith.constant 0 : index
    %98 = vector.load %arg1[%c0_65, %c2_66, %c1_67, %c0_68] : memref<1x18x18x64xf32, #tpu.memory_space<vmem>>, vector<1x16x16x64xf32>
    %99 = vector.shape_cast %98 : vector<1x16x16x64xf32> to vector<16x16x64xf32>
    %100 = vector.shape_cast %99 : vector<16x16x64xf32> to vector<256x64xf32>
    %101 = vector.broadcast %18 : vector<1x64xf32> to vector<256x64xf32>
    %102 = arith.mulf %100, %101 : vector<256x64xf32>
    %103 = vector.broadcast %21 : vector<1x64xf32> to vector<256x64xf32>
    %104 = arith.addf %102, %103 : vector<256x64xf32>
    %c7 = arith.constant 7 : index
    %c0_69 = arith.constant 0 : index
    %c0_70 = arith.constant 0 : index
    %105 = vector.load %arg6[%c7, %c0_69, %c0_70] : memref<9x64x64xf32, #tpu.memory_space<vmem>>, vector<1x64x64xf32>
    %106 = vector.shape_cast %105 : vector<1x64x64xf32> to vector<64x64xf32>
    %cst_71 = arith.constant dense<0.000000e+00> : vector<256x64xf32>
    %107 = tpu.matmul %104, %106, %cst_71 {dimension_numbers = #tpu.dot_dimension_numbers<[1], [0], [0], [1], [0, 0, 1, 1], [], []>} : vector<256x64xf32>, vector<64x64xf32>, vector<256x64xf32> -> vector<256x64xf32>
    %108 = arith.addf %97, %107 : vector<256x64xf32>
    %c0_72 = arith.constant 0 : index
    %c2_73 = arith.constant 2 : index
    %c2_74 = arith.constant 2 : index
    %c0_75 = arith.constant 0 : index
    %109 = vector.load %arg1[%c0_72, %c2_73, %c2_74, %c0_75] : memref<1x18x18x64xf32, #tpu.memory_space<vmem>>, vector<1x16x16x64xf32>
    %110 = vector.shape_cast %109 : vector<1x16x16x64xf32> to vector<16x16x64xf32>
    %111 = vector.shape_cast %110 : vector<16x16x64xf32> to vector<256x64xf32>
    %112 = vector.broadcast %18 : vector<1x64xf32> to vector<256x64xf32>
    %113 = arith.mulf %111, %112 : vector<256x64xf32>
    %114 = vector.broadcast %21 : vector<1x64xf32> to vector<256x64xf32>
    %115 = arith.addf %113, %114 : vector<256x64xf32>
    %c8 = arith.constant 8 : index
    %c0_76 = arith.constant 0 : index
    %c0_77 = arith.constant 0 : index
    %116 = vector.load %arg6[%c8, %c0_76, %c0_77] : memref<9x64x64xf32, #tpu.memory_space<vmem>>, vector<1x64x64xf32>
    %117 = vector.shape_cast %116 : vector<1x64x64xf32> to vector<64x64xf32>
    %cst_78 = arith.constant dense<0.000000e+00> : vector<256x64xf32>
    %118 = tpu.matmul %115, %117, %cst_78 {dimension_numbers = #tpu.dot_dimension_numbers<[1], [0], [0], [1], [0, 0, 1, 1], [], []>} : vector<256x64xf32>, vector<64x64xf32>, vector<256x64xf32> -> vector<256x64xf32>
    %119 = arith.addf %108, %118 : vector<256x64xf32>
    %c0_79 = arith.constant 0 : index
    %c0_80 = arith.constant 0 : index
    %120 = vector.load %arg7[%c0_79, %c0_80] : memref<1x64xf32, #tpu.memory_space<vmem>>, vector<1x64xf32>
    %121 = vector.broadcast %120 : vector<1x64xf32> to vector<256x64xf32>
    %122 = arith.addf %119, %121 : vector<256x64xf32>
    %123 = arith.negf %122 : vector<256x64xf32>
    %124 = math.exp %123 : vector<256x64xf32>
    %cst_81 = arith.constant 1.000000e+00 : f32
    %125 = vector.broadcast %cst_81 : f32 to vector<256x64xf32>
    %126 = arith.addf %125, %124 : vector<256x64xf32>
    %127 = arith.divf %125, %126 : vector<256x64xf32>
    %128 = arith.mulf %122, %127 : vector<256x64xf32>
    %c0_82 = arith.constant 0 : index
    %c0_83 = arith.constant 0 : index
    %c0_84 = arith.constant 0 : index
    %129 = vector.load %arg2[%c0_82, %c0_83, %c0_84] : memref<1x256x32xf32, #tpu.memory_space<vmem>>, vector<1x256x32xf32>
    %130 = vector.shape_cast %129 : vector<1x256x32xf32> to vector<256x32xf32>
    %c0_85 = arith.constant 0 : index
    %c0_86 = arith.constant 0 : index
    %131 = vector.load %arg8[%c0_85, %c0_86] : memref<32x64xf32, #tpu.memory_space<vmem>>, vector<32x64xf32>
    %cst_87 = arith.constant dense<0.000000e+00> : vector<256x64xf32>
    %132 = tpu.matmul %130, %131, %cst_87 {dimension_numbers = #tpu.dot_dimension_numbers<[1], [0], [0], [1], [0, 0, 1, 1], [], []>} : vector<256x32xf32>, vector<32x64xf32>, vector<256x64xf32> -> vector<256x64xf32>
    %c0_88 = arith.constant 0 : index
    %c0_89 = arith.constant 0 : index
    %133 = vector.load %arg9[%c0_88, %c0_89] : memref<1x64xf32, #tpu.memory_space<vmem>>, vector<1x64xf32>
    %134 = vector.broadcast %133 : vector<1x64xf32> to vector<256x64xf32>
    %135 = arith.addf %132, %134 : vector<256x64xf32>
    %136 = arith.addf %128, %135 : vector<256x64xf32>
    %c0_90 = arith.constant 0 : index
    %c0_91 = arith.constant 0 : index
    %c0_92 = arith.constant 0 : index
    %137 = vector.load %arg10[%c0_90, %c0_91, %c0_92] : memref<1x256x64xf32, #tpu.memory_space<vmem>>, vector<1x256x64xf32>
    %138 = vector.shape_cast %137 : vector<1x256x64xf32> to vector<256x64xf32>
    %139 = vector.shape_cast %136 : vector<256x64xf32> to vector<1x256x64xf32>
    tpu.vector_store %arg10[%c0_90, %c0_91, %c0_92], %139 {strides = array<i32>} : memref<1x256x64xf32, #tpu.memory_space<vmem>>, vector<1x256x64xf32>,
    return
  }
  func.func @transform_0(%arg0: i32) -> (i32, i32, i32, i32) {
    %c0_i32 = arith.constant 0 : i32
    %c0_i32_0 = arith.constant 0 : i32
    %c0_i32_1 = arith.constant 0 : i32
    %c0_i32_2 = arith.constant 0 : i32
    return %arg0, %c0_i32, %c0_i32_0, %c0_i32_1 : i32, i32, i32, i32
  }
  func.func @transform_1(%arg0: i32) -> (i32, i32, i32) {
    %c0_i32 = arith.constant 0 : i32
    %c0_i32_0 = arith.constant 0 : i32
    %c0_i32_1 = arith.constant 0 : i32
    return %arg0, %c0_i32, %c0_i32_0 : i32, i32, i32
  }
  func.func @transform_2(%arg0: i32) -> (i32, i32) {
    %c0_i32 = arith.constant 0 : i32
    %c0_i32_0 = arith.constant 0 : i32
    %c0_i32_1 = arith.constant 0 : i32
    return %c0_i32, %c0_i32_0 : i32, i32
  }
  func.func @transform_3(%arg0: i32) -> (i32, i32) {
    %c0_i32 = arith.constant 0 : i32
    %c0_i32_0 = arith.constant 0 : i32
    %c0_i32_1 = arith.constant 0 : i32
    return %c0_i32, %c0_i32_0 : i32, i32
  }
  func.func @transform_4(%arg0: i32) -> (i32, i32) {
    %c0_i32 = arith.constant 0 : i32
    %c0_i32_0 = arith.constant 0 : i32
    %c0_i32_1 = arith.constant 0 : i32
    return %c0_i32, %c0_i32_0 : i32, i32
  }
  func.func @transform_5(%arg0: i32) -> (i32, i32, i32) {
    %c0_i32 = arith.constant 0 : i32
    %c0_i32_0 = arith.constant 0 : i32
    %c0_i32_1 = arith.constant 0 : i32
    %c0_i32_2 = arith.constant 0 : i32
    return %c0_i32, %c0_i32_0, %c0_i32_1 : i32, i32, i32
  }
  func.func @transform_6(%arg0: i32) -> (i32, i32) {
    %c0_i32 = arith.constant 0 : i32
    %c0_i32_0 = arith.constant 0 : i32
    %c0_i32_1 = arith.constant 0 : i32
    return %c0_i32, %c0_i32_0 : i32, i32
  }
  func.func @transform_7(%arg0: i32) -> (i32, i32) {
    %c0_i32 = arith.constant 0 : i32
    %c0_i32_0 = arith.constant 0 : i32
    %c0_i32_1 = arith.constant 0 : i32
    return %c0_i32, %c0_i32_0 : i32, i32
  }
  func.func @transform_8(%arg0: i32) -> (i32, i32) {
    %c0_i32 = arith.constant 0 : i32
    %c0_i32_0 = arith.constant 0 : i32
    %c0_i32_1 = arith.constant 0 : i32
    return %c0_i32, %c0_i32_0 : i32, i32
  }
  func.func @transform_9(%arg0: i32) -> (i32, i32, i32) {
    %c0_i32 = arith.constant 0 : i32
    %c0_i32_0 = arith.constant 0 : i32
    %c0_i32_1 = arith.constant 0 : i32
    return %arg0, %c0_i32, %c0_i32_0 : i32, i32, i32
  }
}

</mosaic_0001>

<llo_original>
// kernel: residual_block_t_emb.2
$region0: #{residual_block_t_emb.2}
  #allocation0 [shape = 'u32[]', space=smem, size = 0x4, offset = 0x4, fixed_abs, tag = 'smem constant byte address 0x4 - core index']
  #allocation1 [shape = 'u32[144,128]{1,0:T(1,128)}', space=vmem, size = 0x12000, scoped, tag = 'internal scratch']
  %s0 = inlined_call_operand.vmem [shape: f32[2,18,18,32], index: 0, kind: input, shape index: {}]
  %s1 = inlined_call_operand.vmem [shape: f32[2,1,64], index: 1, kind: input, shape index: {}]
  %s2 = inlined_call_operand.vmem [shape: f32[1,32], index: 2, kind: input, shape index: {}]
  %s3 = inlined_call_operand.vmem [shape: f32[1,32], index: 3, kind: input, shape index: {}]
  %s4 = inlined_call_operand.vmem [shape: f32[32,32], index: 4, kind: input, shape index: {}]
  %s5 = inlined_call_operand.vmem [shape: f32[9,32,64], index: 5, kind: input, shape index: {}]
  %s6 = inlined_call_operand.vmem [shape: f32[1,64], index: 6, kind: input, shape index: {}]
  %s7 = inlined_call_operand.vmem [shape: f32[64,64], index: 7, kind: input, shape index: {}]
  %s8 = inlined_call_operand.vmem [shape: f32[1,64], index: 8, kind: input, shape index: {}]
  %s9 = inlined_call_operand.vmem [shape: f32[2,256,64], index: 9, kind: output, shape index: {}]
  %s10 = sld [smem:[#allocation0]]
  $region69: #{residual_block_t_emb.2} parent=0
    _
  %s12 = ssub.s32 1, %s10
  %s13 = scalar_select 0, %s12, %s10
  loop: start=0, step=1, limit=4
  $region2: #{residual_block_t_emb.2} parent=0 // loop_pre_header
    _
  $region3: #{residual_block_t_emb.2} parent=0 // loop_header
    %s15 = sphi 0, %s19
    %p16 = scmp.ge.s32.totalorder %s15, 4
    %s25 = sphi 0, %s27
    %s28 = sphi 0, %s25
    %s29 = sphi 0, %s28
    %s45 = sphi 0, %s29
    %s51 = sphi 0, %s53
    %s54 = sphi 0, %s51
    %s55 = sphi 0, %s54
    %s71 = sphi 0, %s55
    %s75 = sphi 0, %s75
    %s77 = sphi 0, %s75
    %s78 = sphi 0, %s77
    %s92 = sphi 0, %s78
    %s96 = sphi 0, %s96
    %s98 = sphi 0, %s96
    %s99 = sphi 0, %s98
    %s113 = sphi 0, %s99
    %s117 = sphi 0, %s117
    %s119 = sphi 0, %s117
    %s120 = sphi 0, %s119
    %s134 = sphi 0, %s120
    %s138 = sphi 0, %s138
    %s140 = sphi 0, %s138
    %s141 = sphi 0, %s140
    %s155 = sphi 0, %s141
    %s159 = sphi 0, %s159
    %s161 = sphi 0, %s159
    %s162 = sphi 0, %s161
    %s176 = sphi 0, %s162
    %s180 = sphi 0, %s180
    %s182 = sphi 0, %s180
    %s183 = sphi 0, %s182
    %s197 = sphi 0, %s183
    %s201 = sphi 0, %s201
    %s203 = sphi 0, %s201
    %s204 = sphi 0, %s203
    %s218 = sphi 0, %s204
    %s224 = sphi 0, %s226
    %s227 = sphi 0, %s224
    %s228 = sphi 0, %s227
    %s244 = sphi 0, %s228
  $region4: #{residual_block_t_emb.2} parent=0 // loop_header_branch
    %18 = sbr.rel (%p16) target = $region8
  $region5: #{residual_block_t_emb.2} parent=0 // loop_body
    %s20 = ssub.s32 %s15, 1
    %s21 = ssub.s32 %s15, 2
    %s22 = sadd.s32 %s15, 1
    %s23 = ssub.s32 %s15, %s22
    %p24 = scmp.eq.s32.totalorder %s23, 0
    %s26 = sadd.s32 %s25, 1
    %s27 = scalar_select %p24, %s25, %s26
    %p30 = pneg %p24
    %p31 = scmp.eq.s32.totalorder %s15, 1
    %p32 = por %p30, %p31
    %p33 = scmp.ne.s32.totalorder %s25, %s28
    %p34 = scmp.eq.s32.totalorder %s15, 0
    %p35 = por %p33, %p34
    %p36 = scmp.ne.s32.totalorder %s25, %s28
    %p37 = scmp.eq.s32.totalorder %s20, 1
    %p38 = por %p36, %p37
    %p39 = scmp.ne.s32.totalorder %s28, %s29
    %p40 = scmp.eq.s32.totalorder %s20, 0
    %p41 = por %p39, %p40
    %p42 = scmp.ne.s32.totalorder %s28, %s29
    %p43 = scmp.eq.s32.totalorder %s21, 1
    %p44 = por %p42, %p43
    %p46 = scmp.ne.s32.totalorder %s29, %s45
    %p47 = scmp.eq.s32.totalorder %s21, 0
    %p48 = por %p46, %p47
    %s49 = ssub.s32 %s15, %s22
    %p50 = scmp.eq.s32.totalorder %s49, 0
    %s52 = sadd.s32 %s51, 1
    %s53 = scalar_select %p50, %s51, %s52
    %p56 = pneg %p50
    %p57 = scmp.eq.s32.totalorder %s15, 1
    %p58 = por %p56, %p57
    %p59 = scmp.ne.s32.totalorder %s51, %s54
    %p60 = scmp.eq.s32.totalorder %s15, 0
    %p61 = por %p59, %p60
    %p62 = scmp.ne.s32.totalorder %s51, %s54
    %p63 = scmp.eq.s32.totalorder %s20, 1
    %p64 = por %p62, %p63
    %p65 = scmp.ne.s32.totalorder %s54, %s55
    %p66 = scmp.eq.s32.totalorder %s20, 0
    %p67 = por %p65, %p66
    %p68 = scmp.ne.s32.totalorder %s54, %s55
    %p69 = scmp.eq.s32.totalorder %s21, 1
    %p70 = por %p68, %p69
    %p72 = scmp.ne.s32.totalorder %s55, %s71
    %p73 = scmp.eq.s32.totalorder %s21, 0
    %p74 = por %p72, %p73
    %s76 = sadd.s32 %s75, 1
    %p79 = scmp.eq.s32.totalorder %s15, 1
    %p80 = scmp.ne.s32.totalorder %s75, %s77
    %p81 = scmp.eq.s32.totalorder %s15, 0
    %p82 = por %p80, %p81
    %p83 = scmp.ne.s32.totalorder %s75, %s77
    %p84 = scmp.eq.s32.totalorder %s20, 1
    %p85 = por %p83, %p84
    %p86 = scmp.ne.s32.totalorder %s77, %s78
    %p87 = scmp.eq.s32.totalorder %s20, 0
    %p88 = por %p86, %p87
    %p89 = scmp.ne.s32.totalorder %s77, %s78
    %p90 = scmp.eq.s32.totalorder %s21, 1
    %p91 = por %p89, %p90
    %p93 = scmp.ne.s32.totalorder %s78, %s92
    %p94 = scmp.eq.s32.totalorder %s21, 0
    %p95 = por %p93, %p94
    %s97 = sadd.s32 %s96, 1
    %p100 = scmp.eq.s32.totalorder %s15, 1
    %p101 = scmp.ne.s32.totalorder %s96, %s98
    %p102 = scmp.eq.s32.totalorder %s15, 0
    %p103 = por %p101, %p102
    %p104 = scmp.ne.s32.totalorder %s96, %s98
    %p105 = scmp.eq.s32.totalorder %s20, 1
    %p106 = por %p104, %p105
    %p107 = scmp.ne.s32.totalorder %s98, %s99
    %p108 = scmp.eq.s32.totalorder %s20, 0
    %p109 = por %p107, %p108
    %p110 = scmp.ne.s32.totalorder %s98, %s99
    %p111 = scmp.eq.s32.totalorder %s21, 1
    %p112 = por %p110, %p111
    %p114 = scmp.ne.s32.totalorder %s99, %s113
    %p115 = scmp.eq.s32.totalorder %s21, 0
    %p116 = por %p114, %p115
    %s118 = sadd.s32 %s117, 1
    %p121 = scmp.eq.s32.totalorder %s15, 1
    %p122 = scmp.ne.s32.totalorder %s117, %s119
    %p123 = scmp.eq.s32.totalorder %s15, 0
    %p124 = por %p122, %p123
    %p125 = scmp.ne.s32.totalorder %s117, %s119
    %p126 = scmp.eq.s32.totalorder %s20, 1
    %p127 = por %p125, %p126
    %p128 = scmp.ne.s32.totalorder %s119, %s120
    %p129 = scmp.eq.s32.totalorder %s20, 0
    %p130 = por %p128, %p129
    %p131 = scmp.ne.s32.totalorder %s119, %s120
    %p132 = scmp.eq.s32.totalorder %s21, 1
    %p133 = por %p131, %p132
    %p135 = scmp.ne.s32.totalorder %s120, %s134
    %p136 = scmp.eq.s32.totalorder %s21, 0
    %p137 = por %p135, %p136
    %s139 = sadd.s32 %s138, 1
    %p142 = scmp.eq.s32.totalorder %s15, 1
    %p143 = scmp.ne.s32.totalorder %s138, %s140
    %p144 = scmp.eq.s32.totalorder %s15, 0
    %p145 = por %p143, %p144
    %p146 = scmp.ne.s32.totalorder %s138, %s140
    %p147 = scmp.eq.s32.totalorder %s20, 1
    %p148 = por %p146, %p147
    %p149 = scmp.ne.s32.totalorder %s140, %s141
    %p150 = scmp.eq.s32.totalorder %s20, 0
    %p151 = por %p149, %p150
    %p152 = scmp.ne.s32.totalorder %s140, %s141
    %p153 = scmp.eq.s32.totalorder %s21, 1
    %p154 = por %p152, %p153
    %p156 = scmp.ne.s32.totalorder %s141, %s155
    %p157 = scmp.eq.s32.totalorder %s21, 0
    %p158 = por %p156, %p157
    %s160 = sadd.s32 %s159, 1
    %p163 = scmp.eq.s32.totalorder %s15, 1
    %p164 = scmp.ne.s32.totalorder %s159, %s161
    %p165 = scmp.eq.s32.totalorder %s15, 0
    %p166 = por %p164, %p165
    %p167 = scmp.ne.s32.totalorder %s159, %s161
    %p168 = scmp.eq.s32.totalorder %s20, 1
    %p169 = por %p167, %p168
    %p170 = scmp.ne.s32.totalorder %s161, %s162
    %p171 = scmp.eq.s32.totalorder %s20, 0
    %p172 = por %p170, %p171
    %p173 = scmp.ne.s32.totalorder %s161, %s162
    %p174 = scmp.eq.s32.totalorder %s21, 1
    %p175 = por %p173, %p174
    %p177 = scmp.ne.s32.totalorder %s162, %s176
    %p178 = scmp.eq.s32.totalorder %s21, 0
    %p179 = por %p177, %p178
    %s181 = sadd.s32 %s180, 1
    %p184 = scmp.eq.s32.totalorder %s15, 1
    %p185 = scmp.ne.s32.totalorder %s180, %s182
    %p186 = scmp.eq.s32.totalorder %s15, 0
    %p187 = por %p185, %p186
    %p188 = scmp.ne.s32.totalorder %s180, %s182
    %p189 = scmp.eq.s32.totalorder %s20, 1
    %p190 = por %p188, %p189
    %p191 = scmp.ne.s32.totalorder %s182, %s183
    %p192 = scmp.eq.s32.totalorder %s20, 0
    %p193 = por %p191, %p192
    %p194 = scmp.ne.s32.totalorder %s182, %s183
    %p195 = scmp.eq.s32.totalorder %s21, 1
    %p196 = por %p194, %p195
    %p198 = scmp.ne.s32.totalorder %s183, %s197
    %p199 = scmp.eq.s32.totalorder %s21, 0
    %p200 = por %p198, %p199
    %s202 = sadd.s32 %s201, 1
    %p205 = scmp.eq.s32.totalorder %s15, 1
    %p206 = scmp.ne.s32.totalorder %s201, %s203
    %p207 = scmp.eq.s32.totalorder %s15, 0
    %p208 = por %p206, %p207
    %p209 = scmp.ne.s32.totalorder %s201, %s203
    %p210 = scmp.eq.s32.totalorder %s20, 1
    %p211 = por %p209, %p210
    %p212 = scmp.ne.s32.totalorder %s203, %s204
    %p213 = scmp.eq.s32.totalorder %s20, 0
    %p214 = por %p212, %p213
    %p215 = scmp.ne.s32.totalorder %s203, %s204
    %p216 = scmp.eq.s32.totalorder %s21, 1
    %p217 = por %p215, %p216
    %p219 = scmp.ne.s32.totalorder %s204, %s218
    %p220 = scmp.eq.s32.totalorder %s21, 0
    %p221 = por %p219, %p220
    %s222 = ssub.s32 %s15, %s22
    %p223 = scmp.eq.s32.totalorder %s222, 0
    %s225 = sadd.s32 %s224, 1
    %s226 = scalar_select %p223, %s224, %s225
    %p229 = pneg %p223
    %p230 = scmp.eq.s32.totalorder %s15, 1
    %p231 = por %p229, %p230
    %p232 = scmp.ne.s32.totalorder %s224, %s227
    %p233 = scmp.eq.s32.totalorder %s15, 0
    %p234 = por %p232, %p233
    %p235 = scmp.ne.s32.totalorder %s224, %s227
    %p236 = scmp.eq.s32.totalorder %s20, 1
    %p237 = por %p235, %p236
    %p238 = scmp.ne.s32.totalorder %s227, %s228
    %p239 = scmp.eq.s32.totalorder %s20, 0
    %p240 = por %p238, %p239
    %p241 = scmp.ne.s32.totalorder %s227, %s228
    %p242 = scmp.eq.s32.totalorder %s21, 1
    %p243 = por %p241, %p242
    %p245 = scmp.ne.s32.totalorder %s228, %s244
    %p246 = scmp.eq.s32.totalorder %s21, 0
    %p247 = por %p245, %p246
    %p248 = scmp.le.s32.totalorder 1, %s15
    %p249 = scmp.lt.s32.totalorder %s15, 3
    %p250 = pnand %p248, %p249
    %p251 = pneg %p250
    // Predicated region
    $region9: #{residual_block_t_emb.2} parent=5 // pred_check
      _
    $region10: #{residual_block_t_emb.2} parent=5 // pred_check_branch
      %253 = sbr.rel (%p250) target = $region12
    $region11: #{residual_block_t_emb.2} parent=5 // pred_region
      %s254 = ssub.s32 %s15, 1
      // Predicated region
      $region13: #{residual_block_t_emb.2} parent=11 // pred_check
        %p255 = pneg %p88
      $region14: #{residual_block_t_emb.2} parent=11 // pred_check_branch
        %257 = sbr.rel (%p255) target = $region16
      $region15: #{residual_block_t_emb.2} parent=11 // pred_region
        _
      $region16: #{residual_block_t_emb.2} parent=11 // pred_fallthru
        _
      // Predicated region
      $region17: #{residual_block_t_emb.2} parent=11 // pred_check
        %p258 = pneg %p109
      $region18: #{residual_block_t_emb.2} parent=11 // pred_check_branch
        %260 = sbr.rel (%p258) target = $region20
      $region19: #{residual_block_t_emb.2} parent=11 // pred_region
        _
      $region20: #{residual_block_t_emb.2} parent=11 // pred_fallthru
        _
      // Predicated region
      $region21: #{residual_block_t_emb.2} parent=11 // pred_check
        %p261 = pneg %p130
      $region22: #{residual_block_t_emb.2} parent=11 // pred_check_branch
        %263 = sbr.rel (%p261) target = $region24
      $region23: #{residual_block_t_emb.2} parent=11 // pred_region
        _
      $region24: #{residual_block_t_emb.2} parent=11 // pred_fallthru
        _
      // Predicated region
      $region25: #{residual_block_t_emb.2} parent=11 // pred_check
        %p264 = pneg %p151
      $region26: #{residual_block_t_emb.2} parent=11 // pred_check_branch
        %266 = sbr.rel (%p264) target = $region28
      $region27: #{residual_block_t_emb.2} parent=11 // pred_region
        _
      $region28: #{residual_block_t_emb.2} parent=11 // pred_fallthru
        _
      // Predicated region
      $region29: #{residual_block_t_emb.2} parent=11 // pred_check
        %p267 = pneg %p172
      $region30: #{residual_block_t_emb.2} parent=11 // pred_check_branch
        %269 = sbr.rel (%p267) target = $region32
      $region31: #{residual_block_t_emb.2} parent=11 // pred_region
        _
      $region32: #{residual_block_t_emb.2} parent=11 // pred_fallthru
        _
      // Predicated region
      $region33: #{residual_block_t_emb.2} parent=11 // pred_check
        %p270 = pneg %p193
      $region34: #{residual_block_t_emb.2} parent=11 // pred_check_branch
        %272 = sbr.rel (%p270) target = $region36
      $region35: #{residual_block_t_emb.2} parent=11 // pred_region
        _
      $region36: #{residual_block_t_emb.2} parent=11 // pred_fallthru
        _
      // Predicated region
      $region37: #{residual_block_t_emb.2} parent=11 // pred_check
        %p273 = pneg %p214
      $region38: #{residual_block_t_emb.2} parent=11 // pred_check_branch
        %275 = sbr.rel (%p273) target = $region40
      $region39: #{residual_block_t_emb.2} parent=11 // pred_region
        _
      $region40: #{residual_block_t_emb.2} parent=11 // pred_fallthru
        _
    $region12: #{residual_block_t_emb.2} parent=5 // pred_fallthru
      _
    %p276 = scmp.lt.s32.totalorder %s15, 2
    // Predicated region
    $region41: #{residual_block_t_emb.2} parent=5 // pred_check
      %p277 = pneg %p276
    $region42: #{residual_block_t_emb.2} parent=5 // pred_check_branch
      %279 = sbr.rel (%p277) target = $region44
    $region43: #{residual_block_t_emb.2} parent=5 // pred_region
      // Predicated region
      $region45: #{residual_block_t_emb.2} parent=43 // pred_check
        %p280 = pneg %p35
      $region46: #{residual_block_t_emb.2} parent=43 // pred_check_branch
        %282 = sbr.rel (%p280) target = $region48
      $region47: #{residual_block_t_emb.2} parent=43 // pred_region
        %p283 = scmp.lt.s32.totalorder %s15, 1
        %s284 = scalar_select %p283, %s15, 1
        %s285 = smul.addr %s284, 54
        %s286 = smul.addr %s285, 8
        %s287 = scalar_lea.vmem %s0, %s286
      $region48: #{residual_block_t_emb.2} parent=43 // pred_fallthru
        _
      // Predicated region
      $region49: #{residual_block_t_emb.2} parent=43 // pred_check
        %p288 = pneg %p61
      $region50: #{residual_block_t_emb.2} parent=43 // pred_check_branch
        %290 = sbr.rel (%p288) target = $region52
      $region51: #{residual_block_t_emb.2} parent=43 // pred_region
        %p291 = scmp.lt.s32.totalorder %s15, 1
        %s292 = scalar_select %p291, %s15, 1
        %s293 = scalar_lea.vmem %s1, %s292
      $region52: #{residual_block_t_emb.2} parent=43 // pred_fallthru
        _
    $region44: #{residual_block_t_emb.2} parent=5 // pred_fallthru
      _
    %p294 = scmp.le.s32.totalorder 1, %s15
    %p295 = scmp.lt.s32.totalorder %s15, 3
    %p296 = pnand %p294, %p295
    %p297 = pneg %p296
    // Predicated region
    $region53: #{residual_block_t_emb.2} parent=5 // pred_check
      _
    $region54: #{residual_block_t_emb.2} parent=5 // pred_check_branch
      %299 = sbr.rel (%p296) target = $region56
    $region55: #{residual_block_t_emb.2} parent=5 // pred_region
      %s300 = ssub.s32 %s15, 1
      %p301 = scmp.lt.s32.totalorder %s20, 1
      %s302 = scalar_select %p301, %s20, 1
      %s303 = smul.addr %s302, 54
      %s304 = smul.addr %s303, 8
      %s305 = scalar_lea.vmem %s0, %s304
      %p306 = pneg %p41
      %p307 = pneg %p38
      %p308 = scmp.lt.s32.totalorder %s20, 1
      %s309 = scalar_select %p308, %s20, 1
      %s310 = scalar_lea.vmem %s1, %s309
      %p311 = pneg %p67
      %p312 = pneg %p64
      %p313 = pneg %p88
      %p314 = pneg %p85
      %p315 = pneg %p109
      %p316 = pneg %p106
      %p317 = pneg %p130
      %p318 = pneg %p127
      %p319 = pneg %p151
      %p320 = pneg %p148
      %p321 = pneg %p172
      %p322 = pneg %p169
      %p323 = pneg %p193
      %p324 = pneg %p190
      %p325 = pneg %p214
      %p326 = pneg %p211
      %p327 = pneg %p240
      %p328 = pneg %p237
      %p329 = scmp.lt.s32.totalorder %s20, 1
      %s330 = scalar_select %p329, %s20, 1
      %s331 = smul.addr %s330, 32
      %s332 = smul.addr %s331, 8
      %s333 = scalar_lea.vmem %s9, %s332
      %p334 = scmp.lt.s32.totalorder %s20, 1
      %s335 = scalar_select %p334, %s20, 1
      %s336 = smul.addr %s335, 54
      %s337 = smul.addr %s336, 8
      %s338 = scalar_lea.vmem %s0, %s337
      %p339 = scmp.lt.s32.totalorder %s20, 1
      %s340 = scalar_select %p339, %s20, 1
      %s341 = scalar_lea.vmem %s1, %s340
      %p342 = scmp.lt.s32.totalorder %s20, 1
      %s343 = scalar_select %p342, %s20, 1
      %s344 = smul.addr %s343, 32
      %s345 = smul.addr %s344, 8
      %s346 = scalar_lea.vmem %s9, %s345
      %s347 = scalar_lea.vmem %s338, 24
      %v348 = vld [vmem:[%s347 + $0x1] sm:$0xff]
      %v349 = vld [vmem:[%s347 + $0x9] sm:$0xff]
      %v350 = vld [vmem:[%s347 + $0x19] sm:$0xff]
      %v351 = vld [vmem:[%s347 + $0x21] sm:$0xff]
      %v352 = vld [vmem:[%s347 + $0x31] sm:$0xff]
      %v353 = vld [vmem:[%s347 + $0x39] sm:$0xff]
      %v354 = vld [vmem:[%s347 + $0x49] sm:$0xff]
      %v355 = vld [vmem:[%s347 + $0x51] sm:$0xff]
      %v356 = vld [vmem:[%s347 + $0x61] sm:$0xff]
      %v357 = vld [vmem:[%s347 + $0x69] sm:$0xff]
      %v358 = vld [vmem:[%s347 + $0x79] sm:$0xff]
      %v359 = vld [vmem:[%s347 + $0x81] sm:$0xff]
      %v360 = vld [vmem:[%s347 + $0x91] sm:$0xff]
      %v361 = vld [vmem:[%s347 + $0x99] sm:$0xff]
      %v362 = vld [vmem:[%s347 + $0xa9] sm:$0xff]
      %v363 = vld [vmem:[%s347 + $0xb1] sm:$0xff]
      %v364 = vld [vmem:[%s347 + $0xc1] sm:$0xff]
      %v365 = vld [vmem:[%s347 + $0xc9] sm:$0xff]
      %v366 = vld [vmem:[%s347 + $0xd9] sm:$0xff]
      %v367 = vld [vmem:[%s347 + $0xe1] sm:$0xff]
      %v368 = vld [vmem:[%s347 + $0xf1] sm:$0xff]
      %v369 = vld [vmem:[%s347 + $0xf9] sm:$0xff]
      %v370 = vld [vmem:[%s347 + $0x109] sm:$0xff]
      %v371 = vld [vmem:[%s347 + $0x111] sm:$0xff]
      %v372 = vld [vmem:[%s347 + $0x121] sm:$0xff]
      %v373 = vld [vmem:[%s347 + $0x129] sm:$0xff]
      %v374 = vld [vmem:[%s347 + $0x139] sm:$0xff]
      %v375 = vld [vmem:[%s347 + $0x141] sm:$0xff]
      %v376 = vld [vmem:[%s347 + $0x151] sm:$0xff]
      %v377 = vld [vmem:[%s347 + $0x159] sm:$0xff]
      %v378 = vld [vmem:[%s347 + $0x169] sm:$0xff]
      %v379 = vld [vmem:[%s347 + $0x171] sm:$0xff]
      %vm380 = vcmask 261120
      %v381 = vsel %vm380, %v348, 0.0
      %v382 = vsel %vm380, %v349, 0.0
      %v383 = vadd.f32 %v381, %v382
      %v384 = vsel %vm380, %v350, 0.0
      %v385 = vadd.f32 %v383, %v384
      %v386 = vsel %vm380, %v351, 0.0
      %v387 = vadd.f32 %v385, %v386
      %v388 = vsel %vm380, %v352, 0.0
      %v389 = vadd.f32 %v387, %v388
      %v390 = vsel %vm380, %v353, 0.0
      %v391 = vadd.f32 %v389, %v390
      %v392 = vsel %vm380, %v354, 0.0
      %v393 = vadd.f32 %v391, %v392
      %v394 = vsel %vm380, %v355, 0.0
      %v395 = vadd.f32 %v393, %v394
      %v396 = vsel %vm380, %v356, 0.0
      %v397 = vadd.f32 %v395, %v396
      %v398 = vsel %vm380, %v357, 0.0
      %v399 = vadd.f32 %v397, %v398
      %v400 = vsel %vm380, %v358, 0.0
      %v401 = vadd.f32 %v399, %v400
      %v402 = vsel %vm380, %v359, 0.0
      %v403 = vadd.f32 %v401, %v402
      %v404 = vsel %vm380, %v360, 0.0
      %v405 = vadd.f32 %v403, %v404
      %v406 = vsel %vm380, %v361, 0.0
      %v407 = vadd.f32 %v405, %v406
      %v408 = vsel %vm380, %v362, 0.0
      %v409 = vadd.f32 %v407, %v408
      %v410 = vsel %vm380, %v363, 0.0
      %v411 = vadd.f32 %v409, %v410
      %v412 = vsel %vm380, %v364, 0.0
      %v413 = vadd.f32 %v411, %v412
      %v414 = vsel %vm380, %v365, 0.0
      %v415 = vadd.f32 %v413, %v414
      %v416 = vsel %vm380, %v366, 0.0
      %v417 = vadd.f32 %v415, %v416
      %v418 = vsel %vm380, %v367, 0.0
      %v419 = vadd.f32 %v417, %v418
      %v420 = vsel %vm380, %v368, 0.0
      %v421 = vadd.f32 %v419, %v420
      %v422 = vsel %vm380, %v369, 0.0
      %v423 = vadd.f32 %v421, %v422
      %v424 = vsel %vm380, %v370, 0.0
      %v425 = vadd.f32 %v423, %v424
      %v426 = vsel %vm380, %v371, 0.0
      %v427 = vadd.f32 %v425, %v426
      %v428 = vsel %vm380, %v372, 0.0
      %v429 = vadd.f32 %v427, %v428
      %v430 = vsel %vm380, %v373, 0.0
      %v431 = vadd.f32 %v429, %v430
      %v432 = vsel %vm380, %v374, 0.0
      %v433 = vadd.f32 %v431, %v432
      %v434 = vsel %vm380, %v375, 0.0
      %v435 = vadd.f32 %v433, %v434
      %v436 = vsel %vm380, %v376, 0.0
      %v437 = vadd.f32 %v435, %v436
      %v438 = vsel %vm380, %v377, 0.0
      %v439 = vadd.f32 %v437, %v438
      %v440 = vsel %vm380, %v378, 0.0
      %v441 = vadd.f32 %v439, %v440
      %v442 = vsel %vm380, %v379, 0.0
      %v443 = vadd.f32 %v441, %v442
      %v444 = vrot.slane %v443, 4
      %v445 = vadd.f32 %v443, %v444
      %v446 = vrot.slane %v445, 2
      %v447 = vadd.f32 %v445, %v446
      %v448 = vrot.slane %v447, 1
      %v449 = vadd.f32 %v447, %v448
      %v450 = vmul.f32 %v348, %v348
      %v451 = vmul.f32 %v349, %v349
      %v452 = vmul.f32 %v350, %v350
      %v453 = vmul.f32 %v351, %v351
      %v454 = vmul.f32 %v352, %v352
      %v455 = vmul.f32 %v353, %v353
      %v456 = vmul.f32 %v354, %v354
      %v457 = vmul.f32 %v355, %v355
      %v458 = vmul.f32 %v356, %v356
      %v459 = vmul.f32 %v357, %v357
      %v460 = vmul.f32 %v358, %v358
      %v461 = vmul.f32 %v359, %v359
      %v462 = vmul.f32 %v360, %v360
      %v463 = vmul.f32 %v361, %v361
      %v464 = vmul.f32 %v362, %v362
      %v465 = vmul.f32 %v363, %v363
      %v466 = vmul.f32 %v364, %v364
      %v467 = vmul.f32 %v365, %v365
      %v468 = vmul.f32 %v366, %v366
      %v469 = vmul.f32 %v367, %v367
      %v470 = vmul.f32 %v368, %v368
      %v471 = vmul.f32 %v369, %v369
      %v472 = vmul.f32 %v370, %v370
      %v473 = vmul.f32 %v371, %v371
      %v474 = vmul.f32 %v372, %v372
      %v475 = vmul.f32 %v373, %v373
      %v476 = vmul.f32 %v374, %v374
      %v477 = vmul.f32 %v375, %v375
      %v478 = vmul.f32 %v376, %v376
      %v479 = vmul.f32 %v377, %v377
      %v480 = vmul.f32 %v378, %v378
      %v481 = vmul.f32 %v379, %v379
      %v482 = vsel %vm380, %v450, 0.0
      %v483 = vsel %vm380, %v451, 0.0
      %v484 = vadd.f32 %v482, %v483
      %v485 = vsel %vm380, %v452, 0.0
      %v486 = vadd.f32 %v484, %v485
      %v487 = vsel %vm380, %v453, 0.0
      %v488 = vadd.f32 %v486, %v487
      %v489 = vsel %vm380, %v454, 0.0
      %v490 = vadd.f32 %v488, %v489
      %v491 = vsel %vm380, %v455, 0.0
      %v492 = vadd.f32 %v490, %v491
      %v493 = vsel %vm380, %v456, 0.0
      %v494 = vadd.f32 %v492, %v493
      %v495 = vsel %vm380, %v457, 0.0
      %v496 = vadd.f32 %v494, %v495
      %v497 = vsel %vm380, %v458, 0.0
      %v498 = vadd.f32 %v496, %v497
      %v499 = vsel %vm380, %v459, 0.0
      %v500 = vadd.f32 %v498, %v499
      %v501 = vsel %vm380, %v460, 0.0
      %v502 = vadd.f32 %v500, %v501
      %v503 = vsel %vm380, %v461, 0.0
      %v504 = vadd.f32 %v502, %v503
      %v505 = vsel %vm380, %v462, 0.0
      %v506 = vadd.f32 %v504, %v505
      %v507 = vsel %vm380, %v463, 0.0
      %v508 = vadd.f32 %v506, %v507
      %v509 = vsel %vm380, %v464, 0.0
      %v510 = vadd.f32 %v508, %v509
      %v511 = vsel %vm380, %v465, 0.0
      %v512 = vadd.f32 %v510, %v511
      %v513 = vsel %vm380, %v466, 0.0
      %v514 = vadd.f32 %v512, %v513
      %v515 = vsel %vm380, %v467, 0.0
      %v516 = vadd.f32 %v514, %v515
      %v517 = vsel %vm380, %v468, 0.0
      %v518 = vadd.f32 %v516, %v517
      %v519 = vsel %vm380, %v469, 0.0
      %v520 = vadd.f32 %v518, %v519
      %v521 = vsel %vm380, %v470, 0.0
      %v522 = vadd.f32 %v520, %v521
      %v523 = vsel %vm380, %v471, 0.0
      %v524 = vadd.f32 %v522, %v523
      %v525 = vsel %vm380, %v472, 0.0
      %v526 = vadd.f32 %v524, %v525
      %v527 = vsel %vm380, %v473, 0.0
      %v528 = vadd.f32 %v526, %v527
      %v529 = vsel %vm380, %v474, 0.0
      %v530 = vadd.f32 %v528, %v529
      %v531 = vsel %vm380, %v475, 0.0
      %v532 = vadd.f32 %v530, %v531
      %v533 = vsel %vm380, %v476, 0.0
      %v534 = vadd.f32 %v532, %v533
      %v535 = vsel %vm380, %v477, 0.0
      %v536 = vadd.f32 %v534, %v535
      %v537 = vsel %vm380, %v478, 0.0
      %v538 = vadd.f32 %v536, %v537
      %v539 = vsel %vm380, %v479, 0.0
      %v540 = vadd.f32 %v538, %v539
      %v541 = vsel %vm380, %v480, 0.0
      %v542 = vadd.f32 %v540, %v541
      %v543 = vsel %vm380, %v481, 0.0
      %v544 = vadd.f32 %v542, %v543
      %v545 = vrot.slane %v544, 4
      %v546 = vadd.f32 %v544, %v545
      %v547 = vrot.slane %v546, 2
      %v548 = vadd.f32 %v546, %v547
      %v549 = vrot.slane %v548, 1
      %v550 = vadd.f32 %v548, %v549
      %v551 = vld [vmem:[%s4] sm:$0xff]
      %v552 = vld [vmem:[%s4 + $0x8] sm:$0xff]
      %v553 = vld [vmem:[%s4 + $0x10] sm:$0xff]
      %v554 = vld [vmem:[%s4 + $0x18] sm:$0xff]
      %v556 = vsel %vm380, %v449, 0
      %558 = vmatprep.subr.mxu0 0.0
      %559 = vmatpush1.msra.mxu0 %v551
      %560 = vmatprep.subr.mxu0 0.0
      %561 = vmatpush1.msra.mxu0 %v552
      %562 = vmatprep.subr.mxu0 0.0
      %563 = vmatpush1.msra.mxu0 %v553
      %564 = vmatprep.subr.mxu0 0.0
      %565 = vmatpush1.msra.mxu0 %v554
      %566 = vmatprep.subr.mxu0 0.0
      %567 = vmatpush1.msra.mxu0 0.0
      %568 = vmatprep.subr.mxu0 0.0
      %569 = vmatpush1.msra.mxu0 0.0
      %570 = vmatprep.subr.mxu0 0.0
      %571 = vmatpush1.msra.mxu0 0.0
      %572 = vmatprep.subr.mxu0 0.0
      %573 = vmatpush1.msra.mxu0 0.0
      %574 = vmatprep.subr.mxu0 0.0
      %575 = vmatpush1.msra.mxu0 0.0
      %576 = vmatprep.subr.mxu0 0.0
      %577 = vmatpush1.msra.mxu0 0.0
      %578 = vmatprep.subr.mxu0 0.0
      %579 = vmatpush1.msra.mxu0 0.0
      %580 = vmatprep.subr.mxu0 0.0
      %581 = vmatpush1.msra.mxu0 0.0
      %582 = vmatprep.subr.mxu0 0.0
      %583 = vmatpush1.msra.mxu0 0.0
      %584 = vmatprep.subr.mxu0 0.0
      %585 = vmatpush1.msra.mxu0 0.0
      %586 = vmatprep.subr.mxu0 0.0
      %587 = vmatpush1.msra.mxu0 0.0
      %588 = vmatprep.subr.mxu0 0.0
      %589 = vmatpush1.msra.mxu0 0.0
      %590 = vmatprep.subr.mxu0 0.0
      %591 = vmatpush1.msra.mxu0 0.0
      %592 = vmatprep.subr.mxu0 0.0
      %593 = vmatpush1.msra.mxu0 0.0
      %594 = vmatprep.subr.mxu0 0.0
      %595 = vmatpush1.msra.mxu0 0.0
      %596 = vmatprep.subr.mxu0 0.0
      %597 = vmatpush1.msra.mxu0 0.0
      %598 = vmatprep.subr.mxu0 0.0
      %599 = vmatpush1.msra.mxu0 0.0
      %600 = vmatprep.subr.mxu0 0.0
      %601 = vmatpush1.msra.mxu0 0.0
      %602 = vmatprep.subr.mxu0 0.0
      %603 = vmatpush1.msra.mxu0 0.0
      %604 = vmatprep.subr.mxu0 0.0
      %605 = vmatpush1.msra.mxu0 0.0
      %606 = vmatprep.subr.mxu0 0.0
      %607 = vmatpush1.msra.mxu0 0.0
      %608 = vmatprep.subr.mxu0 0.0
      %609 = vmatpush1.msra.mxu0 0.0
      %610 = vmatprep.subr.mxu0 0.0
      %611 = vmatpush1.msra.mxu0 0.0
      %612 = vmatprep.subr.mxu0 0.0
      %613 = vmatpush1.msra.mxu0 0.0
      %614 = vmatprep.subr.mxu0 0.0
      %615 = vmatpush1.msra.mxu0 0.0
      %616 = vmatprep.subr.mxu0 0.0
      %617 = vmatpush1.msra.mxu0 0.0
      %618 = vmatprep.subr.mxu0 0.0
      %619 = vmatpush1.msra.mxu0 0.0
      %620 = vmatprep.subr.mxu0 0.0
      %621 = vmatpush1.msra.mxu0 0.0
      %622 = vmatprep.mubr.f32.mxu0 0.0
      %623 = vmatmul.mubr.f32.gmra.mrb[0].mxu0 %v556
      %v624 = vpop.f32.mrb[0].mxu0
      %v625 = vadd.f32 0.0, %v624
      %v626 = vpop.f32.mrb[0].mxu0
      %627 = vdwg.mxu0
      %v629 = vsel %vm380, %v550, 0
      %631 = vmatprep.subr.mxu0 0.0
      %632 = vmatpush1.msra.mxu0 %v551
      %633 = vmatprep.subr.mxu0 0.0
      %634 = vmatpush1.msra.mxu0 %v552
      %635 = vmatprep.subr.mxu0 0.0
      %636 = vmatpush1.msra.mxu0 %v553
      %637 = vmatprep.subr.mxu0 0.0
      %638 = vmatpush1.msra.mxu0 %v554
      %639 = vmatprep.subr.mxu0 0.0
      %640 = vmatpush1.msra.mxu0 0.0
      %641 = vmatprep.subr.mxu0 0.0
      %642 = vmatpush1.msra.mxu0 0.0
      %643 = vmatprep.subr.mxu0 0.0
      %644 = vmatpush1.msra.mxu0 0.0
      %645 = vmatprep.subr.mxu0 0.0
      %646 = vmatpush1.msra.mxu0 0.0
      %647 = vmatprep.subr.mxu0 0.0
      %648 = vmatpush1.msra.mxu0 0.0
      %649 = vmatprep.subr.mxu0 0.0
      %650 = vmatpush1.msra.mxu0 0.0
      %651 = vmatprep.subr.mxu0 0.0
      %652 = vmatpush1.msra.mxu0 0.0
      %653 = vmatprep.subr.mxu0 0.0
      %654 = vmatpush1.msra.mxu0 0.0
      %655 = vmatprep.subr.mxu0 0.0
      %656 = vmatpush1.msra.mxu0 0.0
      %657 = vmatprep.subr.mxu0 0.0
      %658 = vmatpush1.msra.mxu0 0.0
      %659 = vmatprep.subr.mxu0 0.0
      %660 = vmatpush1.msra.mxu0 0.0
      %661 = vmatprep.subr.mxu0 0.0
      %662 = vmatpush1.msra.mxu0 0.0
      %663 = vmatprep.subr.mxu0 0.0
      %664 = vmatpush1.msra.mxu0 0.0
      %665 = vmatprep.subr.mxu0 0.0
      %666 = vmatpush1.msra.mxu0 0.0
      %667 = vmatprep.subr.mxu0 0.0
      %668 = vmatpush1.msra.mxu0 0.0
      %669 = vmatprep.subr.mxu0 0.0
      %670 = vmatpush1.msra.mxu0 0.0
      %671 = vmatprep.subr.mxu0 0.0
      %672 = vmatpush1.msra.mxu0 0.0
      %673 = vmatprep.subr.mxu0 0.0
      %674 = vmatpush1.msra.mxu0 0.0
      %675 = vmatprep.subr.mxu0 0.0
      %676 = vmatpush1.msra.mxu0 0.0
      %677 = vmatprep.subr.mxu0 0.0
      %678 = vmatpush1.msra.mxu0 0.0
      %679 = vmatprep.subr.mxu0 0.0
      %680 = vmatpush1.msra.mxu0 0.0
      %681 = vmatprep.subr.mxu0 0.0
      %682 = vmatpush1.msra.mxu0 0.0
      %683 = vmatprep.subr.mxu0 0.0
      %684 = vmatpush1.msra.mxu0 0.0
      %685 = vmatprep.subr.mxu0 0.0
      %686 = vmatpush1.msra.mxu0 0.0
      %687 = vmatprep.subr.mxu0 0.0
      %688 = vmatpush1.msra.mxu0 0.0
      %689 = vmatprep.subr.mxu0 0.0
      %690 = vmatpush1.msra.mxu0 0.0
      %691 = vmatprep.subr.mxu0 0.0
      %692 = vmatpush1.msra.mxu0 0.0
      %693 = vmatprep.subr.mxu0 0.0
      %694 = vmatpush1.msra.mxu0 0.0
      %695 = vmatprep.mubr.f32.mxu0 0.0
      %696 = vmatmul.mubr.f32.gmra.mrb[0].mxu0 %v629
      %v697 = vpop.f32.mrb[0].mxu0
      %v698 = vadd.f32 0.0, %v697
      %v699 = vpop.f32.mrb[0].mxu0
      %700 = vdwg.mxu0
      %v701 = vmul.f32 %v625, %v625
      %v702 = vsub.f32 %v698, %v701
      %v703 = vld [vmem:[%s2] sm:$0x1]
      %v704 = vadd.f32 %v702, 1e-05
      %v705 = vrsqrt.pop %v704
      %v706 = vmul.f32 %v703, %v705
      %v707 = vld [vmem:[%s3] sm:$0x1]
      %v708 = vmul.f32 %v625, %v706
      %v709 = vsub.f32 %v707, %v708
      %v710 = vld [vmem:[%s338] sm:$0xff]
      %v711 = vld [vmem:[%s338 + $0x8] sm:$0xff]
      %v712 = vld [vmem:[%s338 + $0x18] sm:$0xff]
      %v713 = vld [vmem:[%s338 + $0x20] sm:$0xff]
      %v714 = vld [vmem:[%s338 + $0x30] sm:$0xff]
      %v715 = vld [vmem:[%s338 + $0x38] sm:$0xff]
      %v716 = vld [vmem:[%s338 + $0x48] sm:$0xff]
      %v717 = vld [vmem:[%s338 + $0x50] sm:$0xff]
      %v718 = vld [vmem:[%s338 + $0x60] sm:$0xff]
      %v719 = vld [vmem:[%s338 + $0x68] sm:$0xff]
      %v720 = vld [vmem:[%s338 + $0x78] sm:$0xff]
      %v721 = vld [vmem:[%s338 + $0x80] sm:$0xff]
      %v722 = vld [vmem:[%s338 + $0x90] sm:$0xff]
      %v723 = vld [vmem:[%s338 + $0x98] sm:$0xff]
      %v724 = vld [vmem:[%s338 + $0xa8] sm:$0xff]
      %v725 = vld [vmem:[%s338 + $0xb0] sm:$0xff]
      %v726 = vld [vmem:[%s338 + $0xc0] sm:$0xff]
      %v727 = vld [vmem:[%s338 + $0xc8] sm:$0xff]
      %v728 = vld [vmem:[%s338 + $0xd8] sm:$0xff]
      %v729 = vld [vmem:[%s338 + $0xe0] sm:$0xff]
      %v730 = vld [vmem:[%s338 + $0xf0] sm:$0xff]
      %v731 = vld [vmem:[%s338 + $0xf8] sm:$0xff]
      %v732 = vld [vmem:[%s338 + $0x108] sm:$0xff]
      %v733 = vld [vmem:[%s338 + $0x110] sm:$0xff]
      %v734 = vld [vmem:[%s338 + $0x120] sm:$0xff]
      %v735 = vld [vmem:[%s338 + $0x128] sm:$0xff]
      %v736 = vld [vmem:[%s338 + $0x138] sm:$0xff]
      %v737 = vld [vmem:[%s338 + $0x140] sm:$0xff]
      %v738 = vld [vmem:[%s338 + $0x150] sm:$0xff]
      %v739 = vld [vmem:[%s338 + $0x158] sm:$0xff]
      %v740 = vld [vmem:[%s338 + $0x168] sm:$0xff]
      %v741 = vld [vmem:[%s338 + $0x170] sm:$0xff]
      %v743 = vlaneseq
      %v744 = vshrl.u32 %v743, 7
      %v745 = vsub.s32 0, %v744
      %v746 = vrot.slane %v706, %v745
      %v748 = vmul.f32 %v710, %v746
      %v749 = vmul.f32 %v711, %v746
      %v750 = vmul.f32 %v712, %v746
      %v751 = vmul.f32 %v713, %v746
      %v752 = vmul.f32 %v714, %v746
      %v753 = vmul.f32 %v715, %v746
      %v754 = vmul.f32 %v716, %v746
      %v755 = vmul.f32 %v717, %v746
      %v756 = vmul.f32 %v718, %v746
      %v757 = vmul.f32 %v719, %v746
      %v758 = vmul.f32 %v720, %v746
      %v759 = vmul.f32 %v721, %v746
      %v760 = vmul.f32 %v722, %v746
      %v761 = vmul.f32 %v723, %v746
      %v762 = vmul.f32 %v724, %v746
      %v763 = vmul.f32 %v725, %v746
      %v764 = vmul.f32 %v726, %v746
      %v765 = vmul.f32 %v727, %v746
      %v766 = vmul.f32 %v728, %v746
      %v767 = vmul.f32 %v729, %v746
      %v768 = vmul.f32 %v730, %v746
      %v769 = vmul.f32 %v731, %v746
      %v770 = vmul.f32 %v732, %v746
      %v771 = vmul.f32 %v733, %v746
      %v772 = vmul.f32 %v734, %v746
      %v773 = vmul.f32 %v735, %v746
      %v774 = vmul.f32 %v736, %v746
      %v775 = vmul.f32 %v737, %v746
      %v776 = vmul.f32 %v738, %v746
      %v777 = vmul.f32 %v739, %v746
      %v778 = vmul.f32 %v740, %v746
      %v779 = vmul.f32 %v741, %v746
      %v781 = vlaneseq
      %v782 = vshrl.u32 %v781, 7
      %v783 = vsub.s32 0, %v782
      %v784 = vrot.slane %v709, %v783
      %v786 = vadd.f32 %v748, %v784
      %v787 = vadd.f32 %v749, %v784
      %v788 = vadd.f32 %v750, %v784
      %v789 = vadd.f32 %v751, %v784
      %v790 = vadd.f32 %v752, %v784
      %v791 = vadd.f32 %v753, %v784
      %v792 = vadd.f32 %v754, %v784
      %v793 = vadd.f32 %v755, %v784
      %v794 = vadd.f32 %v756, %v784
      %v795 = vadd.f32 %v757, %v784
      %v796 = vadd.f32 %v758, %v784
      %v797 = vadd.f32 %v759, %v784
      %v798 = vadd.f32 %v760, %v784
      %v799 = vadd.f32 %v761, %v784
      %v800 = vadd.f32 %v762, %v784
      %v801 = vadd.f32 %v763, %v784
      %v802 = vadd.f32 %v764, %v784
      %v803 = vadd.f32 %v765, %v784
      %v804 = vadd.f32 %v766, %v784
      %v805 = vadd.f32 %v767, %v784
      %v806 = vadd.f32 %v768, %v784
      %v807 = vadd.f32 %v769, %v784
      %v808 = vadd.f32 %v770, %v784
      %v809 = vadd.f32 %v771, %v784
      %v810 = vadd.f32 %v772, %v784
      %v811 = vadd.f32 %v773, %v784
      %v812 = vadd.f32 %v774, %v784
      %v813 = vadd.f32 %v775, %v784
      %v814 = vadd.f32 %v776, %v784
      %v815 = vadd.f32 %v777, %v784
      %v816 = vadd.f32 %v778, %v784
      %v817 = vadd.f32 %v779, %v784
      %v818 = vld [vmem:[%s5] sm:$0xff]
      %v819 = vld [vmem:[%s5 + $0x8] sm:$0xff]
      %v820 = vld [vmem:[%s5 + $0x10] sm:$0xff]
      %v821 = vld [vmem:[%s5 + $0x18] sm:$0xff]
      %v822 = vld [vmem:[%s338 + $0x1] sm:$0xff]
      %v823 = vld [vmem:[%s338 + $0x9] sm:$0xff]
      %v824 = vld [vmem:[%s338 + $0x19] sm:$0xff]
      %v825 = vld [vmem:[%s338 + $0x21] sm:$0xff]
      %v826 = vld [vmem:[%s338 + $0x31] sm:$0xff]
      %v827 = vld [vmem:[%s338 + $0x39] sm:$0xff]
      %v828 = vld [vmem:[%s338 + $0x49] sm:$0xff]
      %v829 = vld [vmem:[%s338 + $0x51] sm:$0xff]
      %v830 = vld [vmem:[%s338 + $0x61] sm:$0xff]
      %v831 = vld [vmem:[%s338 + $0x69] sm:$0xff]
      %v832 = vld [vmem:[%s338 + $0x79] sm:$0xff]
      %v833 = vld [vmem:[%s338 + $0x81] sm:$0xff]
      %v834 = vld [vmem:[%s338 + $0x91] sm:$0xff]
      %v835 = vld [vmem:[%s338 + $0x99] sm:$0xff]
      %v836 = vld [vmem:[%s338 + $0xa9] sm:$0xff]
      %v837 = vld [vmem:[%s338 + $0xb1] sm:$0xff]
      %v838 = vld [vmem:[%s338 + $0xc1] sm:$0xff]
      %v839 = vld [vmem:[%s338 + $0xc9] sm:$0xff]
      %v840 = vld [vmem:[%s338 + $0xd9] sm:$0xff]
      %v841 = vld [vmem:[%s338 + $0xe1] sm:$0xff]
      %v842 = vld [vmem:[%s338 + $0xf1] sm:$0xff]
      %v843 = vld [vmem:[%s338 + $0xf9] sm:$0xff]
      %v844 = vld [vmem:[%s338 + $0x109] sm:$0xff]
      %v845 = vld [vmem:[%s338 + $0x111] sm:$0xff]
      %v846 = vld [vmem:[%s338 + $0x121] sm:$0xff]
      %v847 = vld [vmem:[%s338 + $0x129] sm:$0xff]
      %v848 = vld [vmem:[%s338 + $0x139] sm:$0xff]
      %v849 = vld [vmem:[%s338 + $0x141] sm:$0xff]
      %v850 = vld [vmem:[%s338 + $0x151] sm:$0xff]
      %v851 = vld [vmem:[%s338 + $0x159] sm:$0xff]
      %v852 = vld [vmem:[%s338 + $0x169] sm:$0xff]
      %v853 = vld [vmem:[%s338 + $0x171] sm:$0xff]
      %v854 = vmul.f32 %v822, %v746
      %v855 = vmul.f32 %v823, %v746
      %v856 = vmul.f32 %v824, %v746
      %v857 = vmul.f32 %v825, %v746
      %v858 = vmul.f32 %v826, %v746
      %v859 = vmul.f32 %v827, %v746
      %v860 = vmul.f32 %v828, %v746
      %v861 = vmul.f32 %v829, %v746
      %v862 = vmul.f32 %v830, %v746
      %v863 = vmul.f32 %v831, %v746
      %v864 = vmul.f32 %v832, %v746
      %v865 = vmul.f32 %v833, %v746
      %v866 = vmul.f32 %v834, %v746
      %v867 = vmul.f32 %v835, %v746
      %v868 = vmul.f32 %v836, %v746
      %v869 = vmul.f32 %v837, %v746
      %v870 = vmul.f32 %v838, %v746
      %v871 = vmul.f32 %v839, %v746
      %v872 = vmul.f32 %v840, %v746
      %v873 = vmul.f32 %v841, %v746
      %v874 = vmul.f32 %v842, %v746
      %v875 = vmul.f32 %v843, %v746
      %v876 = vmul.f32 %v844, %v746
      %v877 = vmul.f32 %v845, %v746
      %v878 = vmul.f32 %v846, %v746
      %v879 = vmul.f32 %v847, %v746
      %v880 = vmul.f32 %v848, %v746
      %v881 = vmul.f32 %v849, %v746
      %v882 = vmul.f32 %v850, %v746
      %v883 = vmul.f32 %v851, %v746
      %v884 = vmul.f32 %v852, %v746
      %v885 = vmul.f32 %v853, %v746
      %v886 = vadd.f32 %v854, %v784
      %v887 = vadd.f32 %v855, %v784
      %v888 = vadd.f32 %v856, %v784
      %v889 = vadd.f32 %v857, %v784
      %v890 = vadd.f32 %v858, %v784
      %v891 = vadd.f32 %v859, %v784
      %v892 = vadd.f32 %v860, %v784
      %v893 = vadd.f32 %v861, %v784
      %v894 = vadd.f32 %v862, %v784
      %v895 = vadd.f32 %v863, %v784
      %v896 = vadd.f32 %v864, %v784
      %v897 = vadd.f32 %v865, %v784
      %v898 = vadd.f32 %v866, %v784
      %v899 = vadd.f32 %v867, %v784
      %v900 = vadd.f32 %v868, %v784
      %v901 = vadd.f32 %v869, %v784
      %v902 = vadd.f32 %v870, %v784
      %v903 = vadd.f32 %v871, %v784
      %v904 = vadd.f32 %v872, %v784
      %v905 = vadd.f32 %v873, %v784
      %v906 = vadd.f32 %v874, %v784
      %v907 = vadd.f32 %v875, %v784
      %v908 = vadd.f32 %v876, %v784
      %v909 = vadd.f32 %v877, %v784
      %v910 = vadd.f32 %v878, %v784
      %v911 = vadd.f32 %v879, %v784
      %v912 = vadd.f32 %v880, %v784
      %v913 = vadd.f32 %v881, %v784
      %v914 = vadd.f32 %v882, %v784
      %v915 = vadd.f32 %v883, %v784
      %v916 = vadd.f32 %v884, %v784
      %v917 = vadd.f32 %v885, %v784
      %s918 = scalar_lea.vmem %s5, 32
      %v919 = vld [vmem:[%s918] sm:$0xff]
      %v920 = vld [vmem:[%s918 + $0x8] sm:$0xff]
      %v921 = vld [vmem:[%s918 + $0x10] sm:$0xff]
      %v922 = vld [vmem:[%s918 + $0x18] sm:$0xff]
      %v924 = vsel %vm380, %v886, 0
      %v927 = vsel %vm380, %v887, 0
      %v930 = vsel %vm380, %v888, 0
      %v933 = vsel %vm380, %v889, 0
      %v936 = vsel %vm380, %v890, 0
      %v939 = vsel %vm380, %v891, 0
      %v942 = vsel %vm380, %v892, 0
      %v945 = vsel %vm380, %v893, 0
      %v948 = vsel %vm380, %v894, 0
      %v951 = vsel %vm380, %v895, 0
      %v954 = vsel %vm380, %v896, 0
      %v957 = vsel %vm380, %v897, 0
      %v960 = vsel %vm380, %v898, 0
      %v963 = vsel %vm380, %v899, 0
      %v966 = vsel %vm380, %v900, 0
      %v969 = vsel %vm380, %v901, 0
      %v972 = vsel %vm380, %v902, 0
      %v975 = vsel %vm380, %v903, 0
      %v978 = vsel %vm380, %v904, 0
      %v981 = vsel %vm380, %v905, 0
      %v984 = vsel %vm380, %v906, 0
      %v987 = vsel %vm380, %v907, 0
      %v990 = vsel %vm380, %v908, 0
      %v993 = vsel %vm380, %v909, 0
      %v996 = vsel %vm380, %v910, 0
      %v999 = vsel %vm380, %v911, 0
      %v1002 = vsel %vm380, %v912, 0
      %v1005 = vsel %vm380, %v913, 0
      %v1008 = vsel %vm380, %v914, 0
      %v1011 = vsel %vm380, %v915, 0
      %v1014 = vsel %vm380, %v916, 0
      %v1017 = vsel %vm380, %v917, 0
      %1019 = vmatprep.subr.mxu0 0.0
      %1020 = vmatpush1.msra.mxu0 %v919
      %1021 = vmatprep.subr.mxu0 0.0
      %1022 = vmatpush1.msra.mxu0 %v920
      %1023 = vmatprep.subr.mxu0 0.0
      %1024 = vmatpush1.msra.mxu0 %v921
      %1025 = vmatprep.subr.mxu0 0.0
      %1026 = vmatpush1.msra.mxu0 %v922
      %1027 = vmatprep.subr.mxu0 0.0
      %1028 = vmatpush1.msra.mxu0 0.0
      %1029 = vmatprep.subr.mxu0 0.0
      %1030 = vmatpush1.msra.mxu0 0.0
      %1031 = vmatprep.subr.mxu0 0.0
      %1032 = vmatpush1.msra.mxu0 0.0
      %1033 = vmatprep.subr.mxu0 0.0
      %1034 = vmatpush1.msra.mxu0 0.0
      %1035 = vmatprep.subr.mxu0 0.0
      %1036 = vmatpush1.msra.mxu0 0.0
      %1037 = vmatprep.subr.mxu0 0.0
      %1038 = vmatpush1.msra.mxu0 0.0
      %1039 = vmatprep.subr.mxu0 0.0
      %1040 = vmatpush1.msra.mxu0 0.0
      %1041 = vmatprep.subr.mxu0 0.0
      %1042 = vmatpush1.msra.mxu0 0.0
      %1043 = vmatprep.subr.mxu0 0.0
      %1044 = vmatpush1.msra.mxu0 0.0
      %1045 = vmatprep.subr.mxu0 0.0
      %1046 = vmatpush1.msra.mxu0 0.0
      %1047 = vmatprep.subr.mxu0 0.0
      %1048 = vmatpush1.msra.mxu0 0.0
      %1049 = vmatprep.subr.mxu0 0.0
      %1050 = vmatpush1.msra.mxu0 0.0
      %1051 = vmatprep.subr.mxu0 0.0
      %1052 = vmatpush1.msra.mxu0 0.0
      %1053 = vmatprep.subr.mxu0 0.0
      %1054 = vmatpush1.msra.mxu0 0.0
      %1055 = vmatprep.subr.mxu0 0.0
      %1056 = vmatpush1.msra.mxu0 0.0
      %1057 = vmatprep.subr.mxu0 0.0
      %1058 = vmatpush1.msra.mxu0 0.0
      %1059 = vmatprep.subr.mxu0 0.0
      %1060 = vmatpush1.msra.mxu0 0.0
      %1061 = vmatprep.subr.mxu0 0.0
      %1062 = vmatpush1.msra.mxu0 0.0
      %1063 = vmatprep.subr.mxu0 0.0
      %1064 = vmatpush1.msra.mxu0 0.0
      %1065 = vmatprep.subr.mxu0 0.0
      %1066 = vmatpush1.msra.mxu0 0.0
      %1067 = vmatprep.subr.mxu0 0.0
      %1068 = vmatpush1.msra.mxu0 0.0
      %1069 = vmatprep.subr.mxu0 0.0
      %1070 = vmatpush1.msra.mxu0 0.0
      %1071 = vmatprep.subr.mxu0 0.0
      %1072 = vmatpush1.msra.mxu0 0.0
      %1073 = vmatprep.subr.mxu0 0.0
      %1074 = vmatpush1.msra.mxu0 0.0
      %1075 = vmatprep.subr.mxu0 0.0
      %1076 = vmatpush1.msra.mxu0 0.0
      %1077 = vmatprep.subr.mxu0 0.0
      %1078 = vmatpush1.msra.mxu0 0.0
      %1079 = vmatprep.subr.mxu0 0.0
      %1080 = vmatpush1.msra.mxu0 0.0
      %1081 = vmatprep.subr.mxu0 0.0
      %1082 = vmatpush1.msra.mxu0 0.0
      %1083 = vmatprep.mubr.f32.mxu0 0.0
      %1084 = vmatmul.mubr.f32.gmra.mrb[0].mxu0 %v924
      %v1085 = vpop.f32.mrb[0].mxu0
      %v1086 = vadd.f32 0.0, %v1085
      %v1087 = vpop.f32.mrb[0].mxu0
      %1088 = vmatprep.mubr.f32.mxu0 0.0
      %1089 = vmatmul.mubr.f32.gmra.mrb[0].mxu0 %v927
      %v1090 = vpop.f32.mrb[0].mxu0
      %v1091 = vadd.f32 0.0, %v1090
      %v1092 = vpop.f32.mrb[0].mxu0
      %1093 = vmatprep.mubr.f32.mxu0 0.0
      %1094 = vmatmul.mubr.f32.gmra.mrb[0].mxu0 %v930
      %v1095 = vpop.f32.mrb[0].mxu0
      %v1096 = vadd.f32 0.0, %v1095
      %v1097 = vpop.f32.mrb[0].mxu0
      %1098 = vmatprep.mubr.f32.mxu0 0.0
      %1099 = vmatmul.mubr.f32.gmra.mrb[0].mxu0 %v933
      %v1100 = vpop.f32.mrb[0].mxu0
      %v1101 = vadd.f32 0.0, %v1100
      %v1102 = vpop.f32.mrb[0].mxu0
      %1103 = vmatprep.mubr.f32.mxu0 0.0
      %1104 = vmatmul.mubr.f32.gmra.mrb[0].mxu0 %v936
      %v1105 = vpop.f32.mrb[0].mxu0
      %v1106 = vadd.f32 0.0, %v1105
      %v1107 = vpop.f32.mrb[0].mxu0
      %1108 = vmatprep.mubr.f32.mxu0 0.0
      %1109 = vmatmul.mubr.f32.gmra.mrb[0].mxu0 %v939
      %v1110 = vpop.f32.mrb[0].mxu0
      %v1111 = vadd.f32 0.0, %v1110
      %v1112 = vpop.f32.mrb[0].mxu0
      %1113 = vmatprep.mubr.f32.mxu0 0.0
      %1114 = vmatmul.mubr.f32.gmra.mrb[0].mxu0 %v942
      %v1115 = vpop.f32.mrb[0].mxu0
      %v1116 = vadd.f32 0.0, %v1115
      %v1117 = vpop.f32.mrb[0].mxu0
      %1118 = vmatprep.mubr.f32.mxu0 0.0
      %1119 = vmatmul.mubr.f32.gmra.mrb[0].mxu0 %v945
      %v1120 = vpop.f32.mrb[0].mxu0
      %v1121 = vadd.f32 0.0, %v1120
      %v1122 = vpop.f32.mrb[0].mxu0
      %1123 = vmatprep.mubr.f32.mxu0 0.0
      %1124 = vmatmul.mubr.f32.gmra.mrb[0].mxu0 %v948
      %v1125 = vpop.f32.mrb[0].mxu0
      %v1126 = vadd.f32 0.0, %v1125
      %v1127 = vpop.f32.mrb[0].mxu0
      %1128 = vmatprep.mubr.f32.mxu0 0.0
      %1129 = vmatmul.mubr.f32.gmra.mrb[0].mxu0 %v951
      %v1130 = vpop.f32.mrb[0].mxu0
      %v1131 = vadd.f32 0.0, %v1130
      %v1132 = vpop.f32.mrb[0].mxu0
      %1133 = vmatprep.mubr.f32.mxu0 0.0
      %1134 = vmatmul.mubr.f32.gmra.mrb[0].mxu0 %v954
      %v1135 = vpop.f32.mrb[0].mxu0
      %v1136 = vadd.f32 0.0, %v1135
      %v1137 = vpop.f32.mrb[0].mxu0
      %1138 = vmatprep.mubr.f32.mxu0 0.0
      %1139 = vmatmul.mubr.f32.gmra.mrb[0].mxu0 %v957
      %v1140 = vpop.f32.mrb[0].mxu0
      %v1141 = vadd.f32 0.0, %v1140
      %v1142 = vpop.f32.mrb[0].mxu0
      %1143 = vmatprep.mubr.f32.mxu0 0.0
      %1144 = vmatmul.mubr.f32.gmra.mrb[0].mxu0 %v960
      %v1145 = vpop.f32.mrb[0].mxu0
      %v1146 = vadd.f32 0.0, %v1145
      %v1147 = vpop.f32.mrb[0].mxu0
      %1148 = vmatprep.mubr.f32.mxu0 0.0
      %1149 = vmatmul.mubr.f32.gmra.mrb[0].mxu0 %v963
      %v1150 = vpop.f32.mrb[0].mxu0
      %v1151 = vadd.f32 0.0, %v1150
      %v1152 = vpop.f32.mrb[0].mxu0
      %1153 = vmatprep.mubr.f32.mxu0 0.0
      %1154 = vmatmul.mubr.f32.gmra.mrb[0].mxu0 %v966
      %v1155 = vpop.f32.mrb[0].mxu0
      %v1156 = vadd.f32 0.0, %v1155
      %v1157 = vpop.f32.mrb[0].mxu0
      %1158 = vmatprep.mubr.f32.mxu0 0.0
      %1159 = vmatmul.mubr.f32.gmra.mrb[0].mxu0 %v969
      %v1160 = vpop.f32.mrb[0].mxu0
      %v1161 = vadd.f32 0.0, %v1160
      %v1162 = vpop.f32.mrb[0].mxu0
      %1163 = vmatprep.mubr.f32.mxu0 0.0
      %1164 = vmatmul.mubr.f32.gmra.mrb[0].mxu0 %v972
      %v1165 = vpop.f32.mrb[0].mxu0
      %v1166 = vadd.f32 0.0, %v1165
      %v1167 = vpop.f32.mrb[0].mxu0
      %1168 = vmatprep.mubr.f32.mxu0 0.0
      %1169 = vmatmul.mubr.f32.gmra.mrb[0].mxu0 %v975
      %v1170 = vpop.f32.mrb[0].mxu0
      %v1171 = vadd.f32 0.0, %v1170
      %v1172 = vpop.f32.mrb[0].mxu0
      %1173 = vmatprep.mubr.f32.mxu0 0.0
      %1174 = vmatmul.mubr.f32.gmra.mrb[0].mxu0 %v978
      %v1175 = vpop.f32.mrb[0].mxu0
      %v1176 = vadd.f32 0.0, %v1175
      %v1177 = vpop.f32.mrb[0].mxu0
      %1178 = vmatprep.mubr.f32.mxu0 0.0
      %1179 = vmatmul.mubr.f32.gmra.mrb[0].mxu0 %v981
      %v1180 = vpop.f32.mrb[0].mxu0
      %v1181 = vadd.f32 0.0, %v1180
      %v1182 = vpop.f32.mrb[0].mxu0
      %1183 = vmatprep.mubr.f32.mxu0 0.0
      %1184 = vmatmul.mubr.f32.gmra.mrb[0].mxu0 %v984
      %v1185 = vpop.f32.mrb[0].mxu0
      %v1186 = vadd.f32 0.0, %v1185
      %v1187 = vpop.f32.mrb[0].mxu0
      %1188 = vmatprep.mubr.f32.mxu0 0.0
      %1189 = vmatmul.mubr.f32.gmra.mrb[0].mxu0 %v987
      %v1190 = vpop.f32.mrb[0].mxu0
      %v1191 = vadd.f32 0.0, %v1190
      %v1192 = vpop.f32.mrb[0].mxu0
      %1193 = vmatprep.mubr.f32.mxu0 0.0
      %1194 = vmatmul.mubr.f32.gmra.mrb[0].mxu0 %v990
      %v1195 = vpop.f32.mrb[0].mxu0
      %v1196 = vadd.f32 0.0, %v1195
      %v1197 = vpop.f32.mrb[0].mxu0
      %1198 = vmatprep.mubr.f32.mxu0 0.0
      %1199 = vmatmul.mubr.f32.gmra.mrb[0].mxu0 %v993
      %v1200 = vpop.f32.mrb[0].mxu0
      %v1201 = vadd.f32 0.0, %v1200
      %v1202 = vpop.f32.mrb[0].mxu0
      %1203 = vmatprep.mubr.f32.mxu0 0.0
      %1204 = vmatmul.mubr.f32.gmra.mrb[0].mxu0 %v996
      %v1205 = vpop.f32.mrb[0].mxu0
      %v1206 = vadd.f32 0.0, %v1205
      %v1207 = vpop.f32.mrb[0].mxu0
      %1208 = vmatprep.mubr.f32.mxu0 0.0
      %1209 = vmatmul.mubr.f32.gmra.mrb[0].mxu0 %v999
      %v1210 = vpop.f32.mrb[0].mxu0
      %v1211 = vadd.f32 0.0, %v1210
      %v1212 = vpop.f32.mrb[0].mxu0
      %1213 = vmatprep.mubr.f32.mxu0 0.0
      %1214 = vmatmul.mubr.f32.gmra.mrb[0].mxu0 %v1002
      %v1215 = vpop.f32.mrb[0].mxu0
      %v1216 = vadd.f32 0.0, %v1215
      %v1217 = vpop.f32.mrb[0].mxu0
      %1218 = vmatprep.mubr.f32.mxu0 0.0
      %1219 = vmatmul.mubr.f32.gmra.mrb[0].mxu0 %v1005
      %v1220 = vpop.f32.mrb[0].mxu0
      %v1221 = vadd.f32 0.0, %v1220
      %v1222 = vpop.f32.mrb[0].mxu0
      %1223 = vmatprep.mubr.f32.mxu0 0.0
      %1224 = vmatmul.mubr.f32.gmra.mrb[0].mxu0 %v1008
      %v1225 = vpop.f32.mrb[0].mxu0
      %v1226 = vadd.f32 0.0, %v1225
      %v1227 = vpop.f32.mrb[0].mxu0
      %1228 = vmatprep.mubr.f32.mxu0 0.0
      %1229 = vmatmul.mubr.f32.gmra.mrb[0].mxu0 %v1011
      %v1230 = vpop.f32.mrb[0].mxu0
      %v1231 = vadd.f32 0.0, %v1230
      %v1232 = vpop.f32.mrb[0].mxu0
      %1233 = vmatprep.mubr.f32.mxu0 0.0
      %1234 = vmatmul.mubr.f32.gmra.mrb[0].mxu0 %v1014
      %v1235 = vpop.f32.mrb[0].mxu0
      %v1236 = vadd.f32 0.0, %v1235
      %v1237 = vpop.f32.mrb[0].mxu0
      %1238 = vmatprep.mubr.f32.mxu0 0.0
      %1239 = vmatmul.mubr.f32.gmra.mrb[0].mxu0 %v1017
      %v1240 = vpop.f32.mrb[0].mxu0
      %v1241 = vadd.f32 0.0, %v1240
      %v1242 = vpop.f32.mrb[0].mxu0
      %1243 = vdwg.mxu0
      %v1245 = vsel %vm380, %v786, 0
      %v1248 = vsel %vm380, %v787, 0
      %v1251 = vsel %vm380, %v788, 0
      %v1254 = vsel %vm380, %v789, 0
      %v1257 = vsel %vm380, %v790, 0
      %v1260 = vsel %vm380, %v791, 0
      %v1263 = vsel %vm380, %v792, 0
      %v1266 = vsel %vm380, %v793, 0
      %v1269 = vsel %vm380, %v794, 0
      %v1272 = vsel %vm380, %v795, 0
      %v1275 = vsel %vm380, %v796, 0
      %v1278 = vsel %vm380, %v797, 0
      %v1281 = vsel %vm380, %v798, 0
      %v1284 = vsel %vm380, %v799, 0
      %v1287 = vsel %vm380, %v800, 0
      %v1290 = vsel %vm380, %v801, 0
      %v1293 = vsel %vm380, %v802, 0
      %v1296 = vsel %vm380, %v803, 0
      %v1299 = vsel %vm380, %v804, 0
      %v1302 = vsel %vm380, %v805, 0
      %v1305 = vsel %vm380, %v806, 0
      %v1308 = vsel %vm380, %v807, 0
      %v1311 = vsel %vm380, %v808, 0
      %v1314 = vsel %vm380, %v809, 0
      %v1317 = vsel %vm380, %v810, 0
      %v1320 = vsel %vm380, %v811, 0
      %v1323 = vsel %vm380, %v812, 0
      %v1326 = vsel %vm380, %v813, 0
      %v1329 = vsel %vm380, %v814, 0
      %v1332 = vsel %vm380, %v815, 0
      %v1335 = vsel %vm380, %v816, 0
      %v1338 = vsel %vm380, %v817, 0
      %1340 = vmatprep.subr.mxu0 0.0
      %1341 = vmatpush1.msra.mxu0 %v818
      %1342 = vmatprep.subr.mxu0 0.0
      %1343 = vmatpush1.msra.mxu0 %v819
      %1344 = vmatprep.subr.mxu0 0.0
      %1345 = vmatpush1.msra.mxu0 %v820
      %1346 = vmatprep.subr.mxu0 0.0
      %1347 = vmatpush1.msra.mxu0 %v821
      %1348 = vmatprep.subr.mxu0 0.0
      %1349 = vmatpush1.msra.mxu0 0.0
      %1350 = vmatprep.subr.mxu0 0.0
      %1351 = vmatpush1.msra.mxu0 0.0
      %1352 = vmatprep.subr.mxu0 0.0
      %1353 = vmatpush1.msra.mxu0 0.0
      %1354 = vmatprep.subr.mxu0 0.0
      %1355 = vmatpush1.msra.mxu0 0.0
      %1356 = vmatprep.subr.mxu0 0.0
      %1357 = vmatpush1.msra.mxu0 0.0
      %1358 = vmatprep.subr.mxu0 0.0
      %1359 = vmatpush1.msra.mxu0 0.0
      %1360 = vmatprep.subr.mxu0 0.0
      %1361 = vmatpush1.msra.mxu0 0.0
      %1362 = vmatprep.subr.mxu0 0.0
      %1363 = vmatpush1.msra.mxu0 0.0
      %1364 = vmatprep.subr.mxu0 0.0
      %1365 = vmatpush1.msra.mxu0 0.0
      %1366 = vmatprep.subr.mxu0 0.0
      %1367 = vmatpush1.msra.mxu0 0.0
      %1368 = vmatprep.subr.mxu0 0.0
      %1369 = vmatpush1.msra.mxu0 0.0
      %1370 = vmatprep.subr.mxu0 0.0
      %1371 = vmatpush1.msra.mxu0 0.0
      %1372 = vmatprep.subr.mxu0 0.0
      %1373 = vmatpush1.msra.mxu0 0.0
      %1374 = vmatprep.subr.mxu0 0.0
      %1375 = vmatpush1.msra.mxu0 0.0
      %1376 = vmatprep.subr.mxu0 0.0
      %1377 = vmatpush1.msra.mxu0 0.0
      %1378 = vmatprep.subr.mxu0 0.0
      %1379 = vmatpush1.msra.mxu0 0.0
      %1380 = vmatprep.subr.mxu0 0.0
      %1381 = vmatpush1.msra.mxu0 0.0
      %1382 = vmatprep.subr.mxu0 0.0
      %1383 = vmatpush1.msra.mxu0 0.0
      %1384 = vmatprep.subr.mxu0 0.0
      %1385 = vmatpush1.msra.mxu0 0.0
      %1386 = vmatprep.subr.mxu0 0.0
      %1387 = vmatpush1.msra.mxu0 0.0
      %1388 = vmatprep.subr.mxu0 0.0
      %1389 = vmatpush1.msra.mxu0 0.0
      %1390 = vmatprep.subr.mxu0 0.0
      %1391 = vmatpush1.msra.mxu0 0.0
      %1392 = vmatprep.subr.mxu0 0.0
      %1393 = vmatpush1.msra.mxu0 0.0
      %1394 = vmatprep.subr.mxu0 0.0
      %1395 = vmatpush1.msra.mxu0 0.0
      %1396 = vmatprep.subr.mxu0 0.0
      %1397 = vmatpush1.msra.mxu0 0.0
      %1398 = vmatprep.subr.mxu0 0.0
      %1399 = vmatpush1.msra.mxu0 0.0
      %1400 = vmatprep.subr.mxu0 0.0
      %1401 = vmatpush1.msra.mxu0 0.0
      %1402 = vmatprep.subr.mxu0 0.0
      %1403 = vmatpush1.msra.mxu0 0.0
      %1404 = vmatprep.mubr.f32.mxu0 0.0
      %1405 = vmatmul.mubr.f32.gmra.mrb[0].mxu0 %v1245
      %v1406 = vpop.f32.mrb[0].mxu0
      %v1407 = vadd.f32 %v1086, %v1406
      %v1408 = vpop.f32.mrb[0].mxu0
      %1409 = vmatprep.mubr.f32.mxu0 0.0
      %1410 = vmatmul.mubr.f32.gmra.mrb[0].mxu0 %v1248
      %v1411 = vpop.f32.mrb[0].mxu0
      %v1412 = vadd.f32 %v1091, %v1411
      %v1413 = vpop.f32.mrb[0].mxu0
      %1414 = vmatprep.mubr.f32.mxu0 0.0
      %1415 = vmatmul.mubr.f32.gmra.mrb[0].mxu0 %v1251
      %v1416 = vpop.f32.mrb[0].mxu0
      %v1417 = vadd.f32 %v1096, %v1416
      %v1418 = vpop.f32.mrb[0].mxu0
      %1419 = vmatprep.mubr.f32.mxu0 0.0
      %1420 = vmatmul.mubr.f32.gmra.mrb[0].mxu0 %v1254
      %v1421 = vpop.f32.mrb[0].mxu0
      %v1422 = vadd.f32 %v1101, %v1421
      %v1423 = vpop.f32.mrb[0].mxu0
      %1424 = vmatprep.mubr.f32.mxu0 0.0
      %1425 = vmatmul.mubr.f32.gmra.mrb[0].mxu0 %v1257
      %v1426 = vpop.f32.mrb[0].mxu0
      %v1427 = vadd.f32 %v1106, %v1426
      %v1428 = vpop.f32.mrb[0].mxu0
      %1429 = vmatprep.mubr.f32.mxu0 0.0
      %1430 = vmatmul.mubr.f32.gmra.mrb[0].mxu0 %v1260
      %v1431 = vpop.f32.mrb[0].mxu0
      %v1432 = vadd.f32 %v1111, %v1431
      %v1433 = vpop.f32.mrb[0].mxu0
      %1434 = vmatprep.mubr.f32.mxu0 0.0
      %1435 = vmatmul.mubr.f32.gmra.mrb[0].mxu0 %v1263
      %v1436 = vpop.f32.mrb[0].mxu0
      %v1437 = vadd.f32 %v1116, %v1436
      %v1438 = vpop.f32.mrb[0].mxu0
      %1439 = vmatprep.mubr.f32.mxu0 0.0
      %1440 = vmatmul.mubr.f32.gmra.mrb[0].mxu0 %v1266
      %v1441 = vpop.f32.mrb[0].mxu0
      %v1442 = vadd.f32 %v1121, %v1441
      %v1443 = vpop.f32.mrb[0].mxu0
      %1444 = vmatprep.mubr.f32.mxu0 0.0
      %1445 = vmatmul.mubr.f32.gmra.mrb[0].mxu0 %v1269
      %v1446 = vpop.f32.mrb[0].mxu0
      %v1447 = vadd.f32 %v1126, %v1446
      %v1448 = vpop.f32.mrb[0].mxu0
      %1449 = vmatprep.mubr.f32.mxu0 0.0
      %1450 = vmatmul.mubr.f32.gmra.mrb[0].mxu0 %v1272
      %v1451 = vpop.f32.mrb[0].mxu0
      %v1452 = vadd.f32 %v1131, %v1451
      %v1453 = vpop.f32.mrb[0].mxu0
      %1454 = vmatprep.mubr.f32.mxu0 0.0
      %1455 = vmatmul.mubr.f32.gmra.mrb[0].mxu0 %v1275
      %v1456 = vpop.f32.mrb[0].mxu0
      %v1457 = vadd.f32 %v1136, %v1456
      %v1458 = vpop.f32.mrb[0].mxu0
      %1459 = vmatprep.mubr.f32.mxu0 0.0
      %1460 = vmatmul.mubr.f32.gmra.mrb[0].mxu0 %v1278
      %v1461 = vpop.f32.mrb[0].mxu0
      %v1462 = vadd.f32 %v1141, %v1461
      %v1463 = vpop.f32.mrb[0].mxu0
      %1464 = vmatprep.mubr.f32.mxu0 0.0
      %1465 = vmatmul.mubr.f32.gmra.mrb[0].mxu0 %v1281
      %v1466 = vpop.f32.mrb[0].mxu0
      %v1467 = vadd.f32 %v1146, %v1466
      %v1468 = vpop.f32.mrb[0].mxu0
      %1469 = vmatprep.mubr.f32.mxu0 0.0
      %1470 = vmatmul.mubr.f32.gmra.mrb[0].mxu0 %v1284
      %v1471 = vpop.f32.mrb[0].mxu0
      %v1472 = vadd.f32 %v1151, %v1471
      %v1473 = vpop.f32.mrb[0].mxu0
      %1474 = vmatprep.mubr.f32.mxu0 0.0
      %1475 = vmatmul.mubr.f32.gmra.mrb[0].mxu0 %v1287
      %v1476 = vpop.f32.mrb[0].mxu0
      %v1477 = vadd.f32 %v1156, %v1476
      %v1478 = vpop.f32.mrb[0].mxu0
      %1479 = vmatprep.mubr.f32.mxu0 0.0
      %1480 = vmatmul.mubr.f32.gmra.mrb[0].mxu0 %v1290
      %v1481 = vpop.f32.mrb[0].mxu0
      %v1482 = vadd.f32 %v1161, %v1481
      %v1483 = vpop.f32.mrb[0].mxu0
      %1484 = vmatprep.mubr.f32.mxu0 0.0
      %1485 = vmatmul.mubr.f32.gmra.mrb[0].mxu0 %v1293
      %v1486 = vpop.f32.mrb[0].mxu0
      %v1487 = vadd.f32 %v1166, %v1486
      %v1488 = vpop.f32.mrb[0].mxu0
      %1489 = vmatprep.mubr.f32.mxu0 0.0
      %1490 = vmatmul.mubr.f32.gmra.mrb[0].mxu0 %v1296
      %v1491 = vpop.f32.mrb[0].mxu0
      %v1492 = vadd.f32 %v1171, %v1491
      %v1493 = vpop.f32.mrb[0].mxu0
      %1494 = vmatprep.mubr.f32.mxu0 0.0
      %1495 = vmatmul.mubr.f32.gmra.mrb[0].mxu0 %v1299
      %v1496 = vpop.f32.mrb[0].mxu0
      %v1497 = vadd.f32 %v1176, %v1496
      %v1498 = vpop.f32.mrb[0].mxu0
      %1499 = vmatprep.mubr.f32.mxu0 0.0
      %1500 = vmatmul.mubr.f32.gmra.mrb[0].mxu0 %v1302
      %v1501 = vpop.f32.mrb[0].mxu0
      %v1502 = vadd.f32 %v1181, %v1501
      %v1503 = vpop.f32.mrb[0].mxu0
      %1504 = vmatprep.mubr.f32.mxu0 0.0
      %1505 = vmatmul.mubr.f32.gmra.mrb[0].mxu0 %v1305
      %v1506 = vpop.f32.mrb[0].mxu0
      %v1507 = vadd.f32 %v1186, %v1506
      %v1508 = vpop.f32.mrb[0].mxu0
      %1509 = vmatprep.mubr.f32.mxu0 0.0
      %1510 = vmatmul.mubr.f32.gmra.mrb[0].mxu0 %v1308
      %v1511 = vpop.f32.mrb[0].mxu0
      %v1512 = vadd.f32 %v1191, %v1511
      %v1513 = vpop.f32.mrb[0].mxu0
      %1514 = vmatprep.mubr.f32.mxu0 0.0
      %1515 = vmatmul.mubr.f32.gmra.mrb[0].mxu0 %v1311
      %v1516 = vpop.f32.mrb[0].mxu0
      %v1517 = vadd.f32 %v1196, %v1516
      %v1518 = vpop.f32.mrb[0].mxu0
      %1519 = vmatprep.mubr.f32.mxu0 0.0
      %1520 = vmatmul.mubr.f32.gmra.mrb[0].mxu0 %v1314
      %v1521 = vpop.f32.mrb[0].mxu0
      %v1522 = vadd.f32 %v1201, %v1521
      %v1523 = vpop.f32.mrb[0].mxu0
      %1524 = vmatprep.mubr.f32.mxu0 0.0
      %1525 = vmatmul.mubr.f32.gmra.mrb[0].mxu0 %v1317
      %v1526 = vpop.f32.mrb[0].mxu0
      %v1527 = vadd.f32 %v1206, %v1526
      %v1528 = vpop.f32.mrb[0].mxu0
      %1529 = vmatprep.mubr.f32.mxu0 0.0
      %1530 = vmatmul.mubr.f32.gmra.mrb[0].mxu0 %v1320
      %v1531 = vpop.f32.mrb[0].mxu0
      %v1532 = vadd.f32 %v1211, %v1531
      %v1533 = vpop.f32.mrb[0].mxu0
      %1534 = vmatprep.mubr.f32.mxu0 0.0
      %1535 = vmatmul.mubr.f32.gmra.mrb[0].mxu0 %v1323
      %v1536 = vpop.f32.mrb[0].mxu0
      %v1537 = vadd.f32 %v1216, %v1536
      %v1538 = vpop.f32.mrb[0].mxu0
      %1539 = vmatprep.mubr.f32.mxu0 0.0
      %1540 = vmatmul.mubr.f32.gmra.mrb[0].mxu0 %v1326
      %v1541 = vpop.f32.mrb[0].mxu0
      %v1542 = vadd.f32 %v1221, %v1541
      %v1543 = vpop.f32.mrb[0].mxu0
      %1544 = vmatprep.mubr.f32.mxu0 0.0
      %1545 = vmatmul.mubr.f32.gmra.mrb[0].mxu0 %v1329
      %v1546 = vpop.f32.mrb[0].mxu0
      %v1547 = vadd.f32 %v1226, %v1546
      %v1548 = vpop.f32.mrb[0].mxu0
      %1549 = vmatprep.mubr.f32.mxu0 0.0
      %1550 = vmatmul.mubr.f32.gmra.mrb[0].mxu0 %v1332
      %v1551 = vpop.f32.mrb[0].mxu0
      %v1552 = vadd.f32 %v1231, %v1551
      %v1553 = vpop.f32.mrb[0].mxu0
      %1554 = vmatprep.mubr.f32.mxu0 0.0
      %1555 = vmatmul.mubr.f32.gmra.mrb[0].mxu0 %v1335
      %v1556 = vpop.f32.mrb[0].mxu0
      %v1557 = vadd.f32 %v1236, %v1556
      %v1558 = vpop.f32.mrb[0].mxu0
      %1559 = vmatprep.mubr.f32.mxu0 0.0
      %1560 = vmatmul.mubr.f32.gmra.mrb[0].mxu0 %v1338
      %v1561 = vpop.f32.mrb[0].mxu0
      %v1562 = vadd.f32 %v1241, %v1561
      %v1563 = vpop.f32.mrb[0].mxu0
      %1564 = vdwg.mxu0
      %v1565 = vld [vmem:[%s338 + $0x2] sm:$0xff]
      %v1566 = vld [vmem:[%s338 + $0xa] sm:$0xff]
      %v1567 = vld [vmem:[%s338 + $0x1a] sm:$0xff]
      %v1568 = vld [vmem:[%s338 + $0x22] sm:$0xff]
      %v1569 = vld [vmem:[%s338 + $0x32] sm:$0xff]
      %v1570 = vld [vmem:[%s338 + $0x3a] sm:$0xff]
      %v1571 = vld [vmem:[%s338 + $0x4a] sm:$0xff]
      %v1572 = vld [vmem:[%s338 + $0x52] sm:$0xff]
      %v1573 = vld [vmem:[%s338 + $0x62] sm:$0xff]
      %v1574 = vld [vmem:[%s338 + $0x6a] sm:$0xff]
      %v1575 = vld [vmem:[%s338 + $0x7a] sm:$0xff]
      %v1576 = vld [vmem:[%s338 + $0x82] sm:$0xff]
      %v1577 = vld [vmem:[%s338 + $0x92] sm:$0xff]
      %v1578 = vld [vmem:[%s338 + $0x9a] sm:$0xff]
      %v1579 = vld [vmem:[%s338 + $0xaa] sm:$0xff]
      %v1580 = vld [vmem:[%s338 + $0xb2] sm:$0xff]
      %v1581 = vld [vmem:[%s338 + $0xc2] sm:$0xff]
      %v1582 = vld [vmem:[%s338 + $0xca] sm:$0xff]
      %v1583 = vld [vmem:[%s338 + $0xda] sm:$0xff]
      %v1584 = vld [vmem:[%s338 + $0xe2] sm:$0xff]
      %v1585 = vld [vmem:[%s338 + $0xf2] sm:$0xff]
      %v1586 = vld [vmem:[%s338 + $0xfa] sm:$0xff]
      %v1587 = vld [vmem:[%s338 + $0x10a] sm:$0xff]
      %v1588 = vld [vmem:[%s338 + $0x112] sm:$0xff]
      %v1589 = vld [vmem:[%s338 + $0x122] sm:$0xff]
      %v1590 = vld [vmem:[%s338 + $0x12a] sm:$0xff]
      %v1591 = vld [vmem:[%s338 + $0x13a] sm:$0xff]
      %v1592 = vld [vmem:[%s338 + $0x142] sm:$0xff]
      %v1593 = vld [vmem:[%s338 + $0x152] sm:$0xff]
      %v1594 = vld [vmem:[%s338 + $0x15a] sm:$0xff]
      %v1595 = vld [vmem:[%s338 + $0x16a] sm:$0xff]
      %v1596 = vld [vmem:[%s338 + $0x172] sm:$0xff]
      %v1597 = vmul.f32 %v1565, %v746
      %v1598 = vmul.f32 %v1566, %v746
      %v1599 = vmul.f32 %v1567, %v746
      %v1600 = vmul.f32 %v1568, %v746
      %v1601 = vmul.f32 %v1569, %v746
      %v1602 = vmul.f32 %v1570, %v746
      %v1603 = vmul.f32 %v1571, %v746
      %v1604 = vmul.f32 %v1572, %v746
      %v1605 = vmul.f32 %v1573, %v746
      %v1606 = vmul.f32 %v1574, %v746
      %v1607 = vmul.f32 %v1575, %v746
      %v1608 = vmul.f32 %v1576, %v746
      %v1609 = vmul.f32 %v1577, %v746
      %v1610 = vmul.f32 %v1578, %v746
      %v1611 = vmul.f32 %v1579, %v746
      %v1612 = vmul.f32 %v1580, %v746
      %v1613 = vmul.f32 %v1581, %v746
      %v1614 = vmul.f32 %v1582, %v746
      %v1615 = vmul.f32 %v1583, %v746
      %v1616 = vmul.f32 %v1584, %v746
      %v1617 = vmul.f32 %v1585, %v746
      %v1618 = vmul.f32 %v1586, %v746
      %v1619 = vmul.f32 %v1587, %v746
      %v1620 = vmul.f32 %v1588, %v746
      %v1621 = vmul.f32 %v1589, %v746
      %v1622 = vmul.f32 %v1590, %v746
      %v1623 = vmul.f32 %v1591, %v746
      %v1624 = vmul.f32 %v1592, %v746
      %v1625 = vmul.f32 %v1593, %v746
      %v1626 = vmul.f32 %v1594, %v746
      %v1627 = vmul.f32 %v1595, %v746
      %v1628 = vmul.f32 %v1596, %v746
      %v1629 = vadd.f32 %v1597, %v784
      %v1630 = vadd.f32 %v1598, %v784
      %v1631 = vadd.f32 %v1599, %v784
      %v1632 = vadd.f32 %v1600, %v784
      %v1633 = vadd.f32 %v1601, %v784
      %v1634 = vadd.f32 %v1602, %v784
      %v1635 = vadd.f32 %v1603, %v784
      %v1636 = vadd.f32 %v1604, %v784
      %v1637 = vadd.f32 %v1605, %v784
      %v1638 = vadd.f32 %v1606, %v784
      %v1639 = vadd.f32 %v1607, %v784
      %v1640 = vadd.f32 %v1608, %v784
      %v1641 = vadd.f32 %v1609, %v784
      %v1642 = vadd.f32 %v1610, %v784
      %v1643 = vadd.f32 %v1611, %v784
      %v1644 = vadd.f32 %v1612, %v784
      %v1645 = vadd.f32 %v1613, %v784
      %v1646 = vadd.f32 %v1614, %v784
      %v1647 = vadd.f32 %v1615, %v784
      %v1648 = vadd.f32 %v1616, %v784
      %v1649 = vadd.f32 %v1617, %v784
      %v1650 = vadd.f32 %v1618, %v784
      %v1651 = vadd.f32 %v1619, %v784
      %v1652 = vadd.f32 %v1620, %v784
      %v1653 = vadd.f32 %v1621, %v784
      %v1654 = vadd.f32 %v1622, %v784
      %v1655 = vadd.f32 %v1623, %v784
      %v1656 = vadd.f32 %v1624, %v784
      %v1657 = vadd.f32 %v1625, %v784
      %v1658 = vadd.f32 %v1626, %v784
      %v1659 = vadd.f32 %v1627, %v784
      %v1660 = vadd.f32 %v1628, %v784
      %s1661 = scalar_lea.vmem %s5, 64
      %v1662 = vld [vmem:[%s1661] sm:$0xff]
      %v1663 = vld [vmem:[%s1661 + $0x8] sm:$0xff]
      %v1664 = vld [vmem:[%s1661 + $0x10] sm:$0xff]
      %v1665 = vld [vmem:[%s1661 + $0x18] sm:$0xff]
      %v1667 = vsel %vm380, %v1629, 0
      %v1670 = vsel %vm380, %v1630, 0
      %v1673 = vsel %vm380, %v1631, 0
      %v1676 = vsel %vm380, %v1632, 0
      %v1679 = vsel %vm380, %v1633, 0
      %v1682 = vsel %vm380, %v1634, 0
      %v1685 = vsel %vm380, %v1635, 0
      %v1688 = vsel %vm380, %v1636, 0
      %v1691 = vsel %vm380, %v1637, 0
      %v1694 = vsel %vm380, %v1638, 0
      %v1697 = vsel %vm380, %v1639, 0
      %v1700 = vsel %vm380, %v1640, 0
      %v1703 = vsel %vm380, %v1641, 0
      %v1706 = vsel %vm380, %v1642, 0
      %v1709 = vsel %vm380, %v1643, 0
      %v1712 = vsel %vm380, %v1644, 0
      %v1715 = vsel %vm380, %v1645, 0
      %v1718 = vsel %vm380, %v1646, 0
      %v1721 = vsel %vm380, %v1647, 0
      %v1724 = vsel %vm380, %v1648, 0
      %v1727 = vsel %vm380, %v1649, 0
      %v1730 = vsel %vm380, %v1650, 0
      %v1733 = vsel %vm380, %v1651, 0
      %v1736 = vsel %vm380, %v1652, 0
      %v1739 = vsel %vm380, %v1653, 0
      %v1742 = vsel %vm380, %v1654, 0
      %v1745 = vsel %vm380, %v1655, 0
      %v1748 = vsel %vm380, %v1656, 0
      %v1751 = vsel %vm380, %v1657, 0
      %v1754 = vsel %vm380, %v1658, 0
      %v1757 = vsel %vm380, %v1659, 0
      %v1760 = vsel %vm380, %v1660, 0
      %1762 = vmatprep.subr.mxu0 0.0
      %1763 = vmatpush1.msra.mxu0 %v1662
      %1764 = vmatprep.subr.mxu0 0.0
      %1765 = vmatpush1.msra.mxu0 %v1663
      %1766 = vmatprep.subr.mxu0 0.0
      %1767 = vmatpush1.msra.mxu0 %v1664
      %1768 = vmatprep.subr.mxu0 0.0
      %1769 = vmatpush1.msra.mxu0 %v1665
      %1770 = vmatprep.subr.mxu0 0.0
      %1771 = vmatpush1.msra.mxu0 0.0
      %1772 = vmatprep.subr.mxu0 0.0
      %1773 = vmatpush1.msra.mxu0 0.0
      %1774 = vmatprep.subr.mxu0 0.0
      %1775 = vmatpush1.msra.mxu0 0.0
      %1776 = vmatprep.subr.mxu0 0.0
      %1777 = vmatpush1.msra.mxu0 0.0
      %1778 = vmatprep.subr.mxu0 0.0
      %1779 = vmatpush1.msra.mxu0 0.0
      %1780 = vmatprep.subr.mxu0 0.0
      %1781 = vmatpush1.msra.mxu0 0.0
      %1782 = vmatprep.subr.mxu0 0.0
      %1783 = vmatpush1.msra.mxu0 0.0
      %1784 = vmatprep.subr.mxu0 0.0
      %1785 = vmatpush1.msra.mxu0 0.0
      %1786 = vmatprep.subr.mxu0 0.0
      %1787 = vmatpush1.msra.mxu0 0.0
      %1788 = vmatprep.subr.mxu0 0.0
      %1789 = vmatpush1.msra.mxu0 0.0
      %1790 = vmatprep.subr.mxu0 0.0
      %1791 = vmatpush1.msra.mxu0 0.0
      %1792 = vmatprep.subr.mxu0 0.0
      %1793 = vmatpush1.msra.mxu0 0.0
      %1794 = vmatprep.subr.mxu0 0.0
      %1795 = vmatpush1.msra.mxu0 0.0
      %1796 = vmatprep.subr.mxu0 0.0
      %1797 = vmatpush1.msra.mxu0 0.0
      %1798 = vmatprep.subr.mxu0 0.0
      %1799 = vmatpush1.msra.mxu0 0.0
      %1800 = vmatprep.subr.mxu0 0.0
      %1801 = vmatpush1.msra.mxu0 0.0
      %1802 = vmatprep.subr.mxu0 0.0
      %1803 = vmatpush1.msra.mxu0 0.0
      %1804 = vmatprep.subr.mxu0 0.0
      %1805 = vmatpush1.msra.mxu0 0.0
      %1806 = vmatprep.subr.mxu0 0.0
      %1807 = vmatpush1.msra.mxu0 0.0
      %1808 = vmatprep.subr.mxu0 0.0
      %1809 = vmatpush1.msra.mxu0 0.0
      %1810 = vmatprep.subr.mxu0 0.0
      %1811 = vmatpush1.msra.mxu0 0.0
      %1812 = vmatprep.subr.mxu0 0.0
      %1813 = vmatpush1.msra.mxu0 0.0
      %1814 = vmatprep.subr.mxu0 0.0
      %1815 = vmatpush1.msra.mxu0 0.0
      %1816 = vmatprep.subr.mxu0 0.0
      %1817 = vmatpush1.msra.mxu0 0.0
      %1818 = vmatprep.subr.mxu0 0.0
      %1819 = vmatpush1.msra.mxu0 0.0
      %1820 = vmatprep.subr.mxu0 0.0
      %1821 = vmatpush1.msra.mxu0 0.0
      %1822 = vmatprep.subr.mxu0 0.0
      %1823 = vmatpush1.msra.mxu0 0.0
      %1824 = vmatprep.subr.mxu0 0.0
      %1825 = vmatpush1.msra.mxu0 0.0
      %1826 = vmatprep.mubr.f32.mxu0 0.0
      %1827 = vmatmul.mubr.f32.gmra.mrb[0].mxu0 %v1667
      %v1828 = vpop.f32.mrb[0].mxu0
      %v1829 = vadd.f32 0.0, %v1828
      %v1830 = vpop.f32.mrb[0].mxu0
      %1831 = vmatprep.mubr.f32.mxu0 0.0
      %1832 = vmatmul.mubr.f32.gmra.mrb[0].mxu0 %v1670
      %v1833 = vpop.f32.mrb[0].mxu0
      %v1834 = vadd.f32 0.0, %v1833
      %v1835 = vpop.f32.mrb[0].mxu0
      %1836 = vmatprep.mubr.f32.mxu0 0.0
      %1837 = vmatmul.mubr.f32.gmra.mrb[0].mxu0 %v1673
      %v1838 = vpop.f32.mrb[0].mxu0
      %v1839 = vadd.f32 0.0, %v1838
      %v1840 = vpop.f32.mrb[0].mxu0
      %1841 = vmatprep.mubr.f32.mxu0 0.0
      %1842 = vmatmul.mubr.f32.gmra.mrb[0].mxu0 %v1676
      %v1843 = vpop.f32.mrb[0].mxu0
      %v1844 = vadd.f32 0.0, %v1843
      %v1845 = vpop.f32.mrb[0].mxu0
      %1846 = vmatprep.mubr.f32.mxu0 0.0
      %1847 = vmatmul.mubr.f32.gmra.mrb[0].mxu0 %v1679
      %v1848 = vpop.f32.mrb[0].mxu0
      %v1849 = vadd.f32 0.0, %v1848
      %v1850 = vpop.f32.mrb[0].mxu0
      %1851 = vmatprep.mubr.f32.mxu0 0.0
      %1852 = vmatmul.mubr.f32.gmra.mrb[0].mxu0 %v1682
      %v1853 = vpop.f32.mrb[0].mxu0
      %v1854 = vadd.f32 0.0, %v1853
      %v1855 = vpop.f32.mrb[0].mxu0
      %1856 = vmatprep.mubr.f32.mxu0 0.0
      %1857 = vmatmul.mubr.f32.gmra.mrb[0].mxu0 %v1685
      %v1858 = vpop.f32.mrb[0].mxu0
      %v1859 = vadd.f32 0.0, %v1858
      %v1860 = vpop.f32.mrb[0].mxu0
      %1861 = vmatprep.mubr.f32.mxu0 0.0
      %1862 = vmatmul.mubr.f32.gmra.mrb[0].mxu0 %v1688
      %v1863 = vpop.f32.mrb[0].mxu0
      %v1864 = vadd.f32 0.0, %v1863
      %v1865 = vpop.f32.mrb[0].mxu0
      %1866 = vmatprep.mubr.f32.mxu0 0.0
      %1867 = vmatmul.mubr.f32.gmra.mrb[0].mxu0 %v1691
      %v1868 = vpop.f32.mrb[0].mxu0
      %v1869 = vadd.f32 0.0, %v1868
      %v1870 = vpop.f32.mrb[0].mxu0
      %1871 = vmatprep.mubr.f32.mxu0 0.0
      %1872 = vmatmul.mubr.f32.gmra.mrb[0].mxu0 %v1694
      %v1873 = vpop.f32.mrb[0].mxu0
      %v1874 = vadd.f32 0.0, %v1873
      %v1875 = vpop.f32.mrb[0].mxu0
      %1876 = vmatprep.mubr.f32.mxu0 0.0
      %1877 = vmatmul.mubr.f32.gmra.mrb[0].mxu0 %v1697
      %v1878 = vpop.f32.mrb[0].mxu0
      %v1879 = vadd.f32 0.0, %v1878
      %v1880 = vpop.f32.mrb[0].mxu0
      %1881 = vmatprep.mubr.f32.mxu0 0.0
      %1882 = vmatmul.mubr.f32.gmra.mrb[0].mxu0 %v1700
      %v1883 = vpop.f32.mrb[0].mxu0
      %v1884 = vadd.f32 0.0, %v1883
      %v1885 = vpop.f32.mrb[0].mxu0
      %1886 = vmatprep.mubr.f32.mxu0 0.0
      %1887 = vmatmul.mubr.f32.gmra.mrb[0].mxu0 %v1703
      %v1888 = vpop.f32.mrb[0].mxu0
      %v1889 = vadd.f32 0.0, %v1888
      %v1890 = vpop.f32.mrb[0].mxu0
      %1891 = vmatprep.mubr.f32.mxu0 0.0
      %1892 = vmatmul.mubr.f32.gmra.mrb[0].mxu0 %v1706
      %v1893 = vpop.f32.mrb[0].mxu0
      %v1894 = vadd.f32 0.0, %v1893
      %v1895 = vpop.f32.mrb[0].mxu0
      %1896 = vmatprep.mubr.f32.mxu0 0.0
      %1897 = vmatmul.mubr.f32.gmra.mrb[0].mxu0 %v1709
      %v1898 = vpop.f32.mrb[0].mxu0
      %v1899 = vadd.f32 0.0, %v1898
      %v1900 = vpop.f32.mrb[0].mxu0
      %1901 = vmatprep.mubr.f32.mxu0 0.0
      %1902 = vmatmul.mubr.f32.gmra.mrb[0].mxu0 %v1712
      %v1903 = vpop.f32.mrb[0].mxu0
      %v1904 = vadd.f32 0.0, %v1903
      %v1905 = vpop.f32.mrb[0].mxu0
      %1906 = vmatprep.mubr.f32.mxu0 0.0
      %1907 = vmatmul.mubr.f32.gmra.mrb[0].mxu0 %v1715
      %v1908 = vpop.f32.mrb[0].mxu0
      %v1909 = vadd.f32 0.0, %v1908
      %v1910 = vpop.f32.mrb[0].mxu0
      %1911 = vmatprep.mubr.f32.mxu0 0.0
      %1912 = vmatmul.mubr.f32.gmra.mrb[0].mxu0 %v1718
      %v1913 = vpop.f32.mrb[0].mxu0
      %v1914 = vadd.f32 0.0, %v1913
      %v1915 = vpop.f32.mrb[0].mxu0
      %1916 = vmatprep.mubr.f32.mxu0 0.0
      %1917 = vmatmul.mubr.f32.gmra.mrb[0].mxu0 %v1721
      %v1918 = vpop.f32.mrb[0].mxu0
      %v1919 = vadd.f32 0.0, %v1918
      %v1920 = vpop.f32.mrb[0].mxu0
      %1921 = vmatprep.mubr.f32.mxu0 0.0
      %1922 = vmatmul.mubr.f32.gmra.mrb[0].mxu0 %v1724
      %v1923 = vpop.f32.mrb[0].mxu0
      %v1924 = vadd.f32 0.0, %v1923
      %v1925 = vpop.f32.mrb[0].mxu0
      %1926 = vmatprep.mubr.f32.mxu0 0.0
      %1927 = vmatmul.mubr.f32.gmra.mrb[0].mxu0 %v1727
      %v1928 = vpop.f32.mrb[0].mxu0
      %v1929 = vadd.f32 0.0, %v1928
      %v1930 = vpop.f32.mrb[0].mxu0
      %1931 = vmatprep.mubr.f32.mxu0 0.0
      %1932 = vmatmul.mubr.f32.gmra.mrb[0].mxu0 %v1730
      %v1933 = vpop.f32.mrb[0].mxu0
      %v1934 = vadd.f32 0.0, %v1933
      %v1935 = vpop.f32.mrb[0].mxu0
      %1936 = vmatprep.mubr.f32.mxu0 0.0
      %1937 = vmatmul.mubr.f32.gmra.mrb[0].mxu0 %v1733
      %v1938 = vpop.f32.mrb[0].mxu0
      %v1939 = vadd.f32 0.0, %v1938
      %v1940 = vpop.f32.mrb[0].mxu0
      %1941 = vmatprep.mubr.f32.mxu0 0.0
      %1942 = vmatmul.mubr.f32.gmra.mrb[0].mxu0 %v1736
      %v1943 = vpop.f32.mrb[0].mxu0
      %v1944 = vadd.f32 0.0, %v1943
      %v1945 = vpop.f32.mrb[0].mxu0
      %1946 = vmatprep.mubr.f32.mxu0 0.0
      %1947 = vmatmul.mubr.f32.gmra.mrb[0].mxu0 %v1739
      %v1948 = vpop.f32.mrb[0].mxu0
      %v1949 = vadd.f32 0.0, %v1948
      %v1950 = vpop.f32.mrb[0].mxu0
      %1951 = vmatprep.mubr.f32.mxu0 0.0
      %1952 = vmatmul.mubr.f32.gmra.mrb[0].mxu0 %v1742
      %v1953 = vpop.f32.mrb[0].mxu0
      %v1954 = vadd.f32 0.0, %v1953
      %v1955 = vpop.f32.mrb[0].mxu0
      %1956 = vmatprep.mubr.f32.mxu0 0.0
      %1957 = vmatmul.mubr.f32.gmra.mrb[0].mxu0 %v1745
      %v1958 = vpop.f32.mrb[0].mxu0
      %v1959 = vadd.f32 0.0, %v1958
      %v1960 = vpop.f32.mrb[0].mxu0
      %1961 = vmatprep.mubr.f32.mxu0 0.0
      %1962 = vmatmul.mubr.f32.gmra.mrb[0].mxu0 %v1748
      %v1963 = vpop.f32.mrb[0].mxu0
      %v1964 = vadd.f32 0.0, %v1963
      %v1965 = vpop.f32.mrb[0].mxu0
      %1966 = vmatprep.mubr.f32.mxu0 0.0
      %1967 = vmatmul.mubr.f32.gmra.mrb[0].mxu0 %v1751
      %v1968 = vpop.f32.mrb[0].mxu0
      %v1969 = vadd.f32 0.0, %v1968
      %v1970 = vpop.f32.mrb[0].mxu0
      %1971 = vmatprep.mubr.f32.mxu0 0.0
      %1972 = vmatmul.mubr.f32.gmra.mrb[0].mxu0 %v1754
      %v1973 = vpop.f32.mrb[0].mxu0
      %v1974 = vadd.f32 0.0, %v1973
      %v1975 = vpop.f32.mrb[0].mxu0
      %1976 = vmatprep.mubr.f32.mxu0 0.0
      %1977 = vmatmul.mubr.f32.gmra.mrb[0].mxu0 %v1757
      %v1978 = vpop.f32.mrb[0].mxu0
      %v1979 = vadd.f32 0.0, %v1978
      %v1980 = vpop.f32.mrb[0].mxu0
      %1981 = vmatprep.mubr.f32.mxu0 0.0
      %1982 = vmatmul.mubr.f32.gmra.mrb[0].mxu0 %v1760
      %v1983 = vpop.f32.mrb[0].mxu0
      %v1984 = vadd.f32 0.0, %v1983
      %v1985 = vpop.f32.mrb[0].mxu0
      %1986 = vdwg.mxu0
      %v1987 = vadd.f32 %v1407, %v1829
      %v1988 = vadd.f32 %v1412, %v1834
      %v1989 = vadd.f32 %v1417, %v1839
      %v1990 = vadd.f32 %v1422, %v1844
      %v1991 = vadd.f32 %v1427, %v1849
      %v1992 = vadd.f32 %v1432, %v1854
      %v1993 = vadd.f32 %v1437, %v1859
      %v1994 = vadd.f32 %v1442, %v1864
      %v1995 = vadd.f32 %v1447, %v1869
      %v1996 = vadd.f32 %v1452, %v1874
      %v1997 = vadd.f32 %v1457, %v1879
      %v1998 = vadd.f32 %v1462, %v1884
      %v1999 = vadd.f32 %v1467, %v1889
      %v2000 = vadd.f32 %v1472, %v1894
      %v2001 = vadd.f32 %v1477, %v1899
      %v2002 = vadd.f32 %v1482, %v1904
      %v2003 = vadd.f32 %v1487, %v1909
      %v2004 = vadd.f32 %v1492, %v1914
      %v2005 = vadd.f32 %v1497, %v1919
      %v2006 = vadd.f32 %v1502, %v1924
      %v2007 = vadd.f32 %v1507, %v1929
      %v2008 = vadd.f32 %v1512, %v1934
      %v2009 = vadd.f32 %v1517, %v1939
      %v2010 = vadd.f32 %v1522, %v1944
      %v2011 = vadd.f32 %v1527, %v1949
      %v2012 = vadd.f32 %v1532, %v1954
      %v2013 = vadd.f32 %v1537, %v1959
      %v2014 = vadd.f32 %v1542, %v1964
      %v2015 = vadd.f32 %v1547, %v1969
      %v2016 = vadd.f32 %v1552, %v1974
      %v2017 = vadd.f32 %v1557, %v1979
      %v2018 = vadd.f32 %v1562, %v1984
      %v2019 = vld [vmem:[%s347] sm:$0xff]
      %v2020 = vld [vmem:[%s347 + $0x8] sm:$0xff]
      %v2021 = vld [vmem:[%s347 + $0x18] sm:$0xff]
      %v2022 = vld [vmem:[%s347 + $0x20] sm:$0xff]
      %v2023 = vld [vmem:[%s347 + $0x30] sm:$0xff]
      %v2024 = vld [vmem:[%s347 + $0x38] sm:$0xff]
      %v2025 = vld [vmem:[%s347 + $0x48] sm:$0xff]
      %v2026 = vld [vmem:[%s347 + $0x50] sm:$0xff]
      %v2027 = vld [vmem:[%s347 + $0x60] sm:$0xff]
      %v2028 = vld [vmem:[%s347 + $0x68] sm:$0xff]
      %v2029 = vld [vmem:[%s347 + $0x78] sm:$0xff]
      %v2030 = vld [vmem:[%s347 + $0x80] sm:$0xff]
      %v2031 = vld [vmem:[%s347 + $0x90] sm:$0xff]
      %v2032 = vld [vmem:[%s347 + $0x98] sm:$0xff]
      %v2033 = vld [vmem:[%s347 + $0xa8] sm:$0xff]
      %v2034 = vld [vmem:[%s347 + $0xb0] sm:$0xff]
      %v2035 = vld [vmem:[%s347 + $0xc0] sm:$0xff]
      %v2036 = vld [vmem:[%s347 + $0xc8] sm:$0xff]
      %v2037 = vld [vmem:[%s347 + $0xd8] sm:$0xff]
      %v2038 = vld [vmem:[%s347 + $0xe0] sm:$0xff]
      %v2039 = vld [vmem:[%s347 + $0xf0] sm:$0xff]
      %v2040 = vld [vmem:[%s347 + $0xf8] sm:$0xff]
      %v2041 = vld [vmem:[%s347 + $0x108] sm:$0xff]
      %v2042 = vld [vmem:[%s347 + $0x110] sm:$0xff]
      %v2043 = vld [vmem:[%s347 + $0x120] sm:$0xff]
      %v2044 = vld [vmem:[%s347 + $0x128] sm:$0xff]
      %v2045 = vld [vmem:[%s347 + $0x138] sm:$0xff]
      %v2046 = vld [vmem:[%s347 + $0x140] sm:$0xff]
      %v2047 = vld [vmem:[%s347 + $0x150] sm:$0xff]
      %v2048 = vld [vmem:[%s347 + $0x158] sm:$0xff]
      %v2049 = vld [vmem:[%s347 + $0x168] sm:$0xff]
      %v2050 = vld [vmem:[%s347 + $0x170] sm:$0xff]
      %v2051 = vmul.f32 %v2019, %v746
      %v2052 = vmul.f32 %v2020, %v746
      %v2053 = vmul.f32 %v2021, %v746
      %v2054 = vmul.f32 %v2022, %v746
      %v2055 = vmul.f32 %v2023, %v746
      %v2056 = vmul.f32 %v2024, %v746
      %v2057 = vmul.f32 %v2025, %v746
      %v2058 = vmul.f32 %v2026, %v746
      %v2059 = vmul.f32 %v2027, %v746
      %v2060 = vmul.f32 %v2028, %v746
      %v2061 = vmul.f32 %v2029, %v746
      %v2062 = vmul.f32 %v2030, %v746
      %v2063 = vmul.f32 %v2031, %v746
      %v2064 = vmul.f32 %v2032, %v746
      %v2065 = vmul.f32 %v2033, %v746
      %v2066 = vmul.f32 %v2034, %v746
      %v2067 = vmul.f32 %v2035, %v746
      %v2068 = vmul.f32 %v2036, %v746
      %v2069 = vmul.f32 %v2037, %v746
      %v2070 = vmul.f32 %v2038, %v746
      %v2071 = vmul.f32 %v2039, %v746
      %v2072 = vmul.f32 %v2040, %v746
      %v2073 = vmul.f32 %v2041, %v746
      %v2074 = vmul.f32 %v2042, %v746
      %v2075 = vmul.f32 %v2043, %v746
      %v2076 = vmul.f32 %v2044, %v746
      %v2077 = vmul.f32 %v2045, %v746
      %v2078 = vmul.f32 %v2046, %v746
      %v2079 = vmul.f32 %v2047, %v746
      %v2080 = vmul.f32 %v2048, %v746
      %v2081 = vmul.f32 %v2049, %v746
      %v2082 = vmul.f32 %v2050, %v746
      %v2083 = vadd.f32 %v2051, %v784
      %v2084 = vadd.f32 %v2052, %v784
      %v2085 = vadd.f32 %v2053, %v784
      %v2086 = vadd.f32 %v2054, %v784
      %v2087 = vadd.f32 %v2055, %v784
      %v2088 = vadd.f32 %v2056, %v784
      %v2089 = vadd.f32 %v2057, %v784
      %v2090 = vadd.f32 %v2058, %v784
      %v2091 = vadd.f32 %v2059, %v784
      %v2092 = vadd.f32 %v2060, %v784
      %v2093 = vadd.f32 %v2061, %v784
      %v2094 = vadd.f32 %v2062, %v784
      %v2095 = vadd.f32 %v2063, %v784
      %v2096 = vadd.f32 %v2064, %v784
      %v2097 = vadd.f32 %v2065, %v784
      %v2098 = vadd.f32 %v2066, %v784
      %v2099 = vadd.f32 %v2067, %v784
      %v2100 = vadd.f32 %v2068, %v784
      %v2101 = vadd.f32 %v2069, %v784
      %v2102 = vadd.f32 %v2070, %v784
      %v2103 = vadd.f32 %v2071, %v784
      %v2104 = vadd.f32 %v2072, %v784
      %v2105 = vadd.f32 %v2073, %v784
      %v2106 = vadd.f32 %v2074, %v784
      %v2107 = vadd.f32 %v2075, %v784
      %v2108 = vadd.f32 %v2076, %v784
      %v2109 = vadd.f32 %v2077, %v784
      %v2110 = vadd.f32 %v2078, %v784
      %v2111 = vadd.f32 %v2079, %v784
      %v2112 = vadd.f32 %v2080, %v784
      %v2113 = vadd.f32 %v2081, %v784
      %v2114 = vadd.f32 %v2082, %v784
      %s2115 = scalar_lea.vmem %s5, 96
      %v2116 = vld [vmem:[%s2115] sm:$0xff]
      %v2117 = vld [vmem:[%s2115 + $0x8] sm:$0xff]
      %v2118 = vld [vmem:[%s2115 + $0x10] sm:$0xff]
      %v2119 = vld [vmem:[%s2115 + $0x18] sm:$0xff]
      %v2121 = vsel %vm380, %v2083, 0
      %v2124 = vsel %vm380, %v2084, 0
      %v2127 = vsel %vm380, %v2085, 0
      %v2130 = vsel %vm380, %v2086, 0
      %v2133 = vsel %vm380, %v2087, 0
      %v2136 = vsel %vm380, %v2088, 0
      %v2139 = vsel %vm380, %v2089, 0
      %v2142 = vsel %vm380, %v2090, 0
      %v2145 = vsel %vm380, %v2091, 0
      %v2148 = vsel %vm380, %v2092, 0
      %v2151 = vsel %vm380, %v2093, 0
      %v2154 = vsel %vm380, %v2094, 0
      %v2157 = vsel %vm380, %v2095, 0
      %v2160 = vsel %vm380, %v2096, 0
      %v2163 = vsel %vm380, %v2097, 0
      %v2166 = vsel %vm380, %v2098, 0
      %v2169 = vsel %vm380, %v2099, 0
      %v2172 = vsel %vm380, %v2100, 0
      %v2175 = vsel %vm380, %v2101, 0
      %v2178 = vsel %vm380, %v2102, 0
      %v2181 = vsel %vm380, %v2103, 0
      %v2184 = vsel %vm380, %v2104, 0
      %v2187 = vsel %vm380, %v2105, 0
      %v2190 = vsel %vm380, %v2106, 0
      %v2193 = vsel %vm380, %v2107, 0
      %v2196 = vsel %vm380, %v2108, 0
      %v2199 = vsel %vm380, %v2109, 0
      %v2202 = vsel %vm380, %v2110, 0
      %v2205 = vsel %vm380, %v2111, 0
      %v2208 = vsel %vm380, %v2112, 0
      %v2211 = vsel %vm380, %v2113, 0
      %v2214 = vsel %vm380, %v2114, 0
      %2216 = vmatprep.subr.mxu0 0.0
      %2217 = vmatpush1.msra.mxu0 %v2116
      %2218 = vmatprep.subr.mxu0 0.0
      %2219 = vmatpush1.msra.mxu0 %v2117
      %2220 = vmatprep.subr.mxu0 0.0
      %2221 = vmatpush1.msra.mxu0 %v2118
      %2222 = vmatprep.subr.mxu0 0.0
      %2223 = vmatpush1.msra.mxu0 %v2119
      %2224 = vmatprep.subr.mxu0 0.0
      %2225 = vmatpush1.msra.mxu0 0.0
      %2226 = vmatprep.subr.mxu0 0.0
      %2227 = vmatpush1.msra.mxu0 0.0
      %2228 = vmatprep.subr.mxu0 0.0
      %2229 = vmatpush1.msra.mxu0 0.0
      %2230 = vmatprep.subr.mxu0 0.0
      %2231 = vmatpush1.msra.mxu0 0.0
      %2232 = vmatprep.subr.mxu0 0.0
      %2233 = vmatpush1.msra.mxu0 0.0
      %2234 = vmatprep.subr.mxu0 0.0
      %2235 = vmatpush1.msra.mxu0 0.0
      %2236 = vmatprep.subr.mxu0 0.0
      %2237 = vmatpush1.msra.mxu0 0.0
      %2238 = vmatprep.subr.mxu0 0.0
      %2239 = vmatpush1.msra.mxu0 0.0
      %2240 = vmatprep.subr.mxu0 0.0
      %2241 = vmatpush1.msra.mxu0 0.0
      %2242 = vmatprep.subr.mxu0 0.0
      %2243 = vmatpush1.msra.mxu0 0.0
      %2244 = vmatprep.subr.mxu0 0.0
      %2245 = vmatpush1.msra.mxu0 0.0
      %2246 = vmatprep.subr.mxu0 0.0
      %2247 = vmatpush1.msra.mxu0 0.0
      %2248 = vmatprep.subr.mxu0 0.0
      %2249 = vmatpush1.msra.mxu0 0.0
      %2250 = vmatprep.subr.mxu0 0.0
      %2251 = vmatpush1.msra.mxu0 0.0
      %2252 = vmatprep.subr.mxu0 0.0
      %2253 = vmatpush1.msra.mxu0 0.0
      %2254 = vmatprep.subr.mxu0 0.0
      %2255 = vmatpush1.msra.mxu0 0.0
      %2256 = vmatprep.subr.mxu0 0.0
      %2257 = vmatpush1.msra.mxu0 0.0
      %2258 = vmatprep.subr.mxu0 0.0
      %2259 = vmatpush1.msra.mxu0 0.0
      %2260 = vmatprep.subr.mxu0 0.0
      %2261 = vmatpush1.msra.mxu0 0.0
      %2262 = vmatprep.subr.mxu0 0.0
      %2263 = vmatpush1.msra.mxu0 0.0
      %2264 = vmatprep.subr.mxu0 0.0
      %2265 = vmatpush1.msra.mxu0 0.0
      %2266 = vmatprep.subr.mxu0 0.0
      %2267 = vmatpush1.msra.mxu0 0.0
      %2268 = vmatprep.subr.mxu0 0.0
      %2269 = vmatpush1.msra.mxu0 0.0
      %2270 = vmatprep.subr.mxu0 0.0
      %2271 = vmatpush1.msra.mxu0 0.0
      %2272 = vmatprep.subr.mxu0 0.0
      %2273 = vmatpush1.msra.mxu0 0.0
      %2274 = vmatprep.subr.mxu0 0.0
      %2275 = vmatpush1.msra.mxu0 0.0
      %2276 = vmatprep.subr.mxu0 0.0
      %2277 = vmatpush1.msra.mxu0 0.0
      %2278 = vmatprep.subr.mxu0 0.0
      %2279 = vmatpush1.msra.mxu0 0.0
      %2280 = vmatprep.mubr.f32.mxu0 0.0
      %2281 = vmatmul.mubr.f32.gmra.mrb[0].mxu0 %v2121
      %v2282 = vpop.f32.mrb[0].mxu0
      %v2283 = vadd.f32 0.0, %v2282
      %v2284 = vpop.f32.mrb[0].mxu0
      %2285 = vmatprep.mubr.f32.mxu0 0.0
      %2286 = vmatmul.mubr.f32.gmra.mrb[0].mxu0 %v2124
      %v2287 = vpop.f32.mrb[0].mxu0
      %v2288 = vadd.f32 0.0, %v2287
      %v2289 = vpop.f32.mrb[0].mxu0
      %2290 = vmatprep.mubr.f32.mxu0 0.0
      %2291 = vmatmul.mubr.f32.gmra.mrb[0].mxu0 %v2127
      %v2292 = vpop.f32.mrb[0].mxu0
      %v2293 = vadd.f32 0.0, %v2292
      %v2294 = vpop.f32.mrb[0].mxu0
      %2295 = vmatprep.mubr.f32.mxu0 0.0
      %2296 = vmatmul.mubr.f32.gmra.mrb[0].mxu0 %v2130
      %v2297 = vpop.f32.mrb[0].mxu0
      %v2298 = vadd.f32 0.0, %v2297
      %v2299 = vpop.f32.mrb[0].mxu0
      %2300 = vmatprep.mubr.f32.mxu0 0.0
      %2301 = vmatmul.mubr.f32.gmra.mrb[0].mxu0 %v2133
      %v2302 = vpop.f32.mrb[0].mxu0
      %v2303 = vadd.f32 0.0, %v2302
      %v2304 = vpop.f32.mrb[0].mxu0
      %2305 = vmatprep.mubr.f32.mxu0 0.0
      %2306 = vmatmul.mubr.f32.gmra.mrb[0].mxu0 %v2136
      %v2307 = vpop.f32.mrb[0].mxu0
      %v2308 = vadd.f32 0.0, %v2307
      %v2309 = vpop.f32.mrb[0].mxu0
      %2310 = vmatprep.mubr.f32.mxu0 0.0
      %2311 = vmatmul.mubr.f32.gmra.mrb[0].mxu0 %v2139
      %v2312 = vpop.f32.mrb[0].mxu0
      %v2313 = vadd.f32 0.0, %v2312
      %v2314 = vpop.f32.mrb[0].mxu0
      %2315 = vmatprep.mubr.f32.mxu0 0.0
      %2316 = vmatmul.mubr.f32.gmra.mrb[0].mxu0 %v2142
      %v2317 = vpop.f32.mrb[0].mxu0
      %v2318 = vadd.f32 0.0, %v2317
      %v2319 = vpop.f32.mrb[0].mxu0
      %2320 = vmatprep.mubr.f32.mxu0 0.0
      %2321 = vmatmul.mubr.f32.gmra.mrb[0].mxu0 %v2145
      %v2322 = vpop.f32.mrb[0].mxu0
      %v2323 = vadd.f32 0.0, %v2322
      %v2324 = vpop.f32.mrb[0].mxu0
      %2325 = vmatprep.mubr.f32.mxu0 0.0
      %2326 = vmatmul.mubr.f32.gmra.mrb[0].mxu0 %v2148
      %v2327 = vpop.f32.mrb[0].mxu0
      %v2328 = vadd.f32 0.0, %v2327
      %v2329 = vpop.f32.mrb[0].mxu0
      %2330 = vmatprep.mubr.f32.mxu0 0.0
      %2331 = vmatmul.mubr.f32.gmra.mrb[0].mxu0 %v2151
      %v2332 = vpop.f32.mrb[0].mxu0
      %v2333 = vadd.f32 0.0, %v2332
      %v2334 = vpop.f32.mrb[0].mxu0
      %2335 = vmatprep.mubr.f32.mxu0 0.0
      %2336 = vmatmul.mubr.f32.gmra.mrb[0].mxu0 %v2154
      %v2337 = vpop.f32.mrb[0].mxu0
      %v2338 = vadd.f32 0.0, %v2337
      %v2339 = vpop.f32.mrb[0].mxu0
      %2340 = vmatprep.mubr.f32.mxu0 0.0
      %2341 = vmatmul.mubr.f32.gmra.mrb[0].mxu0 %v2157
      %v2342 = vpop.f32.mrb[0].mxu0
      %v2343 = vadd.f32 0.0, %v2342
      %v2344 = vpop.f32.mrb[0].mxu0
      %2345 = vmatprep.mubr.f32.mxu0 0.0
      %2346 = vmatmul.mubr.f32.gmra.mrb[0].mxu0 %v2160
      %v2347 = vpop.f32.mrb[0].mxu0
      %v2348 = vadd.f32 0.0, %v2347
      %v2349 = vpop.f32.mrb[0].mxu0
      %2350 = vmatprep.mubr.f32.mxu0 0.0
      %2351 = vmatmul.mubr.f32.gmra.mrb[0].mxu0 %v2163
      %v2352 = vpop.f32.mrb[0].mxu0
      %v2353 = vadd.f32 0.0, %v2352
      %v2354 = vpop.f32.mrb[0].mxu0
      %2355 = vmatprep.mubr.f32.mxu0 0.0
      %2356 = vmatmul.mubr.f32.gmra.mrb[0].mxu0 %v2166
      %v2357 = vpop.f32.mrb[0].mxu0
      %v2358 = vadd.f32 0.0, %v2357
      %v2359 = vpop.f32.mrb[0].mxu0
      %2360 = vmatprep.mubr.f32.mxu0 0.0
      %2361 = vmatmul.mubr.f32.gmra.mrb[0].mxu0 %v2169
      %v2362 = vpop.f32.mrb[0].mxu0
      %v2363 = vadd.f32 0.0, %v2362
      %v2364 = vpop.f32.mrb[0].mxu0
      %2365 = vmatprep.mubr.f32.mxu0 0.0
      %2366 = vmatmul.mubr.f32.gmra.mrb[0].mxu0 %v2172
      %v2367 = vpop.f32.mrb[0].mxu0
      %v2368 = vadd.f32 0.0, %v2367
      %v2369 = vpop.f32.mrb[0].mxu0
      %2370 = vmatprep.mubr.f32.mxu0 0.0
      %2371 = vmatmul.mubr.f32.gmra.mrb[0].mxu0 %v2175
      %v2372 = vpop.f32.mrb[0].mxu0
      %v2373 = vadd.f32 0.0, %v2372
      %v2374 = vpop.f32.mrb[0].mxu0
      %2375 = vmatprep.mubr.f32.mxu0 0.0
      %2376 = vmatmul.mubr.f32.gmra.mrb[0].mxu0 %v2178
      %v2377 = vpop.f32.mrb[0].mxu0
      %v2378 = vadd.f32 0.0, %v2377
      %v2379 = vpop.f32.mrb[0].mxu0
      %2380 = vmatprep.mubr.f32.mxu0 0.0
      %2381 = vmatmul.mubr.f32.gmra.mrb[0].mxu0 %v2181
      %v2382 = vpop.f32.mrb[0].mxu0
      %v2383 = vadd.f32 0.0, %v2382
      %v2384 = vpop.f32.mrb[0].mxu0
      %2385 = vmatprep.mubr.f32.mxu0 0.0
      %2386 = vmatmul.mubr.f32.gmra.mrb[0].mxu0 %v2184
      %v2387 = vpop.f32.mrb[0].mxu0
      %v2388 = vadd.f32 0.0, %v2387
      %v2389 = vpop.f32.mrb[0].mxu0
      %2390 = vmatprep.mubr.f32.mxu0 0.0
      %2391 = vmatmul.mubr.f32.gmra.mrb[0].mxu0 %v2187
      %v2392 = vpop.f32.mrb[0].mxu0
      %v2393 = vadd.f32 0.0, %v2392
      %v2394 = vpop.f32.mrb[0].mxu0
      %2395 = vmatprep.mubr.f32.mxu0 0.0
      %2396 = vmatmul.mubr.f32.gmra.mrb[0].mxu0 %v2190
      %v2397 = vpop.f32.mrb[0].mxu0
      %v2398 = vadd.f32 0.0, %v2397
      %v2399 = vpop.f32.mrb[0].mxu0
      %2400 = vmatprep.mubr.f32.mxu0 0.0
      %2401 = vmatmul.mubr.f32.gmra.mrb[0].mxu0 %v2193
      %v2402 = vpop.f32.mrb[0].mxu0
      %v2403 = vadd.f32 0.0, %v2402
      %v2404 = vpop.f32.mrb[0].mxu0
      %2405 = vmatprep.mubr.f32.mxu0 0.0
      %2406 = vmatmul.mubr.f32.gmra.mrb[0].mxu0 %v2196
      %v2407 = vpop.f32.mrb[0].mxu0
      %v2408 = vadd.f32 0.0, %v2407
      %v2409 = vpop.f32.mrb[0].mxu0
      %2410 = vmatprep.mubr.f32.mxu0 0.0
      %2411 = vmatmul.mubr.f32.gmra.mrb[0].mxu0 %v2199
      %v2412 = vpop.f32.mrb[0].mxu0
      %v2413 = vadd.f32 0.0, %v2412
      %v2414 = vpop.f32.mrb[0].mxu0
      %2415 = vmatprep.mubr.f32.mxu0 0.0
      %2416 = vmatmul.mubr.f32.gmra.mrb[0].mxu0 %v2202
      %v2417 = vpop.f32.mrb[0].mxu0
      %v2418 = vadd.f32 0.0, %v2417
      %v2419 = vpop.f32.mrb[0].mxu0
      %2420 = vmatprep.mubr.f32.mxu0 0.0
      %2421 = vmatmul.mubr.f32.gmra.mrb[0].mxu0 %v2205
      %v2422 = vpop.f32.mrb[0].mxu0
      %v2423 = vadd.f32 0.0, %v2422
      %v2424 = vpop.f32.mrb[0].mxu0
      %2425 = vmatprep.mubr.f32.mxu0 0.0
      %2426 = vmatmul.mubr.f32.gmra.mrb[0].mxu0 %v2208
      %v2427 = vpop.f32.mrb[0].mxu0
      %v2428 = vadd.f32 0.0, %v2427
      %v2429 = vpop.f32.mrb[0].mxu0
      %2430 = vmatprep.mubr.f32.mxu0 0.0
      %2431 = vmatmul.mubr.f32.gmra.mrb[0].mxu0 %v2211
      %v2432 = vpop.f32.mrb[0].mxu0
      %v2433 = vadd.f32 0.0, %v2432
      %v2434 = vpop.f32.mrb[0].mxu0
      %2435 = vmatprep.mubr.f32.mxu0 0.0
      %2436 = vmatmul.mubr.f32.gmra.mrb[0].mxu0 %v2214
      %v2437 = vpop.f32.mrb[0].mxu0
      %v2438 = vadd.f32 0.0, %v2437
      %v2439 = vpop.f32.mrb[0].mxu0
      %2440 = vdwg.mxu0
      %v2441 = vadd.f32 %v1987, %v2283
      %v2442 = vadd.f32 %v1988, %v2288
      %v2443 = vadd.f32 %v1989, %v2293
      %v2444 = vadd.f32 %v1990, %v2298
      %v2445 = vadd.f32 %v1991, %v2303
      %v2446 = vadd.f32 %v1992, %v2308
      %v2447 = vadd.f32 %v1993, %v2313
      %v2448 = vadd.f32 %v1994, %v2318
      %v2449 = vadd.f32 %v1995, %v2323
      %v2450 = vadd.f32 %v1996, %v2328
      %v2451 = vadd.f32 %v1997, %v2333
      %v2452 = vadd.f32 %v1998, %v2338
      %v2453 = vadd.f32 %v1999, %v2343
      %v2454 = vadd.f32 %v2000, %v2348
      %v2455 = vadd.f32 %v2001, %v2353
      %v2456 = vadd.f32 %v2002, %v2358
      %v2457 = vadd.f32 %v2003, %v2363
      %v2458 = vadd.f32 %v2004, %v2368
      %v2459 = vadd.f32 %v2005, %v2373
      %v2460 = vadd.f32 %v2006, %v2378
      %v2461 = vadd.f32 %v2007, %v2383
      %v2462 = vadd.f32 %v2008, %v2388
      %v2463 = vadd.f32 %v2009, %v2393
      %v2464 = vadd.f32 %v2010, %v2398
      %v2465 = vadd.f32 %v2011, %v2403
      %v2466 = vadd.f32 %v2012, %v2408
      %v2467 = vadd.f32 %v2013, %v2413
      %v2468 = vadd.f32 %v2014, %v2418
      %v2469 = vadd.f32 %v2015, %v2423
      %v2470 = vadd.f32 %v2016, %v2428
      %v2471 = vadd.f32 %v2017, %v2433
      %v2472 = vadd.f32 %v2018, %v2438
      %v2473 = vmul.f32 %v348, %v746
      %v2474 = vmul.f32 %v349, %v746
      %v2475 = vmul.f32 %v350, %v746
      %v2476 = vmul.f32 %v351, %v746
      %v2477 = vmul.f32 %v352, %v746
      %v2478 = vmul.f32 %v353, %v746
      %v2479 = vmul.f32 %v354, %v746
      %v2480 = vmul.f32 %v355, %v746
      %v2481 = vmul.f32 %v356, %v746
      %v2482 = vmul.f32 %v357, %v746
      %v2483 = vmul.f32 %v358, %v746
      %v2484 = vmul.f32 %v359, %v746
      %v2485 = vmul.f32 %v360, %v746
      %v2486 = vmul.f32 %v361, %v746
      %v2487 = vmul.f32 %v362, %v746
      %v2488 = vmul.f32 %v363, %v746
      %v2489 = vmul.f32 %v364, %v746
      %v2490 = vmul.f32 %v365, %v746
      %v2491 = vmul.f32 %v366, %v746
      %v2492 = vmul.f32 %v367, %v746
      %v2493 = vmul.f32 %v368, %v746
      %v2494 = vmul.f32 %v369, %v746
      %v2495 = vmul.f32 %v370, %v746
      %v2496 = vmul.f32 %v371, %v746
      %v2497 = vmul.f32 %v372, %v746
      %v2498 = vmul.f32 %v373, %v746
      %v2499 = vmul.f32 %v374, %v746
      %v2500 = vmul.f32 %v375, %v746
      %v2501 = vmul.f32 %v376, %v746
      %v2502 = vmul.f32 %v377, %v746
      %v2503 = vmul.f32 %v378, %v746
      %v2504 = vmul.f32 %v379, %v746
      %v2505 = vadd.f32 %v2473, %v784
      %v2506 = vadd.f32 %v2474, %v784
      %v2507 = vadd.f32 %v2475, %v784
      %v2508 = vadd.f32 %v2476, %v784
      %v2509 = vadd.f32 %v2477, %v784
      %v2510 = vadd.f32 %v2478, %v784
      %v2511 = vadd.f32 %v2479, %v784
      %v2512 = vadd.f32 %v2480, %v784
      %v2513 = vadd.f32 %v2481, %v784
      %v2514 = vadd.f32 %v2482, %v784
      %v2515 = vadd.f32 %v2483, %v784
      %v2516 = vadd.f32 %v2484, %v784
      %v2517 = vadd.f32 %v2485, %v784
      %v2518 = vadd.f32 %v2486, %v784
      %v2519 = vadd.f32 %v2487, %v784
      %v2520 = vadd.f32 %v2488, %v784
      %v2521 = vadd.f32 %v2489, %v784
      %v2522 = vadd.f32 %v2490, %v784
      %v2523 = vadd.f32 %v2491, %v784
      %v2524 = vadd.f32 %v2492, %v784
      %v2525 = vadd.f32 %v2493, %v784
      %v2526 = vadd.f32 %v2494, %v784
      %v2527 = vadd.f32 %v2495, %v784
      %v2528 = vadd.f32 %v2496, %v784
      %v2529 = vadd.f32 %v2497, %v784
      %v2530 = vadd.f32 %v2498, %v784
      %v2531 = vadd.f32 %v2499, %v784
      %v2532 = vadd.f32 %v2500, %v784
      %v2533 = vadd.f32 %v2501, %v784
      %v2534 = vadd.f32 %v2502, %v784
      %v2535 = vadd.f32 %v2503, %v784
      %v2536 = vadd.f32 %v2504, %v784
      %s2537 = scalar_lea.vmem %s5, 128
      %v2538 = vld [vmem:[%s2537] sm:$0xff]
      %v2539 = vld [vmem:[%s2537 + $0x8] sm:$0xff]
      %v2540 = vld [vmem:[%s2537 + $0x10] sm:$0xff]
      %v2541 = vld [vmem:[%s2537 + $0x18] sm:$0xff]
      %v2543 = vsel %vm380, %v2505, 0
      %v2546 = vsel %vm380, %v2506, 0
      %v2549 = vsel %vm380, %v2507, 0
      %v2552 = vsel %vm380, %v2508, 0
      %v2555 = vsel %vm380, %v2509, 0
      %v2558 = vsel %vm380, %v2510, 0
      %v2561 = vsel %vm380, %v2511, 0
      %v2564 = vsel %vm380, %v2512, 0
      %v2567 = vsel %vm380, %v2513, 0
      %v2570 = vsel %vm380, %v2514, 0
      %v2573 = vsel %vm380, %v2515, 0
      %v2576 = vsel %vm380, %v2516, 0
      %v2579 = vsel %vm380, %v2517, 0
      %v2582 = vsel %vm380, %v2518, 0
      %v2585 = vsel %vm380, %v2519, 0
      %v2588 = vsel %vm380, %v2520, 0
      %v2591 = vsel %vm380, %v2521, 0
      %v2594 = vsel %vm380, %v2522, 0
      %v2597 = vsel %vm380, %v2523, 0
      %v2600 = vsel %vm380, %v2524, 0
      %v2603 = vsel %vm380, %v2525, 0
      %v2606 = vsel %vm380, %v2526, 0
      %v2609 = vsel %vm380, %v2527, 0
      %v2612 = vsel %vm380, %v2528, 0
      %v2615 = vsel %vm380, %v2529, 0
      %v2618 = vsel %vm380, %v2530, 0
      %v2621 = vsel %vm380, %v2531, 0
      %v2624 = vsel %vm380, %v2532, 0
      %v2627 = vsel %vm380, %v2533, 0
      %v2630 = vsel %vm380, %v2534, 0
      %v2633 = vsel %vm380, %v2535, 0
      %v2636 = vsel %vm380, %v2536, 0
      %2638 = vmatprep.subr.mxu0 0.0
      %2639 = vmatpush1.msra.mxu0 %v2538
      %2640 = vmatprep.subr.mxu0 0.0
      %2641 = vmatpush1.msra.mxu0 %v2539
      %2642 = vmatprep.subr.mxu0 0.0
      %2643 = vmatpush1.msra.mxu0 %v2540
      %2644 = vmatprep.subr.mxu0 0.0
      %2645 = vmatpush1.msra.mxu0 %v2541
      %2646 = vmatprep.subr.mxu0 0.0
      %2647 = vmatpush1.msra.mxu0 0.0
      %2648 = vmatprep.subr.mxu0 0.0
      %2649 = vmatpush1.msra.mxu0 0.0
      %2650 = vmatprep.subr.mxu0 0.0
      %2651 = vmatpush1.msra.mxu0 0.0
      %2652 = vmatprep.subr.mxu0 0.0
      %2653 = vmatpush1.msra.mxu0 0.0
      %2654 = vmatprep.subr.mxu0 0.0
      %2655 = vmatpush1.msra.mxu0 0.0
      %2656 = vmatprep.subr.mxu0 0.0
      %2657 = vmatpush1.msra.mxu0 0.0
      %2658 = vmatprep.subr.mxu0 0.0
      %2659 = vmatpush1.msra.mxu0 0.0
      %2660 = vmatprep.subr.mxu0 0.0
      %2661 = vmatpush1.msra.mxu0 0.0
      %2662 = vmatprep.subr.mxu0 0.0
      %2663 = vmatpush1.msra.mxu0 0.0
      %2664 = vmatprep.subr.mxu0 0.0
      %2665 = vmatpush1.msra.mxu0 0.0
      %2666 = vmatprep.subr.mxu0 0.0
      %2667 = vmatpush1.msra.mxu0 0.0
      %2668 = vmatprep.subr.mxu0 0.0
      %2669 = vmatpush1.msra.mxu0 0.0
      %2670 = vmatprep.subr.mxu0 0.0
      %2671 = vmatpush1.msra.mxu0 0.0
      %2672 = vmatprep.subr.mxu0 0.0
      %2673 = vmatpush1.msra.mxu0 0.0
      %2674 = vmatprep.subr.mxu0 0.0
      %2675 = vmatpush1.msra.mxu0 0.0
      %2676 = vmatprep.subr.mxu0 0.0
      %2677 = vmatpush1.msra.mxu0 0.0
      %2678 = vmatprep.subr.mxu0 0.0
      %2679 = vmatpush1.msra.mxu0 0.0
      %2680 = vmatprep.subr.mxu0 0.0
      %2681 = vmatpush1.msra.mxu0 0.0
      %2682 = vmatprep.subr.mxu0 0.0
      %2683 = vmatpush1.msra.mxu0 0.0
      %2684 = vmatprep.subr.mxu0 0.0
      %2685 = vmatpush1.msra.mxu0 0.0
      %2686 = vmatprep.subr.mxu0 0.0
      %2687 = vmatpush1.msra.mxu0 0.0
      %2688 = vmatprep.subr.mxu0 0.0
      %2689 = vmatpush1.msra.mxu0 0.0
      %2690 = vmatprep.subr.mxu0 0.0
      %2691 = vmatpush1.msra.mxu0 0.0
      %2692 = vmatprep.subr.mxu0 0.0
      %2693 = vmatpush1.msra.mxu0 0.0
      %2694 = vmatprep.subr.mxu0 0.0
      %2695 = vmatpush1.msra.mxu0 0.0
      %2696 = vmatprep.subr.mxu0 0.0
      %2697 = vmatpush1.msra.mxu0 0.0
      %2698 = vmatprep.subr.mxu0 0.0
      %2699 = vmatpush1.msra.mxu0 0.0
      %2700 = vmatprep.subr.mxu0 0.0
      %2701 = vmatpush1.msra.mxu0 0.0
      %2702 = vmatprep.mubr.f32.mxu0 0.0
      %2703 = vmatmul.mubr.f32.gmra.mrb[0].mxu0 %v2543
      %v2704 = vpop.f32.mrb[0].mxu0
      %v2705 = vadd.f32 0.0, %v2704
      %v2706 = vpop.f32.mrb[0].mxu0
      %2707 = vmatprep.mubr.f32.mxu0 0.0
      %2708 = vmatmul.mubr.f32.gmra.mrb[0].mxu0 %v2546
      %v2709 = vpop.f32.mrb[0].mxu0
      %v2710 = vadd.f32 0.0, %v2709
      %v2711 = vpop.f32.mrb[0].mxu0
      %2712 = vmatprep.mubr.f32.mxu0 0.0
      %2713 = vmatmul.mubr.f32.gmra.mrb[0].mxu0 %v2549
      %v2714 = vpop.f32.mrb[0].mxu0
      %v2715 = vadd.f32 0.0, %v2714
      %v2716 = vpop.f32.mrb[0].mxu0
      %2717 = vmatprep.mubr.f32.mxu0 0.0
      %2718 = vmatmul.mubr.f32.gmra.mrb[0].mxu0 %v2552
      %v2719 = vpop.f32.mrb[0].mxu0
      %v2720 = vadd.f32 0.0, %v2719
      %v2721 = vpop.f32.mrb[0].mxu0
      %2722 = vmatprep.mubr.f32.mxu0 0.0
      %2723 = vmatmul.mubr.f32.gmra.mrb[0].mxu0 %v2555
      %v2724 = vpop.f32.mrb[0].mxu0
      %v2725 = vadd.f32 0.0, %v2724
      %v2726 = vpop.f32.mrb[0].mxu0
      %2727 = vmatprep.mubr.f32.mxu0 0.0
      %2728 = vmatmul.mubr.f32.gmra.mrb[0].mxu0 %v2558
      %v2729 = vpop.f32.mrb[0].mxu0
      %v2730 = vadd.f32 0.0, %v2729
      %v2731 = vpop.f32.mrb[0].mxu0
      %2732 = vmatprep.mubr.f32.mxu0 0.0
      %2733 = vmatmul.mubr.f32.gmra.mrb[0].mxu0 %v2561
      %v2734 = vpop.f32.mrb[0].mxu0
      %v2735 = vadd.f32 0.0, %v2734
      %v2736 = vpop.f32.mrb[0].mxu0
      %2737 = vmatprep.mubr.f32.mxu0 0.0
      %2738 = vmatmul.mubr.f32.gmra.mrb[0].mxu0 %v2564
      %v2739 = vpop.f32.mrb[0].mxu0
      %v2740 = vadd.f32 0.0, %v2739
      %v2741 = vpop.f32.mrb[0].mxu0
      %2742 = vmatprep.mubr.f32.mxu0 0.0
      %2743 = vmatmul.mubr.f32.gmra.mrb[0].mxu0 %v2567
      %v2744 = vpop.f32.mrb[0].mxu0
      %v2745 = vadd.f32 0.0, %v2744
      %v2746 = vpop.f32.mrb[0].mxu0
      %2747 = vmatprep.mubr.f32.mxu0 0.0
      %2748 = vmatmul.mubr.f32.gmra.mrb[0].mxu0 %v2570
      %v2749 = vpop.f32.mrb[0].mxu0
      %v2750 = vadd.f32 0.0, %v2749
      %v2751 = vpop.f32.mrb[0].mxu0
      %2752 = vmatprep.mubr.f32.mxu0 0.0
      %2753 = vmatmul.mubr.f32.gmra.mrb[0].mxu0 %v2573
      %v2754 = vpop.f32.mrb[0].mxu0
      %v2755 = vadd.f32 0.0, %v2754
      %v2756 = vpop.f32.mrb[0].mxu0
      %2757 = vmatprep.mubr.f32.mxu0 0.0
      %2758 = vmatmul.mubr.f32.gmra.mrb[0].mxu0 %v2576
      %v2759 = vpop.f32.mrb[0].mxu0
      %v2760 = vadd.f32 0.0, %v2759
      %v2761 = vpop.f32.mrb[0].mxu0
      %2762 = vmatprep.mubr.f32.mxu0 0.0
      %2763 = vmatmul.mubr.f32.gmra.mrb[0].mxu0 %v2579
      %v2764 = vpop.f32.mrb[0].mxu0
      %v2765 = vadd.f32 0.0, %v2764
      %v2766 = vpop.f32.mrb[0].mxu0
      %2767 = vmatprep.mubr.f32.mxu0 0.0
      %2768 = vmatmul.mubr.f32.gmra.mrb[0].mxu0 %v2582
      %v2769 = vpop.f32.mrb[0].mxu0
      %v2770 = vadd.f32 0.0, %v2769
      %v2771 = vpop.f32.mrb[0].mxu0
      %2772 = vmatprep.mubr.f32.mxu0 0.0
      %2773 = vmatmul.mubr.f32.gmra.mrb[0].mxu0 %v2585
      %v2774 = vpop.f32.mrb[0].mxu0
      %v2775 = vadd.f32 0.0, %v2774
      %v2776 = vpop.f32.mrb[0].mxu0
      %2777 = vmatprep.mubr.f32.mxu0 0.0
      %2778 = vmatmul.mubr.f32.gmra.mrb[0].mxu0 %v2588
      %v2779 = vpop.f32.mrb[0].mxu0
      %v2780 = vadd.f32 0.0, %v2779
      %v2781 = vpop.f32.mrb[0].mxu0
      %2782 = vmatprep.mubr.f32.mxu0 0.0
      %2783 = vmatmul.mubr.f32.gmra.mrb[0].mxu0 %v2591
      %v2784 = vpop.f32.mrb[0].mxu0
      %v2785 = vadd.f32 0.0, %v2784
      %v2786 = vpop.f32.mrb[0].mxu0
      %2787 = vmatprep.mubr.f32.mxu0 0.0
      %2788 = vmatmul.mubr.f32.gmra.mrb[0].mxu0 %v2594
      %v2789 = vpop.f32.mrb[0].mxu0
      %v2790 = vadd.f32 0.0, %v2789
      %v2791 = vpop.f32.mrb[0].mxu0
      %2792 = vmatprep.mubr.f32.mxu0 0.0
      %2793 = vmatmul.mubr.f32.gmra.mrb[0].mxu0 %v2597
      %v2794 = vpop.f32.mrb[0].mxu0
      %v2795 = vadd.f32 0.0, %v2794
      %v2796 = vpop.f32.mrb[0].mxu0
      %2797 = vmatprep.mubr.f32.mxu0 0.0
      %2798 = vmatmul.mubr.f32.gmra.mrb[0].mxu0 %v2600
      %v2799 = vpop.f32.mrb[0].mxu0
      %v2800 = vadd.f32 0.0, %v2799
      %v2801 = vpop.f32.mrb[0].mxu0
      %2802 = vmatprep.mubr.f32.mxu0 0.0
      %2803 = vmatmul.mubr.f32.gmra.mrb[0].mxu0 %v2603
      %v2804 = vpop.f32.mrb[0].mxu0
      %v2805 = vadd.f32 0.0, %v2804
      %v2806 = vpop.f32.mrb[0].mxu0
      %2807 = vmatprep.mubr.f32.mxu0 0.0
      %2808 = vmatmul.mubr.f32.gmra.mrb[0].mxu0 %v2606
      %v2809 = vpop.f32.mrb[0].mxu0
      %v2810 = vadd.f32 0.0, %v2809
      %v2811 = vpop.f32.mrb[0].mxu0
      %2812 = vmatprep.mubr.f32.mxu0 0.0
      %2813 = vmatmul.mubr.f32.gmra.mrb[0].mxu0 %v2609
      %v2814 = vpop.f32.mrb[0].mxu0
      %v2815 = vadd.f32 0.0, %v2814
      %v2816 = vpop.f32.mrb[0].mxu0
      %2817 = vmatprep.mubr.f32.mxu0 0.0
      %2818 = vmatmul.mubr.f32.gmra.mrb[0].mxu0 %v2612
      %v2819 = vpop.f32.mrb[0].mxu0
      %v2820 = vadd.f32 0.0, %v2819
      %v2821 = vpop.f32.mrb[0].mxu0
      %2822 = vmatprep.mubr.f32.mxu0 0.0
      %2823 = vmatmul.mubr.f32.gmra.mrb[0].mxu0 %v2615
      %v2824 = vpop.f32.mrb[0].mxu0
      %v2825 = vadd.f32 0.0, %v2824
      %v2826 = vpop.f32.mrb[0].mxu0
      %2827 = vmatprep.mubr.f32.mxu0 0.0
      %2828 = vmatmul.mubr.f32.gmra.mrb[0].mxu0 %v2618
      %v2829 = vpop.f32.mrb[0].mxu0
      %v2830 = vadd.f32 0.0, %v2829
      %v2831 = vpop.f32.mrb[0].mxu0
      %2832 = vmatprep.mubr.f32.mxu0 0.0
      %2833 = vmatmul.mubr.f32.gmra.mrb[0].mxu0 %v2621
      %v2834 = vpop.f32.mrb[0].mxu0
      %v2835 = vadd.f32 0.0, %v2834
      %v2836 = vpop.f32.mrb[0].mxu0
      %2837 = vmatprep.mubr.f32.mxu0 0.0
      %2838 = vmatmul.mubr.f32.gmra.mrb[0].mxu0 %v2624
      %v2839 = vpop.f32.mrb[0].mxu0
      %v2840 = vadd.f32 0.0, %v2839
      %v2841 = vpop.f32.mrb[0].mxu0
      %2842 = vmatprep.mubr.f32.mxu0 0.0
      %2843 = vmatmul.mubr.f32.gmra.mrb[0].mxu0 %v2627
      %v2844 = vpop.f32.mrb[0].mxu0
      %v2845 = vadd.f32 0.0, %v2844
      %v2846 = vpop.f32.mrb[0].mxu0
      %2847 = vmatprep.mubr.f32.mxu0 0.0
      %2848 = vmatmul.mubr.f32.gmra.mrb[0].mxu0 %v2630
      %v2849 = vpop.f32.mrb[0].mxu0
      %v2850 = vadd.f32 0.0, %v2849
      %v2851 = vpop.f32.mrb[0].mxu0
      %2852 = vmatprep.mubr.f32.mxu0 0.0
      %2853 = vmatmul.mubr.f32.gmra.mrb[0].mxu0 %v2633
      %v2854 = vpop.f32.mrb[0].mxu0
      %v2855 = vadd.f32 0.0, %v2854
      %v2856 = vpop.f32.mrb[0].mxu0
      %2857 = vmatprep.mubr.f32.mxu0 0.0
      %2858 = vmatmul.mubr.f32.gmra.mrb[0].mxu0 %v2636
      %v2859 = vpop.f32.mrb[0].mxu0
      %v2860 = vadd.f32 0.0, %v2859
      %v2861 = vpop.f32.mrb[0].mxu0
      %2862 = vdwg.mxu0
      %v2863 = vadd.f32 %v2441, %v2705
      %v2864 = vadd.f32 %v2442, %v2710
      %v2865 = vadd.f32 %v2443, %v2715
      %v2866 = vadd.f32 %v2444, %v2720
      %v2867 = vadd.f32 %v2445, %v2725
      %v2868 = vadd.f32 %v2446, %v2730
      %v2869 = vadd.f32 %v2447, %v2735
      %v2870 = vadd.f32 %v2448, %v2740
      %v2871 = vadd.f32 %v2449, %v2745
      %v2872 = vadd.f32 %v2450, %v2750
      %v2873 = vadd.f32 %v2451, %v2755
      %v2874 = vadd.f32 %v2452, %v2760
      %v2875 = vadd.f32 %v2453, %v2765
      %v2876 = vadd.f32 %v2454, %v2770
      %v2877 = vadd.f32 %v2455, %v2775
      %v2878 = vadd.f32 %v2456, %v2780
      %v2879 = vadd.f32 %v2457, %v2785
      %v2880 = vadd.f32 %v2458, %v2790
      %v2881 = vadd.f32 %v2459, %v2795
      %v2882 = vadd.f32 %v2460, %v2800
      %v2883 = vadd.f32 %v2461, %v2805
      %v2884 = vadd.f32 %v2462, %v2810
      %v2885 = vadd.f32 %v2463, %v2815
      %v2886 = vadd.f32 %v2464, %v2820
      %v2887 = vadd.f32 %v2465, %v2825
      %v2888 = vadd.f32 %v2466, %v2830
      %v2889 = vadd.f32 %v2467, %v2835
      %v2890 = vadd.f32 %v2468, %v2840
      %v2891 = vadd.f32 %v2469, %v2845
      %v2892 = vadd.f32 %v2470, %v2850
      %v2893 = vadd.f32 %v2471, %v2855
      %v2894 = vadd.f32 %v2472, %v2860
      %v2895 = vld [vmem:[%s347 + $0x2] sm:$0xff]
      %v2896 = vld [vmem:[%s347 + $0xa] sm:$0xff]
      %v2897 = vld [vmem:[%s347 + $0x1a] sm:$0xff]
      %v2898 = vld [vmem:[%s347 + $0x22] sm:$0xff]
      %v2899 = vld [vmem:[%s347 + $0x32] sm:$0xff]
      %v2900 = vld [vmem:[%s347 + $0x3a] sm:$0xff]
      %v2901 = vld [vmem:[%s347 + $0x4a] sm:$0xff]
      %v2902 = vld [vmem:[%s347 + $0x52] sm:$0xff]
      %v2903 = vld [vmem:[%s347 + $0x62] sm:$0xff]
      %v2904 = vld [vmem:[%s347 + $0x6a] sm:$0xff]
      %v2905 = vld [vmem:[%s347 + $0x7a] sm:$0xff]
      %v2906 = vld [vmem:[%s347 + $0x82] sm:$0xff]
      %v2907 = vld [vmem:[%s347 + $0x92] sm:$0xff]
      %v2908 = vld [vmem:[%s347 + $0x9a] sm:$0xff]
      %v2909 = vld [vmem:[%s347 + $0xaa] sm:$0xff]
      %v2910 = vld [vmem:[%s347 + $0xb2] sm:$0xff]
      %v2911 = vld [vmem:[%s347 + $0xc2] sm:$0xff]
      %v2912 = vld [vmem:[%s347 + $0xca] sm:$0xff]
      %v2913 = vld [vmem:[%s347 + $0xda] sm:$0xff]
      %v2914 = vld [vmem:[%s347 + $0xe2] sm:$0xff]
      %v2915 = vld [vmem:[%s347 + $0xf2] sm:$0xff]
      %v2916 = vld [vmem:[%s347 + $0xfa] sm:$0xff]
      %v2917 = vld [vmem:[%s347 + $0x10a] sm:$0xff]
      %v2918 = vld [vmem:[%s347 + $0x112] sm:$0xff]
      %v2919 = vld [vmem:[%s347 + $0x122] sm:$0xff]
      %v2920 = vld [vmem:[%s347 + $0x12a] sm:$0xff]
      %v2921 = vld [vmem:[%s347 + $0x13a] sm:$0xff]
      %v2922 = vld [vmem:[%s347 + $0x142] sm:$0xff]
      %v2923 = vld [vmem:[%s347 + $0x152] sm:$0xff]
      %v2924 = vld [vmem:[%s347 + $0x15a] sm:$0xff]
      %v2925 = vld [vmem:[%s347 + $0x16a] sm:$0xff]
      %v2926 = vld [vmem:[%s347 + $0x172] sm:$0xff]
      %v2927 = vmul.f32 %v2895, %v746
      %v2928 = vmul.f32 %v2896, %v746
      %v2929 = vmul.f32 %v2897, %v746
      %v2930 = vmul.f32 %v2898, %v746
      %v2931 = vmul.f32 %v2899, %v746
      %v2932 = vmul.f32 %v2900, %v746
      %v2933 = vmul.f32 %v2901, %v746
      %v2934 = vmul.f32 %v2902, %v746
      %v2935 = vmul.f32 %v2903, %v746
      %v2936 = vmul.f32 %v2904, %v746
      %v2937 = vmul.f32 %v2905, %v746
      %v2938 = vmul.f32 %v2906, %v746
      %v2939 = vmul.f32 %v2907, %v746
      %v2940 = vmul.f32 %v2908, %v746
      %v2941 = vmul.f32 %v2909, %v746
      %v2942 = vmul.f32 %v2910, %v746
      %v2943 = vmul.f32 %v2911, %v746
      %v2944 = vmul.f32 %v2912, %v746
      %v2945 = vmul.f32 %v2913, %v746
      %v2946 = vmul.f32 %v2914, %v746
      %v2947 = vmul.f32 %v2915, %v746
      %v2948 = vmul.f32 %v2916, %v746
      %v2949 = vmul.f32 %v2917, %v746
      %v2950 = vmul.f32 %v2918, %v746
      %v2951 = vmul.f32 %v2919, %v746
      %v2952 = vmul.f32 %v2920, %v746
      %v2953 = vmul.f32 %v2921, %v746
      %v2954 = vmul.f32 %v2922, %v746
      %v2955 = vmul.f32 %v2923, %v746
      %v2956 = vmul.f32 %v2924, %v746
      %v2957 = vmul.f32 %v2925, %v746
      %v2958 = vmul.f32 %v2926, %v746
      %v2959 = vadd.f32 %v2927, %v784
      %v2960 = vadd.f32 %v2928, %v784
      %v2961 = vadd.f32 %v2929, %v784
      %v2962 = vadd.f32 %v2930, %v784
      %v2963 = vadd.f32 %v2931, %v784
      %v2964 = vadd.f32 %v2932, %v784
      %v2965 = vadd.f32 %v2933, %v784
      %v2966 = vadd.f32 %v2934, %v784
      %v2967 = vadd.f32 %v2935, %v784
      %v2968 = vadd.f32 %v2936, %v784
      %v2969 = vadd.f32 %v2937, %v784
      %v2970 = vadd.f32 %v2938, %v784
      %v2971 = vadd.f32 %v2939, %v784
      %v2972 = vadd.f32 %v2940, %v784
      %v2973 = vadd.f32 %v2941, %v784
      %v2974 = vadd.f32 %v2942, %v784
      %v2975 = vadd.f32 %v2943, %v784
      %v2976 = vadd.f32 %v2944, %v784
      %v2977 = vadd.f32 %v2945, %v784
      %v2978 = vadd.f32 %v2946, %v784
      %v2979 = vadd.f32 %v2947, %v784
      %v2980 = vadd.f32 %v2948, %v784
      %v2981 = vadd.f32 %v2949, %v784
      %v2982 = vadd.f32 %v2950, %v784
      %v2983 = vadd.f32 %v2951, %v784
      %v2984 = vadd.f32 %v2952, %v784
      %v2985 = vadd.f32 %v2953, %v784
      %v2986 = vadd.f32 %v2954, %v784
      %v2987 = vadd.f32 %v2955, %v784
      %v2988 = vadd.f32 %v2956, %v784
      %v2989 = vadd.f32 %v2957, %v784
      %v2990 = vadd.f32 %v2958, %v784
      %s2991 = scalar_lea.vmem %s5, 160
      %v2992 = vld [vmem:[%s2991] sm:$0xff]
      %v2993 = vld [vmem:[%s2991 + $0x8] sm:$0xff]
      %v2994 = vld [vmem:[%s2991 + $0x10] sm:$0xff]
      %v2995 = vld [vmem:[%s2991 + $0x18] sm:$0xff]
      %v2997 = vsel %vm380, %v2959, 0
      %v3000 = vsel %vm380, %v2960, 0
      %v3003 = vsel %vm380, %v2961, 0
      %v3006 = vsel %vm380, %v2962, 0
      %v3009 = vsel %vm380, %v2963, 0
      %v3012 = vsel %vm380, %v2964, 0
      %v3015 = vsel %vm380, %v2965, 0
      %v3018 = vsel %vm380, %v2966, 0
      %v3021 = vsel %vm380, %v2967, 0
      %v3024 = vsel %vm380, %v2968, 0
      %v3027 = vsel %vm380, %v2969, 0
      %v3030 = vsel %vm380, %v2970, 0
      %v3033 = vsel %vm380, %v2971, 0
      %v3036 = vsel %vm380, %v2972, 0
      %v3039 = vsel %vm380, %v2973, 0
      %v3042 = vsel %vm380, %v2974, 0
      %v3045 = vsel %vm380, %v2975, 0
      %v3048 = vsel %vm380, %v2976, 0
      %v3051 = vsel %vm380, %v2977, 0
      %v3054 = vsel %vm380, %v2978, 0
      %v3057 = vsel %vm380, %v2979, 0
      %v3060 = vsel %vm380, %v2980, 0
      %v3063 = vsel %vm380, %v2981, 0
      %v3066 = vsel %vm380, %v2982, 0
      %v3069 = vsel %vm380, %v2983, 0
      %v3072 = vsel %vm380, %v2984, 0
      %v3075 = vsel %vm380, %v2985, 0
      %v3078 = vsel %vm380, %v2986, 0
      %v3081 = vsel %vm380, %v2987, 0
      %v3084 = vsel %vm380, %v2988, 0
      %v3087 = vsel %vm380, %v2989, 0
      %v3090 = vsel %vm380, %v2990, 0
      %3092 = vmatprep.subr.mxu0 0.0
      %3093 = vmatpush1.msra.mxu0 %v2992
      %3094 = vmatprep.subr.mxu0 0.0
      %3095 = vmatpush1.msra.mxu0 %v2993
      %3096 = vmatprep.subr.mxu0 0.0
      %3097 = vmatpush1.msra.mxu0 %v2994
      %3098 = vmatprep.subr.mxu0 0.0
      %3099 = vmatpush1.msra.mxu0 %v2995
      %3100 = vmatprep.subr.mxu0 0.0
      %3101 = vmatpush1.msra.mxu0 0.0
      %3102 = vmatprep.subr.mxu0 0.0
      %3103 = vmatpush1.msra.mxu0 0.0
      %3104 = vmatprep.subr.mxu0 0.0
      %3105 = vmatpush1.msra.mxu0 0.0
      %3106 = vmatprep.subr.mxu0 0.0
      %3107 = vmatpush1.msra.mxu0 0.0
      %3108 = vmatprep.subr.mxu0 0.0
      %3109 = vmatpush1.msra.mxu0 0.0
      %3110 = vmatprep.subr.mxu0 0.0
      %3111 = vmatpush1.msra.mxu0 0.0
      %3112 = vmatprep.subr.mxu0 0.0
      %3113 = vmatpush1.msra.mxu0 0.0
      %3114 = vmatprep.subr.mxu0 0.0
      %3115 = vmatpush1.msra.mxu0 0.0
      %3116 = vmatprep.subr.mxu0 0.0
      %3117 = vmatpush1.msra.mxu0 0.0
      %3118 = vmatprep.subr.mxu0 0.0
      %3119 = vmatpush1.msra.mxu0 0.0
      %3120 = vmatprep.subr.mxu0 0.0
      %3121 = vmatpush1.msra.mxu0 0.0
      %3122 = vmatprep.subr.mxu0 0.0
      %3123 = vmatpush1.msra.mxu0 0.0
      %3124 = vmatprep.subr.mxu0 0.0
      %3125 = vmatpush1.msra.mxu0 0.0
      %3126 = vmatprep.subr.mxu0 0.0
      %3127 = vmatpush1.msra.mxu0 0.0
      %3128 = vmatprep.subr.mxu0 0.0
      %3129 = vmatpush1.msra.mxu0 0.0
      %3130 = vmatprep.subr.mxu0 0.0
      %3131 = vmatpush1.msra.mxu0 0.0
      %3132 = vmatprep.subr.mxu0 0.0
      %3133 = vmatpush1.msra.mxu0 0.0
      %3134 = vmatprep.subr.mxu0 0.0
      %3135 = vmatpush1.msra.mxu0 0.0
      %3136 = vmatprep.subr.mxu0 0.0
      %3137 = vmatpush1.msra.mxu0 0.0
      %3138 = vmatprep.subr.mxu0 0.0
      %3139 = vmatpush1.msra.mxu0 0.0
      %3140 = vmatprep.subr.mxu0 0.0
      %3141 = vmatpush1.msra.mxu0 0.0
      %3142 = vmatprep.subr.mxu0 0.0
      %3143 = vmatpush1.msra.mxu0 0.0
      %3144 = vmatprep.subr.mxu0 0.0
      %3145 = vmatpush1.msra.mxu0 0.0
      %3146 = vmatprep.subr.mxu0 0.0
      %3147 = vmatpush1.msra.mxu0 0.0
      %3148 = vmatprep.subr.mxu0 0.0
      %3149 = vmatpush1.msra.mxu0 0.0
      %3150 = vmatprep.subr.mxu0 0.0
      %3151 = vmatpush1.msra.mxu0 0.0
      %3152 = vmatprep.subr.mxu0 0.0
      %3153 = vmatpush1.msra.mxu0 0.0
      %3154 = vmatprep.subr.mxu0 0.0
      %3155 = vmatpush1.msra.mxu0 0.0
      %3156 = vmatprep.mubr.f32.mxu0 0.0
      %3157 = vmatmul.mubr.f32.gmra.mrb[0].mxu0 %v2997
      %v3158 = vpop.f32.mrb[0].mxu0
      %v3159 = vadd.f32 0.0, %v3158
      %v3160 = vpop.f32.mrb[0].mxu0
      %3161 = vmatprep.mubr.f32.mxu0 0.0
      %3162 = vmatmul.mubr.f32.gmra.mrb[0].mxu0 %v3000
      %v3163 = vpop.f32.mrb[0].mxu0
      %v3164 = vadd.f32 0.0, %v3163
      %v3165 = vpop.f32.mrb[0].mxu0
      %3166 = vmatprep.mubr.f32.mxu0 0.0
      %3167 = vmatmul.mubr.f32.gmra.mrb[0].mxu0 %v3003
      %v3168 = vpop.f32.mrb[0].mxu0
      %v3169 = vadd.f32 0.0, %v3168
      %v3170 = vpop.f32.mrb[0].mxu0
      %3171 = vmatprep.mubr.f32.mxu0 0.0
      %3172 = vmatmul.mubr.f32.gmra.mrb[0].mxu0 %v3006
      %v3173 = vpop.f32.mrb[0].mxu0
      %v3174 = vadd.f32 0.0, %v3173
      %v3175 = vpop.f32.mrb[0].mxu0
      %3176 = vmatprep.mubr.f32.mxu0 0.0
      %3177 = vmatmul.mubr.f32.gmra.mrb[0].mxu0 %v3009
      %v3178 = vpop.f32.mrb[0].mxu0
      %v3179 = vadd.f32 0.0, %v3178
      %v3180 = vpop.f32.mrb[0].mxu0
      %3181 = vmatprep.mubr.f32.mxu0 0.0
      %3182 = vmatmul.mubr.f32.gmra.mrb[0].mxu0 %v3012
      %v3183 = vpop.f32.mrb[0].mxu0
      %v3184 = vadd.f32 0.0, %v3183
      %v3185 = vpop.f32.mrb[0].mxu0
      %3186 = vmatprep.mubr.f32.mxu0 0.0
      %3187 = vmatmul.mubr.f32.gmra.mrb[0].mxu0 %v3015
      %v3188 = vpop.f32.mrb[0].mxu0
      %v3189 = vadd.f32 0.0, %v3188
      %v3190 = vpop.f32.mrb[0].mxu0
      %3191 = vmatprep.mubr.f32.mxu0 0.0
      %3192 = vmatmul.mubr.f32.gmra.mrb[0].mxu0 %v3018
      %v3193 = vpop.f32.mrb[0].mxu0
      %v3194 = vadd.f32 0.0, %v3193
      %v3195 = vpop.f32.mrb[0].mxu0
      %3196 = vmatprep.mubr.f32.mxu0 0.0
      %3197 = vmatmul.mubr.f32.gmra.mrb[0].mxu0 %v3021
      %v3198 = vpop.f32.mrb[0].mxu0
      %v3199 = vadd.f32 0.0, %v3198
      %v3200 = vpop.f32.mrb[0].mxu0
      %3201 = vmatprep.mubr.f32.mxu0 0.0
      %3202 = vmatmul.mubr.f32.gmra.mrb[0].mxu0 %v3024
      %v3203 = vpop.f32.mrb[0].mxu0
      %v3204 = vadd.f32 0.0, %v3203
      %v3205 = vpop.f32.mrb[0].mxu0
      %3206 = vmatprep.mubr.f32.mxu0 0.0
      %3207 = vmatmul.mubr.f32.gmra.mrb[0].mxu0 %v3027
      %v3208 = vpop.f32.mrb[0].mxu0
      %v3209 = vadd.f32 0.0, %v3208
      %v3210 = vpop.f32.mrb[0].mxu0
      %3211 = vmatprep.mubr.f32.mxu0 0.0
      %3212 = vmatmul.mubr.f32.gmra.mrb[0].mxu0 %v3030
      %v3213 = vpop.f32.mrb[0].mxu0
      %v3214 = vadd.f32 0.0, %v3213
      %v3215 = vpop.f32.mrb[0].mxu0
      %3216 = vmatprep.mubr.f32.mxu0 0.0
      %3217 = vmatmul.mubr.f32.gmra.mrb[0].mxu0 %v3033
      %v3218 = vpop.f32.mrb[0].mxu0
      %v3219 = vadd.f32 0.0, %v3218
      %v3220 = vpop.f32.mrb[0].mxu0
      %3221 = vmatprep.mubr.f32.mxu0 0.0
      %3222 = vmatmul.mubr.f32.gmra.mrb[0].mxu0 %v3036
      %v3223 = vpop.f32.mrb[0].mxu0
      %v3224 = vadd.f32 0.0, %v3223
      %v3225 = vpop.f32.mrb[0].mxu0
      %3226 = vmatprep.mubr.f32.mxu0 0.0
      %3227 = vmatmul.mubr.f32.gmra.mrb[0].mxu0 %v3039
      %v3228 = vpop.f32.mrb[0].mxu0
      %v3229 = vadd.f32 0.0, %v3228
      %v3230 = vpop.f32.mrb[0].mxu0
      %3231 = vmatprep.mubr.f32.mxu0 0.0
      %3232 = vmatmul.mubr.f32.gmra.mrb[0].mxu0 %v3042
      %v3233 = vpop.f32.mrb[0].mxu0
      %v3234 = vadd.f32 0.0, %v3233
      %v3235 = vpop.f32.mrb[0].mxu0
      %3236 = vmatprep.mubr.f32.mxu0 0.0
      %3237 = vmatmul.mubr.f32.gmra.mrb[0].mxu0 %v3045
      %v3238 = vpop.f32.mrb[0].mxu0
      %v3239 = vadd.f32 0.0, %v3238
      %v3240 = vpop.f32.mrb[0].mxu0
      %3241 = vmatprep.mubr.f32.mxu0 0.0
      %3242 = vmatmul.mubr.f32.gmra.mrb[0].mxu0 %v3048
      %v3243 = vpop.f32.mrb[0].mxu0
      %v3244 = vadd.f32 0.0, %v3243
      %v3245 = vpop.f32.mrb[0].mxu0
      %3246 = vmatprep.mubr.f32.mxu0 0.0
      %3247 = vmatmul.mubr.f32.gmra.mrb[0].mxu0 %v3051
      %v3248 = vpop.f32.mrb[0].mxu0
      %v3249 = vadd.f32 0.0, %v3248
      %v3250 = vpop.f32.mrb[0].mxu0
      %3251 = vmatprep.mubr.f32.mxu0 0.0
      %3252 = vmatmul.mubr.f32.gmra.mrb[0].mxu0 %v3054
      %v3253 = vpop.f32.mrb[0].mxu0
      %v3254 = vadd.f32 0.0, %v3253
      %v3255 = vpop.f32.mrb[0].mxu0
      %3256 = vmatprep.mubr.f32.mxu0 0.0
      %3257 = vmatmul.mubr.f32.gmra.mrb[0].mxu0 %v3057
      %v3258 = vpop.f32.mrb[0].mxu0
      %v3259 = vadd.f32 0.0, %v3258
      %v3260 = vpop.f32.mrb[0].mxu0
      %3261 = vmatprep.mubr.f32.mxu0 0.0
      %3262 = vmatmul.mubr.f32.gmra.mrb[0].mxu0 %v3060
      %v3263 = vpop.f32.mrb[0].mxu0
      %v3264 = vadd.f32 0.0, %v3263
      %v3265 = vpop.f32.mrb[0].mxu0
      %3266 = vmatprep.mubr.f32.mxu0 0.0
      %3267 = vmatmul.mubr.f32.gmra.mrb[0].mxu0 %v3063
      %v3268 = vpop.f32.mrb[0].mxu0
      %v3269 = vadd.f32 0.0, %v3268
      %v3270 = vpop.f32.mrb[0].mxu0
      %3271 = vmatprep.mubr.f32.mxu0 0.0
      %3272 = vmatmul.mubr.f32.gmra.mrb[0].mxu0 %v3066
      %v3273 = vpop.f32.mrb[0].mxu0
      %v3274 = vadd.f32 0.0, %v3273
      %v3275 = vpop.f32.mrb[0].mxu0
      %3276 = vmatprep.mubr.f32.mxu0 0.0
      %3277 = vmatmul.mubr.f32.gmra.mrb[0].mxu0 %v3069
      %v3278 = vpop.f32.mrb[0].mxu0
      %v3279 = vadd.f32 0.0, %v3278
      %v3280 = vpop.f32.mrb[0].mxu0
      %3281 = vmatprep.mubr.f32.mxu0 0.0
      %3282 = vmatmul.mubr.f32.gmra.mrb[0].mxu0 %v3072
      %v3283 = vpop.f32.mrb[0].mxu0
      %v3284 = vadd.f32 0.0, %v3283
      %v3285 = vpop.f32.mrb[0].mxu0
      %3286 = vmatprep.mubr.f32.mxu0 0.0
      %3287 = vmatmul.mubr.f32.gmra.mrb[0].mxu0 %v3075
      %v3288 = vpop.f32.mrb[0].mxu0
      %v3289 = vadd.f32 0.0, %v3288
      %v3290 = vpop.f32.mrb[0].mxu0
      %3291 = vmatprep.mubr.f32.mxu0 0.0
      %3292 = vmatmul.mubr.f32.gmra.mrb[0].mxu0 %v3078
      %v3293 = vpop.f32.mrb[0].mxu0
      %v3294 = vadd.f32 0.0, %v3293
      %v3295 = vpop.f32.mrb[0].mxu0
      %3296 = vmatprep.mubr.f32.mxu0 0.0
      %3297 = vmatmul.mubr.f32.gmra.mrb[0].mxu0 %v3081
      %v3298 = vpop.f32.mrb[0].mxu0
      %v3299 = vadd.f32 0.0, %v3298
      %v3300 = vpop.f32.mrb[0].mxu0
      %3301 = vmatprep.mubr.f32.mxu0 0.0
      %3302 = vmatmul.mubr.f32.gmra.mrb[0].mxu0 %v3084
      %v3303 = vpop.f32.mrb[0].mxu0
      %v3304 = vadd.f32 0.0, %v3303
      %v3305 = vpop.f32.mrb[0].mxu0
      %3306 = vmatprep.mubr.f32.mxu0 0.0
      %3307 = vmatmul.mubr.f32.gmra.mrb[0].mxu0 %v3087
      %v3308 = vpop.f32.mrb[0].mxu0
      %v3309 = vadd.f32 0.0, %v3308
      %v3310 = vpop.f32.mrb[0].mxu0
      %3311 = vmatprep.mubr.f32.mxu0 0.0
      %3312 = vmatmul.mubr.f32.gmra.mrb[0].mxu0 %v3090
      %v3313 = vpop.f32.mrb[0].mxu0
      %v3314 = vadd.f32 0.0, %v3313
      %v3315 = vpop.f32.mrb[0].mxu0
      %3316 = vdwg.mxu0
      %v3317 = vadd.f32 %v2863, %v3159
      %v3318 = vadd.f32 %v2864, %v3164
      %v3319 = vadd.f32 %v2865, %v3169
      %v3320 = vadd.f32 %v2866, %v3174
      %v3321 = vadd.f32 %v2867, %v3179
      %v3322 = vadd.f32 %v2868, %v3184
      %v3323 = vadd.f32 %v2869, %v3189
      %v3324 = vadd.f32 %v2870, %v3194
      %v3325 = vadd.f32 %v2871, %v3199
      %v3326 = vadd.f32 %v2872, %v3204
      %v3327 = vadd.f32 %v2873, %v3209
      %v3328 = vadd.f32 %v2874, %v3214
      %v3329 = vadd.f32 %v2875, %v3219
      %v3330 = vadd.f32 %v2876, %v3224
      %v3331 = vadd.f32 %v2877, %v3229
      %v3332 = vadd.f32 %v2878, %v3234
      %v3333 = vadd.f32 %v2879, %v3239
      %v3334 = vadd.f32 %v2880, %v3244
      %v3335 = vadd.f32 %v2881, %v3249
      %v3336 = vadd.f32 %v2882, %v3254
      %v3337 = vadd.f32 %v2883, %v3259
      %v3338 = vadd.f32 %v2884, %v3264
      %v3339 = vadd.f32 %v2885, %v3269
      %v3340 = vadd.f32 %v2886, %v3274
      %v3341 = vadd.f32 %v2887, %v3279
      %v3342 = vadd.f32 %v2888, %v3284
      %v3343 = vadd.f32 %v2889, %v3289
      %v3344 = vadd.f32 %v2890, %v3294
      %v3345 = vadd.f32 %v2891, %v3299
      %v3346 = vadd.f32 %v2892, %v3304
      %v3347 = vadd.f32 %v2893, %v3309
      %v3348 = vadd.f32 %v2894, %v3314
      %s3349 = scalar_lea.vmem %s338, 48
      %v3350 = vld [vmem:[%s3349] sm:$0xff]
      %v3351 = vld [vmem:[%s3349 + $0x8] sm:$0xff]
      %v3352 = vld [vmem:[%s3349 + $0x18] sm:$0xff]
      %v3353 = vld [vmem:[%s3349 + $0x20] sm:$0xff]
      %v3354 = vld [vmem:[%s3349 + $0x30] sm:$0xff]
      %v3355 = vld [vmem:[%s3349 + $0x38] sm:$0xff]
      %v3356 = vld [vmem:[%s3349 + $0x48] sm:$0xff]
      %v3357 = vld [vmem:[%s3349 + $0x50] sm:$0xff]
      %v3358 = vld [vmem:[%s3349 + $0x60] sm:$0xff]
      %v3359 = vld [vmem:[%s3349 + $0x68] sm:$0xff]
      %v3360 = vld [vmem:[%s3349 + $0x78] sm:$0xff]
      %v3361 = vld [vmem:[%s3349 + $0x80] sm:$0xff]
      %v3362 = vld [vmem:[%s3349 + $0x90] sm:$0xff]
      %v3363 = vld [vmem:[%s3349 + $0x98] sm:$0xff]
      %v3364 = vld [vmem:[%s3349 + $0xa8] sm:$0xff]
      %v3365 = vld [vmem:[%s3349 + $0xb0] sm:$0xff]
      %v3366 = vld [vmem:[%s3349 + $0xc0] sm:$0xff]
      %v3367 = vld [vmem:[%s3349 + $0xc8] sm:$0xff]
      %v3368 = vld [vmem:[%s3349 + $0xd8] sm:$0xff]
      %v3369 = vld [vmem:[%s3349 + $0xe0] sm:$0xff]
      %v3370 = vld [vmem:[%s3349 + $0xf0] sm:$0xff]
      %v3371 = vld [vmem:[%s3349 + $0xf8] sm:$0xff]
      %v3372 = vld [vmem:[%s3349 + $0x108] sm:$0xff]
      %v3373 = vld [vmem:[%s3349 + $0x110] sm:$0xff]
      %v3374 = vld [vmem:[%s3349 + $0x120] sm:$0xff]
      %v3375 = vld [vmem:[%s3349 + $0x128] sm:$0xff]
      %v3376 = vld [vmem:[%s3349 + $0x138] sm:$0xff]
      %v3377 = vld [vmem:[%s3349 + $0x140] sm:$0xff]
      %v3378 = vld [vmem:[%s3349 + $0x150] sm:$0xff]
      %v3379 = vld [vmem:[%s3349 + $0x158] sm:$0xff]
      %v3380 = vld [vmem:[%s3349 + $0x168] sm:$0xff]
      %v3381 = vld [vmem:[%s3349 + $0x170] sm:$0xff]
      %v3382 = vmul.f32 %v3350, %v746
      %v3383 = vmul.f32 %v3351, %v746
      %v3384 = vmul.f32 %v3352, %v746
      %v3385 = vmul.f32 %v3353, %v746
      %v3386 = vmul.f32 %v3354, %v746
      %v3387 = vmul.f32 %v3355, %v746
      %v3388 = vmul.f32 %v3356, %v746
      %v3389 = vmul.f32 %v3357, %v746
      %v3390 = vmul.f32 %v3358, %v746
      %v3391 = vmul.f32 %v3359, %v746
      %v3392 = vmul.f32 %v3360, %v746
      %v3393 = vmul.f32 %v3361, %v746
      %v3394 = vmul.f32 %v3362, %v746
      %v3395 = vmul.f32 %v3363, %v746
      %v3396 = vmul.f32 %v3364, %v746
      %v3397 = vmul.f32 %v3365, %v746
      %v3398 = vmul.f32 %v3366, %v746
      %v3399 = vmul.f32 %v3367, %v746
      %v3400 = vmul.f32 %v3368, %v746
      %v3401 = vmul.f32 %v3369, %v746
      %v3402 = vmul.f32 %v3370, %v746
      %v3403 = vmul.f32 %v3371, %v746
      %v3404 = vmul.f32 %v3372, %v746
      %v3405 = vmul.f32 %v3373, %v746
      %v3406 = vmul.f32 %v3374, %v746
      %v3407 = vmul.f32 %v3375, %v746
      %v3408 = vmul.f32 %v3376, %v746
      %v3409 = vmul.f32 %v3377, %v746
      %v3410 = vmul.f32 %v3378, %v746
      %v3411 = vmul.f32 %v3379, %v746
      %v3412 = vmul.f32 %v3380, %v746
      %v3413 = vmul.f32 %v3381, %v746
      %v3414 = vadd.f32 %v3382, %v784
      %v3415 = vadd.f32 %v3383, %v784
      %v3416 = vadd.f32 %v3384, %v784
      %v3417 = vadd.f32 %v3385, %v784
      %v3418 = vadd.f32 %v3386, %v784
      %v3419 = vadd.f32 %v3387, %v784
      %v3420 = vadd.f32 %v3388, %v784
      %v3421 = vadd.f32 %v3389, %v784
      %v3422 = vadd.f32 %v3390, %v784
      %v3423 = vadd.f32 %v3391, %v784
      %v3424 = vadd.f32 %v3392, %v784
      %v3425 = vadd.f32 %v3393, %v784
      %v3426 = vadd.f32 %v3394, %v784
      %v3427 = vadd.f32 %v3395, %v784
      %v3428 = vadd.f32 %v3396, %v784
      %v3429 = vadd.f32 %v3397, %v784
      %v3430 = vadd.f32 %v3398, %v784
      %v3431 = vadd.f32 %v3399, %v784
      %v3432 = vadd.f32 %v3400, %v784
      %v3433 = vadd.f32 %v3401, %v784
      %v3434 = vadd.f32 %v3402, %v784
      %v3435 = vadd.f32 %v3403, %v784
      %v3436 = vadd.f32 %v3404, %v784
      %v3437 = vadd.f32 %v3405, %v784
      %v3438 = vadd.f32 %v3406, %v784
      %v3439 = vadd.f32 %v3407, %v784
      %v3440 = vadd.f32 %v3408, %v784
      %v3441 = vadd.f32 %v3409, %v784
      %v3442 = vadd.f32 %v3410, %v784
      %v3443 = vadd.f32 %v3411, %v784
      %v3444 = vadd.f32 %v3412, %v784
      %v3445 = vadd.f32 %v3413, %v784
      %s3446 = scalar_lea.vmem %s5, 192
      %v3447 = vld [vmem:[%s3446] sm:$0xff]
      %v3448 = vld [vmem:[%s3446 + $0x8] sm:$0xff]
      %v3449 = vld [vmem:[%s3446 + $0x10] sm:$0xff]
      %v3450 = vld [vmem:[%s3446 + $0x18] sm:$0xff]
      %v3452 = vsel %vm380, %v3414, 0
      %v3455 = vsel %vm380, %v3415, 0
      %v3458 = vsel %vm380, %v3416, 0
      %v3461 = vsel %vm380, %v3417, 0
      %v3464 = vsel %vm380, %v3418, 0
      %v3467 = vsel %vm380, %v3419, 0
      %v3470 = vsel %vm380, %v3420, 0
      %v3473 = vsel %vm380, %v3421, 0
      %v3476 = vsel %vm380, %v3422, 0
      %v3479 = vsel %vm380, %v3423, 0
      %v3482 = vsel %vm380, %v3424, 0
      %v3485 = vsel %vm380, %v3425, 0
      %v3488 = vsel %vm380, %v3426, 0
      %v3491 = vsel %vm380, %v3427, 0
      %v3494 = vsel %vm380, %v3428, 0
      %v3497 = vsel %vm380, %v3429, 0
      %v3500 = vsel %vm380, %v3430, 0
      %v3503 = vsel %vm380, %v3431, 0
      %v3506 = vsel %vm380, %v3432, 0
      %v3509 = vsel %vm380, %v3433, 0
      %v3512 = vsel %vm380, %v3434, 0
      %v3515 = vsel %vm380, %v3435, 0
      %v3518 = vsel %vm380, %v3436, 0
      %v3521 = vsel %vm380, %v3437, 0
      %v3524 = vsel %vm380, %v3438, 0
      %v3527 = vsel %vm380, %v3439, 0
      %v3530 = vsel %vm380, %v3440, 0
      %v3533 = vsel %vm380, %v3441, 0
      %v3536 = vsel %vm380, %v3442, 0
      %v3539 = vsel %vm380, %v3443, 0
      %v3542 = vsel %vm380, %v3444, 0
      %v3545 = vsel %vm380, %v3445, 0
      %3547 = vmatprep.subr.mxu0 0.0
      %3548 = vmatpush1.msra.mxu0 %v3447
      %3549 = vmatprep.subr.mxu0 0.0
      %3550 = vmatpush1.msra.mxu0 %v3448
      %3551 = vmatprep.subr.mxu0 0.0
      %3552 = vmatpush1.msra.mxu0 %v3449
      %3553 = vmatprep.subr.mxu0 0.0
      %3554 = vmatpush1.msra.mxu0 %v3450
      %3555 = vmatprep.subr.mxu0 0.0
      %3556 = vmatpush1.msra.mxu0 0.0
      %3557 = vmatprep.subr.mxu0 0.0
      %3558 = vmatpush1.msra.mxu0 0.0
      %3559 = vmatprep.subr.mxu0 0.0
      %3560 = vmatpush1.msra.mxu0 0.0
      %3561 = vmatprep.subr.mxu0 0.0
      %3562 = vmatpush1.msra.mxu0 0.0
      %3563 = vmatprep.subr.mxu0 0.0
      %3564 = vmatpush1.msra.mxu0 0.0
      %3565 = vmatprep.subr.mxu0 0.0
      %3566 = vmatpush1.msra.mxu0 0.0
      %3567 = vmatprep.subr.mxu0 0.0
      %3568 = vmatpush1.msra.mxu0 0.0
      %3569 = vmatprep.subr.mxu0 0.0
      %3570 = vmatpush1.msra.mxu0 0.0
      %3571 = vmatprep.subr.mxu0 0.0
      %3572 = vmatpush1.msra.mxu0 0.0
      %3573 = vmatprep.subr.mxu0 0.0
      %3574 = vmatpush1.msra.mxu0 0.0
      %3575 = vmatprep.subr.mxu0 0.0
      %3576 = vmatpush1.msra.mxu0 0.0
      %3577 = vmatprep.subr.mxu0 0.0
      %3578 = vmatpush1.msra.mxu0 0.0
      %3579 = vmatprep.subr.mxu0 0.0
      %3580 = vmatpush1.msra.mxu0 0.0
      %3581 = vmatprep.subr.mxu0 0.0
      %3582 = vmatpush1.msra.mxu0 0.0
      %3583 = vmatprep.subr.mxu0 0.0
      %3584 = vmatpush1.msra.mxu0 0.0
      %3585 = vmatprep.subr.mxu0 0.0
      %3586 = vmatpush1.msra.mxu0 0.0
      %3587 = vmatprep.subr.mxu0 0.0
      %3588 = vmatpush1.msra.mxu0 0.0
      %3589 = vmatprep.subr.mxu0 0.0
      %3590 = vmatpush1.msra.mxu0 0.0
      %3591 = vmatprep.subr.mxu0 0.0
      %3592 = vmatpush1.msra.mxu0 0.0
      %3593 = vmatprep.subr.mxu0 0.0
      %3594 = vmatpush1.msra.mxu0 0.0
      %3595 = vmatprep.subr.mxu0 0.0
      %3596 = vmatpush1.msra.mxu0 0.0
      %3597 = vmatprep.subr.mxu0 0.0
      %3598 = vmatpush1.msra.mxu0 0.0
      %3599 = vmatprep.subr.mxu0 0.0
      %3600 = vmatpush1.msra.mxu0 0.0
      %3601 = vmatprep.subr.mxu0 0.0
      %3602 = vmatpush1.msra.mxu0 0.0
      %3603 = vmatprep.subr.mxu0 0.0
      %3604 = vmatpush1.msra.mxu0 0.0
      %3605 = vmatprep.subr.mxu0 0.0
      %3606 = vmatpush1.msra.mxu0 0.0
      %3607 = vmatprep.subr.mxu0 0.0
      %3608 = vmatpush1.msra.mxu0 0.0
      %3609 = vmatprep.subr.mxu0 0.0
      %3610 = vmatpush1.msra.mxu0 0.0
      %3611 = vmatprep.mubr.f32.mxu0 0.0
      %3612 = vmatmul.mubr.f32.gmra.mrb[0].mxu0 %v3452
      %v3613 = vpop.f32.mrb[0].mxu0
      %v3614 = vadd.f32 0.0, %v3613
      %v3615 = vpop.f32.mrb[0].mxu0
      %3616 = vmatprep.mubr.f32.mxu0 0.0
      %3617 = vmatmul.mubr.f32.gmra.mrb[0].mxu0 %v3455
      %v3618 = vpop.f32.mrb[0].mxu0
      %v3619 = vadd.f32 0.0, %v3618
      %v3620 = vpop.f32.mrb[0].mxu0
      %3621 = vmatprep.mubr.f32.mxu0 0.0
      %3622 = vmatmul.mubr.f32.gmra.mrb[0].mxu0 %v3458
      %v3623 = vpop.f32.mrb[0].mxu0
      %v3624 = vadd.f32 0.0, %v3623
      %v3625 = vpop.f32.mrb[0].mxu0
      %3626 = vmatprep.mubr.f32.mxu0 0.0
      %3627 = vmatmul.mubr.f32.gmra.mrb[0].mxu0 %v3461
      %v3628 = vpop.f32.mrb[0].mxu0
      %v3629 = vadd.f32 0.0, %v3628
      %v3630 = vpop.f32.mrb[0].mxu0
      %3631 = vmatprep.mubr.f32.mxu0 0.0
      %3632 = vmatmul.mubr.f32.gmra.mrb[0].mxu0 %v3464
      %v3633 = vpop.f32.mrb[0].mxu0
      %v3634 = vadd.f32 0.0, %v3633
      %v3635 = vpop.f32.mrb[0].mxu0
      %3636 = vmatprep.mubr.f32.mxu0 0.0
      %3637 = vmatmul.mubr.f32.gmra.mrb[0].mxu0 %v3467
      %v3638 = vpop.f32.mrb[0].mxu0
      %v3639 = vadd.f32 0.0, %v3638
      %v3640 = vpop.f32.mrb[0].mxu0
      %3641 = vmatprep.mubr.f32.mxu0 0.0
      %3642 = vmatmul.mubr.f32.gmra.mrb[0].mxu0 %v3470
      %v3643 = vpop.f32.mrb[0].mxu0
      %v3644 = vadd.f32 0.0, %v3643
      %v3645 = vpop.f32.mrb[0].mxu0
      %3646 = vmatprep.mubr.f32.mxu0 0.0
      %3647 = vmatmul.mubr.f32.gmra.mrb[0].mxu0 %v3473
      %v3648 = vpop.f32.mrb[0].mxu0
      %v3649 = vadd.f32 0.0, %v3648
      %v3650 = vpop.f32.mrb[0].mxu0
      %3651 = vmatprep.mubr.f32.mxu0 0.0
      %3652 = vmatmul.mubr.f32.gmra.mrb[0].mxu0 %v3476
      %v3653 = vpop.f32.mrb[0].mxu0
      %v3654 = vadd.f32 0.0, %v3653
      %v3655 = vpop.f32.mrb[0].mxu0
      %3656 = vmatprep.mubr.f32.mxu0 0.0
      %3657 = vmatmul.mubr.f32.gmra.mrb[0].mxu0 %v3479
      %v3658 = vpop.f32.mrb[0].mxu0
      %v3659 = vadd.f32 0.0, %v3658
      %v3660 = vpop.f32.mrb[0].mxu0
      %3661 = vmatprep.mubr.f32.mxu0 0.0
      %3662 = vmatmul.mubr.f32.gmra.mrb[0].mxu0 %v3482
      %v3663 = vpop.f32.mrb[0].mxu0
      %v3664 = vadd.f32 0.0, %v3663
      %v3665 = vpop.f32.mrb[0].mxu0
      %3666 = vmatprep.mubr.f32.mxu0 0.0
      %3667 = vmatmul.mubr.f32.gmra.mrb[0].mxu0 %v3485
      %v3668 = vpop.f32.mrb[0].mxu0
      %v3669 = vadd.f32 0.0, %v3668
      %v3670 = vpop.f32.mrb[0].mxu0
      %3671 = vmatprep.mubr.f32.mxu0 0.0
      %3672 = vmatmul.mubr.f32.gmra.mrb[0].mxu0 %v3488
      %v3673 = vpop.f32.mrb[0].mxu0
      %v3674 = vadd.f32 0.0, %v3673
      %v3675 = vpop.f32.mrb[0].mxu0
      %3676 = vmatprep.mubr.f32.mxu0 0.0
      %3677 = vmatmul.mubr.f32.gmra.mrb[0].mxu0 %v3491
      %v3678 = vpop.f32.mrb[0].mxu0
      %v3679 = vadd.f32 0.0, %v3678
      %v3680 = vpop.f32.mrb[0].mxu0
      %3681 = vmatprep.mubr.f32.mxu0 0.0
      %3682 = vmatmul.mubr.f32.gmra.mrb[0].mxu0 %v3494
      %v3683 = vpop.f32.mrb[0].mxu0
      %v3684 = vadd.f32 0.0, %v3683
      %v3685 = vpop.f32.mrb[0].mxu0
      %3686 = vmatprep.mubr.f32.mxu0 0.0
      %3687 = vmatmul.mubr.f32.gmra.mrb[0].mxu0 %v3497
      %v3688 = vpop.f32.mrb[0].mxu0
      %v3689 = vadd.f32 0.0, %v3688
      %v3690 = vpop.f32.mrb[0].mxu0
      %3691 = vmatprep.mubr.f32.mxu0 0.0
      %3692 = vmatmul.mubr.f32.gmra.mrb[0].mxu0 %v3500
      %v3693 = vpop.f32.mrb[0].mxu0
      %v3694 = vadd.f32 0.0, %v3693
      %v3695 = vpop.f32.mrb[0].mxu0
      %3696 = vmatprep.mubr.f32.mxu0 0.0
      %3697 = vmatmul.mubr.f32.gmra.mrb[0].mxu0 %v3503
      %v3698 = vpop.f32.mrb[0].mxu0
      %v3699 = vadd.f32 0.0, %v3698
      %v3700 = vpop.f32.mrb[0].mxu0
      %3701 = vmatprep.mubr.f32.mxu0 0.0
      %3702 = vmatmul.mubr.f32.gmra.mrb[0].mxu0 %v3506
      %v3703 = vpop.f32.mrb[0].mxu0
      %v3704 = vadd.f32 0.0, %v3703
      %v3705 = vpop.f32.mrb[0].mxu0
      %3706 = vmatprep.mubr.f32.mxu0 0.0
      %3707 = vmatmul.mubr.f32.gmra.mrb[0].mxu0 %v3509
      %v3708 = vpop.f32.mrb[0].mxu0
      %v3709 = vadd.f32 0.0, %v3708
      %v3710 = vpop.f32.mrb[0].mxu0
      %3711 = vmatprep.mubr.f32.mxu0 0.0
      %3712 = vmatmul.mubr.f32.gmra.mrb[0].mxu0 %v3512
      %v3713 = vpop.f32.mrb[0].mxu0
      %v3714 = vadd.f32 0.0, %v3713
      %v3715 = vpop.f32.mrb[0].mxu0
      %3716 = vmatprep.mubr.f32.mxu0 0.0
      %3717 = vmatmul.mubr.f32.gmra.mrb[0].mxu0 %v3515
      %v3718 = vpop.f32.mrb[0].mxu0
      %v3719 = vadd.f32 0.0, %v3718
      %v3720 = vpop.f32.mrb[0].mxu0
      %3721 = vmatprep.mubr.f32.mxu0 0.0
      %3722 = vmatmul.mubr.f32.gmra.mrb[0].mxu0 %v3518
      %v3723 = vpop.f32.mrb[0].mxu0
      %v3724 = vadd.f32 0.0, %v3723
      %v3725 = vpop.f32.mrb[0].mxu0
      %3726 = vmatprep.mubr.f32.mxu0 0.0
      %3727 = vmatmul.mubr.f32.gmra.mrb[0].mxu0 %v3521
      %v3728 = vpop.f32.mrb[0].mxu0
      %v3729 = vadd.f32 0.0, %v3728
      %v3730 = vpop.f32.mrb[0].mxu0
      %3731 = vmatprep.mubr.f32.mxu0 0.0
      %3732 = vmatmul.mubr.f32.gmra.mrb[0].mxu0 %v3524
      %v3733 = vpop.f32.mrb[0].mxu0
      %v3734 = vadd.f32 0.0, %v3733
      %v3735 = vpop.f32.mrb[0].mxu0
      %3736 = vmatprep.mubr.f32.mxu0 0.0
      %3737 = vmatmul.mubr.f32.gmra.mrb[0].mxu0 %v3527
      %v3738 = vpop.f32.mrb[0].mxu0
      %v3739 = vadd.f32 0.0, %v3738
      %v3740 = vpop.f32.mrb[0].mxu0
      %3741 = vmatprep.mubr.f32.mxu0 0.0
      %3742 = vmatmul.mubr.f32.gmra.mrb[0].mxu0 %v3530
      %v3743 = vpop.f32.mrb[0].mxu0
      %v3744 = vadd.f32 0.0, %v3743
      %v3745 = vpop.f32.mrb[0].mxu0
      %3746 = vmatprep.mubr.f32.mxu0 0.0
      %3747 = vmatmul.mubr.f32.gmra.mrb[0].mxu0 %v3533
      %v3748 = vpop.f32.mrb[0].mxu0
      %v3749 = vadd.f32 0.0, %v3748
      %v3750 = vpop.f32.mrb[0].mxu0
      %3751 = vmatprep.mubr.f32.mxu0 0.0
      %3752 = vmatmul.mubr.f32.gmra.mrb[0].mxu0 %v3536
      %v3753 = vpop.f32.mrb[0].mxu0
      %v3754 = vadd.f32 0.0, %v3753
      %v3755 = vpop.f32.mrb[0].mxu0
      %3756 = vmatprep.mubr.f32.mxu0 0.0
      %3757 = vmatmul.mubr.f32.gmra.mrb[0].mxu0 %v3539
      %v3758 = vpop.f32.mrb[0].mxu0
      %v3759 = vadd.f32 0.0, %v3758
      %v3760 = vpop.f32.mrb[0].mxu0
      %3761 = vmatprep.mubr.f32.mxu0 0.0
      %3762 = vmatmul.mubr.f32.gmra.mrb[0].mxu0 %v3542
      %v3763 = vpop.f32.mrb[0].mxu0
      %v3764 = vadd.f32 0.0, %v3763
      %v3765 = vpop.f32.mrb[0].mxu0
      %3766 = vmatprep.mubr.f32.mxu0 0.0
      %3767 = vmatmul.mubr.f32.gmra.mrb[0].mxu0 %v3545
      %v3768 = vpop.f32.mrb[0].mxu0
      %v3769 = vadd.f32 0.0, %v3768
      %v3770 = vpop.f32.mrb[0].mxu0
      %3771 = vdwg.mxu0
      %v3772 = vadd.f32 %v3317, %v3614
      %v3773 = vadd.f32 %v3318, %v3619
      %v3774 = vadd.f32 %v3319, %v3624
      %v3775 = vadd.f32 %v3320, %v3629
      %v3776 = vadd.f32 %v3321, %v3634
      %v3777 = vadd.f32 %v3322, %v3639
      %v3778 = vadd.f32 %v3323, %v3644
      %v3779 = vadd.f32 %v3324, %v3649
      %v3780 = vadd.f32 %v3325, %v3654
      %v3781 = vadd.f32 %v3326, %v3659
      %v3782 = vadd.f32 %v3327, %v3664
      %v3783 = vadd.f32 %v3328, %v3669
      %v3784 = vadd.f32 %v3329, %v3674
      %v3785 = vadd.f32 %v3330, %v3679
      %v3786 = vadd.f32 %v3331, %v3684
      %v3787 = vadd.f32 %v3332, %v3689
      %v3788 = vadd.f32 %v3333, %v3694
      %v3789 = vadd.f32 %v3334, %v3699
      %v3790 = vadd.f32 %v3335, %v3704
      %v3791 = vadd.f32 %v3336, %v3709
      %v3792 = vadd.f32 %v3337, %v3714
      %v3793 = vadd.f32 %v3338, %v3719
      %v3794 = vadd.f32 %v3339, %v3724
      %v3795 = vadd.f32 %v3340, %v3729
      %v3796 = vadd.f32 %v3341, %v3734
      %v3797 = vadd.f32 %v3342, %v3739
      %v3798 = vadd.f32 %v3343, %v3744
      %v3799 = vadd.f32 %v3344, %v3749
      %v3800 = vadd.f32 %v3345, %v3754
      %v3801 = vadd.f32 %v3346, %v3759
      %v3802 = vadd.f32 %v3347, %v3764
      %v3803 = vadd.f32 %v3348, %v3769
      %v3804 = vld [vmem:[%s3349 + $0x1] sm:$0xff]
      %v3805 = vld [vmem:[%s3349 + $0x9] sm:$0xff]
      %v3806 = vld [vmem:[%s3349 + $0x19] sm:$0xff]
      %v3807 = vld [vmem:[%s3349 + $0x21] sm:$0xff]
      %v3808 = vld [vmem:[%s3349 + $0x31] sm:$0xff]
      %v3809 = vld [vmem:[%s3349 + $0x39] sm:$0xff]
      %v3810 = vld [vmem:[%s3349 + $0x49] sm:$0xff]
      %v3811 = vld [vmem:[%s3349 + $0x51] sm:$0xff]
      %v3812 = vld [vmem:[%s3349 + $0x61] sm:$0xff]
      %v3813 = vld [vmem:[%s3349 + $0x69] sm:$0xff]
      %v3814 = vld [vmem:[%s3349 + $0x79] sm:$0xff]
      %v3815 = vld [vmem:[%s3349 + $0x81] sm:$0xff]
      %v3816 = vld [vmem:[%s3349 + $0x91] sm:$0xff]
      %v3817 = vld [vmem:[%s3349 + $0x99] sm:$0xff]
      %v3818 = vld [vmem:[%s3349 + $0xa9] sm:$0xff]
      %v3819 = vld [vmem:[%s3349 + $0xb1] sm:$0xff]
      %v3820 = vld [vmem:[%s3349 + $0xc1] sm:$0xff]
      %v3821 = vld [vmem:[%s3349 + $0xc9] sm:$0xff]
      %v3822 = vld [vmem:[%s3349 + $0xd9] sm:$0xff]
      %v3823 = vld [vmem:[%s3349 + $0xe1] sm:$0xff]
      %v3824 = vld [vmem:[%s3349 + $0xf1] sm:$0xff]
      %v3825 = vld [vmem:[%s3349 + $0xf9] sm:$0xff]
      %v3826 = vld [vmem:[%s3349 + $0x109] sm:$0xff]
      %v3827 = vld [vmem:[%s3349 + $0x111] sm:$0xff]
      %v3828 = vld [vmem:[%s3349 + $0x121] sm:$0xff]
      %v3829 = vld [vmem:[%s3349 + $0x129] sm:$0xff]
      %v3830 = vld [vmem:[%s3349 + $0x139] sm:$0xff]
      %v3831 = vld [vmem:[%s3349 + $0x141] sm:$0xff]
      %v3832 = vld [vmem:[%s3349 + $0x151] sm:$0xff]
      %v3833 = vld [vmem:[%s3349 + $0x159] sm:$0xff]
      %v3834 = vld [vmem:[%s3349 + $0x169] sm:$0xff]
      %v3835 = vld [vmem:[%s3349 + $0x171] sm:$0xff]
      %v3836 = vmul.f32 %v3804, %v746
      %v3837 = vmul.f32 %v3805, %v746
      %v3838 = vmul.f32 %v3806, %v746
      %v3839 = vmul.f32 %v3807, %v746
      %v3840 = vmul.f32 %v3808, %v746
      %v3841 = vmul.f32 %v3809, %v746
      %v3842 = vmul.f32 %v3810, %v746
      %v3843 = vmul.f32 %v3811, %v746
      %v3844 = vmul.f32 %v3812, %v746
      %v3845 = vmul.f32 %v3813, %v746
      %v3846 = vmul.f32 %v3814, %v746
      %v3847 = vmul.f32 %v3815, %v746
      %v3848 = vmul.f32 %v3816, %v746
      %v3849 = vmul.f32 %v3817, %v746
      %v3850 = vmul.f32 %v3818, %v746
      %v3851 = vmul.f32 %v3819, %v746
      %v3852 = vmul.f32 %v3820, %v746
      %v3853 = vmul.f32 %v3821, %v746
      %v3854 = vmul.f32 %v3822, %v746
      %v3855 = vmul.f32 %v3823, %v746
      %v3856 = vmul.f32 %v3824, %v746
      %v3857 = vmul.f32 %v3825, %v746
      %v3858 = vmul.f32 %v3826, %v746
      %v3859 = vmul.f32 %v3827, %v746
      %v3860 = vmul.f32 %v3828, %v746
      %v3861 = vmul.f32 %v3829, %v746
      %v3862 = vmul.f32 %v3830, %v746
      %v3863 = vmul.f32 %v3831, %v746
      %v3864 = vmul.f32 %v3832, %v746
      %v3865 = vmul.f32 %v3833, %v746
      %v3866 = vmul.f32 %v3834, %v746
      %v3867 = vmul.f32 %v3835, %v746
      %v3868 = vadd.f32 %v3836, %v784
      %v3869 = vadd.f32 %v3837, %v784
      %v3870 = vadd.f32 %v3838, %v784
      %v3871 = vadd.f32 %v3839, %v784
      %v3872 = vadd.f32 %v3840, %v784
      %v3873 = vadd.f32 %v3841, %v784
      %v3874 = vadd.f32 %v3842, %v784
      %v3875 = vadd.f32 %v3843, %v784
      %v3876 = vadd.f32 %v3844, %v784
      %v3877 = vadd.f32 %v3845, %v784
      %v3878 = vadd.f32 %v3846, %v784
      %v3879 = vadd.f32 %v3847, %v784
      %v3880 = vadd.f32 %v3848, %v784
      %v3881 = vadd.f32 %v3849, %v784
      %v3882 = vadd.f32 %v3850, %v784
      %v3883 = vadd.f32 %v3851, %v784
      %v3884 = vadd.f32 %v3852, %v784
      %v3885 = vadd.f32 %v3853, %v784
      %v3886 = vadd.f32 %v3854, %v784
      %v3887 = vadd.f32 %v3855, %v784
      %v3888 = vadd.f32 %v3856, %v784
      %v3889 = vadd.f32 %v3857, %v784
      %v3890 = vadd.f32 %v3858, %v784
      %v3891 = vadd.f32 %v3859, %v784
      %v3892 = vadd.f32 %v3860, %v784
      %v3893 = vadd.f32 %v3861, %v784
      %v3894 = vadd.f32 %v3862, %v784
      %v3895 = vadd.f32 %v3863, %v784
      %v3896 = vadd.f32 %v3864, %v784
      %v3897 = vadd.f32 %v3865, %v784
      %v3898 = vadd.f32 %v3866, %v784
      %v3899 = vadd.f32 %v3867, %v784
      %s3900 = scalar_lea.vmem %s5, 224
      %v3901 = vld [vmem:[%s3900] sm:$0xff]
      %v3902 = vld [vmem:[%s3900 + $0x8] sm:$0xff]
      %v3903 = vld [vmem:[%s3900 + $0x10] sm:$0xff]
      %v3904 = vld [vmem:[%s3900 + $0x18] sm:$0xff]
      %v3906 = vsel %vm380, %v3868, 0
      %v3909 = vsel %vm380, %v3869, 0
      %v3912 = vsel %vm380, %v3870, 0
      %v3915 = vsel %vm380, %v3871, 0
      %v3918 = vsel %vm380, %v3872, 0
      %v3921 = vsel %vm380, %v3873, 0
      %v3924 = vsel %vm380, %v3874, 0
      %v3927 = vsel %vm380, %v3875, 0
      %v3930 = vsel %vm380, %v3876, 0
      %v3933 = vsel %vm380, %v3877, 0
      %v3936 = vsel %vm380, %v3878, 0
      %v3939 = vsel %vm380, %v3879, 0
      %v3942 = vsel %vm380, %v3880, 0
      %v3945 = vsel %vm380, %v3881, 0
      %v3948 = vsel %vm380, %v3882, 0
      %v3951 = vsel %vm380, %v3883, 0
      %v3954 = vsel %vm380, %v3884, 0
      %v3957 = vsel %vm380, %v3885, 0
      %v3960 = vsel %vm380, %v3886, 0
      %v3963 = vsel %vm380, %v3887, 0
      %v3966 = vsel %vm380, %v3888, 0
      %v3969 = vsel %vm380, %v3889, 0
      %v3972 = vsel %vm380, %v3890, 0
      %v3975 = vsel %vm380, %v3891, 0
      %v3978 = vsel %vm380, %v3892, 0
      %v3981 = vsel %vm380, %v3893, 0
      %v3984 = vsel %vm380, %v3894, 0
      %v3987 = vsel %vm380, %v3895, 0
      %v3990 = vsel %vm380, %v3896, 0
      %v3993 = vsel %vm380, %v3897, 0
      %v3996 = vsel %vm380, %v3898, 0
      %v3999 = vsel %vm380, %v3899, 0
      %4001 = vmatprep.subr.mxu0 0.0
      %4002 = vmatpush1.msra.mxu0 %v3901
      %4003 = vmatprep.subr.mxu0 0.0
      %4004 = vmatpush1.msra.mxu0 %v3902
      %4005 = vmatprep.subr.mxu0 0.0
      %4006 = vmatpush1.msra.mxu0 %v3903
      %4007 = vmatprep.subr.mxu0 0.0
      %4008 = vmatpush1.msra.mxu0 %v3904
      %4009 = vmatprep.subr.mxu0 0.0
      %4010 = vmatpush1.msra.mxu0 0.0
      %4011 = vmatprep.subr.mxu0 0.0
      %4012 = vmatpush1.msra.mxu0 0.0
      %4013 = vmatprep.subr.mxu0 0.0
      %4014 = vmatpush1.msra.mxu0 0.0
      %4015 = vmatprep.subr.mxu0 0.0
      %4016 = vmatpush1.msra.mxu0 0.0
      %4017 = vmatprep.subr.mxu0 0.0
      %4018 = vmatpush1.msra.mxu0 0.0
      %4019 = vmatprep.subr.mxu0 0.0
      %4020 = vmatpush1.msra.mxu0 0.0
      %4021 = vmatprep.subr.mxu0 0.0
      %4022 = vmatpush1.msra.mxu0 0.0
      %4023 = vmatprep.subr.mxu0 0.0
      %4024 = vmatpush1.msra.mxu0 0.0
      %4025 = vmatprep.subr.mxu0 0.0
      %4026 = vmatpush1.msra.mxu0 0.0
      %4027 = vmatprep.subr.mxu0 0.0
      %4028 = vmatpush1.msra.mxu0 0.0
      %4029 = vmatprep.subr.mxu0 0.0
      %4030 = vmatpush1.msra.mxu0 0.0
      %4031 = vmatprep.subr.mxu0 0.0
      %4032 = vmatpush1.msra.mxu0 0.0
      %4033 = vmatprep.subr.mxu0 0.0
      %4034 = vmatpush1.msra.mxu0 0.0
      %4035 = vmatprep.subr.mxu0 0.0
      %4036 = vmatpush1.msra.mxu0 0.0
      %4037 = vmatprep.subr.mxu0 0.0
      %4038 = vmatpush1.msra.mxu0 0.0
      %4039 = vmatprep.subr.mxu0 0.0
      %4040 = vmatpush1.msra.mxu0 0.0
      %4041 = vmatprep.subr.mxu0 0.0
      %4042 = vmatpush1.msra.mxu0 0.0
      %4043 = vmatprep.subr.mxu0 0.0
      %4044 = vmatpush1.msra.mxu0 0.0
      %4045 = vmatprep.subr.mxu0 0.0
      %4046 = vmatpush1.msra.mxu0 0.0
      %4047 = vmatprep.subr.mxu0 0.0
      %4048 = vmatpush1.msra.mxu0 0.0
      %4049 = vmatprep.subr.mxu0 0.0
      %4050 = vmatpush1.msra.mxu0 0.0
      %4051 = vmatprep.subr.mxu0 0.0
      %4052 = vmatpush1.msra.mxu0 0.0
      %4053 = vmatprep.subr.mxu0 0.0
      %4054 = vmatpush1.msra.mxu0 0.0
      %4055 = vmatprep.subr.mxu0 0.0
      %4056 = vmatpush1.msra.mxu0 0.0
      %4057 = vmatprep.subr.mxu0 0.0
      %4058 = vmatpush1.msra.mxu0 0.0
      %4059 = vmatprep.subr.mxu0 0.0
      %4060 = vmatpush1.msra.mxu0 0.0
      %4061 = vmatprep.subr.mxu0 0.0
      %4062 = vmatpush1.msra.mxu0 0.0
      %4063 = vmatprep.subr.mxu0 0.0
      %4064 = vmatpush1.msra.mxu0 0.0
      %4065 = vmatprep.mubr.f32.mxu0 0.0
      %4066 = vmatmul.mubr.f32.gmra.mrb[0].mxu0 %v3906
      %v4067 = vpop.f32.mrb[0].mxu0
      %v4068 = vadd.f32 0.0, %v4067
      %v4069 = vpop.f32.mrb[0].mxu0
      %4070 = vmatprep.mubr.f32.mxu0 0.0
      %4071 = vmatmul.mubr.f32.gmra.mrb[0].mxu0 %v3909
      %v4072 = vpop.f32.mrb[0].mxu0
      %v4073 = vadd.f32 0.0, %v4072
      %v4074 = vpop.f32.mrb[0].mxu0
      %4075 = vmatprep.mubr.f32.mxu0 0.0
      %4076 = vmatmul.mubr.f32.gmra.mrb[0].mxu0 %v3912
      %v4077 = vpop.f32.mrb[0].mxu0
      %v4078 = vadd.f32 0.0, %v4077
      %v4079 = vpop.f32.mrb[0].mxu0
      %4080 = vmatprep.mubr.f32.mxu0 0.0
      %4081 = vmatmul.mubr.f32.gmra.mrb[0].mxu0 %v3915
      %v4082 = vpop.f32.mrb[0].mxu0
      %v4083 = vadd.f32 0.0, %v4082
      %v4084 = vpop.f32.mrb[0].mxu0
      %4085 = vmatprep.mubr.f32.mxu0 0.0
      %4086 = vmatmul.mubr.f32.gmra.mrb[0].mxu0 %v3918
      %v4087 = vpop.f32.mrb[0].mxu0
      %v4088 = vadd.f32 0.0, %v4087
      %v4089 = vpop.f32.mrb[0].mxu0
      %4090 = vmatprep.mubr.f32.mxu0 0.0
      %4091 = vmatmul.mubr.f32.gmra.mrb[0].mxu0 %v3921
      %v4092 = vpop.f32.mrb[0].mxu0
      %v4093 = vadd.f32 0.0, %v4092
      %v4094 = vpop.f32.mrb[0].mxu0
      %4095 = vmatprep.mubr.f32.mxu0 0.0
      %4096 = vmatmul.mubr.f32.gmra.mrb[0].mxu0 %v3924
      %v4097 = vpop.f32.mrb[0].mxu0
      %v4098 = vadd.f32 0.0, %v4097
      %v4099 = vpop.f32.mrb[0].mxu0
      %4100 = vmatprep.mubr.f32.mxu0 0.0
      %4101 = vmatmul.mubr.f32.gmra.mrb[0].mxu0 %v3927
      %v4102 = vpop.f32.mrb[0].mxu0
      %v4103 = vadd.f32 0.0, %v4102
      %v4104 = vpop.f32.mrb[0].mxu0
      %4105 = vmatprep.mubr.f32.mxu0 0.0
      %4106 = vmatmul.mubr.f32.gmra.mrb[0].mxu0 %v3930
      %v4107 = vpop.f32.mrb[0].mxu0
      %v4108 = vadd.f32 0.0, %v4107
      %v4109 = vpop.f32.mrb[0].mxu0
      %4110 = vmatprep.mubr.f32.mxu0 0.0
      %4111 = vmatmul.mubr.f32.gmra.mrb[0].mxu0 %v3933
      %v4112 = vpop.f32.mrb[0].mxu0
      %v4113 = vadd.f32 0.0, %v4112
      %v4114 = vpop.f32.mrb[0].mxu0
      %4115 = vmatprep.mubr.f32.mxu0 0.0
      %4116 = vmatmul.mubr.f32.gmra.mrb[0].mxu0 %v3936
      %v4117 = vpop.f32.mrb[0].mxu0
      %v4118 = vadd.f32 0.0, %v4117
      %v4119 = vpop.f32.mrb[0].mxu0
      %4120 = vmatprep.mubr.f32.mxu0 0.0
      %4121 = vmatmul.mubr.f32.gmra.mrb[0].mxu0 %v3939
      %v4122 = vpop.f32.mrb[0].mxu0
      %v4123 = vadd.f32 0.0, %v4122
      %v4124 = vpop.f32.mrb[0].mxu0
      %4125 = vmatprep.mubr.f32.mxu0 0.0
      %4126 = vmatmul.mubr.f32.gmra.mrb[0].mxu0 %v3942
      %v4127 = vpop.f32.mrb[0].mxu0
      %v4128 = vadd.f32 0.0, %v4127
      %v4129 = vpop.f32.mrb[0].mxu0
      %4130 = vmatprep.mubr.f32.mxu0 0.0
      %4131 = vmatmul.mubr.f32.gmra.mrb[0].mxu0 %v3945
      %v4132 = vpop.f32.mrb[0].mxu0
      %v4133 = vadd.f32 0.0, %v4132
      %v4134 = vpop.f32.mrb[0].mxu0
      %4135 = vmatprep.mubr.f32.mxu0 0.0
      %4136 = vmatmul.mubr.f32.gmra.mrb[0].mxu0 %v3948
      %v4137 = vpop.f32.mrb[0].mxu0
      %v4138 = vadd.f32 0.0, %v4137
      %v4139 = vpop.f32.mrb[0].mxu0
      %4140 = vmatprep.mubr.f32.mxu0 0.0
      %4141 = vmatmul.mubr.f32.gmra.mrb[0].mxu0 %v3951
      %v4142 = vpop.f32.mrb[0].mxu0
      %v4143 = vadd.f32 0.0, %v4142
      %v4144 = vpop.f32.mrb[0].mxu0
      %4145 = vmatprep.mubr.f32.mxu0 0.0
      %4146 = vmatmul.mubr.f32.gmra.mrb[0].mxu0 %v3954
      %v4147 = vpop.f32.mrb[0].mxu0
      %v4148 = vadd.f32 0.0, %v4147
      %v4149 = vpop.f32.mrb[0].mxu0
      %4150 = vmatprep.mubr.f32.mxu0 0.0
      %4151 = vmatmul.mubr.f32.gmra.mrb[0].mxu0 %v3957
      %v4152 = vpop.f32.mrb[0].mxu0
      %v4153 = vadd.f32 0.0, %v4152
      %v4154 = vpop.f32.mrb[0].mxu0
      %4155 = vmatprep.mubr.f32.mxu0 0.0
      %4156 = vmatmul.mubr.f32.gmra.mrb[0].mxu0 %v3960
      %v4157 = vpop.f32.mrb[0].mxu0
      %v4158 = vadd.f32 0.0, %v4157
      %v4159 = vpop.f32.mrb[0].mxu0
      %4160 = vmatprep.mubr.f32.mxu0 0.0
      %4161 = vmatmul.mubr.f32.gmra.mrb[0].mxu0 %v3963
      %v4162 = vpop.f32.mrb[0].mxu0
      %v4163 = vadd.f32 0.0, %v4162
      %v4164 = vpop.f32.mrb[0].mxu0
      %4165 = vmatprep.mubr.f32.mxu0 0.0
      %4166 = vmatmul.mubr.f32.gmra.mrb[0].mxu0 %v3966
      %v4167 = vpop.f32.mrb[0].mxu0
      %v4168 = vadd.f32 0.0, %v4167
      %v4169 = vpop.f32.mrb[0].mxu0
      %4170 = vmatprep.mubr.f32.mxu0 0.0
      %4171 = vmatmul.mubr.f32.gmra.mrb[0].mxu0 %v3969
      %v4172 = vpop.f32.mrb[0].mxu0
      %v4173 = vadd.f32 0.0, %v4172
      %v4174 = vpop.f32.mrb[0].mxu0
      %4175 = vmatprep.mubr.f32.mxu0 0.0
      %4176 = vmatmul.mubr.f32.gmra.mrb[0].mxu0 %v3972
      %v4177 = vpop.f32.mrb[0].mxu0
      %v4178 = vadd.f32 0.0, %v4177
      %v4179 = vpop.f32.mrb[0].mxu0
      %4180 = vmatprep.mubr.f32.mxu0 0.0
      %4181 = vmatmul.mubr.f32.gmra.mrb[0].mxu0 %v3975
      %v4182 = vpop.f32.mrb[0].mxu0
      %v4183 = vadd.f32 0.0, %v4182
      %v4184 = vpop.f32.mrb[0].mxu0
      %4185 = vmatprep.mubr.f32.mxu0 0.0
      %4186 = vmatmul.mubr.f32.gmra.mrb[0].mxu0 %v3978
      %v4187 = vpop.f32.mrb[0].mxu0
      %v4188 = vadd.f32 0.0, %v4187
      %v4189 = vpop.f32.mrb[0].mxu0
      %4190 = vmatprep.mubr.f32.mxu0 0.0
      %4191 = vmatmul.mubr.f32.gmra.mrb[0].mxu0 %v3981
      %v4192 = vpop.f32.mrb[0].mxu0
      %v4193 = vadd.f32 0.0, %v4192
      %v4194 = vpop.f32.mrb[0].mxu0
      %4195 = vmatprep.mubr.f32.mxu0 0.0
      %4196 = vmatmul.mubr.f32.gmra.mrb[0].mxu0 %v3984
      %v4197 = vpop.f32.mrb[0].mxu0
      %v4198 = vadd.f32 0.0, %v4197
      %v4199 = vpop.f32.mrb[0].mxu0
      %4200 = vmatprep.mubr.f32.mxu0 0.0
      %4201 = vmatmul.mubr.f32.gmra.mrb[0].mxu0 %v3987
      %v4202 = vpop.f32.mrb[0].mxu0
      %v4203 = vadd.f32 0.0, %v4202
      %v4204 = vpop.f32.mrb[0].mxu0
      %4205 = vmatprep.mubr.f32.mxu0 0.0
      %4206 = vmatmul.mubr.f32.gmra.mrb[0].mxu0 %v3990
      %v4207 = vpop.f32.mrb[0].mxu0
      %v4208 = vadd.f32 0.0, %v4207
      %v4209 = vpop.f32.mrb[0].mxu0
      %4210 = vmatprep.mubr.f32.mxu0 0.0
      %4211 = vmatmul.mubr.f32.gmra.mrb[0].mxu0 %v3993
      %v4212 = vpop.f32.mrb[0].mxu0
      %v4213 = vadd.f32 0.0, %v4212
      %v4214 = vpop.f32.mrb[0].mxu0
      %4215 = vmatprep.mubr.f32.mxu0 0.0
      %4216 = vmatmul.mubr.f32.gmra.mrb[0].mxu0 %v3996
      %v4217 = vpop.f32.mrb[0].mxu0
      %v4218 = vadd.f32 0.0, %v4217
      %v4219 = vpop.f32.mrb[0].mxu0
      %4220 = vmatprep.mubr.f32.mxu0 0.0
      %4221 = vmatmul.mubr.f32.gmra.mrb[0].mxu0 %v3999
      %v4222 = vpop.f32.mrb[0].mxu0
      %v4223 = vadd.f32 0.0, %v4222
      %v4224 = vpop.f32.mrb[0].mxu0
      %4225 = vdwg.mxu0
      %v4226 = vadd.f32 %v3772, %v4068
      %v4227 = vadd.f32 %v3773, %v4073
      %v4228 = vadd.f32 %v3774, %v4078
      %v4229 = vadd.f32 %v3775, %v4083
      %v4230 = vadd.f32 %v3776, %v4088
      %v4231 = vadd.f32 %v3777, %v4093
      %v4232 = vadd.f32 %v3778, %v4098
      %v4233 = vadd.f32 %v3779, %v4103
      %v4234 = vadd.f32 %v3780, %v4108
      %v4235 = vadd.f32 %v3781, %v4113
      %v4236 = vadd.f32 %v3782, %v4118
      %v4237 = vadd.f32 %v3783, %v4123
      %v4238 = vadd.f32 %v3784, %v4128
      %v4239 = vadd.f32 %v3785, %v4133
      %v4240 = vadd.f32 %v3786, %v4138
      %v4241 = vadd.f32 %v3787, %v4143
      %v4242 = vadd.f32 %v3788, %v4148
      %v4243 = vadd.f32 %v3789, %v4153
      %v4244 = vadd.f32 %v3790, %v4158
      %v4245 = vadd.f32 %v3791, %v4163
      %v4246 = vadd.f32 %v3792, %v4168
      %v4247 = vadd.f32 %v3793, %v4173
      %v4248 = vadd.f32 %v3794, %v4178
      %v4249 = vadd.f32 %v3795, %v4183
      %v4250 = vadd.f32 %v3796, %v4188
      %v4251 = vadd.f32 %v3797, %v4193
      %v4252 = vadd.f32 %v3798, %v4198
      %v4253 = vadd.f32 %v3799, %v4203
      %v4254 = vadd.f32 %v3800, %v4208
      %v4255 = vadd.f32 %v3801, %v4213
      %v4256 = vadd.f32 %v3802, %v4218
      %v4257 = vadd.f32 %v3803, %v4223
      %v4258 = vld [vmem:[%s3349 + $0x2] sm:$0xff]
      %v4259 = vld [vmem:[%s3349 + $0xa] sm:$0xff]
      %v4260 = vld [vmem:[%s3349 + $0x1a] sm:$0xff]
      %v4261 = vld [vmem:[%s3349 + $0x22] sm:$0xff]
      %v4262 = vld [vmem:[%s3349 + $0x32] sm:$0xff]
      %v4263 = vld [vmem:[%s3349 + $0x3a] sm:$0xff]
      %v4264 = vld [vmem:[%s3349 + $0x4a] sm:$0xff]
      %v4265 = vld [vmem:[%s3349 + $0x52] sm:$0xff]
      %v4266 = vld [vmem:[%s3349 + $0x62] sm:$0xff]
      %v4267 = vld [vmem:[%s3349 + $0x6a] sm:$0xff]
      %v4268 = vld [vmem:[%s3349 + $0x7a] sm:$0xff]
      %v4269 = vld [vmem:[%s3349 + $0x82] sm:$0xff]
      %v4270 = vld [vmem:[%s3349 + $0x92] sm:$0xff]
      %v4271 = vld [vmem:[%s3349 + $0x9a] sm:$0xff]
      %v4272 = vld [vmem:[%s3349 + $0xaa] sm:$0xff]
      %v4273 = vld [vmem:[%s3349 + $0xb2] sm:$0xff]
      %v4274 = vld [vmem:[%s3349 + $0xc2] sm:$0xff]
      %v4275 = vld [vmem:[%s3349 + $0xca] sm:$0xff]
      %v4276 = vld [vmem:[%s3349 + $0xda] sm:$0xff]
      %v4277 = vld [vmem:[%s3349 + $0xe2] sm:$0xff]
      %v4278 = vld [vmem:[%s3349 + $0xf2] sm:$0xff]
      %v4279 = vld [vmem:[%s3349 + $0xfa] sm:$0xff]
      %v4280 = vld [vmem:[%s3349 + $0x10a] sm:$0xff]
      %v4281 = vld [vmem:[%s3349 + $0x112] sm:$0xff]
      %v4282 = vld [vmem:[%s3349 + $0x122] sm:$0xff]
      %v4283 = vld [vmem:[%s3349 + $0x12a] sm:$0xff]
      %v4284 = vld [vmem:[%s3349 + $0x13a] sm:$0xff]
      %v4285 = vld [vmem:[%s3349 + $0x142] sm:$0xff]
      %v4286 = vld [vmem:[%s3349 + $0x152] sm:$0xff]
      %v4287 = vld [vmem:[%s3349 + $0x15a] sm:$0xff]
      %v4288 = vld [vmem:[%s3349 + $0x16a] sm:$0xff]
      %v4289 = vld [vmem:[%s3349 + $0x172] sm:$0xff]
      %v4290 = vmul.f32 %v4258, %v746
      %v4291 = vmul.f32 %v4259, %v746
      %v4292 = vmul.f32 %v4260, %v746
      %v4293 = vmul.f32 %v4261, %v746
      %v4294 = vmul.f32 %v4262, %v746
      %v4295 = vmul.f32 %v4263, %v746
      %v4296 = vmul.f32 %v4264, %v746
      %v4297 = vmul.f32 %v4265, %v746
      %v4298 = vmul.f32 %v4266, %v746
      %v4299 = vmul.f32 %v4267, %v746
      %v4300 = vmul.f32 %v4268, %v746
      %v4301 = vmul.f32 %v4269, %v746
      %v4302 = vmul.f32 %v4270, %v746
      %v4303 = vmul.f32 %v4271, %v746
      %v4304 = vmul.f32 %v4272, %v746
      %v4305 = vmul.f32 %v4273, %v746
      %v4306 = vmul.f32 %v4274, %v746
      %v4307 = vmul.f32 %v4275, %v746
      %v4308 = vmul.f32 %v4276, %v746
      %v4309 = vmul.f32 %v4277, %v746
      %v4310 = vmul.f32 %v4278, %v746
      %v4311 = vmul.f32 %v4279, %v746
      %v4312 = vmul.f32 %v4280, %v746
      %v4313 = vmul.f32 %v4281, %v746
      %v4314 = vmul.f32 %v4282, %v746
      %v4315 = vmul.f32 %v4283, %v746
      %v4316 = vmul.f32 %v4284, %v746
      %v4317 = vmul.f32 %v4285, %v746
      %v4318 = vmul.f32 %v4286, %v746
      %v4319 = vmul.f32 %v4287, %v746
      %v4320 = vmul.f32 %v4288, %v746
      %v4321 = vmul.f32 %v4289, %v746
      %v4322 = vadd.f32 %v4290, %v784
      %v4323 = vadd.f32 %v4291, %v784
      %v4324 = vadd.f32 %v4292, %v784
      %v4325 = vadd.f32 %v4293, %v784
      %v4326 = vadd.f32 %v4294, %v784
      %v4327 = vadd.f32 %v4295, %v784
      %v4328 = vadd.f32 %v4296, %v784
      %v4329 = vadd.f32 %v4297, %v784
      %v4330 = vadd.f32 %v4298, %v784
      %v4331 = vadd.f32 %v4299, %v784
      %v4332 = vadd.f32 %v4300, %v784
      %v4333 = vadd.f32 %v4301, %v784
      %v4334 = vadd.f32 %v4302, %v784
      %v4335 = vadd.f32 %v4303, %v784
      %v4336 = vadd.f32 %v4304, %v784
      %v4337 = vadd.f32 %v4305, %v784
      %v4338 = vadd.f32 %v4306, %v784
      %v4339 = vadd.f32 %v4307, %v784
      %v4340 = vadd.f32 %v4308, %v784
      %v4341 = vadd.f32 %v4309, %v784
      %v4342 = vadd.f32 %v4310, %v784
      %v4343 = vadd.f32 %v4311, %v784
      %v4344 = vadd.f32 %v4312, %v784
      %v4345 = vadd.f32 %v4313, %v784
      %v4346 = vadd.f32 %v4314, %v784
      %v4347 = vadd.f32 %v4315, %v784
      %v4348 = vadd.f32 %v4316, %v784
      %v4349 = vadd.f32 %v4317, %v784
      %v4350 = vadd.f32 %v4318, %v784
      %v4351 = vadd.f32 %v4319, %v784
      %v4352 = vadd.f32 %v4320, %v784
      %v4353 = vadd.f32 %v4321, %v784
      %s4354 = scalar_lea.vmem %s5, 256
      %v4355 = vld [vmem:[%s4354] sm:$0xff]
      %v4356 = vld [vmem:[%s4354 + $0x8] sm:$0xff]
      %v4357 = vld [vmem:[%s4354 + $0x10] sm:$0xff]
      %v4358 = vld [vmem:[%s4354 + $0x18] sm:$0xff]
      %v4360 = vsel %vm380, %v4322, 0
      %v4363 = vsel %vm380, %v4323, 0
      %v4366 = vsel %vm380, %v4324, 0
      %v4369 = vsel %vm380, %v4325, 0
      %v4372 = vsel %vm380, %v4326, 0
      %v4375 = vsel %vm380, %v4327, 0
      %v4378 = vsel %vm380, %v4328, 0
      %v4381 = vsel %vm380, %v4329, 0
      %v4384 = vsel %vm380, %v4330, 0
      %v4387 = vsel %vm380, %v4331, 0
      %v4390 = vsel %vm380, %v4332, 0
      %v4393 = vsel %vm380, %v4333, 0
      %v4396 = vsel %vm380, %v4334, 0
      %v4399 = vsel %vm380, %v4335, 0
      %v4402 = vsel %vm380, %v4336, 0
      %v4405 = vsel %vm380, %v4337, 0
      %v4408 = vsel %vm380, %v4338, 0
      %v4411 = vsel %vm380, %v4339, 0
      %v4414 = vsel %vm380, %v4340, 0
      %v4417 = vsel %vm380, %v4341, 0
      %v4420 = vsel %vm380, %v4342, 0
      %v4423 = vsel %vm380, %v4343, 0
      %v4426 = vsel %vm380, %v4344, 0
      %v4429 = vsel %vm380, %v4345, 0
      %v4432 = vsel %vm380, %v4346, 0
      %v4435 = vsel %vm380, %v4347, 0
      %v4438 = vsel %vm380, %v4348, 0
      %v4441 = vsel %vm380, %v4349, 0
      %v4444 = vsel %vm380, %v4350, 0
      %v4447 = vsel %vm380, %v4351, 0
      %v4450 = vsel %vm380, %v4352, 0
      %v4453 = vsel %vm380, %v4353, 0
      %4455 = vmatprep.subr.mxu0 0.0
      %4456 = vmatpush1.msra.mxu0 %v4355
      %4457 = vmatprep.subr.mxu0 0.0
      %4458 = vmatpush1.msra.mxu0 %v4356
      %4459 = vmatprep.subr.mxu0 0.0
      %4460 = vmatpush1.msra.mxu0 %v4357
      %4461 = vmatprep.subr.mxu0 0.0
      %4462 = vmatpush1.msra.mxu0 %v4358
      %4463 = vmatprep.subr.mxu0 0.0
      %4464 = vmatpush1.msra.mxu0 0.0
      %4465 = vmatprep.subr.mxu0 0.0
      %4466 = vmatpush1.msra.mxu0 0.0
      %4467 = vmatprep.subr.mxu0 0.0
      %4468 = vmatpush1.msra.mxu0 0.0
      %4469 = vmatprep.subr.mxu0 0.0
      %4470 = vmatpush1.msra.mxu0 0.0
      %4471 = vmatprep.subr.mxu0 0.0
      %4472 = vmatpush1.msra.mxu0 0.0
      %4473 = vmatprep.subr.mxu0 0.0
      %4474 = vmatpush1.msra.mxu0 0.0
      %4475 = vmatprep.subr.mxu0 0.0
      %4476 = vmatpush1.msra.mxu0 0.0
      %4477 = vmatprep.subr.mxu0 0.0
      %4478 = vmatpush1.msra.mxu0 0.0
      %4479 = vmatprep.subr.mxu0 0.0
      %4480 = vmatpush1.msra.mxu0 0.0
      %4481 = vmatprep.subr.mxu0 0.0
      %4482 = vmatpush1.msra.mxu0 0.0
      %4483 = vmatprep.subr.mxu0 0.0
      %4484 = vmatpush1.msra.mxu0 0.0
      %4485 = vmatprep.subr.mxu0 0.0
      %4486 = vmatpush1.msra.mxu0 0.0
      %4487 = vmatprep.subr.mxu0 0.0
      %4488 = vmatpush1.msra.mxu0 0.0
      %4489 = vmatprep.subr.mxu0 0.0
      %4490 = vmatpush1.msra.mxu0 0.0
      %4491 = vmatprep.subr.mxu0 0.0
      %4492 = vmatpush1.msra.mxu0 0.0
      %4493 = vmatprep.subr.mxu0 0.0
      %4494 = vmatpush1.msra.mxu0 0.0
      %4495 = vmatprep.subr.mxu0 0.0
      %4496 = vmatpush1.msra.mxu0 0.0
      %4497 = vmatprep.subr.mxu0 0.0
      %4498 = vmatpush1.msra.mxu0 0.0
      %4499 = vmatprep.subr.mxu0 0.0
      %4500 = vmatpush1.msra.mxu0 0.0
      %4501 = vmatprep.subr.mxu0 0.0
      %4502 = vmatpush1.msra.mxu0 0.0
      %4503 = vmatprep.subr.mxu0 0.0
      %4504 = vmatpush1.msra.mxu0 0.0
      %4505 = vmatprep.subr.mxu0 0.0
      %4506 = vmatpush1.msra.mxu0 0.0
      %4507 = vmatprep.subr.mxu0 0.0
      %4508 = vmatpush1.msra.mxu0 0.0
      %4509 = vmatprep.subr.mxu0 0.0
      %4510 = vmatpush1.msra.mxu0 0.0
      %4511 = vmatprep.subr.mxu0 0.0
      %4512 = vmatpush1.msra.mxu0 0.0
      %4513 = vmatprep.subr.mxu0 0.0
      %4514 = vmatpush1.msra.mxu0 0.0
      %4515 = vmatprep.subr.mxu0 0.0
      %4516 = vmatpush1.msra.mxu0 0.0
      %4517 = vmatprep.subr.mxu0 0.0
      %4518 = vmatpush1.msra.mxu0 0.0
      %4519 = vmatprep.mubr.f32.mxu0 0.0
      %4520 = vmatmul.mubr.f32.gmra.mrb[0].mxu0 %v4360
      %v4521 = vpop.f32.mrb[0].mxu0
      %v4522 = vadd.f32 0.0, %v4521
      %v4523 = vpop.f32.mrb[0].mxu0
      %4524 = vmatprep.mubr.f32.mxu0 0.0
      %4525 = vmatmul.mubr.f32.gmra.mrb[0].mxu0 %v4363
      %v4526 = vpop.f32.mrb[0].mxu0
      %v4527 = vadd.f32 0.0, %v4526
      %v4528 = vpop.f32.mrb[0].mxu0
      %4529 = vmatprep.mubr.f32.mxu0 0.0
      %4530 = vmatmul.mubr.f32.gmra.mrb[0].mxu0 %v4366
      %v4531 = vpop.f32.mrb[0].mxu0
      %v4532 = vadd.f32 0.0, %v4531
      %v4533 = vpop.f32.mrb[0].mxu0
      %4534 = vmatprep.mubr.f32.mxu0 0.0
      %4535 = vmatmul.mubr.f32.gmra.mrb[0].mxu0 %v4369
      %v4536 = vpop.f32.mrb[0].mxu0
      %v4537 = vadd.f32 0.0, %v4536
      %v4538 = vpop.f32.mrb[0].mxu0
      %4539 = vmatprep.mubr.f32.mxu0 0.0
      %4540 = vmatmul.mubr.f32.gmra.mrb[0].mxu0 %v4372
      %v4541 = vpop.f32.mrb[0].mxu0
      %v4542 = vadd.f32 0.0, %v4541
      %v4543 = vpop.f32.mrb[0].mxu0
      %4544 = vmatprep.mubr.f32.mxu0 0.0
      %4545 = vmatmul.mubr.f32.gmra.mrb[0].mxu0 %v4375
      %v4546 = vpop.f32.mrb[0].mxu0
      %v4547 = vadd.f32 0.0, %v4546
      %v4548 = vpop.f32.mrb[0].mxu0
      %4549 = vmatprep.mubr.f32.mxu0 0.0
      %4550 = vmatmul.mubr.f32.gmra.mrb[0].mxu0 %v4378
      %v4551 = vpop.f32.mrb[0].mxu0
      %v4552 = vadd.f32 0.0, %v4551
      %v4553 = vpop.f32.mrb[0].mxu0
      %4554 = vmatprep.mubr.f32.mxu0 0.0
      %4555 = vmatmul.mubr.f32.gmra.mrb[0].mxu0 %v4381
      %v4556 = vpop.f32.mrb[0].mxu0
      %v4557 = vadd.f32 0.0, %v4556
      %v4558 = vpop.f32.mrb[0].mxu0
      %4559 = vmatprep.mubr.f32.mxu0 0.0
      %4560 = vmatmul.mubr.f32.gmra.mrb[0].mxu0 %v4384
      %v4561 = vpop.f32.mrb[0].mxu0
      %v4562 = vadd.f32 0.0, %v4561
      %v4563 = vpop.f32.mrb[0].mxu0
      %4564 = vmatprep.mubr.f32.mxu0 0.0
      %4565 = vmatmul.mubr.f32.gmra.mrb[0].mxu0 %v4387
      %v4566 = vpop.f32.mrb[0].mxu0
      %v4567 = vadd.f32 0.0, %v4566
      %v4568 = vpop.f32.mrb[0].mxu0
      %4569 = vmatprep.mubr.f32.mxu0 0.0
      %4570 = vmatmul.mubr.f32.gmra.mrb[0].mxu0 %v4390
      %v4571 = vpop.f32.mrb[0].mxu0
      %v4572 = vadd.f32 0.0, %v4571
      %v4573 = vpop.f32.mrb[0].mxu0
      %4574 = vmatprep.mubr.f32.mxu0 0.0
      %4575 = vmatmul.mubr.f32.gmra.mrb[0].mxu0 %v4393
      %v4576 = vpop.f32.mrb[0].mxu0
      %v4577 = vadd.f32 0.0, %v4576
      %v4578 = vpop.f32.mrb[0].mxu0
      %4579 = vmatprep.mubr.f32.mxu0 0.0
      %4580 = vmatmul.mubr.f32.gmra.mrb[0].mxu0 %v4396
      %v4581 = vpop.f32.mrb[0].mxu0
      %v4582 = vadd.f32 0.0, %v4581
      %v4583 = vpop.f32.mrb[0].mxu0
      %4584 = vmatprep.mubr.f32.mxu0 0.0
      %4585 = vmatmul.mubr.f32.gmra.mrb[0].mxu0 %v4399
      %v4586 = vpop.f32.mrb[0].mxu0
      %v4587 = vadd.f32 0.0, %v4586
      %v4588 = vpop.f32.mrb[0].mxu0
      %4589 = vmatprep.mubr.f32.mxu0 0.0
      %4590 = vmatmul.mubr.f32.gmra.mrb[0].mxu0 %v4402
      %v4591 = vpop.f32.mrb[0].mxu0
      %v4592 = vadd.f32 0.0, %v4591
      %v4593 = vpop.f32.mrb[0].mxu0
      %4594 = vmatprep.mubr.f32.mxu0 0.0
      %4595 = vmatmul.mubr.f32.gmra.mrb[0].mxu0 %v4405
      %v4596 = vpop.f32.mrb[0].mxu0
      %v4597 = vadd.f32 0.0, %v4596
      %v4598 = vpop.f32.mrb[0].mxu0
      %4599 = vmatprep.mubr.f32.mxu0 0.0
      %4600 = vmatmul.mubr.f32.gmra.mrb[0].mxu0 %v4408
      %v4601 = vpop.f32.mrb[0].mxu0
      %v4602 = vadd.f32 0.0, %v4601
      %v4603 = vpop.f32.mrb[0].mxu0
      %4604 = vmatprep.mubr.f32.mxu0 0.0
      %4605 = vmatmul.mubr.f32.gmra.mrb[0].mxu0 %v4411
      %v4606 = vpop.f32.mrb[0].mxu0
      %v4607 = vadd.f32 0.0, %v4606
      %v4608 = vpop.f32.mrb[0].mxu0
      %4609 = vmatprep.mubr.f32.mxu0 0.0
      %4610 = vmatmul.mubr.f32.gmra.mrb[0].mxu0 %v4414
      %v4611 = vpop.f32.mrb[0].mxu0
      %v4612 = vadd.f32 0.0, %v4611
      %v4613 = vpop.f32.mrb[0].mxu0
      %4614 = vmatprep.mubr.f32.mxu0 0.0
      %4615 = vmatmul.mubr.f32.gmra.mrb[0].mxu0 %v4417
      %v4616 = vpop.f32.mrb[0].mxu0
      %v4617 = vadd.f32 0.0, %v4616
      %v4618 = vpop.f32.mrb[0].mxu0
      %4619 = vmatprep.mubr.f32.mxu0 0.0
      %4620 = vmatmul.mubr.f32.gmra.mrb[0].mxu0 %v4420
      %v4621 = vpop.f32.mrb[0].mxu0
      %v4622 = vadd.f32 0.0, %v4621
      %v4623 = vpop.f32.mrb[0].mxu0
      %4624 = vmatprep.mubr.f32.mxu0 0.0
      %4625 = vmatmul.mubr.f32.gmra.mrb[0].mxu0 %v4423
      %v4626 = vpop.f32.mrb[0].mxu0
      %v4627 = vadd.f32 0.0, %v4626
      %v4628 = vpop.f32.mrb[0].mxu0
      %4629 = vmatprep.mubr.f32.mxu0 0.0
      %4630 = vmatmul.mubr.f32.gmra.mrb[0].mxu0 %v4426
      %v4631 = vpop.f32.mrb[0].mxu0
      %v4632 = vadd.f32 0.0, %v4631
      %v4633 = vpop.f32.mrb[0].mxu0
      %4634 = vmatprep.mubr.f32.mxu0 0.0
      %4635 = vmatmul.mubr.f32.gmra.mrb[0].mxu0 %v4429
      %v4636 = vpop.f32.mrb[0].mxu0
      %v4637 = vadd.f32 0.0, %v4636
      %v4638 = vpop.f32.mrb[0].mxu0
      %4639 = vmatprep.mubr.f32.mxu0 0.0
      %4640 = vmatmul.mubr.f32.gmra.mrb[0].mxu0 %v4432
      %v4641 = vpop.f32.mrb[0].mxu0
      %v4642 = vadd.f32 0.0, %v4641
      %v4643 = vpop.f32.mrb[0].mxu0
      %4644 = vmatprep.mubr.f32.mxu0 0.0
      %4645 = vmatmul.mubr.f32.gmra.mrb[0].mxu0 %v4435
      %v4646 = vpop.f32.mrb[0].mxu0
      %v4647 = vadd.f32 0.0, %v4646
      %v4648 = vpop.f32.mrb[0].mxu0
      %4649 = vmatprep.mubr.f32.mxu0 0.0
      %4650 = vmatmul.mubr.f32.gmra.mrb[0].mxu0 %v4438
      %v4651 = vpop.f32.mrb[0].mxu0
      %v4652 = vadd.f32 0.0, %v4651
      %v4653 = vpop.f32.mrb[0].mxu0
      %4654 = vmatprep.mubr.f32.mxu0 0.0
      %4655 = vmatmul.mubr.f32.gmra.mrb[0].mxu0 %v4441
      %v4656 = vpop.f32.mrb[0].mxu0
      %v4657 = vadd.f32 0.0, %v4656
      %v4658 = vpop.f32.mrb[0].mxu0
      %4659 = vmatprep.mubr.f32.mxu0 0.0
      %4660 = vmatmul.mubr.f32.gmra.mrb[0].mxu0 %v4444
      %v4661 = vpop.f32.mrb[0].mxu0
      %v4662 = vadd.f32 0.0, %v4661
      %v4663 = vpop.f32.mrb[0].mxu0
      %4664 = vmatprep.mubr.f32.mxu0 0.0
      %4665 = vmatmul.mubr.f32.gmra.mrb[0].mxu0 %v4447
      %v4666 = vpop.f32.mrb[0].mxu0
      %v4667 = vadd.f32 0.0, %v4666
      %v4668 = vpop.f32.mrb[0].mxu0
      %4669 = vmatprep.mubr.f32.mxu0 0.0
      %4670 = vmatmul.mubr.f32.gmra.mrb[0].mxu0 %v4450
      %v4671 = vpop.f32.mrb[0].mxu0
      %v4672 = vadd.f32 0.0, %v4671
      %v4673 = vpop.f32.mrb[0].mxu0
      %4674 = vmatprep.mubr.f32.mxu0 0.0
      %4675 = vmatmul.mubr.f32.gmra.mrb[0].mxu0 %v4453
      %v4676 = vpop.f32.mrb[0].mxu0
      %v4677 = vadd.f32 0.0, %v4676
      %v4678 = vpop.f32.mrb[0].mxu0
      %4679 = vdwg.mxu0
      %v4680 = vadd.f32 %v4226, %v4522
      %v4681 = vadd.f32 %v4227, %v4527
      %v4682 = vadd.f32 %v4228, %v4532
      %v4683 = vadd.f32 %v4229, %v4537
      %v4684 = vadd.f32 %v4230, %v4542
      %v4685 = vadd.f32 %v4231, %v4547
      %v4686 = vadd.f32 %v4232, %v4552
      %v4687 = vadd.f32 %v4233, %v4557
      %v4688 = vadd.f32 %v4234, %v4562
      %v4689 = vadd.f32 %v4235, %v4567
      %v4690 = vadd.f32 %v4236, %v4572
      %v4691 = vadd.f32 %v4237, %v4577
      %v4692 = vadd.f32 %v4238, %v4582
      %v4693 = vadd.f32 %v4239, %v4587
      %v4694 = vadd.f32 %v4240, %v4592
      %v4695 = vadd.f32 %v4241, %v4597
      %v4696 = vadd.f32 %v4242, %v4602
      %v4697 = vadd.f32 %v4243, %v4607
      %v4698 = vadd.f32 %v4244, %v4612
      %v4699 = vadd.f32 %v4245, %v4617
      %v4700 = vadd.f32 %v4246, %v4622
      %v4701 = vadd.f32 %v4247, %v4627
      %v4702 = vadd.f32 %v4248, %v4632
      %v4703 = vadd.f32 %v4249, %v4637
      %v4704 = vadd.f32 %v4250, %v4642
      %v4705 = vadd.f32 %v4251, %v4647
      %v4706 = vadd.f32 %v4252, %v4652
      %v4707 = vadd.f32 %v4253, %v4657
      %v4708 = vadd.f32 %v4254, %v4662
      %v4709 = vadd.f32 %v4255, %v4667
      %v4710 = vadd.f32 %v4256, %v4672
      %v4711 = vadd.f32 %v4257, %v4677
      %v4712 = vld [vmem:[%s6] sm:$0x1]
      %v4714 = vlaneseq
      %v4715 = vshrl.u32 %v4714, 7
      %v4716 = vsub.s32 0, %v4715
      %v4717 = vrot.slane %v4712, %v4716
      %v4719 = vadd.f32 %v4680, %v4717
      %v4720 = vadd.f32 %v4681, %v4717
      %v4721 = vadd.f32 %v4682, %v4717
      %v4722 = vadd.f32 %v4683, %v4717
      %v4723 = vadd.f32 %v4684, %v4717
      %v4724 = vadd.f32 %v4685, %v4717
      %v4725 = vadd.f32 %v4686, %v4717
      %v4726 = vadd.f32 %v4687, %v4717
      %v4727 = vadd.f32 %v4688, %v4717
      %v4728 = vadd.f32 %v4689, %v4717
      %v4729 = vadd.f32 %v4690, %v4717
      %v4730 = vadd.f32 %v4691, %v4717
      %v4731 = vadd.f32 %v4692, %v4717
      %v4732 = vadd.f32 %v4693, %v4717
      %v4733 = vadd.f32 %v4694, %v4717
      %v4734 = vadd.f32 %v4695, %v4717
      %v4735 = vadd.f32 %v4696, %v4717
      %v4736 = vadd.f32 %v4697, %v4717
      %v4737 = vadd.f32 %v4698, %v4717
      %v4738 = vadd.f32 %v4699, %v4717
      %v4739 = vadd.f32 %v4700, %v4717
      %v4740 = vadd.f32 %v4701, %v4717
      %v4741 = vadd.f32 %v4702, %v4717
      %v4742 = vadd.f32 %v4703, %v4717
      %v4743 = vadd.f32 %v4704, %v4717
      %v4744 = vadd.f32 %v4705, %v4717
      %v4745 = vadd.f32 %v4706, %v4717
      %v4746 = vadd.f32 %v4707, %v4717
      %v4747 = vadd.f32 %v4708, %v4717
      %v4748 = vadd.f32 %v4709, %v4717
      %v4749 = vadd.f32 %v4710, %v4717
      %v4750 = vadd.f32 %v4711, %v4717
      %v4751 = vxor.u32 %v4719, 2147483648
      %v4752 = vxor.u32 %v4720, 2147483648
      %v4753 = vxor.u32 %v4721, 2147483648
      %v4754 = vxor.u32 %v4722, 2147483648
      %v4755 = vxor.u32 %v4723, 2147483648
      %v4756 = vxor.u32 %v4724, 2147483648
      %v4757 = vxor.u32 %v4725, 2147483648
      %v4758 = vxor.u32 %v4726, 2147483648
      %v4759 = vxor.u32 %v4727, 2147483648
      %v4760 = vxor.u32 %v4728, 2147483648
      %v4761 = vxor.u32 %v4729, 2147483648
      %v4762 = vxor.u32 %v4730, 2147483648
      %v4763 = vxor.u32 %v4731, 2147483648
      %v4764 = vxor.u32 %v4732, 2147483648
      %v4765 = vxor.u32 %v4733, 2147483648
      %v4766 = vxor.u32 %v4734, 2147483648
      %v4767 = vxor.u32 %v4735, 2147483648
      %v4768 = vxor.u32 %v4736, 2147483648
      %v4769 = vxor.u32 %v4737, 2147483648
      %v4770 = vxor.u32 %v4738, 2147483648
      %v4771 = vxor.u32 %v4739, 2147483648
      %v4772 = vxor.u32 %v4740, 2147483648
      %v4773 = vxor.u32 %v4741, 2147483648
      %v4774 = vxor.u32 %v4742, 2147483648
      %v4775 = vxor.u32 %v4743, 2147483648
      %v4776 = vxor.u32 %v4744, 2147483648
      %v4777 = vxor.u32 %v4745, 2147483648
      %v4778 = vxor.u32 %v4746, 2147483648
      %v4779 = vxor.u32 %v4747, 2147483648
      %v4780 = vxor.u32 %v4748, 2147483648
      %v4781 = vxor.u32 %v4749, 2147483648
      %v4782 = vxor.u32 %v4750, 2147483648
      %v4783 = vmul.f32 %v4751, 1.442695
      %v4784 = vpow.pop %v4783
      %v4785 = vmul.f32 %v4752, 1.442695
      %v4786 = vpow.pop %v4785
      %v4787 = vmul.f32 %v4753, 1.442695
      %v4788 = vpow.pop %v4787
      %v4789 = vmul.f32 %v4754, 1.442695
      %v4790 = vpow.pop %v4789
      %v4791 = vmul.f32 %v4755, 1.442695
      %v4792 = vpow.pop %v4791
      %v4793 = vmul.f32 %v4756, 1.442695
      %v4794 = vpow.pop %v4793
      %v4795 = vmul.f32 %v4757, 1.442695
      %v4796 = vpow.pop %v4795
      %v4797 = vmul.f32 %v4758, 1.442695
      %v4798 = vpow.pop %v4797
      %v4799 = vmul.f32 %v4759, 1.442695
      %v4800 = vpow.pop %v4799
      %v4801 = vmul.f32 %v4760, 1.442695
      %v4802 = vpow.pop %v4801
      %v4803 = vmul.f32 %v4761, 1.442695
      %v4804 = vpow.pop %v4803
      %v4805 = vmul.f32 %v4762, 1.442695
      %v4806 = vpow.pop %v4805
      %v4807 = vmul.f32 %v4763, 1.442695
      %v4808 = vpow.pop %v4807
      %v4809 = vmul.f32 %v4764, 1.442695
      %v4810 = vpow.pop %v4809
      %v4811 = vmul.f32 %v4765, 1.442695
      %v4812 = vpow.pop %v4811
      %v4813 = vmul.f32 %v4766, 1.442695
      %v4814 = vpow.pop %v4813
      %v4815 = vmul.f32 %v4767, 1.442695
      %v4816 = vpow.pop %v4815
      %v4817 = vmul.f32 %v4768, 1.442695
      %v4818 = vpow.pop %v4817
      %v4819 = vmul.f32 %v4769, 1.442695
      %v4820 = vpow.pop %v4819
      %v4821 = vmul.f32 %v4770, 1.442695
      %v4822 = vpow.pop %v4821
      %v4823 = vmul.f32 %v4771, 1.442695
      %v4824 = vpow.pop %v4823
      %v4825 = vmul.f32 %v4772, 1.442695
      %v4826 = vpow.pop %v4825
      %v4827 = vmul.f32 %v4773, 1.442695
      %v4828 = vpow.pop %v4827
      %v4829 = vmul.f32 %v4774, 1.442695
      %v4830 = vpow.pop %v4829
      %v4831 = vmul.f32 %v4775, 1.442695
      %v4832 = vpow.pop %v4831
      %v4833 = vmul.f32 %v4776, 1.442695
      %v4834 = vpow.pop %v4833
      %v4835 = vmul.f32 %v4777, 1.442695
      %v4836 = vpow.pop %v4835
      %v4837 = vmul.f32 %v4778, 1.442695
      %v4838 = vpow.pop %v4837
      %v4839 = vmul.f32 %v4779, 1.442695
      %v4840 = vpow.pop %v4839
      %v4841 = vmul.f32 %v4780, 1.442695
      %v4842 = vpow.pop %v4841
      %v4843 = vmul.f32 %v4781, 1.442695
      %v4844 = vpow.pop %v4843
      %v4845 = vmul.f32 %v4782, 1.442695
      %v4846 = vpow.pop %v4845
      %v4847 = vadd.f32 %v4784, 1.0
      %v4848 = vadd.f32 %v4786, 1.0
      %v4849 = vadd.f32 %v4788, 1.0
      %v4850 = vadd.f32 %v4790, 1.0
      %v4851 = vadd.f32 %v4792, 1.0
      %v4852 = vadd.f32 %v4794, 1.0
      %v4853 = vadd.f32 %v4796, 1.0
      %v4854 = vadd.f32 %v4798, 1.0
      %v4855 = vadd.f32 %v4800, 1.0
      %v4856 = vadd.f32 %v4802, 1.0
      %v4857 = vadd.f32 %v4804, 1.0
      %v4858 = vadd.f32 %v4806, 1.0
      %v4859 = vadd.f32 %v4808, 1.0
      %v4860 = vadd.f32 %v4810, 1.0
      %v4861 = vadd.f32 %v4812, 1.0
      %v4862 = vadd.f32 %v4814, 1.0
      %v4863 = vadd.f32 %v4816, 1.0
      %v4864 = vadd.f32 %v4818, 1.0
      %v4865 = vadd.f32 %v4820, 1.0
      %v4866 = vadd.f32 %v4822, 1.0
      %v4867 = vadd.f32 %v4824, 1.0
      %v4868 = vadd.f32 %v4826, 1.0
      %v4869 = vadd.f32 %v4828, 1.0
      %v4870 = vadd.f32 %v4830, 1.0
      %v4871 = vadd.f32 %v4832, 1.0
      %v4872 = vadd.f32 %v4834, 1.0
      %v4873 = vadd.f32 %v4836, 1.0
      %v4874 = vadd.f32 %v4838, 1.0
      %v4875 = vadd.f32 %v4840, 1.0
      %v4876 = vadd.f32 %v4842, 1.0
      %v4877 = vadd.f32 %v4844, 1.0
      %v4878 = vadd.f32 %v4846, 1.0
      %v4879 = vrcp.pop %v4847
      %v4880 = vmul.f32 1.0, %v4879
      %v4881 = vrcp.pop %v4848
      %v4882 = vmul.f32 1.0, %v4881
      %v4883 = vrcp.pop %v4849
      %v4884 = vmul.f32 1.0, %v4883
      %v4885 = vrcp.pop %v4850
      %v4886 = vmul.f32 1.0, %v4885
      %v4887 = vrcp.pop %v4851
      %v4888 = vmul.f32 1.0, %v4887
      %v4889 = vrcp.pop %v4852
      %v4890 = vmul.f32 1.0, %v4889
      %v4891 = vrcp.pop %v4853
      %v4892 = vmul.f32 1.0, %v4891
      %v4893 = vrcp.pop %v4854
      %v4894 = vmul.f32 1.0, %v4893
      %v4895 = vrcp.pop %v4855
      %v4896 = vmul.f32 1.0, %v4895
      %v4897 = vrcp.pop %v4856
      %v4898 = vmul.f32 1.0, %v4897
      %v4899 = vrcp.pop %v4857
      %v4900 = vmul.f32 1.0, %v4899
      %v4901 = vrcp.pop %v4858
      %v4902 = vmul.f32 1.0, %v4901
      %v4903 = vrcp.pop %v4859
      %v4904 = vmul.f32 1.0, %v4903
      %v4905 = vrcp.pop %v4860
      %v4906 = vmul.f32 1.0, %v4905
      %v4907 = vrcp.pop %v4861
      %v4908 = vmul.f32 1.0, %v4907
      %v4909 = vrcp.pop %v4862
      %v4910 = vmul.f32 1.0, %v4909
      %v4911 = vrcp.pop %v4863
      %v4912 = vmul.f32 1.0, %v4911
      %v4913 = vrcp.pop %v4864
      %v4914 = vmul.f32 1.0, %v4913
      %v4915 = vrcp.pop %v4865
      %v4916 = vmul.f32 1.0, %v4915
      %v4917 = vrcp.pop %v4866
      %v4918 = vmul.f32 1.0, %v4917
      %v4919 = vrcp.pop %v4867
      %v4920 = vmul.f32 1.0, %v4919
      %v4921 = vrcp.pop %v4868
      %v4922 = vmul.f32 1.0, %v4921
      %v4923 = vrcp.pop %v4869
      %v4924 = vmul.f32 1.0, %v4923
      %v4925 = vrcp.pop %v4870
      %v4926 = vmul.f32 1.0, %v4925
      %v4927 = vrcp.pop %v4871
      %v4928 = vmul.f32 1.0, %v4927
      %v4929 = vrcp.pop %v4872
      %v4930 = vmul.f32 1.0, %v4929
      %v4931 = vrcp.pop %v4873
      %v4932 = vmul.f32 1.0, %v4931
      %v4933 = vrcp.pop %v4874
      %v4934 = vmul.f32 1.0, %v4933
      %v4935 = vrcp.pop %v4875
      %v4936 = vmul.f32 1.0, %v4935
      %v4937 = vrcp.pop %v4876
      %v4938 = vmul.f32 1.0, %v4937
      %v4939 = vrcp.pop %v4877
      %v4940 = vmul.f32 1.0, %v4939
      %v4941 = vrcp.pop %v4878
      %v4942 = vmul.f32 1.0, %v4941
      %v4943 = vmul.f32 %v4719, %v4880
      %v4944 = vmul.f32 %v4720, %v4882
      %v4945 = vmul.f32 %v4721, %v4884
      %v4946 = vmul.f32 %v4722, %v4886
      %v4947 = vmul.f32 %v4723, %v4888
      %v4948 = vmul.f32 %v4724, %v4890
      %v4949 = vmul.f32 %v4725, %v4892
      %v4950 = vmul.f32 %v4726, %v4894
      %v4951 = vmul.f32 %v4727, %v4896
      %v4952 = vmul.f32 %v4728, %v4898
      %v4953 = vmul.f32 %v4729, %v4900
      %v4954 = vmul.f32 %v4730, %v4902
      %v4955 = vmul.f32 %v4731, %v4904
      %v4956 = vmul.f32 %v4732, %v4906
      %v4957 = vmul.f32 %v4733, %v4908
      %v4958 = vmul.f32 %v4734, %v4910
      %v4959 = vmul.f32 %v4735, %v4912
      %v4960 = vmul.f32 %v4736, %v4914
      %v4961 = vmul.f32 %v4737, %v4916
      %v4962 = vmul.f32 %v4738, %v4918
      %v4963 = vmul.f32 %v4739, %v4920
      %v4964 = vmul.f32 %v4740, %v4922
      %v4965 = vmul.f32 %v4741, %v4924
      %v4966 = vmul.f32 %v4742, %v4926
      %v4967 = vmul.f32 %v4743, %v4928
      %v4968 = vmul.f32 %v4744, %v4930
      %v4969 = vmul.f32 %v4745, %v4932
      %v4970 = vmul.f32 %v4746, %v4934
      %v4971 = vmul.f32 %v4747, %v4936
      %v4972 = vmul.f32 %v4748, %v4938
      %v4973 = vmul.f32 %v4749, %v4940
      %v4974 = vmul.f32 %v4750, %v4942
      %v4975 = vld [vmem:[%s341] sm:$0x1]
      %v4976 = vld [vmem:[%s7] sm:$0xff]
      %v4977 = vld [vmem:[%s7 + $0x8] sm:$0xff]
      %v4978 = vld [vmem:[%s7 + $0x10] sm:$0xff]
      %v4979 = vld [vmem:[%s7 + $0x18] sm:$0xff]
      %v4980 = vld [vmem:[%s7 + $0x20] sm:$0xff]
      %v4981 = vld [vmem:[%s7 + $0x28] sm:$0xff]
      %v4982 = vld [vmem:[%s7 + $0x30] sm:$0xff]
      %v4983 = vld [vmem:[%s7 + $0x38] sm:$0xff]
      %v4984 = vld [vmem:[%s8] sm:$0x1]
      %vm4985 = vcmask 523264
      %v4987 = vsel %vm4985, %v4975, 0
      %4989 = vmatprep.subr.mxu0 0.0
      %4990 = vmatpush1.msra.mxu0 %v4976
      %4991 = vmatprep.subr.mxu0 0.0
      %4992 = vmatpush1.msra.mxu0 %v4977
      %4993 = vmatprep.subr.mxu0 0.0
      %4994 = vmatpush1.msra.mxu0 %v4978
      %4995 = vmatprep.subr.mxu0 0.0
      %4996 = vmatpush1.msra.mxu0 %v4979
      %4997 = vmatprep.subr.mxu0 0.0
      %4998 = vmatpush1.msra.mxu0 %v4980
      %4999 = vmatprep.subr.mxu0 0.0
      %5000 = vmatpush1.msra.mxu0 %v4981
      %5001 = vmatprep.subr.mxu0 0.0
      %5002 = vmatpush1.msra.mxu0 %v4982
      %5003 = vmatprep.subr.mxu0 0.0
      %5004 = vmatpush1.msra.mxu0 %v4983
      %5005 = vmatprep.subr.mxu0 0.0
      %5006 = vmatpush1.msra.mxu0 0.0
      %5007 = vmatprep.subr.mxu0 0.0
      %5008 = vmatpush1.msra.mxu0 0.0
      %5009 = vmatprep.subr.mxu0 0.0
      %5010 = vmatpush1.msra.mxu0 0.0
      %5011 = vmatprep.subr.mxu0 0.0
      %5012 = vmatpush1.msra.mxu0 0.0
      %5013 = vmatprep.subr.mxu0 0.0
      %5014 = vmatpush1.msra.mxu0 0.0
      %5015 = vmatprep.subr.mxu0 0.0
      %5016 = vmatpush1.msra.mxu0 0.0
      %5017 = vmatprep.subr.mxu0 0.0
      %5018 = vmatpush1.msra.mxu0 0.0
      %5019 = vmatprep.subr.mxu0 0.0
      %5020 = vmatpush1.msra.mxu0 0.0
      %5021 = vmatprep.subr.mxu0 0.0
      %5022 = vmatpush1.msra.mxu0 0.0
      %5023 = vmatprep.subr.mxu0 0.0
      %5024 = vmatpush1.msra.mxu0 0.0
      %5025 = vmatprep.subr.mxu0 0.0
      %5026 = vmatpush1.msra.mxu0 0.0
      %5027 = vmatprep.subr.mxu0 0.0
      %5028 = vmatpush1.msra.mxu0 0.0
      %5029 = vmatprep.subr.mxu0 0.0
      %5030 = vmatpush1.msra.mxu0 0.0
      %5031 = vmatprep.subr.mxu0 0.0
      %5032 = vmatpush1.msra.mxu0 0.0
      %5033 = vmatprep.subr.mxu0 0.0
      %5034 = vmatpush1.msra.mxu0 0.0
      %5035 = vmatprep.subr.mxu0 0.0
      %5036 = vmatpush1.msra.mxu0 0.0
      %5037 = vmatprep.subr.mxu0 0.0
      %5038 = vmatpush1.msra.mxu0 0.0
      %5039 = vmatprep.subr.mxu0 0.0
      %5040 = vmatpush1.msra.mxu0 0.0
      %5041 = vmatprep.subr.mxu0 0.0
      %5042 = vmatpush1.msra.mxu0 0.0
      %5043 = vmatprep.subr.mxu0 0.0
      %5044 = vmatpush1.msra.mxu0 0.0
      %5045 = vmatprep.subr.mxu0 0.0
      %5046 = vmatpush1.msra.mxu0 0.0
      %5047 = vmatprep.subr.mxu0 0.0
      %5048 = vmatpush1.msra.mxu0 0.0
      %5049 = vmatprep.subr.mxu0 0.0
      %5050 = vmatpush1.msra.mxu0 0.0
      %5051 = vmatprep.subr.mxu0 0.0
      %5052 = vmatpush1.msra.mxu0 0.0
      %5053 = vmatprep.mubr.f32.mxu0 0.0
      %5054 = vmatmul.mubr.f32.gmra.mrb[0].mxu0 %v4987
      %v5055 = vpop.f32.mrb[0].mxu0
      %v5056 = vadd.f32 %v4984, %v5055
      %v5057 = vpop.f32.mrb[0].mxu0
      %5058 = vdwg.mxu0
      %v5059 = vlaneseq
      %v5060 = vshrl.u32 %v5059, 7
      %v5061 = vsub.s32 0, %v5060
      %v5062 = vrot.slane %v5056, %v5061
      %v5063 = vadd.f32 %v4943, %v5062
      %v5064 = vadd.f32 %v4944, %v5062
      %v5065 = vadd.f32 %v4945, %v5062
      %v5066 = vadd.f32 %v4946, %v5062
      %v5067 = vadd.f32 %v4947, %v5062
      %v5068 = vadd.f32 %v4948, %v5062
      %v5069 = vadd.f32 %v4949, %v5062
      %v5070 = vadd.f32 %v4950, %v5062
      %v5071 = vadd.f32 %v4951, %v5062
      %v5072 = vadd.f32 %v4952, %v5062
      %v5073 = vadd.f32 %v4953, %v5062
      %v5074 = vadd.f32 %v4954, %v5062
      %v5075 = vadd.f32 %v4955, %v5062
      %v5076 = vadd.f32 %v4956, %v5062
      %v5077 = vadd.f32 %v4957, %v5062
      %v5078 = vadd.f32 %v4958, %v5062
      %v5079 = vadd.f32 %v4959, %v5062
      %v5080 = vadd.f32 %v4960, %v5062
      %v5081 = vadd.f32 %v4961, %v5062
      %v5082 = vadd.f32 %v4962, %v5062
      %v5083 = vadd.f32 %v4963, %v5062
      %v5084 = vadd.f32 %v4964, %v5062
      %v5085 = vadd.f32 %v4965, %v5062
      %v5086 = vadd.f32 %v4966, %v5062
      %v5087 = vadd.f32 %v4967, %v5062
      %v5088 = vadd.f32 %v4968, %v5062
      %v5089 = vadd.f32 %v4969, %v5062
      %v5090 = vadd.f32 %v4970, %v5062
      %v5091 = vadd.f32 %v4971, %v5062
      %v5092 = vadd.f32 %v4972, %v5062
      %v5093 = vadd.f32 %v4973, %v5062
      %v5094 = vadd.f32 %v4974, %v5062
      %5095 = vst.msk [vmem:[%s346] sm:$0xff] %vm4985, %v5063
      %5096 = vst.msk [vmem:[%s346 + $0x8] sm:$0xff] %vm4985, %v5064
      %5097 = vst.msk [vmem:[%s346 + $0x10] sm:$0xff] %vm4985, %v5065
      %5098 = vst.msk [vmem:[%s346 + $0x18] sm:$0xff] %vm4985, %v5066
      %5099 = vst.msk [vmem:[%s346 + $0x20] sm:$0xff] %vm4985, %v5067
      %5100 = vst.msk [vmem:[%s346 + $0x28] sm:$0xff] %vm4985, %v5068
      %5101 = vst.msk [vmem:[%s346 + $0x30] sm:$0xff] %vm4985, %v5069
      %5102 = vst.msk [vmem:[%s346 + $0x38] sm:$0xff] %vm4985, %v5070
      %5103 = vst.msk [vmem:[%s346 + $0x40] sm:$0xff] %vm4985, %v5071
      %5104 = vst.msk [vmem:[%s346 + $0x48] sm:$0xff] %vm4985, %v5072
      %5105 = vst.msk [vmem:[%s346 + $0x50] sm:$0xff] %vm4985, %v5073
      %5106 = vst.msk [vmem:[%s346 + $0x58] sm:$0xff] %vm4985, %v5074
      %5107 = vst.msk [vmem:[%s346 + $0x60] sm:$0xff] %vm4985, %v5075
      %5108 = vst.msk [vmem:[%s346 + $0x68] sm:$0xff] %vm4985, %v5076
      %5109 = vst.msk [vmem:[%s346 + $0x70] sm:$0xff] %vm4985, %v5077
      %5110 = vst.msk [vmem:[%s346 + $0x78] sm:$0xff] %vm4985, %v5078
      %5111 = vst.msk [vmem:[%s346 + $0x80] sm:$0xff] %vm4985, %v5079
      %5112 = vst.msk [vmem:[%s346 + $0x88] sm:$0xff] %vm4985, %v5080
      %5113 = vst.msk [vmem:[%s346 + $0x90] sm:$0xff] %vm4985, %v5081
      %5114 = vst.msk [vmem:[%s346 + $0x98] sm:$0xff] %vm4985, %v5082
      %5115 = vst.msk [vmem:[%s346 + $0xa0] sm:$0xff] %vm4985, %v5083
      %5116 = vst.msk [vmem:[%s346 + $0xa8] sm:$0xff] %vm4985, %v5084
      %5117 = vst.msk [vmem:[%s346 + $0xb0] sm:$0xff] %vm4985, %v5085
      %5118 = vst.msk [vmem:[%s346 + $0xb8] sm:$0xff] %vm4985, %v5086
      %5119 = vst.msk [vmem:[%s346 + $0xc0] sm:$0xff] %vm4985, %v5087
      %5120 = vst.msk [vmem:[%s346 + $0xc8] sm:$0xff] %vm4985, %v5088
      %5121 = vst.msk [vmem:[%s346 + $0xd0] sm:$0xff] %vm4985, %v5089
      %5122 = vst.msk [vmem:[%s346 + $0xd8] sm:$0xff] %vm4985, %v5090
      %5123 = vst.msk [vmem:[%s346 + $0xe0] sm:$0xff] %vm4985, %v5091
      %5124 = vst.msk [vmem:[%s346 + $0xe8] sm:$0xff] %vm4985, %v5092
      %5125 = vst.msk [vmem:[%s346 + $0xf0] sm:$0xff] %vm4985, %v5093
      %5126 = vst.msk [vmem:[%s346 + $0xf8] sm:$0xff] %vm4985, %v5094
      %p5127 = scmp.lt.s32.totalorder %s20, 1
      %s5128 = scalar_select %p5127, %s20, 1
      %s5129 = smul.addr %s5128, 32
      %s5130 = smul.addr %s5129, 8
      %s5131 = scalar_lea.vmem %s9, %s5130
      // Predicated region
      $region57: #{residual_block_t_emb.2} parent=55 // pred_check
        %p5132 = pneg %p237
      $region58: #{residual_block_t_emb.2} parent=55 // pred_check_branch
        %5134 = sbr.rel (%p5132) target = $region60
      $region59: #{residual_block_t_emb.2} parent=55 // pred_region
        _
      $region60: #{residual_block_t_emb.2} parent=55 // pred_fallthru
        _
    $region56: #{residual_block_t_emb.2} parent=5 // pred_fallthru
      _
    %p5135 = scmp.le.s32.totalorder 2, %s15
    // Predicated region
    $region61: #{residual_block_t_emb.2} parent=5 // pred_check
      %p5136 = pneg %p5135
    $region62: #{residual_block_t_emb.2} parent=5 // pred_check_branch
      %5138 = sbr.rel (%p5136) target = $region64
    $region63: #{residual_block_t_emb.2} parent=5 // pred_region
      %s5139 = ssub.s32 %s15, 2
      // Predicated region
      $region65: #{residual_block_t_emb.2} parent=63 // pred_check
        %p5140 = pneg %p243
      $region66: #{residual_block_t_emb.2} parent=63 // pred_check_branch
        %5142 = sbr.rel (%p5140) target = $region68
      $region67: #{residual_block_t_emb.2} parent=63 // pred_region
        %p5143 = scmp.lt.s32.totalorder %s21, 1
        %s5144 = scalar_select %p5143, %s21, 1
        %s5145 = smul.addr %s5144, 32
        %s5146 = smul.addr %s5145, 8
        %s5147 = scalar_lea.vmem %s9, %s5146
      $region68: #{residual_block_t_emb.2} parent=63 // pred_fallthru
        _
    $region64: #{residual_block_t_emb.2} parent=5 // pred_fallthru
      _
  $region6: #{residual_block_t_emb.2} parent=0 // loop_footer
    %s19 = sadd.s32 1, %s15
  $region7: #{residual_block_t_emb.2} parent=0 // loop_footer_branch
    %14 = sbr.rel target = $region3
  $region8: #{residual_block_t_emb.2} parent=0 // loop_exit
    _

// kernel: residual_block_t_emb.3
$region0: #{residual_block_t_emb.3}
  #allocation0 [shape = 'u32[]', space=smem, size = 0x4, offset = 0x4, fixed_abs, tag = 'smem constant byte address 0x4 - core index']
  #allocation1 [shape = 'u32[144,128]{1,0:T(1,128)}', space=vmem, size = 0x12000, scoped, tag = 'internal scratch']
  %s0 = inlined_call_operand.vmem [shape: f32[2,18,18,64], index: 0, kind: input, shape index: {}]
  %s1 = inlined_call_operand.vmem [shape: f32[2,256,32], index: 1, kind: input, shape index: {}]
  %s2 = inlined_call_operand.vmem [shape: f32[1,64], index: 2, kind: input, shape index: {}]
  %s3 = inlined_call_operand.vmem [shape: f32[1,64], index: 3, kind: input, shape index: {}]
  %s4 = inlined_call_operand.vmem [shape: f32[64,64], index: 4, kind: input, shape index: {}]
  %s5 = inlined_call_operand.vmem [shape: f32[9,64,64], index: 5, kind: input, shape index: {}]
  %s6 = inlined_call_operand.vmem [shape: f32[1,64], index: 6, kind: input, shape index: {}]
  %s7 = inlined_call_operand.vmem [shape: f32[32,64], index: 7, kind: input, shape index: {}]
  %s8 = inlined_call_operand.vmem [shape: f32[1,64], index: 8, kind: input, shape index: {}]
  %s9 = inlined_call_operand.hbm [shape: f32[2,256,64], index: 9, kind: output, shape index: {}]
  %s10 = sld [smem:[#allocation0]]
  $region69: #{residual_block_t_emb.3} parent=0
    _
  %s12 = ssub.s32 1, %s10
  %s13 = scalar_select 0, %s12, %s10
  $region1: #{residual_block_t_emb.3} parent=0
    #allocation2 [shape = 'u8[262144]{0}', space=vmem, size = 0x40000, scoped, tag = 'output window, operand 0']
    #allocation3 [shape = 's32[2]{0}', space=sflag, size = 0x8, scoped, tag = 'scoped memory for residual_block_t_emb.3']
    %14 = vsyncpa [#allocation3], 0
    %s15 = scalar_lea.sflag [#allocation3], 1
    %16 = vsyncpa %s15, 0
    loop: start=0, step=1, limit=4
    $region2: #{residual_block_t_emb.3} parent=1 // loop_pre_header
      _
    $region3: #{residual_block_t_emb.3} parent=1 // loop_header
      %s18 = sphi 0, %s22
      %p19 = scmp.ge.s32.totalorder %s18, 4
      %s28 = sphi 0, %s30
      %s31 = sphi 0, %s28
      %s32 = sphi 0, %s31
      %s48 = sphi 0, %s32
      %s54 = sphi 0, %s56
      %s57 = sphi 0, %s54
      %s58 = sphi 0, %s57
      %s74 = sphi 0, %s58
      %s78 = sphi 0, %s78
      %s80 = sphi 0, %s78
      %s81 = sphi 0, %s80
      %s95 = sphi 0, %s81
      %s99 = sphi 0, %s99
      %s101 = sphi 0, %s99
      %s102 = sphi 0, %s101
      %s116 = sphi 0, %s102
      %s120 = sphi 0, %s120
      %s122 = sphi 0, %s120
      %s123 = sphi 0, %s122
      %s137 = sphi 0, %s123
      %s141 = sphi 0, %s141
      %s143 = sphi 0, %s141
      %s144 = sphi 0, %s143
      %s158 = sphi 0, %s144
      %s162 = sphi 0, %s162
      %s164 = sphi 0, %s162
      %s165 = sphi 0, %s164
      %s179 = sphi 0, %s165
      %s183 = sphi 0, %s183
      %s185 = sphi 0, %s183
      %s186 = sphi 0, %s185
      %s200 = sphi 0, %s186
      %s204 = sphi 0, %s204
      %s206 = sphi 0, %s204
      %s207 = sphi 0, %s206
      %s221 = sphi 0, %s207
      %s227 = sphi 0, %s229
      %s230 = sphi 0, %s227
      %s231 = sphi 0, %s230
      %s247 = sphi 0, %s231
    $region4: #{residual_block_t_emb.3} parent=1 // loop_header_branch
      %21 = sbr.rel (%p19) target = $region8
    $region5: #{residual_block_t_emb.3} parent=1 // loop_body
      %s23 = ssub.s32 %s18, 1
      %s24 = ssub.s32 %s18, 2
      %s25 = sadd.s32 %s18, 1
      %s26 = ssub.s32 %s18, %s25
      %p27 = scmp.eq.s32.totalorder %s26, 0
      %s29 = sadd.s32 %s28, 1
      %s30 = scalar_select %p27, %s28, %s29
      %p33 = pneg %p27
      %p34 = scmp.eq.s32.totalorder %s18, 1
      %p35 = por %p33, %p34
      %p36 = scmp.ne.s32.totalorder %s28, %s31
      %p37 = scmp.eq.s32.totalorder %s18, 0
      %p38 = por %p36, %p37
      %p39 = scmp.ne.s32.totalorder %s28, %s31
      %p40 = scmp.eq.s32.totalorder %s23, 1
      %p41 = por %p39, %p40
      %p42 = scmp.ne.s32.totalorder %s31, %s32
      %p43 = scmp.eq.s32.totalorder %s23, 0
      %p44 = por %p42, %p43
      %p45 = scmp.ne.s32.totalorder %s31, %s32
      %p46 = scmp.eq.s32.totalorder %s24, 1
      %p47 = por %p45, %p46
      %p49 = scmp.ne.s32.totalorder %s32, %s48
      %p50 = scmp.eq.s32.totalorder %s24, 0
      %p51 = por %p49, %p50
      %s52 = ssub.s32 %s18, %s25
      %p53 = scmp.eq.s32.totalorder %s52, 0
      %s55 = sadd.s32 %s54, 1
      %s56 = scalar_select %p53, %s54, %s55
      %p59 = pneg %p53
      %p60 = scmp.eq.s32.totalorder %s18, 1
      %p61 = por %p59, %p60
      %p62 = scmp.ne.s32.totalorder %s54, %s57
      %p63 = scmp.eq.s32.totalorder %s18, 0
      %p64 = por %p62, %p63
      %p65 = scmp.ne.s32.totalorder %s54, %s57
      %p66 = scmp.eq.s32.totalorder %s23, 1
      %p67 = por %p65, %p66
      %p68 = scmp.ne.s32.totalorder %s57, %s58
      %p69 = scmp.eq.s32.totalorder %s23, 0
      %p70 = por %p68, %p69
      %p71 = scmp.ne.s32.totalorder %s57, %s58
      %p72 = scmp.eq.s32.totalorder %s24, 1
      %p73 = por %p71, %p72
      %p75 = scmp.ne.s32.totalorder %s58, %s74
      %p76 = scmp.eq.s32.totalorder %s24, 0
      %p77 = por %p75, %p76
      %s79 = sadd.s32 %s78, 1
      %p82 = scmp.eq.s32.totalorder %s18, 1
      %p83 = scmp.ne.s32.totalorder %s78, %s80
      %p84 = scmp.eq.s32.totalorder %s18, 0
      %p85 = por %p83, %p84
      %p86 = scmp.ne.s32.totalorder %s78, %s80
      %p87 = scmp.eq.s32.totalorder %s23, 1
      %p88 = por %p86, %p87
      %p89 = scmp.ne.s32.totalorder %s80, %s81
      %p90 = scmp.eq.s32.totalorder %s23, 0
      %p91 = por %p89, %p90
      %p92 = scmp.ne.s32.totalorder %s80, %s81
      %p93 = scmp.eq.s32.totalorder %s24, 1
      %p94 = por %p92, %p93
      %p96 = scmp.ne.s32.totalorder %s81, %s95
      %p97 = scmp.eq.s32.totalorder %s24, 0
      %p98 = por %p96, %p97
      %s100 = sadd.s32 %s99, 1
      %p103 = scmp.eq.s32.totalorder %s18, 1
      %p104 = scmp.ne.s32.totalorder %s99, %s101
      %p105 = scmp.eq.s32.totalorder %s18, 0
      %p106 = por %p104, %p105
      %p107 = scmp.ne.s32.totalorder %s99, %s101
      %p108 = scmp.eq.s32.totalorder %s23, 1
      %p109 = por %p107, %p108
      %p110 = scmp.ne.s32.totalorder %s101, %s102
      %p111 = scmp.eq.s32.totalorder %s23, 0
      %p112 = por %p110, %p111
      %p113 = scmp.ne.s32.totalorder %s101, %s102
      %p114 = scmp.eq.s32.totalorder %s24, 1
      %p115 = por %p113, %p114
      %p117 = scmp.ne.s32.totalorder %s102, %s116
      %p118 = scmp.eq.s32.totalorder %s24, 0
      %p119 = por %p117, %p118
      %s121 = sadd.s32 %s120, 1
      %p124 = scmp.eq.s32.totalorder %s18, 1
      %p125 = scmp.ne.s32.totalorder %s120, %s122
      %p126 = scmp.eq.s32.totalorder %s18, 0
      %p127 = por %p125, %p126
      %p128 = scmp.ne.s32.totalorder %s120, %s122
      %p129 = scmp.eq.s32.totalorder %s23, 1
      %p130 = por %p128, %p129
      %p131 = scmp.ne.s32.totalorder %s122, %s123
      %p132 = scmp.eq.s32.totalorder %s23, 0
      %p133 = por %p131, %p132
      %p134 = scmp.ne.s32.totalorder %s122, %s123
      %p135 = scmp.eq.s32.totalorder %s24, 1
      %p136 = por %p134, %p135
      %p138 = scmp.ne.s32.totalorder %s123, %s137
      %p139 = scmp.eq.s32.totalorder %s24, 0
      %p140 = por %p138, %p139
      %s142 = sadd.s32 %s141, 1
      %p145 = scmp.eq.s32.totalorder %s18, 1
      %p146 = scmp.ne.s32.totalorder %s141, %s143
      %p147 = scmp.eq.s32.totalorder %s18, 0
      %p148 = por %p146, %p147
      %p149 = scmp.ne.s32.totalorder %s141, %s143
      %p150 = scmp.eq.s32.totalorder %s23, 1
      %p151 = por %p149, %p150
      %p152 = scmp.ne.s32.totalorder %s143, %s144
      %p153 = scmp.eq.s32.totalorder %s23, 0
      %p154 = por %p152, %p153
      %p155 = scmp.ne.s32.totalorder %s143, %s144
      %p156 = scmp.eq.s32.totalorder %s24, 1
      %p157 = por %p155, %p156
      %p159 = scmp.ne.s32.totalorder %s144, %s158
      %p160 = scmp.eq.s32.totalorder %s24, 0
      %p161 = por %p159, %p160
      %s163 = sadd.s32 %s162, 1
      %p166 = scmp.eq.s32.totalorder %s18, 1
      %p167 = scmp.ne.s32.totalorder %s162, %s164
      %p168 = scmp.eq.s32.totalorder %s18, 0
      %p169 = por %p167, %p168
      %p170 = scmp.ne.s32.totalorder %s162, %s164
      %p171 = scmp.eq.s32.totalorder %s23, 1
      %p172 = por %p170, %p171
      %p173 = scmp.ne.s32.totalorder %s164, %s165
      %p174 = scmp.eq.s32.totalorder %s23, 0
      %p175 = por %p173, %p174
      %p176 = scmp.ne.s32.totalorder %s164, %s165
      %p177 = scmp.eq.s32.totalorder %s24, 1
      %p178 = por %p176, %p177
      %p180 = scmp.ne.s32.totalorder %s165, %s179
      %p181 = scmp.eq.s32.totalorder %s24, 0
      %p182 = por %p180, %p181
      %s184 = sadd.s32 %s183, 1
      %p187 = scmp.eq.s32.totalorder %s18, 1
      %p188 = scmp.ne.s32.totalorder %s183, %s185
      %p189 = scmp.eq.s32.totalorder %s18, 0
      %p190 = por %p188, %p189
      %p191 = scmp.ne.s32.totalorder %s183, %s185
      %p192 = scmp.eq.s32.totalorder %s23, 1
      %p193 = por %p191, %p192
      %p194 = scmp.ne.s32.totalorder %s185, %s186
      %p195 = scmp.eq.s32.totalorder %s23, 0
      %p196 = por %p194, %p195
      %p197 = scmp.ne.s32.totalorder %s185, %s186
      %p198 = scmp.eq.s32.totalorder %s24, 1
      %p199 = por %p197, %p198
      %p201 = scmp.ne.s32.totalorder %s186, %s200
      %p202 = scmp.eq.s32.totalorder %s24, 0
      %p203 = por %p201, %p202
      %s205 = sadd.s32 %s204, 1
      %p208 = scmp.eq.s32.totalorder %s18, 1
      %p209 = scmp.ne.s32.totalorder %s204, %s206
      %p210 = scmp.eq.s32.totalorder %s18, 0
      %p211 = por %p209, %p210
      %p212 = scmp.ne.s32.totalorder %s204, %s206
      %p213 = scmp.eq.s32.totalorder %s23, 1
      %p214 = por %p212, %p213
      %p215 = scmp.ne.s32.totalorder %s206, %s207
      %p216 = scmp.eq.s32.totalorder %s23, 0
      %p217 = por %p215, %p216
      %p218 = scmp.ne.s32.totalorder %s206, %s207
      %p219 = scmp.eq.s32.totalorder %s24, 1
      %p220 = por %p218, %p219
      %p222 = scmp.ne.s32.totalorder %s207, %s221
      %p223 = scmp.eq.s32.totalorder %s24, 0
      %p224 = por %p222, %p223
      %s225 = ssub.s32 %s18, %s25
      %p226 = scmp.eq.s32.totalorder %s225, 0
      %s228 = sadd.s32 %s227, 1
      %s229 = scalar_select %p226, %s227, %s228
      %p232 = pneg %p226
      %p233 = scmp.eq.s32.totalorder %s18, 1
      %p234 = por %p232, %p233
      %p235 = scmp.ne.s32.totalorder %s227, %s230
      %p236 = scmp.eq.s32.totalorder %s18, 0
      %p237 = por %p235, %p236
      %p238 = scmp.ne.s32.totalorder %s227, %s230
      %p239 = scmp.eq.s32.totalorder %s23, 1
      %p240 = por %p238, %p239
      %p241 = scmp.ne.s32.totalorder %s230, %s231
      %p242 = scmp.eq.s32.totalorder %s23, 0
      %p243 = por %p241, %p242
      %p244 = scmp.ne.s32.totalorder %s230, %s231
      %p245 = scmp.eq.s32.totalorder %s24, 1
      %p246 = por %p244, %p245
      %p248 = scmp.ne.s32.totalorder %s231, %s247
      %p249 = scmp.eq.s32.totalorder %s24, 0
      %p250 = por %p248, %p249
      %p251 = scmp.le.s32.totalorder 1, %s18
      %p252 = scmp.lt.s32.totalorder %s18, 3
      %p253 = pnand %p251, %p252
      %p254 = pneg %p253
      // Predicated region
      $region9: #{residual_block_t_emb.3} parent=5 // pred_check
        _
      $region10: #{residual_block_t_emb.3} parent=5 // pred_check_branch
        %256 = sbr.rel (%p253) target = $region12
      $region11: #{residual_block_t_emb.3} parent=5 // pred_region
        %s257 = ssub.s32 %s18, 1
        // Predicated region
        $region13: #{residual_block_t_emb.3} parent=11 // pred_check
          %p258 = pneg %p91
        $region14: #{residual_block_t_emb.3} parent=11 // pred_check_branch
          %260 = sbr.rel (%p258) target = $region16
        $region15: #{residual_block_t_emb.3} parent=11 // pred_region
          _
        $region16: #{residual_block_t_emb.3} parent=11 // pred_fallthru
          _
        // Predicated region
        $region17: #{residual_block_t_emb.3} parent=11 // pred_check
          %p261 = pneg %p112
        $region18: #{residual_block_t_emb.3} parent=11 // pred_check_branch
          %263 = sbr.rel (%p261) target = $region20
        $region19: #{residual_block_t_emb.3} parent=11 // pred_region
          _
        $region20: #{residual_block_t_emb.3} parent=11 // pred_fallthru
          _
        // Predicated region
        $region21: #{residual_block_t_emb.3} parent=11 // pred_check
          %p264 = pneg %p133
        $region22: #{residual_block_t_emb.3} parent=11 // pred_check_branch
          %266 = sbr.rel (%p264) target = $region24
        $region23: #{residual_block_t_emb.3} parent=11 // pred_region
          _
        $region24: #{residual_block_t_emb.3} parent=11 // pred_fallthru
          _
        // Predicated region
        $region25: #{residual_block_t_emb.3} parent=11 // pred_check
          %p267 = pneg %p154
        $region26: #{residual_block_t_emb.3} parent=11 // pred_check_branch
          %269 = sbr.rel (%p267) target = $region28
        $region27: #{residual_block_t_emb.3} parent=11 // pred_region
          _
        $region28: #{residual_block_t_emb.3} parent=11 // pred_fallthru
          _
        // Predicated region
        $region29: #{residual_block_t_emb.3} parent=11 // pred_check
          %p270 = pneg %p175
        $region30: #{residual_block_t_emb.3} parent=11 // pred_check_branch
          %272 = sbr.rel (%p270) target = $region32
        $region31: #{residual_block_t_emb.3} parent=11 // pred_region
          _
        $region32: #{residual_block_t_emb.3} parent=11 // pred_fallthru
          _
        // Predicated region
        $region33: #{residual_block_t_emb.3} parent=11 // pred_check
          %p273 = pneg %p196
        $region34: #{residual_block_t_emb.3} parent=11 // pred_check_branch
          %275 = sbr.rel (%p273) target = $region36
        $region35: #{residual_block_t_emb.3} parent=11 // pred_region
          _
        $region36: #{residual_block_t_emb.3} parent=11 // pred_fallthru
          _
        // Predicated region
        $region37: #{residual_block_t_emb.3} parent=11 // pred_check
          %p276 = pneg %p217
        $region38: #{residual_block_t_emb.3} parent=11 // pred_check_branch
          %278 = sbr.rel (%p276) target = $region40
        $region39: #{residual_block_t_emb.3} parent=11 // pred_region
          _
        $region40: #{residual_block_t_emb.3} parent=11 // pred_fallthru
          _
      $region12: #{residual_block_t_emb.3} parent=5 // pred_fallthru
        _
      %p279 = scmp.lt.s32.totalorder %s18, 2
      // Predicated region
      $region41: #{residual_block_t_emb.3} parent=5 // pred_check
        %p280 = pneg %p279
      $region42: #{residual_block_t_emb.3} parent=5 // pred_check_branch
        %282 = sbr.rel (%p280) target = $region44
      $region43: #{residual_block_t_emb.3} parent=5 // pred_region
        // Predicated region
        $region45: #{residual_block_t_emb.3} parent=43 // pred_check
          %p283 = pneg %p38
        $region46: #{residual_block_t_emb.3} parent=43 // pred_check_branch
          %285 = sbr.rel (%p283) target = $region48
        $region47: #{residual_block_t_emb.3} parent=43 // pred_region
          %p286 = scmp.lt.s32.totalorder %s18, 1
          %s287 = scalar_select %p286, %s18, 1
          %s288 = smul.addr %s287, 54
          %s289 = smul.addr %s288, 8
          %s290 = scalar_lea.vmem %s0, %s289
        $region48: #{residual_block_t_emb.3} parent=43 // pred_fallthru
          _
        // Predicated region
        $region49: #{residual_block_t_emb.3} parent=43 // pred_check
          %p291 = pneg %p64
        $region50: #{residual_block_t_emb.3} parent=43 // pred_check_branch
          %293 = sbr.rel (%p291) target = $region52
        $region51: #{residual_block_t_emb.3} parent=43 // pred_region
          %p294 = scmp.lt.s32.totalorder %s18, 1
          %s295 = scalar_select %p294, %s18, 1
          %s296 = smul.addr %s295, 32
          %s297 = smul.addr %s296, 8
          %s298 = scalar_lea.vmem %s1, %s297
        $region52: #{residual_block_t_emb.3} parent=43 // pred_fallthru
          _
      $region44: #{residual_block_t_emb.3} parent=5 // pred_fallthru
        _
      %p299 = scmp.le.s32.totalorder 1, %s18
      %p300 = scmp.lt.s32.totalorder %s18, 3
      %p301 = pnand %p299, %p300
      %p302 = pneg %p301
      // Predicated region
      $region53: #{residual_block_t_emb.3} parent=5 // pred_check
        _
      $region54: #{residual_block_t_emb.3} parent=5 // pred_check_branch
        %304 = sbr.rel (%p301) target = $region56
      $region55: #{residual_block_t_emb.3} parent=5 // pred_region
        %s305 = ssub.s32 %s18, 1
        %p306 = scmp.lt.s32.totalorder %s23, 1
        %s307 = scalar_select %p306, %s23, 1
        %s308 = smul.addr %s307, 54
        %s309 = smul.addr %s308, 8
        %s310 = scalar_lea.vmem %s0, %s309
        %p311 = pneg %p44
        %p312 = pneg %p41
        %p313 = scmp.lt.s32.totalorder %s23, 1
        %s314 = scalar_select %p313, %s23, 1
        %s315 = smul.addr %s314, 32
        %s316 = smul.addr %s315, 8
        %s317 = scalar_lea.vmem %s1, %s316
        %p318 = pneg %p70
        %p319 = pneg %p67
        %p320 = pneg %p91
        %p321 = pneg %p88
        %p322 = pneg %p112
        %p323 = pneg %p109
        %p324 = pneg %p133
        %p325 = pneg %p130
        %p326 = pneg %p154
        %p327 = pneg %p151
        %p328 = pneg %p175
        %p329 = pneg %p172
        %p330 = pneg %p196
        %p331 = pneg %p193
        %p332 = pneg %p217
        %p333 = pneg %p214
        %p334 = pneg %p243
        %p335 = pneg %p240
        %s336 = sand.u32 %s230, 1
        %s337 = scalar_lea.sflag [#allocation3], %s336
        %s338 = sand.u32 %s230, 1
        %s339 = smul.addr %s338, 256
        %s340 = scalar_lea.vmem [#allocation2], %s339
        %p341 = scmp.lt.s32.totalorder %s23, 1
        %s342 = scalar_select %p341, %s23, 1
        %s343 = smul.addr %s342, 54
        %s344 = smul.addr %s343, 8
        %s345 = scalar_lea.vmem %s0, %s344
        %p346 = scmp.lt.s32.totalorder %s23, 1
        %s347 = scalar_select %p346, %s23, 1
        %s348 = smul.addr %s347, 32
        %s349 = smul.addr %s348, 8
        %s350 = scalar_lea.vmem %s1, %s349
        %s351 = scalar_lea.vmem %s345, 24
        %v352 = vld [vmem:[%s351 + $0x1] sm:$0xff]
        %v353 = vld [vmem:[%s351 + $0x9] sm:$0xff]
        %v354 = vld [vmem:[%s351 + $0x19] sm:$0xff]
        %v355 = vld [vmem:[%s351 + $0x21] sm:$0xff]
        %v356 = vld [vmem:[%s351 + $0x31] sm:$0xff]
        %v357 = vld [vmem:[%s351 + $0x39] sm:$0xff]
        %v358 = vld [vmem:[%s351 + $0x49] sm:$0xff]
        %v359 = vld [vmem:[%s351 + $0x51] sm:$0xff]
        %v360 = vld [vmem:[%s351 + $0x61] sm:$0xff]
        %v361 = vld [vmem:[%s351 + $0x69] sm:$0xff]
        %v362 = vld [vmem:[%s351 + $0x79] sm:$0xff]
        %v363 = vld [vmem:[%s351 + $0x81] sm:$0xff]
        %v364 = vld [vmem:[%s351 + $0x91] sm:$0xff]
        %v365 = vld [vmem:[%s351 + $0x99] sm:$0xff]
        %v366 = vld [vmem:[%s351 + $0xa9] sm:$0xff]
        %v367 = vld [vmem:[%s351 + $0xb1] sm:$0xff]
        %v368 = vld [vmem:[%s351 + $0xc1] sm:$0xff]
        %v369 = vld [vmem:[%s351 + $0xc9] sm:$0xff]
        %v370 = vld [vmem:[%s351 + $0xd9] sm:$0xff]
        %v371 = vld [vmem:[%s351 + $0xe1] sm:$0xff]
        %v372 = vld [vmem:[%s351 + $0xf1] sm:$0xff]
        %v373 = vld [vmem:[%s351 + $0xf9] sm:$0xff]
        %v374 = vld [vmem:[%s351 + $0x109] sm:$0xff]
        %v375 = vld [vmem:[%s351 + $0x111] sm:$0xff]
        %v376 = vld [vmem:[%s351 + $0x121] sm:$0xff]
        %v377 = vld [vmem:[%s351 + $0x129] sm:$0xff]
        %v378 = vld [vmem:[%s351 + $0x139] sm:$0xff]
        %v379 = vld [vmem:[%s351 + $0x141] sm:$0xff]
        %v380 = vld [vmem:[%s351 + $0x151] sm:$0xff]
        %v381 = vld [vmem:[%s351 + $0x159] sm:$0xff]
        %v382 = vld [vmem:[%s351 + $0x169] sm:$0xff]
        %v383 = vld [vmem:[%s351 + $0x171] sm:$0xff]
        %vm384 = vcmask 523264
        %v385 = vsel %vm384, %v352, 0.0
        %v386 = vsel %vm384, %v353, 0.0
        %v387 = vadd.f32 %v385, %v386
        %v388 = vsel %vm384, %v354, 0.0
        %v389 = vadd.f32 %v387, %v388
        %v390 = vsel %vm384, %v355, 0.0
        %v391 = vadd.f32 %v389, %v390
        %v392 = vsel %vm384, %v356, 0.0
        %v393 = vadd.f32 %v391, %v392
        %v394 = vsel %vm384, %v357, 0.0
        %v395 = vadd.f32 %v393, %v394
        %v396 = vsel %vm384, %v358, 0.0
        %v397 = vadd.f32 %v395, %v396
        %v398 = vsel %vm384, %v359, 0.0
        %v399 = vadd.f32 %v397, %v398
        %v400 = vsel %vm384, %v360, 0.0
        %v401 = vadd.f32 %v399, %v400
        %v402 = vsel %vm384, %v361, 0.0
        %v403 = vadd.f32 %v401, %v402
        %v404 = vsel %vm384, %v362, 0.0
        %v405 = vadd.f32 %v403, %v404
        %v406 = vsel %vm384, %v363, 0.0
        %v407 = vadd.f32 %v405, %v406
        %v408 = vsel %vm384, %v364, 0.0
        %v409 = vadd.f32 %v407, %v408
        %v410 = vsel %vm384, %v365, 0.0
        %v411 = vadd.f32 %v409, %v410
        %v412 = vsel %vm384, %v366, 0.0
        %v413 = vadd.f32 %v411, %v412
        %v414 = vsel %vm384, %v367, 0.0
        %v415 = vadd.f32 %v413, %v414
        %v416 = vsel %vm384, %v368, 0.0
        %v417 = vadd.f32 %v415, %v416
        %v418 = vsel %vm384, %v369, 0.0
        %v419 = vadd.f32 %v417, %v418
        %v420 = vsel %vm384, %v370, 0.0
        %v421 = vadd.f32 %v419, %v420
        %v422 = vsel %vm384, %v371, 0.0
        %v423 = vadd.f32 %v421, %v422
        %v424 = vsel %vm384, %v372, 0.0
        %v425 = vadd.f32 %v423, %v424
        %v426 = vsel %vm384, %v373, 0.0
        %v427 = vadd.f32 %v425, %v426
        %v428 = vsel %vm384, %v374, 0.0
        %v429 = vadd.f32 %v427, %v428
        %v430 = vsel %vm384, %v375, 0.0
        %v431 = vadd.f32 %v429, %v430
        %v432 = vsel %vm384, %v376, 0.0
        %v433 = vadd.f32 %v431, %v432
        %v434 = vsel %vm384, %v377, 0.0
        %v435 = vadd.f32 %v433, %v434
        %v436 = vsel %vm384, %v378, 0.0
        %v437 = vadd.f32 %v435, %v436
        %v438 = vsel %vm384, %v379, 0.0
        %v439 = vadd.f32 %v437, %v438
        %v440 = vsel %vm384, %v380, 0.0
        %v441 = vadd.f32 %v439, %v440
        %v442 = vsel %vm384, %v381, 0.0
        %v443 = vadd.f32 %v441, %v442
        %v444 = vsel %vm384, %v382, 0.0
        %v445 = vadd.f32 %v443, %v444
        %v446 = vsel %vm384, %v383, 0.0
        %v447 = vadd.f32 %v445, %v446
        %v448 = vrot.slane %v447, 4
        %v449 = vadd.f32 %v447, %v448
        %v450 = vrot.slane %v449, 2
        %v451 = vadd.f32 %v449, %v450
        %v452 = vrot.slane %v451, 1
        %v453 = vadd.f32 %v451, %v452
        %v454 = vmul.f32 %v352, %v352
        %v455 = vmul.f32 %v353, %v353
        %v456 = vmul.f32 %v354, %v354
        %v457 = vmul.f32 %v355, %v355
        %v458 = vmul.f32 %v356, %v356
        %v459 = vmul.f32 %v357, %v357
        %v460 = vmul.f32 %v358, %v358
        %v461 = vmul.f32 %v359, %v359
        %v462 = vmul.f32 %v360, %v360
        %v463 = vmul.f32 %v361, %v361
        %v464 = vmul.f32 %v362, %v362
        %v465 = vmul.f32 %v363, %v363
        %v466 = vmul.f32 %v364, %v364
        %v467 = vmul.f32 %v365, %v365
        %v468 = vmul.f32 %v366, %v366
        %v469 = vmul.f32 %v367, %v367
        %v470 = vmul.f32 %v368, %v368
        %v471 = vmul.f32 %v369, %v369
        %v472 = vmul.f32 %v370, %v370
        %v473 = vmul.f32 %v371, %v371
        %v474 = vmul.f32 %v372, %v372
        %v475 = vmul.f32 %v373, %v373
        %v476 = vmul.f32 %v374, %v374
        %v477 = vmul.f32 %v375, %v375
        %v478 = vmul.f32 %v376, %v376
        %v479 = vmul.f32 %v377, %v377
        %v480 = vmul.f32 %v378, %v378
        %v481 = vmul.f32 %v379, %v379
        %v482 = vmul.f32 %v380, %v380
        %v483 = vmul.f32 %v381, %v381
        %v484 = vmul.f32 %v382, %v382
        %v485 = vmul.f32 %v383, %v383
        %v486 = vsel %vm384, %v454, 0.0
        %v487 = vsel %vm384, %v455, 0.0
        %v488 = vadd.f32 %v486, %v487
        %v489 = vsel %vm384, %v456, 0.0
        %v490 = vadd.f32 %v488, %v489
        %v491 = vsel %vm384, %v457, 0.0
        %v492 = vadd.f32 %v490, %v491
        %v493 = vsel %vm384, %v458, 0.0
        %v494 = vadd.f32 %v492, %v493
        %v495 = vsel %vm384, %v459, 0.0
        %v496 = vadd.f32 %v494, %v495
        %v497 = vsel %vm384, %v460, 0.0
        %v498 = vadd.f32 %v496, %v497
        %v499 = vsel %vm384, %v461, 0.0
        %v500 = vadd.f32 %v498, %v499
        %v501 = vsel %vm384, %v462, 0.0
        %v502 = vadd.f32 %v500, %v501
        %v503 = vsel %vm384, %v463, 0.0
        %v504 = vadd.f32 %v502, %v503
        %v505 = vsel %vm384, %v464, 0.0
        %v506 = vadd.f32 %v504, %v505
        %v507 = vsel %vm384, %v465, 0.0
        %v508 = vadd.f32 %v506, %v507
        %v509 = vsel %vm384, %v466, 0.0
        %v510 = vadd.f32 %v508, %v509
        %v511 = vsel %vm384, %v467, 0.0
        %v512 = vadd.f32 %v510, %v511
        %v513 = vsel %vm384, %v468, 0.0
        %v514 = vadd.f32 %v512, %v513
        %v515 = vsel %vm384, %v469, 0.0
        %v516 = vadd.f32 %v514, %v515
        %v517 = vsel %vm384, %v470, 0.0
        %v518 = vadd.f32 %v516, %v517
        %v519 = vsel %vm384, %v471, 0.0
        %v520 = vadd.f32 %v518, %v519
        %v521 = vsel %vm384, %v472, 0.0
        %v522 = vadd.f32 %v520, %v521
        %v523 = vsel %vm384, %v473, 0.0
        %v524 = vadd.f32 %v522, %v523
        %v525 = vsel %vm384, %v474, 0.0
        %v526 = vadd.f32 %v524, %v525
        %v527 = vsel %vm384, %v475, 0.0
        %v528 = vadd.f32 %v526, %v527
        %v529 = vsel %vm384, %v476, 0.0
        %v530 = vadd.f32 %v528, %v529
        %v531 = vsel %vm384, %v477, 0.0
        %v532 = vadd.f32 %v530, %v531
        %v533 = vsel %vm384, %v478, 0.0
        %v534 = vadd.f32 %v532, %v533
        %v535 = vsel %vm384, %v479, 0.0
        %v536 = vadd.f32 %v534, %v535
        %v537 = vsel %vm384, %v480, 0.0
        %v538 = vadd.f32 %v536, %v537
        %v539 = vsel %vm384, %v481, 0.0
        %v540 = vadd.f32 %v538, %v539
        %v541 = vsel %vm384, %v482, 0.0
        %v542 = vadd.f32 %v540, %v541
        %v543 = vsel %vm384, %v483, 0.0
        %v544 = vadd.f32 %v542, %v543
        %v545 = vsel %vm384, %v484, 0.0
        %v546 = vadd.f32 %v544, %v545
        %v547 = vsel %vm384, %v485, 0.0
        %v548 = vadd.f32 %v546, %v547
        %v549 = vrot.slane %v548, 4
        %v550 = vadd.f32 %v548, %v549
        %v551 = vrot.slane %v550, 2
        %v552 = vadd.f32 %v550, %v551
        %v553 = vrot.slane %v552, 1
        %v554 = vadd.f32 %v552, %v553
        %v555 = vld [vmem:[%s4] sm:$0xff]
        %v556 = vld [vmem:[%s4 + $0x8] sm:$0xff]
        %v557 = vld [vmem:[%s4 + $0x10] sm:$0xff]
        %v558 = vld [vmem:[%s4 + $0x18] sm:$0xff]
        %v559 = vld [vmem:[%s4 + $0x20] sm:$0xff]
        %v560 = vld [vmem:[%s4 + $0x28] sm:$0xff]
        %v561 = vld [vmem:[%s4 + $0x30] sm:$0xff]
        %v562 = vld [vmem:[%s4 + $0x38] sm:$0xff]
        %v564 = vsel %vm384, %v453, 0
        %566 = vmatprep.subr.mxu0 0.0
        %567 = vmatpush1.msra.mxu0 %v555
        %568 = vmatprep.subr.mxu0 0.0
        %569 = vmatpush1.msra.mxu0 %v556
        %570 = vmatprep.subr.mxu0 0.0
        %571 = vmatpush1.msra.mxu0 %v557
        %572 = vmatprep.subr.mxu0 0.0
        %573 = vmatpush1.msra.mxu0 %v558
        %574 = vmatprep.subr.mxu0 0.0
        %575 = vmatpush1.msra.mxu0 %v559
        %576 = vmatprep.subr.mxu0 0.0
        %577 = vmatpush1.msra.mxu0 %v560
        %578 = vmatprep.subr.mxu0 0.0
        %579 = vmatpush1.msra.mxu0 %v561
        %580 = vmatprep.subr.mxu0 0.0
        %581 = vmatpush1.msra.mxu0 %v562
        %582 = vmatprep.subr.mxu0 0.0
        %583 = vmatpush1.msra.mxu0 0.0
        %584 = vmatprep.subr.mxu0 0.0
        %585 = vmatpush1.msra.mxu0 0.0
        %586 = vmatprep.subr.mxu0 0.0
        %587 = vmatpush1.msra.mxu0 0.0
        %588 = vmatprep.subr.mxu0 0.0
        %589 = vmatpush1.msra.mxu0 0.0
        %590 = vmatprep.subr.mxu0 0.0
        %591 = vmatpush1.msra.mxu0 0.0
        %592 = vmatprep.subr.mxu0 0.0
        %593 = vmatpush1.msra.mxu0 0.0
        %594 = vmatprep.subr.mxu0 0.0
        %595 = vmatpush1.msra.mxu0 0.0
        %596 = vmatprep.subr.mxu0 0.0
        %597 = vmatpush1.msra.mxu0 0.0
        %598 = vmatprep.subr.mxu0 0.0
        %599 = vmatpush1.msra.mxu0 0.0
        %600 = vmatprep.subr.mxu0 0.0
        %601 = vmatpush1.msra.mxu0 0.0
        %602 = vmatprep.subr.mxu0 0.0
        %603 = vmatpush1.msra.mxu0 0.0
        %604 = vmatprep.subr.mxu0 0.0
        %605 = vmatpush1.msra.mxu0 0.0
        %606 = vmatprep.subr.mxu0 0.0
        %607 = vmatpush1.msra.mxu0 0.0
        %608 = vmatprep.subr.mxu0 0.0
        %609 = vmatpush1.msra.mxu0 0.0
        %610 = vmatprep.subr.mxu0 0.0
        %611 = vmatpush1.msra.mxu0 0.0
        %612 = vmatprep.subr.mxu0 0.0
        %613 = vmatpush1.msra.mxu0 0.0
        %614 = vmatprep.subr.mxu0 0.0
        %615 = vmatpush1.msra.mxu0 0.0
        %616 = vmatprep.subr.mxu0 0.0
        %617 = vmatpush1.msra.mxu0 0.0
        %618 = vmatprep.subr.mxu0 0.0
        %619 = vmatpush1.msra.mxu0 0.0
        %620 = vmatprep.subr.mxu0 0.0
        %621 = vmatpush1.msra.mxu0 0.0
        %622 = vmatprep.subr.mxu0 0.0
        %623 = vmatpush1.msra.mxu0 0.0
        %624 = vmatprep.subr.mxu0 0.0
        %625 = vmatpush1.msra.mxu0 0.0
        %626 = vmatprep.subr.mxu0 0.0
        %627 = vmatpush1.msra.mxu0 0.0
        %628 = vmatprep.subr.mxu0 0.0
        %629 = vmatpush1.msra.mxu0 0.0
        %630 = vmatprep.mubr.f32.mxu0 0.0
        %631 = vmatmul.mubr.f32.gmra.mrb[0].mxu0 %v564
        %v632 = vpop.f32.mrb[0].mxu0
        %v633 = vadd.f32 0.0, %v632
        %v634 = vpop.f32.mrb[0].mxu0
        %635 = vdwg.mxu0
        %v637 = vsel %vm384, %v554, 0
        %639 = vmatprep.subr.mxu0 0.0
        %640 = vmatpush1.msra.mxu0 %v555
        %641 = vmatprep.subr.mxu0 0.0
        %642 = vmatpush1.msra.mxu0 %v556
        %643 = vmatprep.subr.mxu0 0.0
        %644 = vmatpush1.msra.mxu0 %v557
        %645 = vmatprep.subr.mxu0 0.0
        %646 = vmatpush1.msra.mxu0 %v558
        %647 = vmatprep.subr.mxu0 0.0
        %648 = vmatpush1.msra.mxu0 %v559
        %649 = vmatprep.subr.mxu0 0.0
        %650 = vmatpush1.msra.mxu0 %v560
        %651 = vmatprep.subr.mxu0 0.0
        %652 = vmatpush1.msra.mxu0 %v561
        %653 = vmatprep.subr.mxu0 0.0
        %654 = vmatpush1.msra.mxu0 %v562
        %655 = vmatprep.subr.mxu0 0.0
        %656 = vmatpush1.msra.mxu0 0.0
        %657 = vmatprep.subr.mxu0 0.0
        %658 = vmatpush1.msra.mxu0 0.0
        %659 = vmatprep.subr.mxu0 0.0
        %660 = vmatpush1.msra.mxu0 0.0
        %661 = vmatprep.subr.mxu0 0.0
        %662 = vmatpush1.msra.mxu0 0.0
        %663 = vmatprep.subr.mxu0 0.0
        %664 = vmatpush1.msra.mxu0 0.0
        %665 = vmatprep.subr.mxu0 0.0
        %666 = vmatpush1.msra.mxu0 0.0
        %667 = vmatprep.subr.mxu0 0.0
        %668 = vmatpush1.msra.mxu0 0.0
        %669 = vmatprep.subr.mxu0 0.0
        %670 = vmatpush1.msra.mxu0 0.0
        %671 = vmatprep.subr.mxu0 0.0
        %672 = vmatpush1.msra.mxu0 0.0
        %673 = vmatprep.subr.mxu0 0.0
        %674 = vmatpush1.msra.mxu0 0.0
        %675 = vmatprep.subr.mxu0 0.0
        %676 = vmatpush1.msra.mxu0 0.0
        %677 = vmatprep.subr.mxu0 0.0
        %678 = vmatpush1.msra.mxu0 0.0
        %679 = vmatprep.subr.mxu0 0.0
        %680 = vmatpush1.msra.mxu0 0.0
        %681 = vmatprep.subr.mxu0 0.0
        %682 = vmatpush1.msra.mxu0 0.0
        %683 = vmatprep.subr.mxu0 0.0
        %684 = vmatpush1.msra.mxu0 0.0
        %685 = vmatprep.subr.mxu0 0.0
        %686 = vmatpush1.msra.mxu0 0.0
        %687 = vmatprep.subr.mxu0 0.0
        %688 = vmatpush1.msra.mxu0 0.0
        %689 = vmatprep.subr.mxu0 0.0
        %690 = vmatpush1.msra.mxu0 0.0
        %691 = vmatprep.subr.mxu0 0.0
        %692 = vmatpush1.msra.mxu0 0.0
        %693 = vmatprep.subr.mxu0 0.0
        %694 = vmatpush1.msra.mxu0 0.0
        %695 = vmatprep.subr.mxu0 0.0
        %696 = vmatpush1.msra.mxu0 0.0
        %697 = vmatprep.subr.mxu0 0.0
        %698 = vmatpush1.msra.mxu0 0.0
        %699 = vmatprep.subr.mxu0 0.0
        %700 = vmatpush1.msra.mxu0 0.0
        %701 = vmatprep.subr.mxu0 0.0
        %702 = vmatpush1.msra.mxu0 0.0
        %703 = vmatprep.mubr.f32.mxu0 0.0
        %704 = vmatmul.mubr.f32.gmra.mrb[0].mxu0 %v637
        %v705 = vpop.f32.mrb[0].mxu0
        %v706 = vadd.f32 0.0, %v705
        %v707 = vpop.f32.mrb[0].mxu0
        %708 = vdwg.mxu0
        %v709 = vmul.f32 %v633, %v633
        %v710 = vsub.f32 %v706, %v709
        %v711 = vld [vmem:[%s2] sm:$0x1]
        %v712 = vadd.f32 %v710, 1e-05
        %v713 = vrsqrt.pop %v712
        %v714 = vmul.f32 %v711, %v713
        %v715 = vld [vmem:[%s3] sm:$0x1]
        %v716 = vmul.f32 %v633, %v714
        %v717 = vsub.f32 %v715, %v716
        %v718 = vld [vmem:[%s345] sm:$0xff]
        %v719 = vld [vmem:[%s345 + $0x8] sm:$0xff]
        %v720 = vld [vmem:[%s345 + $0x18] sm:$0xff]
        %v721 = vld [vmem:[%s345 + $0x20] sm:$0xff]
        %v722 = vld [vmem:[%s345 + $0x30] sm:$0xff]
        %v723 = vld [vmem:[%s345 + $0x38] sm:$0xff]
        %v724 = vld [vmem:[%s345 + $0x48] sm:$0xff]
        %v725 = vld [vmem:[%s345 + $0x50] sm:$0xff]
        %v726 = vld [vmem:[%s345 + $0x60] sm:$0xff]
        %v727 = vld [vmem:[%s345 + $0x68] sm:$0xff]
        %v728 = vld [vmem:[%s345 + $0x78] sm:$0xff]
        %v729 = vld [vmem:[%s345 + $0x80] sm:$0xff]
        %v730 = vld [vmem:[%s345 + $0x90] sm:$0xff]
        %v731 = vld [vmem:[%s345 + $0x98] sm:$0xff]
        %v732 = vld [vmem:[%s345 + $0xa8] sm:$0xff]
        %v733 = vld [vmem:[%s345 + $0xb0] sm:$0xff]
        %v734 = vld [vmem:[%s345 + $0xc0] sm:$0xff]
        %v735 = vld [vmem:[%s345 + $0xc8] sm:$0xff]
        %v736 = vld [vmem:[%s345 + $0xd8] sm:$0xff]
        %v737 = vld [vmem:[%s345 + $0xe0] sm:$0xff]
        %v738 = vld [vmem:[%s345 + $0xf0] sm:$0xff]
        %v739 = vld [vmem:[%s345 + $0xf8] sm:$0xff]
        %v740 = vld [vmem:[%s345 + $0x108] sm:$0xff]
        %v741 = vld [vmem:[%s345 + $0x110] sm:$0xff]
        %v742 = vld [vmem:[%s345 + $0x120] sm:$0xff]
        %v743 = vld [vmem:[%s345 + $0x128] sm:$0xff]
        %v744 = vld [vmem:[%s345 + $0x138] sm:$0xff]
        %v745 = vld [vmem:[%s345 + $0x140] sm:$0xff]
        %v746 = vld [vmem:[%s345 + $0x150] sm:$0xff]
        %v747 = vld [vmem:[%s345 + $0x158] sm:$0xff]
        %v748 = vld [vmem:[%s345 + $0x168] sm:$0xff]
        %v749 = vld [vmem:[%s345 + $0x170] sm:$0xff]
        %v751 = vlaneseq
        %v752 = vshrl.u32 %v751, 7
        %v753 = vsub.s32 0, %v752
        %v754 = vrot.slane %v714, %v753
        %v756 = vmul.f32 %v718, %v754
        %v757 = vmul.f32 %v719, %v754
        %v758 = vmul.f32 %v720, %v754
        %v759 = vmul.f32 %v721, %v754
        %v760 = vmul.f32 %v722, %v754
        %v761 = vmul.f32 %v723, %v754
        %v762 = vmul.f32 %v724, %v754
        %v763 = vmul.f32 %v725, %v754
        %v764 = vmul.f32 %v726, %v754
        %v765 = vmul.f32 %v727, %v754
        %v766 = vmul.f32 %v728, %v754
        %v767 = vmul.f32 %v729, %v754
        %v768 = vmul.f32 %v730, %v754
        %v769 = vmul.f32 %v731, %v754
        %v770 = vmul.f32 %v732, %v754
        %v771 = vmul.f32 %v733, %v754
        %v772 = vmul.f32 %v734, %v754
        %v773 = vmul.f32 %v735, %v754
        %v774 = vmul.f32 %v736, %v754
        %v775 = vmul.f32 %v737, %v754
        %v776 = vmul.f32 %v738, %v754
        %v777 = vmul.f32 %v739, %v754
        %v778 = vmul.f32 %v740, %v754
        %v779 = vmul.f32 %v741, %v754
        %v780 = vmul.f32 %v742, %v754
        %v781 = vmul.f32 %v743, %v754
        %v782 = vmul.f32 %v744, %v754
        %v783 = vmul.f32 %v745, %v754
        %v784 = vmul.f32 %v746, %v754
        %v785 = vmul.f32 %v747, %v754
        %v786 = vmul.f32 %v748, %v754
        %v787 = vmul.f32 %v749, %v754
        %v789 = vlaneseq
        %v790 = vshrl.u32 %v789, 7
        %v791 = vsub.s32 0, %v790
        %v792 = vrot.slane %v717, %v791
        %v794 = vadd.f32 %v756, %v792
        %v795 = vadd.f32 %v757, %v792
        %v796 = vadd.f32 %v758, %v792
        %v797 = vadd.f32 %v759, %v792
        %v798 = vadd.f32 %v760, %v792
        %v799 = vadd.f32 %v761, %v792
        %v800 = vadd.f32 %v762, %v792
        %v801 = vadd.f32 %v763, %v792
        %v802 = vadd.f32 %v764, %v792
        %v803 = vadd.f32 %v765, %v792
        %v804 = vadd.f32 %v766, %v792
        %v805 = vadd.f32 %v767, %v792
        %v806 = vadd.f32 %v768, %v792
        %v807 = vadd.f32 %v769, %v792
        %v808 = vadd.f32 %v770, %v792
        %v809 = vadd.f32 %v771, %v792
        %v810 = vadd.f32 %v772, %v792
        %v811 = vadd.f32 %v773, %v792
        %v812 = vadd.f32 %v774, %v792
        %v813 = vadd.f32 %v775, %v792
        %v814 = vadd.f32 %v776, %v792
        %v815 = vadd.f32 %v777, %v792
        %v816 = vadd.f32 %v778, %v792
        %v817 = vadd.f32 %v779, %v792
        %v818 = vadd.f32 %v780, %v792
        %v819 = vadd.f32 %v781, %v792
        %v820 = vadd.f32 %v782, %v792
        %v821 = vadd.f32 %v783, %v792
        %v822 = vadd.f32 %v784, %v792
        %v823 = vadd.f32 %v785, %v792
        %v824 = vadd.f32 %v786, %v792
        %v825 = vadd.f32 %v787, %v792
        %v826 = vld [vmem:[%s5] sm:$0xff]
        %v827 = vld [vmem:[%s5 + $0x8] sm:$0xff]
        %v828 = vld [vmem:[%s5 + $0x10] sm:$0xff]
        %v829 = vld [vmem:[%s5 + $0x18] sm:$0xff]
        %v830 = vld [vmem:[%s5 + $0x20] sm:$0xff]
        %v831 = vld [vmem:[%s5 + $0x28] sm:$0xff]
        %v832 = vld [vmem:[%s5 + $0x30] sm:$0xff]
        %v833 = vld [vmem:[%s5 + $0x38] sm:$0xff]
        %v834 = vld [vmem:[%s345 + $0x1] sm:$0xff]
        %v835 = vld [vmem:[%s345 + $0x9] sm:$0xff]
        %v836 = vld [vmem:[%s345 + $0x19] sm:$0xff]
        %v837 = vld [vmem:[%s345 + $0x21] sm:$0xff]
        %v838 = vld [vmem:[%s345 + $0x31] sm:$0xff]
        %v839 = vld [vmem:[%s345 + $0x39] sm:$0xff]
        %v840 = vld [vmem:[%s345 + $0x49] sm:$0xff]
        %v841 = vld [vmem:[%s345 + $0x51] sm:$0xff]
        %v842 = vld [vmem:[%s345 + $0x61] sm:$0xff]
        %v843 = vld [vmem:[%s345 + $0x69] sm:$0xff]
        %v844 = vld [vmem:[%s345 + $0x79] sm:$0xff]
        %v845 = vld [vmem:[%s345 + $0x81] sm:$0xff]
        %v846 = vld [vmem:[%s345 + $0x91] sm:$0xff]
        %v847 = vld [vmem:[%s345 + $0x99] sm:$0xff]
        %v848 = vld [vmem:[%s345 + $0xa9] sm:$0xff]
        %v849 = vld [vmem:[%s345 + $0xb1] sm:$0xff]
        %v850 = vld [vmem:[%s345 + $0xc1] sm:$0xff]
        %v851 = vld [vmem:[%s345 + $0xc9] sm:$0xff]
        %v852 = vld [vmem:[%s345 + $0xd9] sm:$0xff]
        %v853 = vld [vmem:[%s345 + $0xe1] sm:$0xff]
        %v854 = vld [vmem:[%s345 + $0xf1] sm:$0xff]
        %v855 = vld [vmem:[%s345 + $0xf9] sm:$0xff]
        %v856 = vld [vmem:[%s345 + $0x109] sm:$0xff]
        %v857 = vld [vmem:[%s345 + $0x111] sm:$0xff]
        %v858 = vld [vmem:[%s345 + $0x121] sm:$0xff]
        %v859 = vld [vmem:[%s345 + $0x129] sm:$0xff]
        %v860 = vld [vmem:[%s345 + $0x139] sm:$0xff]
        %v861 = vld [vmem:[%s345 + $0x141] sm:$0xff]
        %v862 = vld [vmem:[%s345 + $0x151] sm:$0xff]
        %v863 = vld [vmem:[%s345 + $0x159] sm:$0xff]
        %v864 = vld [vmem:[%s345 + $0x169] sm:$0xff]
        %v865 = vld [vmem:[%s345 + $0x171] sm:$0xff]
        %v866 = vmul.f32 %v834, %v754
        %v867 = vmul.f32 %v835, %v754
        %v868 = vmul.f32 %v836, %v754
        %v869 = vmul.f32 %v837, %v754
        %v870 = vmul.f32 %v838, %v754
        %v871 = vmul.f32 %v839, %v754
        %v872 = vmul.f32 %v840, %v754
        %v873 = vmul.f32 %v841, %v754
        %v874 = vmul.f32 %v842, %v754
        %v875 = vmul.f32 %v843, %v754
        %v876 = vmul.f32 %v844, %v754
        %v877 = vmul.f32 %v845, %v754
        %v878 = vmul.f32 %v846, %v754
        %v879 = vmul.f32 %v847, %v754
        %v880 = vmul.f32 %v848, %v754
        %v881 = vmul.f32 %v849, %v754
        %v882 = vmul.f32 %v850, %v754
        %v883 = vmul.f32 %v851, %v754
        %v884 = vmul.f32 %v852, %v754
        %v885 = vmul.f32 %v853, %v754
        %v886 = vmul.f32 %v854, %v754
        %v887 = vmul.f32 %v855, %v754
        %v888 = vmul.f32 %v856, %v754
        %v889 = vmul.f32 %v857, %v754
        %v890 = vmul.f32 %v858, %v754
        %v891 = vmul.f32 %v859, %v754
        %v892 = vmul.f32 %v860, %v754
        %v893 = vmul.f32 %v861, %v754
        %v894 = vmul.f32 %v862, %v754
        %v895 = vmul.f32 %v863, %v754
        %v896 = vmul.f32 %v864, %v754
        %v897 = vmul.f32 %v865, %v754
        %v898 = vadd.f32 %v866, %v792
        %v899 = vadd.f32 %v867, %v792
        %v900 = vadd.f32 %v868, %v792
        %v901 = vadd.f32 %v869, %v792
        %v902 = vadd.f32 %v870, %v792
        %v903 = vadd.f32 %v871, %v792
        %v904 = vadd.f32 %v872, %v792
        %v905 = vadd.f32 %v873, %v792
        %v906 = vadd.f32 %v874, %v792
        %v907 = vadd.f32 %v875, %v792
        %v908 = vadd.f32 %v876, %v792
        %v909 = vadd.f32 %v877, %v792
        %v910 = vadd.f32 %v878, %v792
        %v911 = vadd.f32 %v879, %v792
        %v912 = vadd.f32 %v880, %v792
        %v913 = vadd.f32 %v881, %v792
        %v914 = vadd.f32 %v882, %v792
        %v915 = vadd.f32 %v883, %v792
        %v916 = vadd.f32 %v884, %v792
        %v917 = vadd.f32 %v885, %v792
        %v918 = vadd.f32 %v886, %v792
        %v919 = vadd.f32 %v887, %v792
        %v920 = vadd.f32 %v888, %v792
        %v921 = vadd.f32 %v889, %v792
        %v922 = vadd.f32 %v890, %v792
        %v923 = vadd.f32 %v891, %v792
        %v924 = vadd.f32 %v892, %v792
        %v925 = vadd.f32 %v893, %v792
        %v926 = vadd.f32 %v894, %v792
        %v927 = vadd.f32 %v895, %v792
        %v928 = vadd.f32 %v896, %v792
        %v929 = vadd.f32 %v897, %v792
        %s930 = scalar_lea.vmem %s5, 64
        %v931 = vld [vmem:[%s930] sm:$0xff]
        %v932 = vld [vmem:[%s930 + $0x8] sm:$0xff]
        %v933 = vld [vmem:[%s930 + $0x10] sm:$0xff]
        %v934 = vld [vmem:[%s930 + $0x18] sm:$0xff]
        %v935 = vld [vmem:[%s930 + $0x20] sm:$0xff]
        %v936 = vld [vmem:[%s930 + $0x28] sm:$0xff]
        %v937 = vld [vmem:[%s930 + $0x30] sm:$0xff]
        %v938 = vld [vmem:[%s930 + $0x38] sm:$0xff]
        %v940 = vsel %vm384, %v898, 0
        %v943 = vsel %vm384, %v899, 0
        %v946 = vsel %vm384, %v900, 0
        %v949 = vsel %vm384, %v901, 0
        %v952 = vsel %vm384, %v902, 0
        %v955 = vsel %vm384, %v903, 0
        %v958 = vsel %vm384, %v904, 0
        %v961 = vsel %vm384, %v905, 0
        %v964 = vsel %vm384, %v906, 0
        %v967 = vsel %vm384, %v907, 0
        %v970 = vsel %vm384, %v908, 0
        %v973 = vsel %vm384, %v909, 0
        %v976 = vsel %vm384, %v910, 0
        %v979 = vsel %vm384, %v911, 0
        %v982 = vsel %vm384, %v912, 0
        %v985 = vsel %vm384, %v913, 0
        %v988 = vsel %vm384, %v914, 0
        %v991 = vsel %vm384, %v915, 0
        %v994 = vsel %vm384, %v916, 0
        %v997 = vsel %vm384, %v917, 0
        %v1000 = vsel %vm384, %v918, 0
        %v1003 = vsel %vm384, %v919, 0
        %v1006 = vsel %vm384, %v920, 0
        %v1009 = vsel %vm384, %v921, 0
        %v1012 = vsel %vm384, %v922, 0
        %v1015 = vsel %vm384, %v923, 0
        %v1018 = vsel %vm384, %v924, 0
        %v1021 = vsel %vm384, %v925, 0
        %v1024 = vsel %vm384, %v926, 0
        %v1027 = vsel %vm384, %v927, 0
        %v1030 = vsel %vm384, %v928, 0
        %v1033 = vsel %vm384, %v929, 0
        %1035 = vmatprep.subr.mxu0 0.0
        %1036 = vmatpush1.msra.mxu0 %v931
        %1037 = vmatprep.subr.mxu0 0.0
        %1038 = vmatpush1.msra.mxu0 %v932
        %1039 = vmatprep.subr.mxu0 0.0
        %1040 = vmatpush1.msra.mxu0 %v933
        %1041 = vmatprep.subr.mxu0 0.0
        %1042 = vmatpush1.msra.mxu0 %v934
        %1043 = vmatprep.subr.mxu0 0.0
        %1044 = vmatpush1.msra.mxu0 %v935
        %1045 = vmatprep.subr.mxu0 0.0
        %1046 = vmatpush1.msra.mxu0 %v936
        %1047 = vmatprep.subr.mxu0 0.0
        %1048 = vmatpush1.msra.mxu0 %v937
        %1049 = vmatprep.subr.mxu0 0.0
        %1050 = vmatpush1.msra.mxu0 %v938
        %1051 = vmatprep.subr.mxu0 0.0
        %1052 = vmatpush1.msra.mxu0 0.0
        %1053 = vmatprep.subr.mxu0 0.0
        %1054 = vmatpush1.msra.mxu0 0.0
        %1055 = vmatprep.subr.mxu0 0.0
        %1056 = vmatpush1.msra.mxu0 0.0
        %1057 = vmatprep.subr.mxu0 0.0
        %1058 = vmatpush1.msra.mxu0 0.0
        %1059 = vmatprep.subr.mxu0 0.0
        %1060 = vmatpush1.msra.mxu0 0.0
        %1061 = vmatprep.subr.mxu0 0.0
        %1062 = vmatpush1.msra.mxu0 0.0
        %1063 = vmatprep.subr.mxu0 0.0
        %1064 = vmatpush1.msra.mxu0 0.0
        %1065 = vmatprep.subr.mxu0 0.0
        %1066 = vmatpush1.msra.mxu0 0.0
        %1067 = vmatprep.subr.mxu0 0.0
        %1068 = vmatpush1.msra.mxu0 0.0
        %1069 = vmatprep.subr.mxu0 0.0
        %1070 = vmatpush1.msra.mxu0 0.0
        %1071 = vmatprep.subr.mxu0 0.0
        %1072 = vmatpush1.msra.mxu0 0.0
        %1073 = vmatprep.subr.mxu0 0.0
        %1074 = vmatpush1.msra.mxu0 0.0
        %1075 = vmatprep.subr.mxu0 0.0
        %1076 = vmatpush1.msra.mxu0 0.0
        %1077 = vmatprep.subr.mxu0 0.0
        %1078 = vmatpush1.msra.mxu0 0.0
        %1079 = vmatprep.subr.mxu0 0.0
        %1080 = vmatpush1.msra.mxu0 0.0
        %1081 = vmatprep.subr.mxu0 0.0
        %1082 = vmatpush1.msra.mxu0 0.0
        %1083 = vmatprep.subr.mxu0 0.0
        %1084 = vmatpush1.msra.mxu0 0.0
        %1085 = vmatprep.subr.mxu0 0.0
        %1086 = vmatpush1.msra.mxu0 0.0
        %1087 = vmatprep.subr.mxu0 0.0
        %1088 = vmatpush1.msra.mxu0 0.0
        %1089 = vmatprep.subr.mxu0 0.0
        %1090 = vmatpush1.msra.mxu0 0.0
        %1091 = vmatprep.subr.mxu0 0.0
        %1092 = vmatpush1.msra.mxu0 0.0
        %1093 = vmatprep.subr.mxu0 0.0
        %1094 = vmatpush1.msra.mxu0 0.0
        %1095 = vmatprep.subr.mxu0 0.0
        %1096 = vmatpush1.msra.mxu0 0.0
        %1097 = vmatprep.subr.mxu0 0.0
        %1098 = vmatpush1.msra.mxu0 0.0
        %1099 = vmatprep.mubr.f32.mxu0 0.0
        %1100 = vmatmul.mubr.f32.gmra.mrb[0].mxu0 %v940
        %v1101 = vpop.f32.mrb[0].mxu0
        %v1102 = vadd.f32 0.0, %v1101
        %v1103 = vpop.f32.mrb[0].mxu0
        %1104 = vmatprep.mubr.f32.mxu0 0.0
        %1105 = vmatmul.mubr.f32.gmra.mrb[0].mxu0 %v943
        %v1106 = vpop.f32.mrb[0].mxu0
        %v1107 = vadd.f32 0.0, %v1106
        %v1108 = vpop.f32.mrb[0].mxu0
        %1109 = vmatprep.mubr.f32.mxu0 0.0
        %1110 = vmatmul.mubr.f32.gmra.mrb[0].mxu0 %v946
        %v1111 = vpop.f32.mrb[0].mxu0
        %v1112 = vadd.f32 0.0, %v1111
        %v1113 = vpop.f32.mrb[0].mxu0
        %1114 = vmatprep.mubr.f32.mxu0 0.0
        %1115 = vmatmul.mubr.f32.gmra.mrb[0].mxu0 %v949
        %v1116 = vpop.f32.mrb[0].mxu0
        %v1117 = vadd.f32 0.0, %v1116
        %v1118 = vpop.f32.mrb[0].mxu0
        %1119 = vmatprep.mubr.f32.mxu0 0.0
        %1120 = vmatmul.mubr.f32.gmra.mrb[0].mxu0 %v952
        %v1121 = vpop.f32.mrb[0].mxu0
        %v1122 = vadd.f32 0.0, %v1121
        %v1123 = vpop.f32.mrb[0].mxu0
        %1124 = vmatprep.mubr.f32.mxu0 0.0
        %1125 = vmatmul.mubr.f32.gmra.mrb[0].mxu0 %v955
        %v1126 = vpop.f32.mrb[0].mxu0
        %v1127 = vadd.f32 0.0, %v1126
        %v1128 = vpop.f32.mrb[0].mxu0
        %1129 = vmatprep.mubr.f32.mxu0 0.0
        %1130 = vmatmul.mubr.f32.gmra.mrb[0].mxu0 %v958
        %v1131 = vpop.f32.mrb[0].mxu0
        %v1132 = vadd.f32 0.0, %v1131
        %v1133 = vpop.f32.mrb[0].mxu0
        %1134 = vmatprep.mubr.f32.mxu0 0.0
        %1135 = vmatmul.mubr.f32.gmra.mrb[0].mxu0 %v961
        %v1136 = vpop.f32.mrb[0].mxu0
        %v1137 = vadd.f32 0.0, %v1136
        %v1138 = vpop.f32.mrb[0].mxu0
        %1139 = vmatprep.mubr.f32.mxu0 0.0
        %1140 = vmatmul.mubr.f32.gmra.mrb[0].mxu0 %v964
        %v1141 = vpop.f32.mrb[0].mxu0
        %v1142 = vadd.f32 0.0, %v1141
        %v1143 = vpop.f32.mrb[0].mxu0
        %1144 = vmatprep.mubr.f32.mxu0 0.0
        %1145 = vmatmul.mubr.f32.gmra.mrb[0].mxu0 %v967
        %v1146 = vpop.f32.mrb[0].mxu0
        %v1147 = vadd.f32 0.0, %v1146
        %v1148 = vpop.f32.mrb[0].mxu0
        %1149 = vmatprep.mubr.f32.mxu0 0.0
        %1150 = vmatmul.mubr.f32.gmra.mrb[0].mxu0 %v970
        %v1151 = vpop.f32.mrb[0].mxu0
        %v1152 = vadd.f32 0.0, %v1151
        %v1153 = vpop.f32.mrb[0].mxu0
        %1154 = vmatprep.mubr.f32.mxu0 0.0
        %1155 = vmatmul.mubr.f32.gmra.mrb[0].mxu0 %v973
        %v1156 = vpop.f32.mrb[0].mxu0
        %v1157 = vadd.f32 0.0, %v1156
        %v1158 = vpop.f32.mrb[0].mxu0
        %1159 = vmatprep.mubr.f32.mxu0 0.0
        %1160 = vmatmul.mubr.f32.gmra.mrb[0].mxu0 %v976
        %v1161 = vpop.f32.mrb[0].mxu0
        %v1162 = vadd.f32 0.0, %v1161
        %v1163 = vpop.f32.mrb[0].mxu0
        %1164 = vmatprep.mubr.f32.mxu0 0.0
        %1165 = vmatmul.mubr.f32.gmra.mrb[0].mxu0 %v979
        %v1166 = vpop.f32.mrb[0].mxu0
        %v1167 = vadd.f32 0.0, %v1166
        %v1168 = vpop.f32.mrb[0].mxu0
        %1169 = vmatprep.mubr.f32.mxu0 0.0
        %1170 = vmatmul.mubr.f32.gmra.mrb[0].mxu0 %v982
        %v1171 = vpop.f32.mrb[0].mxu0
        %v1172 = vadd.f32 0.0, %v1171
        %v1173 = vpop.f32.mrb[0].mxu0
        %1174 = vmatprep.mubr.f32.mxu0 0.0
        %1175 = vmatmul.mubr.f32.gmra.mrb[0].mxu0 %v985
        %v1176 = vpop.f32.mrb[0].mxu0
        %v1177 = vadd.f32 0.0, %v1176
        %v1178 = vpop.f32.mrb[0].mxu0
        %1179 = vmatprep.mubr.f32.mxu0 0.0
        %1180 = vmatmul.mubr.f32.gmra.mrb[0].mxu0 %v988
        %v1181 = vpop.f32.mrb[0].mxu0
        %v1182 = vadd.f32 0.0, %v1181
        %v1183 = vpop.f32.mrb[0].mxu0
        %1184 = vmatprep.mubr.f32.mxu0 0.0
        %1185 = vmatmul.mubr.f32.gmra.mrb[0].mxu0 %v991
        %v1186 = vpop.f32.mrb[0].mxu0
        %v1187 = vadd.f32 0.0, %v1186
        %v1188 = vpop.f32.mrb[0].mxu0
        %1189 = vmatprep.mubr.f32.mxu0 0.0
        %1190 = vmatmul.mubr.f32.gmra.mrb[0].mxu0 %v994
        %v1191 = vpop.f32.mrb[0].mxu0
        %v1192 = vadd.f32 0.0, %v1191
        %v1193 = vpop.f32.mrb[0].mxu0
        %1194 = vmatprep.mubr.f32.mxu0 0.0
        %1195 = vmatmul.mubr.f32.gmra.mrb[0].mxu0 %v997
        %v1196 = vpop.f32.mrb[0].mxu0
        %v1197 = vadd.f32 0.0, %v1196
        %v1198 = vpop.f32.mrb[0].mxu0
        %1199 = vmatprep.mubr.f32.mxu0 0.0
        %1200 = vmatmul.mubr.f32.gmra.mrb[0].mxu0 %v1000
        %v1201 = vpop.f32.mrb[0].mxu0
        %v1202 = vadd.f32 0.0, %v1201
        %v1203 = vpop.f32.mrb[0].mxu0
        %1204 = vmatprep.mubr.f32.mxu0 0.0
        %1205 = vmatmul.mubr.f32.gmra.mrb[0].mxu0 %v1003
        %v1206 = vpop.f32.mrb[0].mxu0
        %v1207 = vadd.f32 0.0, %v1206
        %v1208 = vpop.f32.mrb[0].mxu0
        %1209 = vmatprep.mubr.f32.mxu0 0.0
        %1210 = vmatmul.mubr.f32.gmra.mrb[0].mxu0 %v1006
        %v1211 = vpop.f32.mrb[0].mxu0
        %v1212 = vadd.f32 0.0, %v1211
        %v1213 = vpop.f32.mrb[0].mxu0
        %1214 = vmatprep.mubr.f32.mxu0 0.0
        %1215 = vmatmul.mubr.f32.gmra.mrb[0].mxu0 %v1009
        %v1216 = vpop.f32.mrb[0].mxu0
        %v1217 = vadd.f32 0.0, %v1216
        %v1218 = vpop.f32.mrb[0].mxu0
        %1219 = vmatprep.mubr.f32.mxu0 0.0
        %1220 = vmatmul.mubr.f32.gmra.mrb[0].mxu0 %v1012
        %v1221 = vpop.f32.mrb[0].mxu0
        %v1222 = vadd.f32 0.0, %v1221
        %v1223 = vpop.f32.mrb[0].mxu0
        %1224 = vmatprep.mubr.f32.mxu0 0.0
        %1225 = vmatmul.mubr.f32.gmra.mrb[0].mxu0 %v1015
        %v1226 = vpop.f32.mrb[0].mxu0
        %v1227 = vadd.f32 0.0, %v1226
        %v1228 = vpop.f32.mrb[0].mxu0
        %1229 = vmatprep.mubr.f32.mxu0 0.0
        %1230 = vmatmul.mubr.f32.gmra.mrb[0].mxu0 %v1018
        %v1231 = vpop.f32.mrb[0].mxu0
        %v1232 = vadd.f32 0.0, %v1231
        %v1233 = vpop.f32.mrb[0].mxu0
        %1234 = vmatprep.mubr.f32.mxu0 0.0
        %1235 = vmatmul.mubr.f32.gmra.mrb[0].mxu0 %v1021
        %v1236 = vpop.f32.mrb[0].mxu0
        %v1237 = vadd.f32 0.0, %v1236
        %v1238 = vpop.f32.mrb[0].mxu0
        %1239 = vmatprep.mubr.f32.mxu0 0.0
        %1240 = vmatmul.mubr.f32.gmra.mrb[0].mxu0 %v1024
        %v1241 = vpop.f32.mrb[0].mxu0
        %v1242 = vadd.f32 0.0, %v1241
        %v1243 = vpop.f32.mrb[0].mxu0
        %1244 = vmatprep.mubr.f32.mxu0 0.0
        %1245 = vmatmul.mubr.f32.gmra.mrb[0].mxu0 %v1027
        %v1246 = vpop.f32.mrb[0].mxu0
        %v1247 = vadd.f32 0.0, %v1246
        %v1248 = vpop.f32.mrb[0].mxu0
        %1249 = vmatprep.mubr.f32.mxu0 0.0
        %1250 = vmatmul.mubr.f32.gmra.mrb[0].mxu0 %v1030
        %v1251 = vpop.f32.mrb[0].mxu0
        %v1252 = vadd.f32 0.0, %v1251
        %v1253 = vpop.f32.mrb[0].mxu0
        %1254 = vmatprep.mubr.f32.mxu0 0.0
        %1255 = vmatmul.mubr.f32.gmra.mrb[0].mxu0 %v1033
        %v1256 = vpop.f32.mrb[0].mxu0
        %v1257 = vadd.f32 0.0, %v1256
        %v1258 = vpop.f32.mrb[0].mxu0
        %1259 = vdwg.mxu0
        %v1261 = vsel %vm384, %v794, 0
        %v1264 = vsel %vm384, %v795, 0
        %v1267 = vsel %vm384, %v796, 0
        %v1270 = vsel %vm384, %v797, 0
        %v1273 = vsel %vm384, %v798, 0
        %v1276 = vsel %vm384, %v799, 0
        %v1279 = vsel %vm384, %v800, 0
        %v1282 = vsel %vm384, %v801, 0
        %v1285 = vsel %vm384, %v802, 0
        %v1288 = vsel %vm384, %v803, 0
        %v1291 = vsel %vm384, %v804, 0
        %v1294 = vsel %vm384, %v805, 0
        %v1297 = vsel %vm384, %v806, 0
        %v1300 = vsel %vm384, %v807, 0
        %v1303 = vsel %vm384, %v808, 0
        %v1306 = vsel %vm384, %v809, 0
        %v1309 = vsel %vm384, %v810, 0
        %v1312 = vsel %vm384, %v811, 0
        %v1315 = vsel %vm384, %v812, 0
        %v1318 = vsel %vm384, %v813, 0
        %v1321 = vsel %vm384, %v814, 0
        %v1324 = vsel %vm384, %v815, 0
        %v1327 = vsel %vm384, %v816, 0
        %v1330 = vsel %vm384, %v817, 0
        %v1333 = vsel %vm384, %v818, 0
        %v1336 = vsel %vm384, %v819, 0
        %v1339 = vsel %vm384, %v820, 0
        %v1342 = vsel %vm384, %v821, 0
        %v1345 = vsel %vm384, %v822, 0
        %v1348 = vsel %vm384, %v823, 0
        %v1351 = vsel %vm384, %v824, 0
        %v1354 = vsel %vm384, %v825, 0
        %1356 = vmatprep.subr.mxu0 0.0
        %1357 = vmatpush1.msra.mxu0 %v826
        %1358 = vmatprep.subr.mxu0 0.0
        %1359 = vmatpush1.msra.mxu0 %v827
        %1360 = vmatprep.subr.mxu0 0.0
        %1361 = vmatpush1.msra.mxu0 %v828
        %1362 = vmatprep.subr.mxu0 0.0
        %1363 = vmatpush1.msra.mxu0 %v829
        %1364 = vmatprep.subr.mxu0 0.0
        %1365 = vmatpush1.msra.mxu0 %v830
        %1366 = vmatprep.subr.mxu0 0.0
        %1367 = vmatpush1.msra.mxu0 %v831
        %1368 = vmatprep.subr.mxu0 0.0
        %1369 = vmatpush1.msra.mxu0 %v832
        %1370 = vmatprep.subr.mxu0 0.0
        %1371 = vmatpush1.msra.mxu0 %v833
        %1372 = vmatprep.subr.mxu0 0.0
        %1373 = vmatpush1.msra.mxu0 0.0
        %1374 = vmatprep.subr.mxu0 0.0
        %1375 = vmatpush1.msra.mxu0 0.0
        %1376 = vmatprep.subr.mxu0 0.0
        %1377 = vmatpush1.msra.mxu0 0.0
        %1378 = vmatprep.subr.mxu0 0.0
        %1379 = vmatpush1.msra.mxu0 0.0
        %1380 = vmatprep.subr.mxu0 0.0
        %1381 = vmatpush1.msra.mxu0 0.0
        %1382 = vmatprep.subr.mxu0 0.0
        %1383 = vmatpush1.msra.mxu0 0.0
        %1384 = vmatprep.subr.mxu0 0.0
        %1385 = vmatpush1.msra.mxu0 0.0
        %1386 = vmatprep.subr.mxu0 0.0
        %1387 = vmatpush1.msra.mxu0 0.0
        %1388 = vmatprep.subr.mxu0 0.0
        %1389 = vmatpush1.msra.mxu0 0.0
        %1390 = vmatprep.subr.mxu0 0.0
        %1391 = vmatpush1.msra.mxu0 0.0
        %1392 = vmatprep.subr.mxu0 0.0
        %1393 = vmatpush1.msra.mxu0 0.0
        %1394 = vmatprep.subr.mxu0 0.0
        %1395 = vmatpush1.msra.mxu0 0.0
        %1396 = vmatprep.subr.mxu0 0.0
        %1397 = vmatpush1.msra.mxu0 0.0
        %1398 = vmatprep.subr.mxu0 0.0
        %1399 = vmatpush1.msra.mxu0 0.0
        %1400 = vmatprep.subr.mxu0 0.0
        %1401 = vmatpush1.msra.mxu0 0.0
        %1402 = vmatprep.subr.mxu0 0.0
        %1403 = vmatpush1.msra.mxu0 0.0
        %1404 = vmatprep.subr.mxu0 0.0
        %1405 = vmatpush1.msra.mxu0 0.0
        %1406 = vmatprep.subr.mxu0 0.0
        %1407 = vmatpush1.msra.mxu0 0.0
        %1408 = vmatprep.subr.mxu0 0.0
        %1409 = vmatpush1.msra.mxu0 0.0
        %1410 = vmatprep.subr.mxu0 0.0
        %1411 = vmatpush1.msra.mxu0 0.0
        %1412 = vmatprep.subr.mxu0 0.0
        %1413 = vmatpush1.msra.mxu0 0.0
        %1414 = vmatprep.subr.mxu0 0.0
        %1415 = vmatpush1.msra.mxu0 0.0
        %1416 = vmatprep.subr.mxu0 0.0
        %1417 = vmatpush1.msra.mxu0 0.0
        %1418 = vmatprep.subr.mxu0 0.0
        %1419 = vmatpush1.msra.mxu0 0.0
        %1420 = vmatprep.mubr.f32.mxu0 0.0
        %1421 = vmatmul.mubr.f32.gmra.mrb[0].mxu0 %v1261
        %v1422 = vpop.f32.mrb[0].mxu0
        %v1423 = vadd.f32 %v1102, %v1422
        %v1424 = vpop.f32.mrb[0].mxu0
        %1425 = vmatprep.mubr.f32.mxu0 0.0
        %1426 = vmatmul.mubr.f32.gmra.mrb[0].mxu0 %v1264
        %v1427 = vpop.f32.mrb[0].mxu0
        %v1428 = vadd.f32 %v1107, %v1427
        %v1429 = vpop.f32.mrb[0].mxu0
        %1430 = vmatprep.mubr.f32.mxu0 0.0
        %1431 = vmatmul.mubr.f32.gmra.mrb[0].mxu0 %v1267
        %v1432 = vpop.f32.mrb[0].mxu0
        %v1433 = vadd.f32 %v1112, %v1432
        %v1434 = vpop.f32.mrb[0].mxu0
        %1435 = vmatprep.mubr.f32.mxu0 0.0
        %1436 = vmatmul.mubr.f32.gmra.mrb[0].mxu0 %v1270
        %v1437 = vpop.f32.mrb[0].mxu0
        %v1438 = vadd.f32 %v1117, %v1437
        %v1439 = vpop.f32.mrb[0].mxu0
        %1440 = vmatprep.mubr.f32.mxu0 0.0
        %1441 = vmatmul.mubr.f32.gmra.mrb[0].mxu0 %v1273
        %v1442 = vpop.f32.mrb[0].mxu0
        %v1443 = vadd.f32 %v1122, %v1442
        %v1444 = vpop.f32.mrb[0].mxu0
        %1445 = vmatprep.mubr.f32.mxu0 0.0
        %1446 = vmatmul.mubr.f32.gmra.mrb[0].mxu0 %v1276
        %v1447 = vpop.f32.mrb[0].mxu0
        %v1448 = vadd.f32 %v1127, %v1447
        %v1449 = vpop.f32.mrb[0].mxu0
        %1450 = vmatprep.mubr.f32.mxu0 0.0
        %1451 = vmatmul.mubr.f32.gmra.mrb[0].mxu0 %v1279
        %v1452 = vpop.f32.mrb[0].mxu0
        %v1453 = vadd.f32 %v1132, %v1452
        %v1454 = vpop.f32.mrb[0].mxu0
        %1455 = vmatprep.mubr.f32.mxu0 0.0
        %1456 = vmatmul.mubr.f32.gmra.mrb[0].mxu0 %v1282
        %v1457 = vpop.f32.mrb[0].mxu0
        %v1458 = vadd.f32 %v1137, %v1457
        %v1459 = vpop.f32.mrb[0].mxu0
        %1460 = vmatprep.mubr.f32.mxu0 0.0
        %1461 = vmatmul.mubr.f32.gmra.mrb[0].mxu0 %v1285
        %v1462 = vpop.f32.mrb[0].mxu0
        %v1463 = vadd.f32 %v1142, %v1462
        %v1464 = vpop.f32.mrb[0].mxu0
        %1465 = vmatprep.mubr.f32.mxu0 0.0
        %1466 = vmatmul.mubr.f32.gmra.mrb[0].mxu0 %v1288
        %v1467 = vpop.f32.mrb[0].mxu0
        %v1468 = vadd.f32 %v1147, %v1467
        %v1469 = vpop.f32.mrb[0].mxu0
        %1470 = vmatprep.mubr.f32.mxu0 0.0
        %1471 = vmatmul.mubr.f32.gmra.mrb[0].mxu0 %v1291
        %v1472 = vpop.f32.mrb[0].mxu0
        %v1473 = vadd.f32 %v1152, %v1472
        %v1474 = vpop.f32.mrb[0].mxu0
        %1475 = vmatprep.mubr.f32.mxu0 0.0
        %1476 = vmatmul.mubr.f32.gmra.mrb[0].mxu0 %v1294
        %v1477 = vpop.f32.mrb[0].mxu0
        %v1478 = vadd.f32 %v1157, %v1477
        %v1479 = vpop.f32.mrb[0].mxu0
        %1480 = vmatprep.mubr.f32.mxu0 0.0
        %1481 = vmatmul.mubr.f32.gmra.mrb[0].mxu0 %v1297
        %v1482 = vpop.f32.mrb[0].mxu0
        %v1483 = vadd.f32 %v1162, %v1482
        %v1484 = vpop.f32.mrb[0].mxu0
        %1485 = vmatprep.mubr.f32.mxu0 0.0
        %1486 = vmatmul.mubr.f32.gmra.mrb[0].mxu0 %v1300
        %v1487 = vpop.f32.mrb[0].mxu0
        %v1488 = vadd.f32 %v1167, %v1487
        %v1489 = vpop.f32.mrb[0].mxu0
        %1490 = vmatprep.mubr.f32.mxu0 0.0
        %1491 = vmatmul.mubr.f32.gmra.mrb[0].mxu0 %v1303
        %v1492 = vpop.f32.mrb[0].mxu0
        %v1493 = vadd.f32 %v1172, %v1492
        %v1494 = vpop.f32.mrb[0].mxu0
        %1495 = vmatprep.mubr.f32.mxu0 0.0
        %1496 = vmatmul.mubr.f32.gmra.mrb[0].mxu0 %v1306
        %v1497 = vpop.f32.mrb[0].mxu0
        %v1498 = vadd.f32 %v1177, %v1497
        %v1499 = vpop.f32.mrb[0].mxu0
        %1500 = vmatprep.mubr.f32.mxu0 0.0
        %1501 = vmatmul.mubr.f32.gmra.mrb[0].mxu0 %v1309
        %v1502 = vpop.f32.mrb[0].mxu0
        %v1503 = vadd.f32 %v1182, %v1502
        %v1504 = vpop.f32.mrb[0].mxu0
        %1505 = vmatprep.mubr.f32.mxu0 0.0
        %1506 = vmatmul.mubr.f32.gmra.mrb[0].mxu0 %v1312
        %v1507 = vpop.f32.mrb[0].mxu0
        %v1508 = vadd.f32 %v1187, %v1507
        %v1509 = vpop.f32.mrb[0].mxu0
        %1510 = vmatprep.mubr.f32.mxu0 0.0
        %1511 = vmatmul.mubr.f32.gmra.mrb[0].mxu0 %v1315
        %v1512 = vpop.f32.mrb[0].mxu0
        %v1513 = vadd.f32 %v1192, %v1512
        %v1514 = vpop.f32.mrb[0].mxu0
        %1515 = vmatprep.mubr.f32.mxu0 0.0
        %1516 = vmatmul.mubr.f32.gmra.mrb[0].mxu0 %v1318
        %v1517 = vpop.f32.mrb[0].mxu0
        %v1518 = vadd.f32 %v1197, %v1517
        %v1519 = vpop.f32.mrb[0].mxu0
        %1520 = vmatprep.mubr.f32.mxu0 0.0
        %1521 = vmatmul.mubr.f32.gmra.mrb[0].mxu0 %v1321
        %v1522 = vpop.f32.mrb[0].mxu0
        %v1523 = vadd.f32 %v1202, %v1522
        %v1524 = vpop.f32.mrb[0].mxu0
        %1525 = vmatprep.mubr.f32.mxu0 0.0
        %1526 = vmatmul.mubr.f32.gmra.mrb[0].mxu0 %v1324
        %v1527 = vpop.f32.mrb[0].mxu0
        %v1528 = vadd.f32 %v1207, %v1527
        %v1529 = vpop.f32.mrb[0].mxu0
        %1530 = vmatprep.mubr.f32.mxu0 0.0
        %1531 = vmatmul.mubr.f32.gmra.mrb[0].mxu0 %v1327
        %v1532 = vpop.f32.mrb[0].mxu0
        %v1533 = vadd.f32 %v1212, %v1532
        %v1534 = vpop.f32.mrb[0].mxu0
        %1535 = vmatprep.mubr.f32.mxu0 0.0
        %1536 = vmatmul.mubr.f32.gmra.mrb[0].mxu0 %v1330
        %v1537 = vpop.f32.mrb[0].mxu0
        %v1538 = vadd.f32 %v1217, %v1537
        %v1539 = vpop.f32.mrb[0].mxu0
        %1540 = vmatprep.mubr.f32.mxu0 0.0
        %1541 = vmatmul.mubr.f32.gmra.mrb[0].mxu0 %v1333
        %v1542 = vpop.f32.mrb[0].mxu0
        %v1543 = vadd.f32 %v1222, %v1542
        %v1544 = vpop.f32.mrb[0].mxu0
        %1545 = vmatprep.mubr.f32.mxu0 0.0
        %1546 = vmatmul.mubr.f32.gmra.mrb[0].mxu0 %v1336
        %v1547 = vpop.f32.mrb[0].mxu0
        %v1548 = vadd.f32 %v1227, %v1547
        %v1549 = vpop.f32.mrb[0].mxu0
        %1550 = vmatprep.mubr.f32.mxu0 0.0
        %1551 = vmatmul.mubr.f32.gmra.mrb[0].mxu0 %v1339
        %v1552 = vpop.f32.mrb[0].mxu0
        %v1553 = vadd.f32 %v1232, %v1552
        %v1554 = vpop.f32.mrb[0].mxu0
        %1555 = vmatprep.mubr.f32.mxu0 0.0
        %1556 = vmatmul.mubr.f32.gmra.mrb[0].mxu0 %v1342
        %v1557 = vpop.f32.mrb[0].mxu0
        %v1558 = vadd.f32 %v1237, %v1557
        %v1559 = vpop.f32.mrb[0].mxu0
        %1560 = vmatprep.mubr.f32.mxu0 0.0
        %1561 = vmatmul.mubr.f32.gmra.mrb[0].mxu0 %v1345
        %v1562 = vpop.f32.mrb[0].mxu0
        %v1563 = vadd.f32 %v1242, %v1562
        %v1564 = vpop.f32.mrb[0].mxu0
        %1565 = vmatprep.mubr.f32.mxu0 0.0
        %1566 = vmatmul.mubr.f32.gmra.mrb[0].mxu0 %v1348
        %v1567 = vpop.f32.mrb[0].mxu0
        %v1568 = vadd.f32 %v1247, %v1567
        %v1569 = vpop.f32.mrb[0].mxu0
        %1570 = vmatprep.mubr.f32.mxu0 0.0
        %1571 = vmatmul.mubr.f32.gmra.mrb[0].mxu0 %v1351
        %v1572 = vpop.f32.mrb[0].mxu0
        %v1573 = vadd.f32 %v1252, %v1572
        %v1574 = vpop.f32.mrb[0].mxu0
        %1575 = vmatprep.mubr.f32.mxu0 0.0
        %1576 = vmatmul.mubr.f32.gmra.mrb[0].mxu0 %v1354
        %v1577 = vpop.f32.mrb[0].mxu0
        %v1578 = vadd.f32 %v1257, %v1577
        %v1579 = vpop.f32.mrb[0].mxu0
        %1580 = vdwg.mxu0
        %v1581 = vld [vmem:[%s345 + $0x2] sm:$0xff]
        %v1582 = vld [vmem:[%s345 + $0xa] sm:$0xff]
        %v1583 = vld [vmem:[%s345 + $0x1a] sm:$0xff]
        %v1584 = vld [vmem:[%s345 + $0x22] sm:$0xff]
        %v1585 = vld [vmem:[%s345 + $0x32] sm:$0xff]
        %v1586 = vld [vmem:[%s345 + $0x3a] sm:$0xff]
        %v1587 = vld [vmem:[%s345 + $0x4a] sm:$0xff]
        %v1588 = vld [vmem:[%s345 + $0x52] sm:$0xff]
        %v1589 = vld [vmem:[%s345 + $0x62] sm:$0xff]
        %v1590 = vld [vmem:[%s345 + $0x6a] sm:$0xff]
        %v1591 = vld [vmem:[%s345 + $0x7a] sm:$0xff]
        %v1592 = vld [vmem:[%s345 + $0x82] sm:$0xff]
        %v1593 = vld [vmem:[%s345 + $0x92] sm:$0xff]
        %v1594 = vld [vmem:[%s345 + $0x9a] sm:$0xff]
        %v1595 = vld [vmem:[%s345 + $0xaa] sm:$0xff]
        %v1596 = vld [vmem:[%s345 + $0xb2] sm:$0xff]
        %v1597 = vld [vmem:[%s345 + $0xc2] sm:$0xff]
        %v1598 = vld [vmem:[%s345 + $0xca] sm:$0xff]
        %v1599 = vld [vmem:[%s345 + $0xda] sm:$0xff]
        %v1600 = vld [vmem:[%s345 + $0xe2] sm:$0xff]
        %v1601 = vld [vmem:[%s345 + $0xf2] sm:$0xff]
        %v1602 = vld [vmem:[%s345 + $0xfa] sm:$0xff]
        %v1603 = vld [vmem:[%s345 + $0x10a] sm:$0xff]
        %v1604 = vld [vmem:[%s345 + $0x112] sm:$0xff]
        %v1605 = vld [vmem:[%s345 + $0x122] sm:$0xff]
        %v1606 = vld [vmem:[%s345 + $0x12a] sm:$0xff]
        %v1607 = vld [vmem:[%s345 + $0x13a] sm:$0xff]
        %v1608 = vld [vmem:[%s345 + $0x142] sm:$0xff]
        %v1609 = vld [vmem:[%s345 + $0x152] sm:$0xff]
        %v1610 = vld [vmem:[%s345 + $0x15a] sm:$0xff]
        %v1611 = vld [vmem:[%s345 + $0x16a] sm:$0xff]
        %v1612 = vld [vmem:[%s345 + $0x172] sm:$0xff]
        %v1613 = vmul.f32 %v1581, %v754
        %v1614 = vmul.f32 %v1582, %v754
        %v1615 = vmul.f32 %v1583, %v754
        %v1616 = vmul.f32 %v1584, %v754
        %v1617 = vmul.f32 %v1585, %v754
        %v1618 = vmul.f32 %v1586, %v754
        %v1619 = vmul.f32 %v1587, %v754
        %v1620 = vmul.f32 %v1588, %v754
        %v1621 = vmul.f32 %v1589, %v754
        %v1622 = vmul.f32 %v1590, %v754
        %v1623 = vmul.f32 %v1591, %v754
        %v1624 = vmul.f32 %v1592, %v754
        %v1625 = vmul.f32 %v1593, %v754
        %v1626 = vmul.f32 %v1594, %v754
        %v1627 = vmul.f32 %v1595, %v754
        %v1628 = vmul.f32 %v1596, %v754
        %v1629 = vmul.f32 %v1597, %v754
        %v1630 = vmul.f32 %v1598, %v754
        %v1631 = vmul.f32 %v1599, %v754
        %v1632 = vmul.f32 %v1600, %v754
        %v1633 = vmul.f32 %v1601, %v754
        %v1634 = vmul.f32 %v1602, %v754
        %v1635 = vmul.f32 %v1603, %v754
        %v1636 = vmul.f32 %v1604, %v754
        %v1637 = vmul.f32 %v1605, %v754
        %v1638 = vmul.f32 %v1606, %v754
        %v1639 = vmul.f32 %v1607, %v754
        %v1640 = vmul.f32 %v1608, %v754
        %v1641 = vmul.f32 %v1609, %v754
        %v1642 = vmul.f32 %v1610, %v754
        %v1643 = vmul.f32 %v1611, %v754
        %v1644 = vmul.f32 %v1612, %v754
        %v1645 = vadd.f32 %v1613, %v792
        %v1646 = vadd.f32 %v1614, %v792
        %v1647 = vadd.f32 %v1615, %v792
        %v1648 = vadd.f32 %v1616, %v792
        %v1649 = vadd.f32 %v1617, %v792
        %v1650 = vadd.f32 %v1618, %v792
        %v1651 = vadd.f32 %v1619, %v792
        %v1652 = vadd.f32 %v1620, %v792
        %v1653 = vadd.f32 %v1621, %v792
        %v1654 = vadd.f32 %v1622, %v792
        %v1655 = vadd.f32 %v1623, %v792
        %v1656 = vadd.f32 %v1624, %v792
        %v1657 = vadd.f32 %v1625, %v792
        %v1658 = vadd.f32 %v1626, %v792
        %v1659 = vadd.f32 %v1627, %v792
        %v1660 = vadd.f32 %v1628, %v792
        %v1661 = vadd.f32 %v1629, %v792
        %v1662 = vadd.f32 %v1630, %v792
        %v1663 = vadd.f32 %v1631, %v792
        %v1664 = vadd.f32 %v1632, %v792
        %v1665 = vadd.f32 %v1633, %v792
        %v1666 = vadd.f32 %v1634, %v792
        %v1667 = vadd.f32 %v1635, %v792
        %v1668 = vadd.f32 %v1636, %v792
        %v1669 = vadd.f32 %v1637, %v792
        %v1670 = vadd.f32 %v1638, %v792
        %v1671 = vadd.f32 %v1639, %v792
        %v1672 = vadd.f32 %v1640, %v792
        %v1673 = vadd.f32 %v1641, %v792
        %v1674 = vadd.f32 %v1642, %v792
        %v1675 = vadd.f32 %v1643, %v792
        %v1676 = vadd.f32 %v1644, %v792
        %s1677 = scalar_lea.vmem %s5, 128
        %v1678 = vld [vmem:[%s1677] sm:$0xff]
        %v1679 = vld [vmem:[%s1677 + $0x8] sm:$0xff]
        %v1680 = vld [vmem:[%s1677 + $0x10] sm:$0xff]
        %v1681 = vld [vmem:[%s1677 + $0x18] sm:$0xff]
        %v1682 = vld [vmem:[%s1677 + $0x20] sm:$0xff]
        %v1683 = vld [vmem:[%s1677 + $0x28] sm:$0xff]
        %v1684 = vld [vmem:[%s1677 + $0x30] sm:$0xff]
        %v1685 = vld [vmem:[%s1677 + $0x38] sm:$0xff]
        %v1687 = vsel %vm384, %v1645, 0
        %v1690 = vsel %vm384, %v1646, 0
        %v1693 = vsel %vm384, %v1647, 0
        %v1696 = vsel %vm384, %v1648, 0
        %v1699 = vsel %vm384, %v1649, 0
        %v1702 = vsel %vm384, %v1650, 0
        %v1705 = vsel %vm384, %v1651, 0
        %v1708 = vsel %vm384, %v1652, 0
        %v1711 = vsel %vm384, %v1653, 0
        %v1714 = vsel %vm384, %v1654, 0
        %v1717 = vsel %vm384, %v1655, 0
        %v1720 = vsel %vm384, %v1656, 0
        %v1723 = vsel %vm384, %v1657, 0
        %v1726 = vsel %vm384, %v1658, 0
        %v1729 = vsel %vm384, %v1659, 0
        %v1732 = vsel %vm384, %v1660, 0
        %v1735 = vsel %vm384, %v1661, 0
        %v1738 = vsel %vm384, %v1662, 0
        %v1741 = vsel %vm384, %v1663, 0
        %v1744 = vsel %vm384, %v1664, 0
        %v1747 = vsel %vm384, %v1665, 0
        %v1750 = vsel %vm384, %v1666, 0
        %v1753 = vsel %vm384, %v1667, 0
        %v1756 = vsel %vm384, %v1668, 0
        %v1759 = vsel %vm384, %v1669, 0
        %v1762 = vsel %vm384, %v1670, 0
        %v1765 = vsel %vm384, %v1671, 0
        %v1768 = vsel %vm384, %v1672, 0
        %v1771 = vsel %vm384, %v1673, 0
        %v1774 = vsel %vm384, %v1674, 0
        %v1777 = vsel %vm384, %v1675, 0
        %v1780 = vsel %vm384, %v1676, 0
        %1782 = vmatprep.subr.mxu0 0.0
        %1783 = vmatpush1.msra.mxu0 %v1678
        %1784 = vmatprep.subr.mxu0 0.0
        %1785 = vmatpush1.msra.mxu0 %v1679
        %1786 = vmatprep.subr.mxu0 0.0
        %1787 = vmatpush1.msra.mxu0 %v1680
        %1788 = vmatprep.subr.mxu0 0.0
        %1789 = vmatpush1.msra.mxu0 %v1681
        %1790 = vmatprep.subr.mxu0 0.0
        %1791 = vmatpush1.msra.mxu0 %v1682
        %1792 = vmatprep.subr.mxu0 0.0
        %1793 = vmatpush1.msra.mxu0 %v1683
        %1794 = vmatprep.subr.mxu0 0.0
        %1795 = vmatpush1.msra.mxu0 %v1684
        %1796 = vmatprep.subr.mxu0 0.0
        %1797 = vmatpush1.msra.mxu0 %v1685
        %1798 = vmatprep.subr.mxu0 0.0
        %1799 = vmatpush1.msra.mxu0 0.0
        %1800 = vmatprep.subr.mxu0 0.0
        %1801 = vmatpush1.msra.mxu0 0.0
        %1802 = vmatprep.subr.mxu0 0.0
        %1803 = vmatpush1.msra.mxu0 0.0
        %1804 = vmatprep.subr.mxu0 0.0
        %1805 = vmatpush1.msra.mxu0 0.0
        %1806 = vmatprep.subr.mxu0 0.0
        %1807 = vmatpush1.msra.mxu0 0.0
        %1808 = vmatprep.subr.mxu0 0.0
        %1809 = vmatpush1.msra.mxu0 0.0
        %1810 = vmatprep.subr.mxu0 0.0
        %1811 = vmatpush1.msra.mxu0 0.0
        %1812 = vmatprep.subr.mxu0 0.0
        %1813 = vmatpush1.msra.mxu0 0.0
        %1814 = vmatprep.subr.mxu0 0.0
        %1815 = vmatpush1.msra.mxu0 0.0
        %1816 = vmatprep.subr.mxu0 0.0
        %1817 = vmatpush1.msra.mxu0 0.0
        %1818 = vmatprep.subr.mxu0 0.0
        %1819 = vmatpush1.msra.mxu0 0.0
        %1820 = vmatprep.subr.mxu0 0.0
        %1821 = vmatpush1.msra.mxu0 0.0
        %1822 = vmatprep.subr.mxu0 0.0
        %1823 = vmatpush1.msra.mxu0 0.0
        %1824 = vmatprep.subr.mxu0 0.0
        %1825 = vmatpush1.msra.mxu0 0.0
        %1826 = vmatprep.subr.mxu0 0.0
        %1827 = vmatpush1.msra.mxu0 0.0
        %1828 = vmatprep.subr.mxu0 0.0
        %1829 = vmatpush1.msra.mxu0 0.0
        %1830 = vmatprep.subr.mxu0 0.0
        %1831 = vmatpush1.msra.mxu0 0.0
        %1832 = vmatprep.subr.mxu0 0.0
        %1833 = vmatpush1.msra.mxu0 0.0
        %1834 = vmatprep.subr.mxu0 0.0
        %1835 = vmatpush1.msra.mxu0 0.0
        %1836 = vmatprep.subr.mxu0 0.0
        %1837 = vmatpush1.msra.mxu0 0.0
        %1838 = vmatprep.subr.mxu0 0.0
        %1839 = vmatpush1.msra.mxu0 0.0
        %1840 = vmatprep.subr.mxu0 0.0
        %1841 = vmatpush1.msra.mxu0 0.0
        %1842 = vmatprep.subr.mxu0 0.0
        %1843 = vmatpush1.msra.mxu0 0.0
        %1844 = vmatprep.subr.mxu0 0.0
        %1845 = vmatpush1.msra.mxu0 0.0
        %1846 = vmatprep.mubr.f32.mxu0 0.0
        %1847 = vmatmul.mubr.f32.gmra.mrb[0].mxu0 %v1687
        %v1848 = vpop.f32.mrb[0].mxu0
        %v1849 = vadd.f32 0.0, %v1848
        %v1850 = vpop.f32.mrb[0].mxu0
        %1851 = vmatprep.mubr.f32.mxu0 0.0
        %1852 = vmatmul.mubr.f32.gmra.mrb[0].mxu0 %v1690
        %v1853 = vpop.f32.mrb[0].mxu0
        %v1854 = vadd.f32 0.0, %v1853
        %v1855 = vpop.f32.mrb[0].mxu0
        %1856 = vmatprep.mubr.f32.mxu0 0.0
        %1857 = vmatmul.mubr.f32.gmra.mrb[0].mxu0 %v1693
        %v1858 = vpop.f32.mrb[0].mxu0
        %v1859 = vadd.f32 0.0, %v1858
        %v1860 = vpop.f32.mrb[0].mxu0
        %1861 = vmatprep.mubr.f32.mxu0 0.0
        %1862 = vmatmul.mubr.f32.gmra.mrb[0].mxu0 %v1696
        %v1863 = vpop.f32.mrb[0].mxu0
        %v1864 = vadd.f32 0.0, %v1863
        %v1865 = vpop.f32.mrb[0].mxu0
        %1866 = vmatprep.mubr.f32.mxu0 0.0
        %1867 = vmatmul.mubr.f32.gmra.mrb[0].mxu0 %v1699
        %v1868 = vpop.f32.mrb[0].mxu0
        %v1869 = vadd.f32 0.0, %v1868
        %v1870 = vpop.f32.mrb[0].mxu0
        %1871 = vmatprep.mubr.f32.mxu0 0.0
        %1872 = vmatmul.mubr.f32.gmra.mrb[0].mxu0 %v1702
        %v1873 = vpop.f32.mrb[0].mxu0
        %v1874 = vadd.f32 0.0, %v1873
        %v1875 = vpop.f32.mrb[0].mxu0
        %1876 = vmatprep.mubr.f32.mxu0 0.0
        %1877 = vmatmul.mubr.f32.gmra.mrb[0].mxu0 %v1705
        %v1878 = vpop.f32.mrb[0].mxu0
        %v1879 = vadd.f32 0.0, %v1878
        %v1880 = vpop.f32.mrb[0].mxu0
        %1881 = vmatprep.mubr.f32.mxu0 0.0
        %1882 = vmatmul.mubr.f32.gmra.mrb[0].mxu0 %v1708
        %v1883 = vpop.f32.mrb[0].mxu0
        %v1884 = vadd.f32 0.0, %v1883
        %v1885 = vpop.f32.mrb[0].mxu0
        %1886 = vmatprep.mubr.f32.mxu0 0.0
        %1887 = vmatmul.mubr.f32.gmra.mrb[0].mxu0 %v1711
        %v1888 = vpop.f32.mrb[0].mxu0
        %v1889 = vadd.f32 0.0, %v1888
        %v1890 = vpop.f32.mrb[0].mxu0
        %1891 = vmatprep.mubr.f32.mxu0 0.0
        %1892 = vmatmul.mubr.f32.gmra.mrb[0].mxu0 %v1714
        %v1893 = vpop.f32.mrb[0].mxu0
        %v1894 = vadd.f32 0.0, %v1893
        %v1895 = vpop.f32.mrb[0].mxu0
        %1896 = vmatprep.mubr.f32.mxu0 0.0
        %1897 = vmatmul.mubr.f32.gmra.mrb[0].mxu0 %v1717
        %v1898 = vpop.f32.mrb[0].mxu0
        %v1899 = vadd.f32 0.0, %v1898
        %v1900 = vpop.f32.mrb[0].mxu0
        %1901 = vmatprep.mubr.f32.mxu0 0.0
        %1902 = vmatmul.mubr.f32.gmra.mrb[0].mxu0 %v1720
        %v1903 = vpop.f32.mrb[0].mxu0
        %v1904 = vadd.f32 0.0, %v1903
        %v1905 = vpop.f32.mrb[0].mxu0
        %1906 = vmatprep.mubr.f32.mxu0 0.0
        %1907 = vmatmul.mubr.f32.gmra.mrb[0].mxu0 %v1723
        %v1908 = vpop.f32.mrb[0].mxu0
        %v1909 = vadd.f32 0.0, %v1908
        %v1910 = vpop.f32.mrb[0].mxu0
        %1911 = vmatprep.mubr.f32.mxu0 0.0
        %1912 = vmatmul.mubr.f32.gmra.mrb[0].mxu0 %v1726
        %v1913 = vpop.f32.mrb[0].mxu0
        %v1914 = vadd.f32 0.0, %v1913
        %v1915 = vpop.f32.mrb[0].mxu0
        %1916 = vmatprep.mubr.f32.mxu0 0.0
        %1917 = vmatmul.mubr.f32.gmra.mrb[0].mxu0 %v1729
        %v1918 = vpop.f32.mrb[0].mxu0
        %v1919 = vadd.f32 0.0, %v1918
        %v1920 = vpop.f32.mrb[0].mxu0
        %1921 = vmatprep.mubr.f32.mxu0 0.0
        %1922 = vmatmul.mubr.f32.gmra.mrb[0].mxu0 %v1732
        %v1923 = vpop.f32.mrb[0].mxu0
        %v1924 = vadd.f32 0.0, %v1923
        %v1925 = vpop.f32.mrb[0].mxu0
        %1926 = vmatprep.mubr.f32.mxu0 0.0
        %1927 = vmatmul.mubr.f32.gmra.mrb[0].mxu0 %v1735
        %v1928 = vpop.f32.mrb[0].mxu0
        %v1929 = vadd.f32 0.0, %v1928
        %v1930 = vpop.f32.mrb[0].mxu0
        %1931 = vmatprep.mubr.f32.mxu0 0.0
        %1932 = vmatmul.mubr.f32.gmra.mrb[0].mxu0 %v1738
        %v1933 = vpop.f32.mrb[0].mxu0
        %v1934 = vadd.f32 0.0, %v1933
        %v1935 = vpop.f32.mrb[0].mxu0
        %1936 = vmatprep.mubr.f32.mxu0 0.0
        %1937 = vmatmul.mubr.f32.gmra.mrb[0].mxu0 %v1741
        %v1938 = vpop.f32.mrb[0].mxu0
        %v1939 = vadd.f32 0.0, %v1938
        %v1940 = vpop.f32.mrb[0].mxu0
        %1941 = vmatprep.mubr.f32.mxu0 0.0
        %1942 = vmatmul.mubr.f32.gmra.mrb[0].mxu0 %v1744
        %v1943 = vpop.f32.mrb[0].mxu0
        %v1944 = vadd.f32 0.0, %v1943
        %v1945 = vpop.f32.mrb[0].mxu0
        %1946 = vmatprep.mubr.f32.mxu0 0.0
        %1947 = vmatmul.mubr.f32.gmra.mrb[0].mxu0 %v1747
        %v1948 = vpop.f32.mrb[0].mxu0
        %v1949 = vadd.f32 0.0, %v1948
        %v1950 = vpop.f32.mrb[0].mxu0
        %1951 = vmatprep.mubr.f32.mxu0 0.0
        %1952 = vmatmul.mubr.f32.gmra.mrb[0].mxu0 %v1750
        %v1953 = vpop.f32.mrb[0].mxu0
        %v1954 = vadd.f32 0.0, %v1953
        %v1955 = vpop.f32.mrb[0].mxu0
        %1956 = vmatprep.mubr.f32.mxu0 0.0
        %1957 = vmatmul.mubr.f32.gmra.mrb[0].mxu0 %v1753
        %v1958 = vpop.f32.mrb[0].mxu0
        %v1959 = vadd.f32 0.0, %v1958
        %v1960 = vpop.f32.mrb[0].mxu0
        %1961 = vmatprep.mubr.f32.mxu0 0.0
        %1962 = vmatmul.mubr.f32.gmra.mrb[0].mxu0 %v1756
        %v1963 = vpop.f32.mrb[0].mxu0
        %v1964 = vadd.f32 0.0, %v1963
        %v1965 = vpop.f32.mrb[0].mxu0
        %1966 = vmatprep.mubr.f32.mxu0 0.0
        %1967 = vmatmul.mubr.f32.gmra.mrb[0].mxu0 %v1759
        %v1968 = vpop.f32.mrb[0].mxu0
        %v1969 = vadd.f32 0.0, %v1968
        %v1970 = vpop.f32.mrb[0].mxu0
        %1971 = vmatprep.mubr.f32.mxu0 0.0
        %1972 = vmatmul.mubr.f32.gmra.mrb[0].mxu0 %v1762
        %v1973 = vpop.f32.mrb[0].mxu0
        %v1974 = vadd.f32 0.0, %v1973
        %v1975 = vpop.f32.mrb[0].mxu0
        %1976 = vmatprep.mubr.f32.mxu0 0.0
        %1977 = vmatmul.mubr.f32.gmra.mrb[0].mxu0 %v1765
        %v1978 = vpop.f32.mrb[0].mxu0
        %v1979 = vadd.f32 0.0, %v1978
        %v1980 = vpop.f32.mrb[0].mxu0
        %1981 = vmatprep.mubr.f32.mxu0 0.0
        %1982 = vmatmul.mubr.f32.gmra.mrb[0].mxu0 %v1768
        %v1983 = vpop.f32.mrb[0].mxu0
        %v1984 = vadd.f32 0.0, %v1983
        %v1985 = vpop.f32.mrb[0].mxu0
        %1986 = vmatprep.mubr.f32.mxu0 0.0
        %1987 = vmatmul.mubr.f32.gmra.mrb[0].mxu0 %v1771
        %v1988 = vpop.f32.mrb[0].mxu0
        %v1989 = vadd.f32 0.0, %v1988
        %v1990 = vpop.f32.mrb[0].mxu0
        %1991 = vmatprep.mubr.f32.mxu0 0.0
        %1992 = vmatmul.mubr.f32.gmra.mrb[0].mxu0 %v1774
        %v1993 = vpop.f32.mrb[0].mxu0
        %v1994 = vadd.f32 0.0, %v1993
        %v1995 = vpop.f32.mrb[0].mxu0
        %1996 = vmatprep.mubr.f32.mxu0 0.0
        %1997 = vmatmul.mubr.f32.gmra.mrb[0].mxu0 %v1777
        %v1998 = vpop.f32.mrb[0].mxu0
        %v1999 = vadd.f32 0.0, %v1998
        %v2000 = vpop.f32.mrb[0].mxu0
        %2001 = vmatprep.mubr.f32.mxu0 0.0
        %2002 = vmatmul.mubr.f32.gmra.mrb[0].mxu0 %v1780
        %v2003 = vpop.f32.mrb[0].mxu0
        %v2004 = vadd.f32 0.0, %v2003
        %v2005 = vpop.f32.mrb[0].mxu0
        %2006 = vdwg.mxu0
        %v2007 = vadd.f32 %v1423, %v1849
        %v2008 = vadd.f32 %v1428, %v1854
        %v2009 = vadd.f32 %v1433, %v1859
        %v2010 = vadd.f32 %v1438, %v1864
        %v2011 = vadd.f32 %v1443, %v1869
        %v2012 = vadd.f32 %v1448, %v1874
        %v2013 = vadd.f32 %v1453, %v1879
        %v2014 = vadd.f32 %v1458, %v1884
        %v2015 = vadd.f32 %v1463, %v1889
        %v2016 = vadd.f32 %v1468, %v1894
        %v2017 = vadd.f32 %v1473, %v1899
        %v2018 = vadd.f32 %v1478, %v1904
        %v2019 = vadd.f32 %v1483, %v1909
        %v2020 = vadd.f32 %v1488, %v1914
        %v2021 = vadd.f32 %v1493, %v1919
        %v2022 = vadd.f32 %v1498, %v1924
        %v2023 = vadd.f32 %v1503, %v1929
        %v2024 = vadd.f32 %v1508, %v1934
        %v2025 = vadd.f32 %v1513, %v1939
        %v2026 = vadd.f32 %v1518, %v1944
        %v2027 = vadd.f32 %v1523, %v1949
        %v2028 = vadd.f32 %v1528, %v1954
        %v2029 = vadd.f32 %v1533, %v1959
        %v2030 = vadd.f32 %v1538, %v1964
        %v2031 = vadd.f32 %v1543, %v1969
        %v2032 = vadd.f32 %v1548, %v1974
        %v2033 = vadd.f32 %v1553, %v1979
        %v2034 = vadd.f32 %v1558, %v1984
        %v2035 = vadd.f32 %v1563, %v1989
        %v2036 = vadd.f32 %v1568, %v1994
        %v2037 = vadd.f32 %v1573, %v1999
        %v2038 = vadd.f32 %v1578, %v2004
        %v2039 = vld [vmem:[%s351] sm:$0xff]
        %v2040 = vld [vmem:[%s351 + $0x8] sm:$0xff]
        %v2041 = vld [vmem:[%s351 + $0x18] sm:$0xff]
        %v2042 = vld [vmem:[%s351 + $0x20] sm:$0xff]
        %v2043 = vld [vmem:[%s351 + $0x30] sm:$0xff]
        %v2044 = vld [vmem:[%s351 + $0x38] sm:$0xff]
        %v2045 = vld [vmem:[%s351 + $0x48] sm:$0xff]
        %v2046 = vld [vmem:[%s351 + $0x50] sm:$0xff]
        %v2047 = vld [vmem:[%s351 + $0x60] sm:$0xff]
        %v2048 = vld [vmem:[%s351 + $0x68] sm:$0xff]
        %v2049 = vld [vmem:[%s351 + $0x78] sm:$0xff]
        %v2050 = vld [vmem:[%s351 + $0x80] sm:$0xff]
        %v2051 = vld [vmem:[%s351 + $0x90] sm:$0xff]
        %v2052 = vld [vmem:[%s351 + $0x98] sm:$0xff]
        %v2053 = vld [vmem:[%s351 + $0xa8] sm:$0xff]
        %v2054 = vld [vmem:[%s351 + $0xb0] sm:$0xff]
        %v2055 = vld [vmem:[%s351 + $0xc0] sm:$0xff]
        %v2056 = vld [vmem:[%s351 + $0xc8] sm:$0xff]
        %v2057 = vld [vmem:[%s351 + $0xd8] sm:$0xff]
        %v2058 = vld [vmem:[%s351 + $0xe0] sm:$0xff]
        %v2059 = vld [vmem:[%s351 + $0xf0] sm:$0xff]
        %v2060 = vld [vmem:[%s351 + $0xf8] sm:$0xff]
        %v2061 = vld [vmem:[%s351 + $0x108] sm:$0xff]
        %v2062 = vld [vmem:[%s351 + $0x110] sm:$0xff]
        %v2063 = vld [vmem:[%s351 + $0x120] sm:$0xff]
        %v2064 = vld [vmem:[%s351 + $0x128] sm:$0xff]
        %v2065 = vld [vmem:[%s351 + $0x138] sm:$0xff]
        %v2066 = vld [vmem:[%s351 + $0x140] sm:$0xff]
        %v2067 = vld [vmem:[%s351 + $0x150] sm:$0xff]
        %v2068 = vld [vmem:[%s351 + $0x158] sm:$0xff]
        %v2069 = vld [vmem:[%s351 + $0x168] sm:$0xff]
        %v2070 = vld [vmem:[%s351 + $0x170] sm:$0xff]
        %v2071 = vmul.f32 %v2039, %v754
        %v2072 = vmul.f32 %v2040, %v754
        %v2073 = vmul.f32 %v2041, %v754
        %v2074 = vmul.f32 %v2042, %v754
        %v2075 = vmul.f32 %v2043, %v754
        %v2076 = vmul.f32 %v2044, %v754
        %v2077 = vmul.f32 %v2045, %v754
        %v2078 = vmul.f32 %v2046, %v754
        %v2079 = vmul.f32 %v2047, %v754
        %v2080 = vmul.f32 %v2048, %v754
        %v2081 = vmul.f32 %v2049, %v754
        %v2082 = vmul.f32 %v2050, %v754
        %v2083 = vmul.f32 %v2051, %v754
        %v2084 = vmul.f32 %v2052, %v754
        %v2085 = vmul.f32 %v2053, %v754
        %v2086 = vmul.f32 %v2054, %v754
        %v2087 = vmul.f32 %v2055, %v754
        %v2088 = vmul.f32 %v2056, %v754
        %v2089 = vmul.f32 %v2057, %v754
        %v2090 = vmul.f32 %v2058, %v754
        %v2091 = vmul.f32 %v2059, %v754
        %v2092 = vmul.f32 %v2060, %v754
        %v2093 = vmul.f32 %v2061, %v754
        %v2094 = vmul.f32 %v2062, %v754
        %v2095 = vmul.f32 %v2063, %v754
        %v2096 = vmul.f32 %v2064, %v754
        %v2097 = vmul.f32 %v2065, %v754
        %v2098 = vmul.f32 %v2066, %v754
        %v2099 = vmul.f32 %v2067, %v754
        %v2100 = vmul.f32 %v2068, %v754
        %v2101 = vmul.f32 %v2069, %v754
        %v2102 = vmul.f32 %v2070, %v754
        %v2103 = vadd.f32 %v2071, %v792
        %v2104 = vadd.f32 %v2072, %v792
        %v2105 = vadd.f32 %v2073, %v792
        %v2106 = vadd.f32 %v2074, %v792
        %v2107 = vadd.f32 %v2075, %v792
        %v2108 = vadd.f32 %v2076, %v792
        %v2109 = vadd.f32 %v2077, %v792
        %v2110 = vadd.f32 %v2078, %v792
        %v2111 = vadd.f32 %v2079, %v792
        %v2112 = vadd.f32 %v2080, %v792
        %v2113 = vadd.f32 %v2081, %v792
        %v2114 = vadd.f32 %v2082, %v792
        %v2115 = vadd.f32 %v2083, %v792
        %v2116 = vadd.f32 %v2084, %v792
        %v2117 = vadd.f32 %v2085, %v792
        %v2118 = vadd.f32 %v2086, %v792
        %v2119 = vadd.f32 %v2087, %v792
        %v2120 = vadd.f32 %v2088, %v792
        %v2121 = vadd.f32 %v2089, %v792
        %v2122 = vadd.f32 %v2090, %v792
        %v2123 = vadd.f32 %v2091, %v792
        %v2124 = vadd.f32 %v2092, %v792
        %v2125 = vadd.f32 %v2093, %v792
        %v2126 = vadd.f32 %v2094, %v792
        %v2127 = vadd.f32 %v2095, %v792
        %v2128 = vadd.f32 %v2096, %v792
        %v2129 = vadd.f32 %v2097, %v792
        %v2130 = vadd.f32 %v2098, %v792
        %v2131 = vadd.f32 %v2099, %v792
        %v2132 = vadd.f32 %v2100, %v792
        %v2133 = vadd.f32 %v2101, %v792
        %v2134 = vadd.f32 %v2102, %v792
        %s2135 = scalar_lea.vmem %s5, 192
        %v2136 = vld [vmem:[%s2135] sm:$0xff]
        %v2137 = vld [vmem:[%s2135 + $0x8] sm:$0xff]
        %v2138 = vld [vmem:[%s2135 + $0x10] sm:$0xff]
        %v2139 = vld [vmem:[%s2135 + $0x18] sm:$0xff]
        %v2140 = vld [vmem:[%s2135 + $0x20] sm:$0xff]
        %v2141 = vld [vmem:[%s2135 + $0x28] sm:$0xff]
        %v2142 = vld [vmem:[%s2135 + $0x30] sm:$0xff]
        %v2143 = vld [vmem:[%s2135 + $0x38] sm:$0xff]
        %v2145 = vsel %vm384, %v2103, 0
        %v2148 = vsel %vm384, %v2104, 0
        %v2151 = vsel %vm384, %v2105, 0
        %v2154 = vsel %vm384, %v2106, 0
        %v2157 = vsel %vm384, %v2107, 0
        %v2160 = vsel %vm384, %v2108, 0
        %v2163 = vsel %vm384, %v2109, 0
        %v2166 = vsel %vm384, %v2110, 0
        %v2169 = vsel %vm384, %v2111, 0
        %v2172 = vsel %vm384, %v2112, 0
        %v2175 = vsel %vm384, %v2113, 0
        %v2178 = vsel %vm384, %v2114, 0
        %v2181 = vsel %vm384, %v2115, 0
        %v2184 = vsel %vm384, %v2116, 0
        %v2187 = vsel %vm384, %v2117, 0
        %v2190 = vsel %vm384, %v2118, 0
        %v2193 = vsel %vm384, %v2119, 0
        %v2196 = vsel %vm384, %v2120, 0
        %v2199 = vsel %vm384, %v2121, 0
        %v2202 = vsel %vm384, %v2122, 0
        %v2205 = vsel %vm384, %v2123, 0
        %v2208 = vsel %vm384, %v2124, 0
        %v2211 = vsel %vm384, %v2125, 0
        %v2214 = vsel %vm384, %v2126, 0
        %v2217 = vsel %vm384, %v2127, 0
        %v2220 = vsel %vm384, %v2128, 0
        %v2223 = vsel %vm384, %v2129, 0
        %v2226 = vsel %vm384, %v2130, 0
        %v2229 = vsel %vm384, %v2131, 0
        %v2232 = vsel %vm384, %v2132, 0
        %v2235 = vsel %vm384, %v2133, 0
        %v2238 = vsel %vm384, %v2134, 0
        %2240 = vmatprep.subr.mxu0 0.0
        %2241 = vmatpush1.msra.mxu0 %v2136
        %2242 = vmatprep.subr.mxu0 0.0
        %2243 = vmatpush1.msra.mxu0 %v2137
        %2244 = vmatprep.subr.mxu0 0.0
        %2245 = vmatpush1.msra.mxu0 %v2138
        %2246 = vmatprep.subr.mxu0 0.0
        %2247 = vmatpush1.msra.mxu0 %v2139
        %2248 = vmatprep.subr.mxu0 0.0
        %2249 = vmatpush1.msra.mxu0 %v2140
        %2250 = vmatprep.subr.mxu0 0.0
        %2251 = vmatpush1.msra.mxu0 %v2141
        %2252 = vmatprep.subr.mxu0 0.0
        %2253 = vmatpush1.msra.mxu0 %v2142
        %2254 = vmatprep.subr.mxu0 0.0
        %2255 = vmatpush1.msra.mxu0 %v2143
        %2256 = vmatprep.subr.mxu0 0.0
        %2257 = vmatpush1.msra.mxu0 0.0
        %2258 = vmatprep.subr.mxu0 0.0
        %2259 = vmatpush1.msra.mxu0 0.0
        %2260 = vmatprep.subr.mxu0 0.0
        %2261 = vmatpush1.msra.mxu0 0.0
        %2262 = vmatprep.subr.mxu0 0.0
        %2263 = vmatpush1.msra.mxu0 0.0
        %2264 = vmatprep.subr.mxu0 0.0
        %2265 = vmatpush1.msra.mxu0 0.0
        %2266 = vmatprep.subr.mxu0 0.0
        %2267 = vmatpush1.msra.mxu0 0.0
        %2268 = vmatprep.subr.mxu0 0.0
        %2269 = vmatpush1.msra.mxu0 0.0
        %2270 = vmatprep.subr.mxu0 0.0
        %2271 = vmatpush1.msra.mxu0 0.0
        %2272 = vmatprep.subr.mxu0 0.0
        %2273 = vmatpush1.msra.mxu0 0.0
        %2274 = vmatprep.subr.mxu0 0.0
        %2275 = vmatpush1.msra.mxu0 0.0
        %2276 = vmatprep.subr.mxu0 0.0
        %2277 = vmatpush1.msra.mxu0 0.0
        %2278 = vmatprep.subr.mxu0 0.0
        %2279 = vmatpush1.msra.mxu0 0.0
        %2280 = vmatprep.subr.mxu0 0.0
        %2281 = vmatpush1.msra.mxu0 0.0
        %2282 = vmatprep.subr.mxu0 0.0
        %2283 = vmatpush1.msra.mxu0 0.0
        %2284 = vmatprep.subr.mxu0 0.0
        %2285 = vmatpush1.msra.mxu0 0.0
        %2286 = vmatprep.subr.mxu0 0.0
        %2287 = vmatpush1.msra.mxu0 0.0
        %2288 = vmatprep.subr.mxu0 0.0
        %2289 = vmatpush1.msra.mxu0 0.0
        %2290 = vmatprep.subr.mxu0 0.0
        %2291 = vmatpush1.msra.mxu0 0.0
        %2292 = vmatprep.subr.mxu0 0.0
        %2293 = vmatpush1.msra.mxu0 0.0
        %2294 = vmatprep.subr.mxu0 0.0
        %2295 = vmatpush1.msra.mxu0 0.0
        %2296 = vmatprep.subr.mxu0 0.0
        %2297 = vmatpush1.msra.mxu0 0.0
        %2298 = vmatprep.subr.mxu0 0.0
        %2299 = vmatpush1.msra.mxu0 0.0
        %2300 = vmatprep.subr.mxu0 0.0
        %2301 = vmatpush1.msra.mxu0 0.0
        %2302 = vmatprep.subr.mxu0 0.0
        %2303 = vmatpush1.msra.mxu0 0.0
        %2304 = vmatprep.mubr.f32.mxu0 0.0
        %2305 = vmatmul.mubr.f32.gmra.mrb[0].mxu0 %v2145
        %v2306 = vpop.f32.mrb[0].mxu0
        %v2307 = vadd.f32 0.0, %v2306
        %v2308 = vpop.f32.mrb[0].mxu0
        %2309 = vmatprep.mubr.f32.mxu0 0.0
        %2310 = vmatmul.mubr.f32.gmra.mrb[0].mxu0 %v2148
        %v2311 = vpop.f32.mrb[0].mxu0
        %v2312 = vadd.f32 0.0, %v2311
        %v2313 = vpop.f32.mrb[0].mxu0
        %2314 = vmatprep.mubr.f32.mxu0 0.0
        %2315 = vmatmul.mubr.f32.gmra.mrb[0].mxu0 %v2151
        %v2316 = vpop.f32.mrb[0].mxu0
        %v2317 = vadd.f32 0.0, %v2316
        %v2318 = vpop.f32.mrb[0].mxu0
        %2319 = vmatprep.mubr.f32.mxu0 0.0
        %2320 = vmatmul.mubr.f32.gmra.mrb[0].mxu0 %v2154
        %v2321 = vpop.f32.mrb[0].mxu0
        %v2322 = vadd.f32 0.0, %v2321
        %v2323 = vpop.f32.mrb[0].mxu0
        %2324 = vmatprep.mubr.f32.mxu0 0.0
        %2325 = vmatmul.mubr.f32.gmra.mrb[0].mxu0 %v2157
        %v2326 = vpop.f32.mrb[0].mxu0
        %v2327 = vadd.f32 0.0, %v2326
        %v2328 = vpop.f32.mrb[0].mxu0
        %2329 = vmatprep.mubr.f32.mxu0 0.0
        %2330 = vmatmul.mubr.f32.gmra.mrb[0].mxu0 %v2160
        %v2331 = vpop.f32.mrb[0].mxu0
        %v2332 = vadd.f32 0.0, %v2331
        %v2333 = vpop.f32.mrb[0].mxu0
        %2334 = vmatprep.mubr.f32.mxu0 0.0
        %2335 = vmatmul.mubr.f32.gmra.mrb[0].mxu0 %v2163
        %v2336 = vpop.f32.mrb[0].mxu0
        %v2337 = vadd.f32 0.0, %v2336
        %v2338 = vpop.f32.mrb[0].mxu0
        %2339 = vmatprep.mubr.f32.mxu0 0.0
        %2340 = vmatmul.mubr.f32.gmra.mrb[0].mxu0 %v2166
        %v2341 = vpop.f32.mrb[0].mxu0
        %v2342 = vadd.f32 0.0, %v2341
        %v2343 = vpop.f32.mrb[0].mxu0
        %2344 = vmatprep.mubr.f32.mxu0 0.0
        %2345 = vmatmul.mubr.f32.gmra.mrb[0].mxu0 %v2169
        %v2346 = vpop.f32.mrb[0].mxu0
        %v2347 = vadd.f32 0.0, %v2346
        %v2348 = vpop.f32.mrb[0].mxu0
        %2349 = vmatprep.mubr.f32.mxu0 0.0
        %2350 = vmatmul.mubr.f32.gmra.mrb[0].mxu0 %v2172
        %v2351 = vpop.f32.mrb[0].mxu0
        %v2352 = vadd.f32 0.0, %v2351
        %v2353 = vpop.f32.mrb[0].mxu0
        %2354 = vmatprep.mubr.f32.mxu0 0.0
        %2355 = vmatmul.mubr.f32.gmra.mrb[0].mxu0 %v2175
        %v2356 = vpop.f32.mrb[0].mxu0
        %v2357 = vadd.f32 0.0, %v2356
        %v2358 = vpop.f32.mrb[0].mxu0
        %2359 = vmatprep.mubr.f32.mxu0 0.0
        %2360 = vmatmul.mubr.f32.gmra.mrb[0].mxu0 %v2178
        %v2361 = vpop.f32.mrb[0].mxu0
        %v2362 = vadd.f32 0.0, %v2361
        %v2363 = vpop.f32.mrb[0].mxu0
        %2364 = vmatprep.mubr.f32.mxu0 0.0
        %2365 = vmatmul.mubr.f32.gmra.mrb[0].mxu0 %v2181
        %v2366 = vpop.f32.mrb[0].mxu0
        %v2367 = vadd.f32 0.0, %v2366
        %v2368 = vpop.f32.mrb[0].mxu0
        %2369 = vmatprep.mubr.f32.mxu0 0.0
        %2370 = vmatmul.mubr.f32.gmra.mrb[0].mxu0 %v2184
        %v2371 = vpop.f32.mrb[0].mxu0
        %v2372 = vadd.f32 0.0, %v2371
        %v2373 = vpop.f32.mrb[0].mxu0
        %2374 = vmatprep.mubr.f32.mxu0 0.0
        %2375 = vmatmul.mubr.f32.gmra.mrb[0].mxu0 %v2187
        %v2376 = vpop.f32.mrb[0].mxu0
        %v2377 = vadd.f32 0.0, %v2376
        %v2378 = vpop.f32.mrb[0].mxu0
        %2379 = vmatprep.mubr.f32.mxu0 0.0
        %2380 = vmatmul.mubr.f32.gmra.mrb[0].mxu0 %v2190
        %v2381 = vpop.f32.mrb[0].mxu0
        %v2382 = vadd.f32 0.0, %v2381
        %v2383 = vpop.f32.mrb[0].mxu0
        %2384 = vmatprep.mubr.f32.mxu0 0.0
        %2385 = vmatmul.mubr.f32.gmra.mrb[0].mxu0 %v2193
        %v2386 = vpop.f32.mrb[0].mxu0
        %v2387 = vadd.f32 0.0, %v2386
        %v2388 = vpop.f32.mrb[0].mxu0
        %2389 = vmatprep.mubr.f32.mxu0 0.0
        %2390 = vmatmul.mubr.f32.gmra.mrb[0].mxu0 %v2196
        %v2391 = vpop.f32.mrb[0].mxu0
        %v2392 = vadd.f32 0.0, %v2391
        %v2393 = vpop.f32.mrb[0].mxu0
        %2394 = vmatprep.mubr.f32.mxu0 0.0
        %2395 = vmatmul.mubr.f32.gmra.mrb[0].mxu0 %v2199
        %v2396 = vpop.f32.mrb[0].mxu0
        %v2397 = vadd.f32 0.0, %v2396
        %v2398 = vpop.f32.mrb[0].mxu0
        %2399 = vmatprep.mubr.f32.mxu0 0.0
        %2400 = vmatmul.mubr.f32.gmra.mrb[0].mxu0 %v2202
        %v2401 = vpop.f32.mrb[0].mxu0
        %v2402 = vadd.f32 0.0, %v2401
        %v2403 = vpop.f32.mrb[0].mxu0
        %2404 = vmatprep.mubr.f32.mxu0 0.0
        %2405 = vmatmul.mubr.f32.gmra.mrb[0].mxu0 %v2205
        %v2406 = vpop.f32.mrb[0].mxu0
        %v2407 = vadd.f32 0.0, %v2406
        %v2408 = vpop.f32.mrb[0].mxu0
        %2409 = vmatprep.mubr.f32.mxu0 0.0
        %2410 = vmatmul.mubr.f32.gmra.mrb[0].mxu0 %v2208
        %v2411 = vpop.f32.mrb[0].mxu0
        %v2412 = vadd.f32 0.0, %v2411
        %v2413 = vpop.f32.mrb[0].mxu0
        %2414 = vmatprep.mubr.f32.mxu0 0.0
        %2415 = vmatmul.mubr.f32.gmra.mrb[0].mxu0 %v2211
        %v2416 = vpop.f32.mrb[0].mxu0
        %v2417 = vadd.f32 0.0, %v2416
        %v2418 = vpop.f32.mrb[0].mxu0
        %2419 = vmatprep.mubr.f32.mxu0 0.0
        %2420 = vmatmul.mubr.f32.gmra.mrb[0].mxu0 %v2214
        %v2421 = vpop.f32.mrb[0].mxu0
        %v2422 = vadd.f32 0.0, %v2421
        %v2423 = vpop.f32.mrb[0].mxu0
        %2424 = vmatprep.mubr.f32.mxu0 0.0
        %2425 = vmatmul.mubr.f32.gmra.mrb[0].mxu0 %v2217
        %v2426 = vpop.f32.mrb[0].mxu0
        %v2427 = vadd.f32 0.0, %v2426
        %v2428 = vpop.f32.mrb[0].mxu0
        %2429 = vmatprep.mubr.f32.mxu0 0.0
        %2430 = vmatmul.mubr.f32.gmra.mrb[0].mxu0 %v2220
        %v2431 = vpop.f32.mrb[0].mxu0
        %v2432 = vadd.f32 0.0, %v2431
        %v2433 = vpop.f32.mrb[0].mxu0
        %2434 = vmatprep.mubr.f32.mxu0 0.0
        %2435 = vmatmul.mubr.f32.gmra.mrb[0].mxu0 %v2223
        %v2436 = vpop.f32.mrb[0].mxu0
        %v2437 = vadd.f32 0.0, %v2436
        %v2438 = vpop.f32.mrb[0].mxu0
        %2439 = vmatprep.mubr.f32.mxu0 0.0
        %2440 = vmatmul.mubr.f32.gmra.mrb[0].mxu0 %v2226
        %v2441 = vpop.f32.mrb[0].mxu0
        %v2442 = vadd.f32 0.0, %v2441
        %v2443 = vpop.f32.mrb[0].mxu0
        %2444 = vmatprep.mubr.f32.mxu0 0.0
        %2445 = vmatmul.mubr.f32.gmra.mrb[0].mxu0 %v2229
        %v2446 = vpop.f32.mrb[0].mxu0
        %v2447 = vadd.f32 0.0, %v2446
        %v2448 = vpop.f32.mrb[0].mxu0
        %2449 = vmatprep.mubr.f32.mxu0 0.0
        %2450 = vmatmul.mubr.f32.gmra.mrb[0].mxu0 %v2232
        %v2451 = vpop.f32.mrb[0].mxu0
        %v2452 = vadd.f32 0.0, %v2451
        %v2453 = vpop.f32.mrb[0].mxu0
        %2454 = vmatprep.mubr.f32.mxu0 0.0
        %2455 = vmatmul.mubr.f32.gmra.mrb[0].mxu0 %v2235
        %v2456 = vpop.f32.mrb[0].mxu0
        %v2457 = vadd.f32 0.0, %v2456
        %v2458 = vpop.f32.mrb[0].mxu0
        %2459 = vmatprep.mubr.f32.mxu0 0.0
        %2460 = vmatmul.mubr.f32.gmra.mrb[0].mxu0 %v2238
        %v2461 = vpop.f32.mrb[0].mxu0
        %v2462 = vadd.f32 0.0, %v2461
        %v2463 = vpop.f32.mrb[0].mxu0
        %2464 = vdwg.mxu0
        %v2465 = vadd.f32 %v2007, %v2307
        %v2466 = vadd.f32 %v2008, %v2312
        %v2467 = vadd.f32 %v2009, %v2317
        %v2468 = vadd.f32 %v2010, %v2322
        %v2469 = vadd.f32 %v2011, %v2327
        %v2470 = vadd.f32 %v2012, %v2332
        %v2471 = vadd.f32 %v2013, %v2337
        %v2472 = vadd.f32 %v2014, %v2342
        %v2473 = vadd.f32 %v2015, %v2347
        %v2474 = vadd.f32 %v2016, %v2352
        %v2475 = vadd.f32 %v2017, %v2357
        %v2476 = vadd.f32 %v2018, %v2362
        %v2477 = vadd.f32 %v2019, %v2367
        %v2478 = vadd.f32 %v2020, %v2372
        %v2479 = vadd.f32 %v2021, %v2377
        %v2480 = vadd.f32 %v2022, %v2382
        %v2481 = vadd.f32 %v2023, %v2387
        %v2482 = vadd.f32 %v2024, %v2392
        %v2483 = vadd.f32 %v2025, %v2397
        %v2484 = vadd.f32 %v2026, %v2402
        %v2485 = vadd.f32 %v2027, %v2407
        %v2486 = vadd.f32 %v2028, %v2412
        %v2487 = vadd.f32 %v2029, %v2417
        %v2488 = vadd.f32 %v2030, %v2422
        %v2489 = vadd.f32 %v2031, %v2427
        %v2490 = vadd.f32 %v2032, %v2432
        %v2491 = vadd.f32 %v2033, %v2437
        %v2492 = vadd.f32 %v2034, %v2442
        %v2493 = vadd.f32 %v2035, %v2447
        %v2494 = vadd.f32 %v2036, %v2452
        %v2495 = vadd.f32 %v2037, %v2457
        %v2496 = vadd.f32 %v2038, %v2462
        %v2497 = vmul.f32 %v352, %v754
        %v2498 = vmul.f32 %v353, %v754
        %v2499 = vmul.f32 %v354, %v754
        %v2500 = vmul.f32 %v355, %v754
        %v2501 = vmul.f32 %v356, %v754
        %v2502 = vmul.f32 %v357, %v754
        %v2503 = vmul.f32 %v358, %v754
        %v2504 = vmul.f32 %v359, %v754
        %v2505 = vmul.f32 %v360, %v754
        %v2506 = vmul.f32 %v361, %v754
        %v2507 = vmul.f32 %v362, %v754
        %v2508 = vmul.f32 %v363, %v754
        %v2509 = vmul.f32 %v364, %v754
        %v2510 = vmul.f32 %v365, %v754
        %v2511 = vmul.f32 %v366, %v754
        %v2512 = vmul.f32 %v367, %v754
        %v2513 = vmul.f32 %v368, %v754
        %v2514 = vmul.f32 %v369, %v754
        %v2515 = vmul.f32 %v370, %v754
        %v2516 = vmul.f32 %v371, %v754
        %v2517 = vmul.f32 %v372, %v754
        %v2518 = vmul.f32 %v373, %v754
        %v2519 = vmul.f32 %v374, %v754
        %v2520 = vmul.f32 %v375, %v754
        %v2521 = vmul.f32 %v376, %v754
        %v2522 = vmul.f32 %v377, %v754
        %v2523 = vmul.f32 %v378, %v754
        %v2524 = vmul.f32 %v379, %v754
        %v2525 = vmul.f32 %v380, %v754
        %v2526 = vmul.f32 %v381, %v754
        %v2527 = vmul.f32 %v382, %v754
        %v2528 = vmul.f32 %v383, %v754
        %v2529 = vadd.f32 %v2497, %v792
        %v2530 = vadd.f32 %v2498, %v792
        %v2531 = vadd.f32 %v2499, %v792
        %v2532 = vadd.f32 %v2500, %v792
        %v2533 = vadd.f32 %v2501, %v792
        %v2534 = vadd.f32 %v2502, %v792
        %v2535 = vadd.f32 %v2503, %v792
        %v2536 = vadd.f32 %v2504, %v792
        %v2537 = vadd.f32 %v2505, %v792
        %v2538 = vadd.f32 %v2506, %v792
        %v2539 = vadd.f32 %v2507, %v792
        %v2540 = vadd.f32 %v2508, %v792
        %v2541 = vadd.f32 %v2509, %v792
        %v2542 = vadd.f32 %v2510, %v792
        %v2543 = vadd.f32 %v2511, %v792
        %v2544 = vadd.f32 %v2512, %v792
        %v2545 = vadd.f32 %v2513, %v792
        %v2546 = vadd.f32 %v2514, %v792
        %v2547 = vadd.f32 %v2515, %v792
        %v2548 = vadd.f32 %v2516, %v792
        %v2549 = vadd.f32 %v2517, %v792
        %v2550 = vadd.f32 %v2518, %v792
        %v2551 = vadd.f32 %v2519, %v792
        %v2552 = vadd.f32 %v2520, %v792
        %v2553 = vadd.f32 %v2521, %v792
        %v2554 = vadd.f32 %v2522, %v792
        %v2555 = vadd.f32 %v2523, %v792
        %v2556 = vadd.f32 %v2524, %v792
        %v2557 = vadd.f32 %v2525, %v792
        %v2558 = vadd.f32 %v2526, %v792
        %v2559 = vadd.f32 %v2527, %v792
        %v2560 = vadd.f32 %v2528, %v792
        %s2561 = scalar_lea.vmem %s5, 256
        %v2562 = vld [vmem:[%s2561] sm:$0xff]
        %v2563 = vld [vmem:[%s2561 + $0x8] sm:$0xff]
        %v2564 = vld [vmem:[%s2561 + $0x10] sm:$0xff]
        %v2565 = vld [vmem:[%s2561 + $0x18] sm:$0xff]
        %v2566 = vld [vmem:[%s2561 + $0x20] sm:$0xff]
        %v2567 = vld [vmem:[%s2561 + $0x28] sm:$0xff]
        %v2568 = vld [vmem:[%s2561 + $0x30] sm:$0xff]
        %v2569 = vld [vmem:[%s2561 + $0x38] sm:$0xff]
        %v2571 = vsel %vm384, %v2529, 0
        %v2574 = vsel %vm384, %v2530, 0
        %v2577 = vsel %vm384, %v2531, 0
        %v2580 = vsel %vm384, %v2532, 0
        %v2583 = vsel %vm384, %v2533, 0
        %v2586 = vsel %vm384, %v2534, 0
        %v2589 = vsel %vm384, %v2535, 0
        %v2592 = vsel %vm384, %v2536, 0
        %v2595 = vsel %vm384, %v2537, 0
        %v2598 = vsel %vm384, %v2538, 0
        %v2601 = vsel %vm384, %v2539, 0
        %v2604 = vsel %vm384, %v2540, 0
        %v2607 = vsel %vm384, %v2541, 0
        %v2610 = vsel %vm384, %v2542, 0
        %v2613 = vsel %vm384, %v2543, 0
        %v2616 = vsel %vm384, %v2544, 0
        %v2619 = vsel %vm384, %v2545, 0
        %v2622 = vsel %vm384, %v2546, 0
        %v2625 = vsel %vm384, %v2547, 0
        %v2628 = vsel %vm384, %v2548, 0
        %v2631 = vsel %vm384, %v2549, 0
        %v2634 = vsel %vm384, %v2550, 0
        %v2637 = vsel %vm384, %v2551, 0
        %v2640 = vsel %vm384, %v2552, 0
        %v2643 = vsel %vm384, %v2553, 0
        %v2646 = vsel %vm384, %v2554, 0
        %v2649 = vsel %vm384, %v2555, 0
        %v2652 = vsel %vm384, %v2556, 0
        %v2655 = vsel %vm384, %v2557, 0
        %v2658 = vsel %vm384, %v2558, 0
        %v2661 = vsel %vm384, %v2559, 0
        %v2664 = vsel %vm384, %v2560, 0
        %2666 = vmatprep.subr.mxu0 0.0
        %2667 = vmatpush1.msra.mxu0 %v2562
        %2668 = vmatprep.subr.mxu0 0.0
        %2669 = vmatpush1.msra.mxu0 %v2563
        %2670 = vmatprep.subr.mxu0 0.0
        %2671 = vmatpush1.msra.mxu0 %v2564
        %2672 = vmatprep.subr.mxu0 0.0
        %2673 = vmatpush1.msra.mxu0 %v2565
        %2674 = vmatprep.subr.mxu0 0.0
        %2675 = vmatpush1.msra.mxu0 %v2566
        %2676 = vmatprep.subr.mxu0 0.0
        %2677 = vmatpush1.msra.mxu0 %v2567
        %2678 = vmatprep.subr.mxu0 0.0
        %2679 = vmatpush1.msra.mxu0 %v2568
        %2680 = vmatprep.subr.mxu0 0.0
        %2681 = vmatpush1.msra.mxu0 %v2569
        %2682 = vmatprep.subr.mxu0 0.0
        %2683 = vmatpush1.msra.mxu0 0.0
        %2684 = vmatprep.subr.mxu0 0.0
        %2685 = vmatpush1.msra.mxu0 0.0
        %2686 = vmatprep.subr.mxu0 0.0
        %2687 = vmatpush1.msra.mxu0 0.0
        %2688 = vmatprep.subr.mxu0 0.0
        %2689 = vmatpush1.msra.mxu0 0.0
        %2690 = vmatprep.subr.mxu0 0.0
        %2691 = vmatpush1.msra.mxu0 0.0
        %2692 = vmatprep.subr.mxu0 0.0
        %2693 = vmatpush1.msra.mxu0 0.0
        %2694 = vmatprep.subr.mxu0 0.0
        %2695 = vmatpush1.msra.mxu0 0.0
        %2696 = vmatprep.subr.mxu0 0.0
        %2697 = vmatpush1.msra.mxu0 0.0
        %2698 = vmatprep.subr.mxu0 0.0
        %2699 = vmatpush1.msra.mxu0 0.0
        %2700 = vmatprep.subr.mxu0 0.0
        %2701 = vmatpush1.msra.mxu0 0.0
        %2702 = vmatprep.subr.mxu0 0.0
        %2703 = vmatpush1.msra.mxu0 0.0
        %2704 = vmatprep.subr.mxu0 0.0
        %2705 = vmatpush1.msra.mxu0 0.0
        %2706 = vmatprep.subr.mxu0 0.0
        %2707 = vmatpush1.msra.mxu0 0.0
        %2708 = vmatprep.subr.mxu0 0.0
        %2709 = vmatpush1.msra.mxu0 0.0
        %2710 = vmatprep.subr.mxu0 0.0
        %2711 = vmatpush1.msra.mxu0 0.0
        %2712 = vmatprep.subr.mxu0 0.0
        %2713 = vmatpush1.msra.mxu0 0.0
        %2714 = vmatprep.subr.mxu0 0.0
        %2715 = vmatpush1.msra.mxu0 0.0
        %2716 = vmatprep.subr.mxu0 0.0
        %2717 = vmatpush1.msra.mxu0 0.0
        %2718 = vmatprep.subr.mxu0 0.0
        %2719 = vmatpush1.msra.mxu0 0.0
        %2720 = vmatprep.subr.mxu0 0.0
        %2721 = vmatpush1.msra.mxu0 0.0
        %2722 = vmatprep.subr.mxu0 0.0
        %2723 = vmatpush1.msra.mxu0 0.0
        %2724 = vmatprep.subr.mxu0 0.0
        %2725 = vmatpush1.msra.mxu0 0.0
        %2726 = vmatprep.subr.mxu0 0.0
        %2727 = vmatpush1.msra.mxu0 0.0
        %2728 = vmatprep.subr.mxu0 0.0
        %2729 = vmatpush1.msra.mxu0 0.0
        %2730 = vmatprep.mubr.f32.mxu0 0.0
        %2731 = vmatmul.mubr.f32.gmra.mrb[0].mxu0 %v2571
        %v2732 = vpop.f32.mrb[0].mxu0
        %v2733 = vadd.f32 0.0, %v2732
        %v2734 = vpop.f32.mrb[0].mxu0
        %2735 = vmatprep.mubr.f32.mxu0 0.0
        %2736 = vmatmul.mubr.f32.gmra.mrb[0].mxu0 %v2574
        %v2737 = vpop.f32.mrb[0].mxu0
        %v2738 = vadd.f32 0.0, %v2737
        %v2739 = vpop.f32.mrb[0].mxu0
        %2740 = vmatprep.mubr.f32.mxu0 0.0
        %2741 = vmatmul.mubr.f32.gmra.mrb[0].mxu0 %v2577
        %v2742 = vpop.f32.mrb[0].mxu0
        %v2743 = vadd.f32 0.0, %v2742
        %v2744 = vpop.f32.mrb[0].mxu0
        %2745 = vmatprep.mubr.f32.mxu0 0.0
        %2746 = vmatmul.mubr.f32.gmra.mrb[0].mxu0 %v2580
        %v2747 = vpop.f32.mrb[0].mxu0
        %v2748 = vadd.f32 0.0, %v2747
        %v2749 = vpop.f32.mrb[0].mxu0
        %2750 = vmatprep.mubr.f32.mxu0 0.0
        %2751 = vmatmul.mubr.f32.gmra.mrb[0].mxu0 %v2583
        %v2752 = vpop.f32.mrb[0].mxu0
        %v2753 = vadd.f32 0.0, %v2752
        %v2754 = vpop.f32.mrb[0].mxu0
        %2755 = vmatprep.mubr.f32.mxu0 0.0
        %2756 = vmatmul.mubr.f32.gmra.mrb[0].mxu0 %v2586
        %v2757 = vpop.f32.mrb[0].mxu0
        %v2758 = vadd.f32 0.0, %v2757
        %v2759 = vpop.f32.mrb[0].mxu0
        %2760 = vmatprep.mubr.f32.mxu0 0.0
        %2761 = vmatmul.mubr.f32.gmra.mrb[0].mxu0 %v2589
        %v2762 = vpop.f32.mrb[0].mxu0
        %v2763 = vadd.f32 0.0, %v2762
        %v2764 = vpop.f32.mrb[0].mxu0
        %2765 = vmatprep.mubr.f32.mxu0 0.0
        %2766 = vmatmul.mubr.f32.gmra.mrb[0].mxu0 %v2592
        %v2767 = vpop.f32.mrb[0].mxu0
        %v2768 = vadd.f32 0.0, %v2767
        %v2769 = vpop.f32.mrb[0].mxu0
        %2770 = vmatprep.mubr.f32.mxu0 0.0
        %2771 = vmatmul.mubr.f32.gmra.mrb[0].mxu0 %v2595
        %v2772 = vpop.f32.mrb[0].mxu0
        %v2773 = vadd.f32 0.0, %v2772
        %v2774 = vpop.f32.mrb[0].mxu0
        %2775 = vmatprep.mubr.f32.mxu0 0.0
        %2776 = vmatmul.mubr.f32.gmra.mrb[0].mxu0 %v2598
        %v2777 = vpop.f32.mrb[0].mxu0
        %v2778 = vadd.f32 0.0, %v2777
        %v2779 = vpop.f32.mrb[0].mxu0
        %2780 = vmatprep.mubr.f32.mxu0 0.0
        %2781 = vmatmul.mubr.f32.gmra.mrb[0].mxu0 %v2601
        %v2782 = vpop.f32.mrb[0].mxu0
        %v2783 = vadd.f32 0.0, %v2782
        %v2784 = vpop.f32.mrb[0].mxu0
        %2785 = vmatprep.mubr.f32.mxu0 0.0
        %2786 = vmatmul.mubr.f32.gmra.mrb[0].mxu0 %v2604
        %v2787 = vpop.f32.mrb[0].mxu0
        %v2788 = vadd.f32 0.0, %v2787
        %v2789 = vpop.f32.mrb[0].mxu0
        %2790 = vmatprep.mubr.f32.mxu0 0.0
        %2791 = vmatmul.mubr.f32.gmra.mrb[0].mxu0 %v2607
        %v2792 = vpop.f32.mrb[0].mxu0
        %v2793 = vadd.f32 0.0, %v2792
        %v2794 = vpop.f32.mrb[0].mxu0
        %2795 = vmatprep.mubr.f32.mxu0 0.0
        %2796 = vmatmul.mubr.f32.gmra.mrb[0].mxu0 %v2610
        %v2797 = vpop.f32.mrb[0].mxu0
        %v2798 = vadd.f32 0.0, %v2797
        %v2799 = vpop.f32.mrb[0].mxu0
        %2800 = vmatprep.mubr.f32.mxu0 0.0
        %2801 = vmatmul.mubr.f32.gmra.mrb[0].mxu0 %v2613
        %v2802 = vpop.f32.mrb[0].mxu0
        %v2803 = vadd.f32 0.0, %v2802
        %v2804 = vpop.f32.mrb[0].mxu0
        %2805 = vmatprep.mubr.f32.mxu0 0.0
        %2806 = vmatmul.mubr.f32.gmra.mrb[0].mxu0 %v2616
        %v2807 = vpop.f32.mrb[0].mxu0
        %v2808 = vadd.f32 0.0, %v2807
        %v2809 = vpop.f32.mrb[0].mxu0
        %2810 = vmatprep.mubr.f32.mxu0 0.0
        %2811 = vmatmul.mubr.f32.gmra.mrb[0].mxu0 %v2619
        %v2812 = vpop.f32.mrb[0].mxu0
        %v2813 = vadd.f32 0.0, %v2812
        %v2814 = vpop.f32.mrb[0].mxu0
        %2815 = vmatprep.mubr.f32.mxu0 0.0
        %2816 = vmatmul.mubr.f32.gmra.mrb[0].mxu0 %v2622
        %v2817 = vpop.f32.mrb[0].mxu0
        %v2818 = vadd.f32 0.0, %v2817
        %v2819 = vpop.f32.mrb[0].mxu0
        %2820 = vmatprep.mubr.f32.mxu0 0.0
        %2821 = vmatmul.mubr.f32.gmra.mrb[0].mxu0 %v2625
        %v2822 = vpop.f32.mrb[0].mxu0
        %v2823 = vadd.f32 0.0, %v2822
        %v2824 = vpop.f32.mrb[0].mxu0
        %2825 = vmatprep.mubr.f32.mxu0 0.0
        %2826 = vmatmul.mubr.f32.gmra.mrb[0].mxu0 %v2628
        %v2827 = vpop.f32.mrb[0].mxu0
        %v2828 = vadd.f32 0.0, %v2827
        %v2829 = vpop.f32.mrb[0].mxu0
        %2830 = vmatprep.mubr.f32.mxu0 0.0
        %2831 = vmatmul.mubr.f32.gmra.mrb[0].mxu0 %v2631
        %v2832 = vpop.f32.mrb[0].mxu0
        %v2833 = vadd.f32 0.0, %v2832
        %v2834 = vpop.f32.mrb[0].mxu0
        %2835 = vmatprep.mubr.f32.mxu0 0.0
        %2836 = vmatmul.mubr.f32.gmra.mrb[0].mxu0 %v2634
        %v2837 = vpop.f32.mrb[0].mxu0
        %v2838 = vadd.f32 0.0, %v2837
        %v2839 = vpop.f32.mrb[0].mxu0
        %2840 = vmatprep.mubr.f32.mxu0 0.0
        %2841 = vmatmul.mubr.f32.gmra.mrb[0].mxu0 %v2637
        %v2842 = vpop.f32.mrb[0].mxu0
        %v2843 = vadd.f32 0.0, %v2842
        %v2844 = vpop.f32.mrb[0].mxu0
        %2845 = vmatprep.mubr.f32.mxu0 0.0
        %2846 = vmatmul.mubr.f32.gmra.mrb[0].mxu0 %v2640
        %v2847 = vpop.f32.mrb[0].mxu0
        %v2848 = vadd.f32 0.0, %v2847
        %v2849 = vpop.f32.mrb[0].mxu0
        %2850 = vmatprep.mubr.f32.mxu0 0.0
        %2851 = vmatmul.mubr.f32.gmra.mrb[0].mxu0 %v2643
        %v2852 = vpop.f32.mrb[0].mxu0
        %v2853 = vadd.f32 0.0, %v2852
        %v2854 = vpop.f32.mrb[0].mxu0
        %2855 = vmatprep.mubr.f32.mxu0 0.0
        %2856 = vmatmul.mubr.f32.gmra.mrb[0].mxu0 %v2646
        %v2857 = vpop.f32.mrb[0].mxu0
        %v2858 = vadd.f32 0.0, %v2857
        %v2859 = vpop.f32.mrb[0].mxu0
        %2860 = vmatprep.mubr.f32.mxu0 0.0
        %2861 = vmatmul.mubr.f32.gmra.mrb[0].mxu0 %v2649
        %v2862 = vpop.f32.mrb[0].mxu0
        %v2863 = vadd.f32 0.0, %v2862
        %v2864 = vpop.f32.mrb[0].mxu0
        %2865 = vmatprep.mubr.f32.mxu0 0.0
        %2866 = vmatmul.mubr.f32.gmra.mrb[0].mxu0 %v2652
        %v2867 = vpop.f32.mrb[0].mxu0
        %v2868 = vadd.f32 0.0, %v2867
        %v2869 = vpop.f32.mrb[0].mxu0
        %2870 = vmatprep.mubr.f32.mxu0 0.0
        %2871 = vmatmul.mubr.f32.gmra.mrb[0].mxu0 %v2655
        %v2872 = vpop.f32.mrb[0].mxu0
        %v2873 = vadd.f32 0.0, %v2872
        %v2874 = vpop.f32.mrb[0].mxu0
        %2875 = vmatprep.mubr.f32.mxu0 0.0
        %2876 = vmatmul.mubr.f32.gmra.mrb[0].mxu0 %v2658
        %v2877 = vpop.f32.mrb[0].mxu0
        %v2878 = vadd.f32 0.0, %v2877
        %v2879 = vpop.f32.mrb[0].mxu0
        %2880 = vmatprep.mubr.f32.mxu0 0.0
        %2881 = vmatmul.mubr.f32.gmra.mrb[0].mxu0 %v2661
        %v2882 = vpop.f32.mrb[0].mxu0
        %v2883 = vadd.f32 0.0, %v2882
        %v2884 = vpop.f32.mrb[0].mxu0
        %2885 = vmatprep.mubr.f32.mxu0 0.0
        %2886 = vmatmul.mubr.f32.gmra.mrb[0].mxu0 %v2664
        %v2887 = vpop.f32.mrb[0].mxu0
        %v2888 = vadd.f32 0.0, %v2887
        %v2889 = vpop.f32.mrb[0].mxu0
        %2890 = vdwg.mxu0
        %v2891 = vadd.f32 %v2465, %v2733
        %v2892 = vadd.f32 %v2466, %v2738
        %v2893 = vadd.f32 %v2467, %v2743
        %v2894 = vadd.f32 %v2468, %v2748
        %v2895 = vadd.f32 %v2469, %v2753
        %v2896 = vadd.f32 %v2470, %v2758
        %v2897 = vadd.f32 %v2471, %v2763
        %v2898 = vadd.f32 %v2472, %v2768
        %v2899 = vadd.f32 %v2473, %v2773
        %v2900 = vadd.f32 %v2474, %v2778
        %v2901 = vadd.f32 %v2475, %v2783
        %v2902 = vadd.f32 %v2476, %v2788
        %v2903 = vadd.f32 %v2477, %v2793
        %v2904 = vadd.f32 %v2478, %v2798
        %v2905 = vadd.f32 %v2479, %v2803
        %v2906 = vadd.f32 %v2480, %v2808
        %v2907 = vadd.f32 %v2481, %v2813
        %v2908 = vadd.f32 %v2482, %v2818
        %v2909 = vadd.f32 %v2483, %v2823
        %v2910 = vadd.f32 %v2484, %v2828
        %v2911 = vadd.f32 %v2485, %v2833
        %v2912 = vadd.f32 %v2486, %v2838
        %v2913 = vadd.f32 %v2487, %v2843
        %v2914 = vadd.f32 %v2488, %v2848
        %v2915 = vadd.f32 %v2489, %v2853
        %v2916 = vadd.f32 %v2490, %v2858
        %v2917 = vadd.f32 %v2491, %v2863
        %v2918 = vadd.f32 %v2492, %v2868
        %v2919 = vadd.f32 %v2493, %v2873
        %v2920 = vadd.f32 %v2494, %v2878
        %v2921 = vadd.f32 %v2495, %v2883
        %v2922 = vadd.f32 %v2496, %v2888
        %v2923 = vld [vmem:[%s351 + $0x2] sm:$0xff]
        %v2924 = vld [vmem:[%s351 + $0xa] sm:$0xff]
        %v2925 = vld [vmem:[%s351 + $0x1a] sm:$0xff]
        %v2926 = vld [vmem:[%s351 + $0x22] sm:$0xff]
        %v2927 = vld [vmem:[%s351 + $0x32] sm:$0xff]
        %v2928 = vld [vmem:[%s351 + $0x3a] sm:$0xff]
        %v2929 = vld [vmem:[%s351 + $0x4a] sm:$0xff]
        %v2930 = vld [vmem:[%s351 + $0x52] sm:$0xff]
        %v2931 = vld [vmem:[%s351 + $0x62] sm:$0xff]
        %v2932 = vld [vmem:[%s351 + $0x6a] sm:$0xff]
        %v2933 = vld [vmem:[%s351 + $0x7a] sm:$0xff]
        %v2934 = vld [vmem:[%s351 + $0x82] sm:$0xff]
        %v2935 = vld [vmem:[%s351 + $0x92] sm:$0xff]
        %v2936 = vld [vmem:[%s351 + $0x9a] sm:$0xff]
        %v2937 = vld [vmem:[%s351 + $0xaa] sm:$0xff]
        %v2938 = vld [vmem:[%s351 + $0xb2] sm:$0xff]
        %v2939 = vld [vmem:[%s351 + $0xc2] sm:$0xff]
        %v2940 = vld [vmem:[%s351 + $0xca] sm:$0xff]
        %v2941 = vld [vmem:[%s351 + $0xda] sm:$0xff]
        %v2942 = vld [vmem:[%s351 + $0xe2] sm:$0xff]
        %v2943 = vld [vmem:[%s351 + $0xf2] sm:$0xff]
        %v2944 = vld [vmem:[%s351 + $0xfa] sm:$0xff]
        %v2945 = vld [vmem:[%s351 + $0x10a] sm:$0xff]
        %v2946 = vld [vmem:[%s351 + $0x112] sm:$0xff]
        %v2947 = vld [vmem:[%s351 + $0x122] sm:$0xff]
        %v2948 = vld [vmem:[%s351 + $0x12a] sm:$0xff]
        %v2949 = vld [vmem:[%s351 + $0x13a] sm:$0xff]
        %v2950 = vld [vmem:[%s351 + $0x142] sm:$0xff]
        %v2951 = vld [vmem:[%s351 + $0x152] sm:$0xff]
        %v2952 = vld [vmem:[%s351 + $0x15a] sm:$0xff]
        %v2953 = vld [vmem:[%s351 + $0x16a] sm:$0xff]
        %v2954 = vld [vmem:[%s351 + $0x172] sm:$0xff]
        %v2955 = vmul.f32 %v2923, %v754
        %v2956 = vmul.f32 %v2924, %v754
        %v2957 = vmul.f32 %v2925, %v754
        %v2958 = vmul.f32 %v2926, %v754
        %v2959 = vmul.f32 %v2927, %v754
        %v2960 = vmul.f32 %v2928, %v754
        %v2961 = vmul.f32 %v2929, %v754
        %v2962 = vmul.f32 %v2930, %v754
        %v2963 = vmul.f32 %v2931, %v754
        %v2964 = vmul.f32 %v2932, %v754
        %v2965 = vmul.f32 %v2933, %v754
        %v2966 = vmul.f32 %v2934, %v754
        %v2967 = vmul.f32 %v2935, %v754
        %v2968 = vmul.f32 %v2936, %v754
        %v2969 = vmul.f32 %v2937, %v754
        %v2970 = vmul.f32 %v2938, %v754
        %v2971 = vmul.f32 %v2939, %v754
        %v2972 = vmul.f32 %v2940, %v754
        %v2973 = vmul.f32 %v2941, %v754
        %v2974 = vmul.f32 %v2942, %v754
        %v2975 = vmul.f32 %v2943, %v754
        %v2976 = vmul.f32 %v2944, %v754
        %v2977 = vmul.f32 %v2945, %v754
        %v2978 = vmul.f32 %v2946, %v754
        %v2979 = vmul.f32 %v2947, %v754
        %v2980 = vmul.f32 %v2948, %v754
        %v2981 = vmul.f32 %v2949, %v754
        %v2982 = vmul.f32 %v2950, %v754
        %v2983 = vmul.f32 %v2951, %v754
        %v2984 = vmul.f32 %v2952, %v754
        %v2985 = vmul.f32 %v2953, %v754
        %v2986 = vmul.f32 %v2954, %v754
        %v2987 = vadd.f32 %v2955, %v792
        %v2988 = vadd.f32 %v2956, %v792
        %v2989 = vadd.f32 %v2957, %v792
        %v2990 = vadd.f32 %v2958, %v792
        %v2991 = vadd.f32 %v2959, %v792
        %v2992 = vadd.f32 %v2960, %v792
        %v2993 = vadd.f32 %v2961, %v792
        %v2994 = vadd.f32 %v2962, %v792
        %v2995 = vadd.f32 %v2963, %v792
        %v2996 = vadd.f32 %v2964, %v792
        %v2997 = vadd.f32 %v2965, %v792
        %v2998 = vadd.f32 %v2966, %v792
        %v2999 = vadd.f32 %v2967, %v792
        %v3000 = vadd.f32 %v2968, %v792
        %v3001 = vadd.f32 %v2969, %v792
        %v3002 = vadd.f32 %v2970, %v792
        %v3003 = vadd.f32 %v2971, %v792
        %v3004 = vadd.f32 %v2972, %v792
        %v3005 = vadd.f32 %v2973, %v792
        %v3006 = vadd.f32 %v2974, %v792
        %v3007 = vadd.f32 %v2975, %v792
        %v3008 = vadd.f32 %v2976, %v792
        %v3009 = vadd.f32 %v2977, %v792
        %v3010 = vadd.f32 %v2978, %v792
        %v3011 = vadd.f32 %v2979, %v792
        %v3012 = vadd.f32 %v2980, %v792
        %v3013 = vadd.f32 %v2981, %v792
        %v3014 = vadd.f32 %v2982, %v792
        %v3015 = vadd.f32 %v2983, %v792
        %v3016 = vadd.f32 %v2984, %v792
        %v3017 = vadd.f32 %v2985, %v792
        %v3018 = vadd.f32 %v2986, %v792
        %s3019 = scalar_lea.vmem %s5, 320
        %v3020 = vld [vmem:[%s3019] sm:$0xff]
        %v3021 = vld [vmem:[%s3019 + $0x8] sm:$0xff]
        %v3022 = vld [vmem:[%s3019 + $0x10] sm:$0xff]
        %v3023 = vld [vmem:[%s3019 + $0x18] sm:$0xff]
        %v3024 = vld [vmem:[%s3019 + $0x20] sm:$0xff]
        %v3025 = vld [vmem:[%s3019 + $0x28] sm:$0xff]
        %v3026 = vld [vmem:[%s3019 + $0x30] sm:$0xff]
        %v3027 = vld [vmem:[%s3019 + $0x38] sm:$0xff]
        %v3029 = vsel %vm384, %v2987, 0
        %v3032 = vsel %vm384, %v2988, 0
        %v3035 = vsel %vm384, %v2989, 0
        %v3038 = vsel %vm384, %v2990, 0
        %v3041 = vsel %vm384, %v2991, 0
        %v3044 = vsel %vm384, %v2992, 0
        %v3047 = vsel %vm384, %v2993, 0
        %v3050 = vsel %vm384, %v2994, 0
        %v3053 = vsel %vm384, %v2995, 0
        %v3056 = vsel %vm384, %v2996, 0
        %v3059 = vsel %vm384, %v2997, 0
        %v3062 = vsel %vm384, %v2998, 0
        %v3065 = vsel %vm384, %v2999, 0
        %v3068 = vsel %vm384, %v3000, 0
        %v3071 = vsel %vm384, %v3001, 0
        %v3074 = vsel %vm384, %v3002, 0
        %v3077 = vsel %vm384, %v3003, 0
        %v3080 = vsel %vm384, %v3004, 0
        %v3083 = vsel %vm384, %v3005, 0
        %v3086 = vsel %vm384, %v3006, 0
        %v3089 = vsel %vm384, %v3007, 0
        %v3092 = vsel %vm384, %v3008, 0
        %v3095 = vsel %vm384, %v3009, 0
        %v3098 = vsel %vm384, %v3010, 0
        %v3101 = vsel %vm384, %v3011, 0
        %v3104 = vsel %vm384, %v3012, 0
        %v3107 = vsel %vm384, %v3013, 0
        %v3110 = vsel %vm384, %v3014, 0
        %v3113 = vsel %vm384, %v3015, 0
        %v3116 = vsel %vm384, %v3016, 0
        %v3119 = vsel %vm384, %v3017, 0
        %v3122 = vsel %vm384, %v3018, 0
        %3124 = vmatprep.subr.mxu0 0.0
        %3125 = vmatpush1.msra.mxu0 %v3020
        %3126 = vmatprep.subr.mxu0 0.0
        %3127 = vmatpush1.msra.mxu0 %v3021
        %3128 = vmatprep.subr.mxu0 0.0
        %3129 = vmatpush1.msra.mxu0 %v3022
        %3130 = vmatprep.subr.mxu0 0.0
        %3131 = vmatpush1.msra.mxu0 %v3023
        %3132 = vmatprep.subr.mxu0 0.0
        %3133 = vmatpush1.msra.mxu0 %v3024
        %3134 = vmatprep.subr.mxu0 0.0
        %3135 = vmatpush1.msra.mxu0 %v3025
        %3136 = vmatprep.subr.mxu0 0.0
        %3137 = vmatpush1.msra.mxu0 %v3026
        %3138 = vmatprep.subr.mxu0 0.0
        %3139 = vmatpush1.msra.mxu0 %v3027
        %3140 = vmatprep.subr.mxu0 0.0
        %3141 = vmatpush1.msra.mxu0 0.0
        %3142 = vmatprep.subr.mxu0 0.0
        %3143 = vmatpush1.msra.mxu0 0.0
        %3144 = vmatprep.subr.mxu0 0.0
        %3145 = vmatpush1.msra.mxu0 0.0
        %3146 = vmatprep.subr.mxu0 0.0
        %3147 = vmatpush1.msra.mxu0 0.0
        %3148 = vmatprep.subr.mxu0 0.0
        %3149 = vmatpush1.msra.mxu0 0.0
        %3150 = vmatprep.subr.mxu0 0.0
        %3151 = vmatpush1.msra.mxu0 0.0
        %3152 = vmatprep.subr.mxu0 0.0
        %3153 = vmatpush1.msra.mxu0 0.0
        %3154 = vmatprep.subr.mxu0 0.0
        %3155 = vmatpush1.msra.mxu0 0.0
        %3156 = vmatprep.subr.mxu0 0.0
        %3157 = vmatpush1.msra.mxu0 0.0
        %3158 = vmatprep.subr.mxu0 0.0
        %3159 = vmatpush1.msra.mxu0 0.0
        %3160 = vmatprep.subr.mxu0 0.0
        %3161 = vmatpush1.msra.mxu0 0.0
        %3162 = vmatprep.subr.mxu0 0.0
        %3163 = vmatpush1.msra.mxu0 0.0
        %3164 = vmatprep.subr.mxu0 0.0
        %3165 = vmatpush1.msra.mxu0 0.0
        %3166 = vmatprep.subr.mxu0 0.0
        %3167 = vmatpush1.msra.mxu0 0.0
        %3168 = vmatprep.subr.mxu0 0.0
        %3169 = vmatpush1.msra.mxu0 0.0
        %3170 = vmatprep.subr.mxu0 0.0
        %3171 = vmatpush1.msra.mxu0 0.0
        %3172 = vmatprep.subr.mxu0 0.0
        %3173 = vmatpush1.msra.mxu0 0.0
        %3174 = vmatprep.subr.mxu0 0.0
        %3175 = vmatpush1.msra.mxu0 0.0
        %3176 = vmatprep.subr.mxu0 0.0
        %3177 = vmatpush1.msra.mxu0 0.0
        %3178 = vmatprep.subr.mxu0 0.0
        %3179 = vmatpush1.msra.mxu0 0.0
        %3180 = vmatprep.subr.mxu0 0.0
        %3181 = vmatpush1.msra.mxu0 0.0
        %3182 = vmatprep.subr.mxu0 0.0
        %3183 = vmatpush1.msra.mxu0 0.0
        %3184 = vmatprep.subr.mxu0 0.0
        %3185 = vmatpush1.msra.mxu0 0.0
        %3186 = vmatprep.subr.mxu0 0.0
        %3187 = vmatpush1.msra.mxu0 0.0
        %3188 = vmatprep.mubr.f32.mxu0 0.0
        %3189 = vmatmul.mubr.f32.gmra.mrb[0].mxu0 %v3029
        %v3190 = vpop.f32.mrb[0].mxu0
        %v3191 = vadd.f32 0.0, %v3190
        %v3192 = vpop.f32.mrb[0].mxu0
        %3193 = vmatprep.mubr.f32.mxu0 0.0
        %3194 = vmatmul.mubr.f32.gmra.mrb[0].mxu0 %v3032
        %v3195 = vpop.f32.mrb[0].mxu0
        %v3196 = vadd.f32 0.0, %v3195
        %v3197 = vpop.f32.mrb[0].mxu0
        %3198 = vmatprep.mubr.f32.mxu0 0.0
        %3199 = vmatmul.mubr.f32.gmra.mrb[0].mxu0 %v3035
        %v3200 = vpop.f32.mrb[0].mxu0
        %v3201 = vadd.f32 0.0, %v3200
        %v3202 = vpop.f32.mrb[0].mxu0
        %3203 = vmatprep.mubr.f32.mxu0 0.0
        %3204 = vmatmul.mubr.f32.gmra.mrb[0].mxu0 %v3038
        %v3205 = vpop.f32.mrb[0].mxu0
        %v3206 = vadd.f32 0.0, %v3205
        %v3207 = vpop.f32.mrb[0].mxu0
        %3208 = vmatprep.mubr.f32.mxu0 0.0
        %3209 = vmatmul.mubr.f32.gmra.mrb[0].mxu0 %v3041
        %v3210 = vpop.f32.mrb[0].mxu0
        %v3211 = vadd.f32 0.0, %v3210
        %v3212 = vpop.f32.mrb[0].mxu0
        %3213 = vmatprep.mubr.f32.mxu0 0.0
        %3214 = vmatmul.mubr.f32.gmra.mrb[0].mxu0 %v3044
        %v3215 = vpop.f32.mrb[0].mxu0
        %v3216 = vadd.f32 0.0, %v3215
        %v3217 = vpop.f32.mrb[0].mxu0
        %3218 = vmatprep.mubr.f32.mxu0 0.0
        %3219 = vmatmul.mubr.f32.gmra.mrb[0].mxu0 %v3047
        %v3220 = vpop.f32.mrb[0].mxu0
        %v3221 = vadd.f32 0.0, %v3220
        %v3222 = vpop.f32.mrb[0].mxu0
        %3223 = vmatprep.mubr.f32.mxu0 0.0
        %3224 = vmatmul.mubr.f32.gmra.mrb[0].mxu0 %v3050
        %v3225 = vpop.f32.mrb[0].mxu0
        %v3226 = vadd.f32 0.0, %v3225
        %v3227 = vpop.f32.mrb[0].mxu0
        %3228 = vmatprep.mubr.f32.mxu0 0.0
        %3229 = vmatmul.mubr.f32.gmra.mrb[0].mxu0 %v3053
        %v3230 = vpop.f32.mrb[0].mxu0
        %v3231 = vadd.f32 0.0, %v3230
        %v3232 = vpop.f32.mrb[0].mxu0
        %3233 = vmatprep.mubr.f32.mxu0 0.0
        %3234 = vmatmul.mubr.f32.gmra.mrb[0].mxu0 %v3056
        %v3235 = vpop.f32.mrb[0].mxu0
        %v3236 = vadd.f32 0.0, %v3235
        %v3237 = vpop.f32.mrb[0].mxu0
        %3238 = vmatprep.mubr.f32.mxu0 0.0
        %3239 = vmatmul.mubr.f32.gmra.mrb[0].mxu0 %v3059
        %v3240 = vpop.f32.mrb[0].mxu0
        %v3241 = vadd.f32 0.0, %v3240
        %v3242 = vpop.f32.mrb[0].mxu0
        %3243 = vmatprep.mubr.f32.mxu0 0.0
        %3244 = vmatmul.mubr.f32.gmra.mrb[0].mxu0 %v3062
        %v3245 = vpop.f32.mrb[0].mxu0
        %v3246 = vadd.f32 0.0, %v3245
        %v3247 = vpop.f32.mrb[0].mxu0
        %3248 = vmatprep.mubr.f32.mxu0 0.0
        %3249 = vmatmul.mubr.f32.gmra.mrb[0].mxu0 %v3065
        %v3250 = vpop.f32.mrb[0].mxu0
        %v3251 = vadd.f32 0.0, %v3250
        %v3252 = vpop.f32.mrb[0].mxu0
        %3253 = vmatprep.mubr.f32.mxu0 0.0
        %3254 = vmatmul.mubr.f32.gmra.mrb[0].mxu0 %v3068
        %v3255 = vpop.f32.mrb[0].mxu0
        %v3256 = vadd.f32 0.0, %v3255
        %v3257 = vpop.f32.mrb[0].mxu0
        %3258 = vmatprep.mubr.f32.mxu0 0.0
        %3259 = vmatmul.mubr.f32.gmra.mrb[0].mxu0 %v3071
        %v3260 = vpop.f32.mrb[0].mxu0
        %v3261 = vadd.f32 0.0, %v3260
        %v3262 = vpop.f32.mrb[0].mxu0
        %3263 = vmatprep.mubr.f32.mxu0 0.0
        %3264 = vmatmul.mubr.f32.gmra.mrb[0].mxu0 %v3074
        %v3265 = vpop.f32.mrb[0].mxu0
        %v3266 = vadd.f32 0.0, %v3265
        %v3267 = vpop.f32.mrb[0].mxu0
        %3268 = vmatprep.mubr.f32.mxu0 0.0
        %3269 = vmatmul.mubr.f32.gmra.mrb[0].mxu0 %v3077
        %v3270 = vpop.f32.mrb[0].mxu0
        %v3271 = vadd.f32 0.0, %v3270
        %v3272 = vpop.f32.mrb[0].mxu0
        %3273 = vmatprep.mubr.f32.mxu0 0.0
        %3274 = vmatmul.mubr.f32.gmra.mrb[0].mxu0 %v3080
        %v3275 = vpop.f32.mrb[0].mxu0
        %v3276 = vadd.f32 0.0, %v3275
        %v3277 = vpop.f32.mrb[0].mxu0
        %3278 = vmatprep.mubr.f32.mxu0 0.0
        %3279 = vmatmul.mubr.f32.gmra.mrb[0].mxu0 %v3083
        %v3280 = vpop.f32.mrb[0].mxu0
        %v3281 = vadd.f32 0.0, %v3280
        %v3282 = vpop.f32.mrb[0].mxu0
        %3283 = vmatprep.mubr.f32.mxu0 0.0
        %3284 = vmatmul.mubr.f32.gmra.mrb[0].mxu0 %v3086
        %v3285 = vpop.f32.mrb[0].mxu0
        %v3286 = vadd.f32 0.0, %v3285
        %v3287 = vpop.f32.mrb[0].mxu0
        %3288 = vmatprep.mubr.f32.mxu0 0.0
        %3289 = vmatmul.mubr.f32.gmra.mrb[0].mxu0 %v3089
        %v3290 = vpop.f32.mrb[0].mxu0
        %v3291 = vadd.f32 0.0, %v3290
        %v3292 = vpop.f32.mrb[0].mxu0
        %3293 = vmatprep.mubr.f32.mxu0 0.0
        %3294 = vmatmul.mubr.f32.gmra.mrb[0].mxu0 %v3092
        %v3295 = vpop.f32.mrb[0].mxu0
        %v3296 = vadd.f32 0.0, %v3295
        %v3297 = vpop.f32.mrb[0].mxu0
        %3298 = vmatprep.mubr.f32.mxu0 0.0
        %3299 = vmatmul.mubr.f32.gmra.mrb[0].mxu0 %v3095
        %v3300 = vpop.f32.mrb[0].mxu0
        %v3301 = vadd.f32 0.0, %v3300
        %v3302 = vpop.f32.mrb[0].mxu0
        %3303 = vmatprep.mubr.f32.mxu0 0.0
        %3304 = vmatmul.mubr.f32.gmra.mrb[0].mxu0 %v3098
        %v3305 = vpop.f32.mrb[0].mxu0
        %v3306 = vadd.f32 0.0, %v3305
        %v3307 = vpop.f32.mrb[0].mxu0
        %3308 = vmatprep.mubr.f32.mxu0 0.0
        %3309 = vmatmul.mubr.f32.gmra.mrb[0].mxu0 %v3101
        %v3310 = vpop.f32.mrb[0].mxu0
        %v3311 = vadd.f32 0.0, %v3310
        %v3312 = vpop.f32.mrb[0].mxu0
        %3313 = vmatprep.mubr.f32.mxu0 0.0
        %3314 = vmatmul.mubr.f32.gmra.mrb[0].mxu0 %v3104
        %v3315 = vpop.f32.mrb[0].mxu0
        %v3316 = vadd.f32 0.0, %v3315
        %v3317 = vpop.f32.mrb[0].mxu0
        %3318 = vmatprep.mubr.f32.mxu0 0.0
        %3319 = vmatmul.mubr.f32.gmra.mrb[0].mxu0 %v3107
        %v3320 = vpop.f32.mrb[0].mxu0
        %v3321 = vadd.f32 0.0, %v3320
        %v3322 = vpop.f32.mrb[0].mxu0
        %3323 = vmatprep.mubr.f32.mxu0 0.0
        %3324 = vmatmul.mubr.f32.gmra.mrb[0].mxu0 %v3110
        %v3325 = vpop.f32.mrb[0].mxu0
        %v3326 = vadd.f32 0.0, %v3325
        %v3327 = vpop.f32.mrb[0].mxu0
        %3328 = vmatprep.mubr.f32.mxu0 0.0
        %3329 = vmatmul.mubr.f32.gmra.mrb[0].mxu0 %v3113
        %v3330 = vpop.f32.mrb[0].mxu0
        %v3331 = vadd.f32 0.0, %v3330
        %v3332 = vpop.f32.mrb[0].mxu0
        %3333 = vmatprep.mubr.f32.mxu0 0.0
        %3334 = vmatmul.mubr.f32.gmra.mrb[0].mxu0 %v3116
        %v3335 = vpop.f32.mrb[0].mxu0
        %v3336 = vadd.f32 0.0, %v3335
        %v3337 = vpop.f32.mrb[0].mxu0
        %3338 = vmatprep.mubr.f32.mxu0 0.0
        %3339 = vmatmul.mubr.f32.gmra.mrb[0].mxu0 %v3119
        %v3340 = vpop.f32.mrb[0].mxu0
        %v3341 = vadd.f32 0.0, %v3340
        %v3342 = vpop.f32.mrb[0].mxu0
        %3343 = vmatprep.mubr.f32.mxu0 0.0
        %3344 = vmatmul.mubr.f32.gmra.mrb[0].mxu0 %v3122
        %v3345 = vpop.f32.mrb[0].mxu0
        %v3346 = vadd.f32 0.0, %v3345
        %v3347 = vpop.f32.mrb[0].mxu0
        %3348 = vdwg.mxu0
        %v3349 = vadd.f32 %v2891, %v3191
        %v3350 = vadd.f32 %v2892, %v3196
        %v3351 = vadd.f32 %v2893, %v3201
        %v3352 = vadd.f32 %v2894, %v3206
        %v3353 = vadd.f32 %v2895, %v3211
        %v3354 = vadd.f32 %v2896, %v3216
        %v3355 = vadd.f32 %v2897, %v3221
        %v3356 = vadd.f32 %v2898, %v3226
        %v3357 = vadd.f32 %v2899, %v3231
        %v3358 = vadd.f32 %v2900, %v3236
        %v3359 = vadd.f32 %v2901, %v3241
        %v3360 = vadd.f32 %v2902, %v3246
        %v3361 = vadd.f32 %v2903, %v3251
        %v3362 = vadd.f32 %v2904, %v3256
        %v3363 = vadd.f32 %v2905, %v3261
        %v3364 = vadd.f32 %v2906, %v3266
        %v3365 = vadd.f32 %v2907, %v3271
        %v3366 = vadd.f32 %v2908, %v3276
        %v3367 = vadd.f32 %v2909, %v3281
        %v3368 = vadd.f32 %v2910, %v3286
        %v3369 = vadd.f32 %v2911, %v3291
        %v3370 = vadd.f32 %v2912, %v3296
        %v3371 = vadd.f32 %v2913, %v3301
        %v3372 = vadd.f32 %v2914, %v3306
        %v3373 = vadd.f32 %v2915, %v3311
        %v3374 = vadd.f32 %v2916, %v3316
        %v3375 = vadd.f32 %v2917, %v3321
        %v3376 = vadd.f32 %v2918, %v3326
        %v3377 = vadd.f32 %v2919, %v3331
        %v3378 = vadd.f32 %v2920, %v3336
        %v3379 = vadd.f32 %v2921, %v3341
        %v3380 = vadd.f32 %v2922, %v3346
        %s3381 = scalar_lea.vmem %s345, 48
        %v3382 = vld [vmem:[%s3381] sm:$0xff]
        %v3383 = vld [vmem:[%s3381 + $0x8] sm:$0xff]
        %v3384 = vld [vmem:[%s3381 + $0x18] sm:$0xff]
        %v3385 = vld [vmem:[%s3381 + $0x20] sm:$0xff]
        %v3386 = vld [vmem:[%s3381 + $0x30] sm:$0xff]
        %v3387 = vld [vmem:[%s3381 + $0x38] sm:$0xff]
        %v3388 = vld [vmem:[%s3381 + $0x48] sm:$0xff]
        %v3389 = vld [vmem:[%s3381 + $0x50] sm:$0xff]
        %v3390 = vld [vmem:[%s3381 + $0x60] sm:$0xff]
        %v3391 = vld [vmem:[%s3381 + $0x68] sm:$0xff]
        %v3392 = vld [vmem:[%s3381 + $0x78] sm:$0xff]
        %v3393 = vld [vmem:[%s3381 + $0x80] sm:$0xff]
        %v3394 = vld [vmem:[%s3381 + $0x90] sm:$0xff]
        %v3395 = vld [vmem:[%s3381 + $0x98] sm:$0xff]
        %v3396 = vld [vmem:[%s3381 + $0xa8] sm:$0xff]
        %v3397 = vld [vmem:[%s3381 + $0xb0] sm:$0xff]
        %v3398 = vld [vmem:[%s3381 + $0xc0] sm:$0xff]
        %v3399 = vld [vmem:[%s3381 + $0xc8] sm:$0xff]
        %v3400 = vld [vmem:[%s3381 + $0xd8] sm:$0xff]
        %v3401 = vld [vmem:[%s3381 + $0xe0] sm:$0xff]
        %v3402 = vld [vmem:[%s3381 + $0xf0] sm:$0xff]
        %v3403 = vld [vmem:[%s3381 + $0xf8] sm:$0xff]
        %v3404 = vld [vmem:[%s3381 + $0x108] sm:$0xff]
        %v3405 = vld [vmem:[%s3381 + $0x110] sm:$0xff]
        %v3406 = vld [vmem:[%s3381 + $0x120] sm:$0xff]
        %v3407 = vld [vmem:[%s3381 + $0x128] sm:$0xff]
        %v3408 = vld [vmem:[%s3381 + $0x138] sm:$0xff]
        %v3409 = vld [vmem:[%s3381 + $0x140] sm:$0xff]
        %v3410 = vld [vmem:[%s3381 + $0x150] sm:$0xff]
        %v3411 = vld [vmem:[%s3381 + $0x158] sm:$0xff]
        %v3412 = vld [vmem:[%s3381 + $0x168] sm:$0xff]
        %v3413 = vld [vmem:[%s3381 + $0x170] sm:$0xff]
        %v3414 = vmul.f32 %v3382, %v754
        %v3415 = vmul.f32 %v3383, %v754
        %v3416 = vmul.f32 %v3384, %v754
        %v3417 = vmul.f32 %v3385, %v754
        %v3418 = vmul.f32 %v3386, %v754
        %v3419 = vmul.f32 %v3387, %v754
        %v3420 = vmul.f32 %v3388, %v754
        %v3421 = vmul.f32 %v3389, %v754
        %v3422 = vmul.f32 %v3390, %v754
        %v3423 = vmul.f32 %v3391, %v754
        %v3424 = vmul.f32 %v3392, %v754
        %v3425 = vmul.f32 %v3393, %v754
        %v3426 = vmul.f32 %v3394, %v754
        %v3427 = vmul.f32 %v3395, %v754
        %v3428 = vmul.f32 %v3396, %v754
        %v3429 = vmul.f32 %v3397, %v754
        %v3430 = vmul.f32 %v3398, %v754
        %v3431 = vmul.f32 %v3399, %v754
        %v3432 = vmul.f32 %v3400, %v754
        %v3433 = vmul.f32 %v3401, %v754
        %v3434 = vmul.f32 %v3402, %v754
        %v3435 = vmul.f32 %v3403, %v754
        %v3436 = vmul.f32 %v3404, %v754
        %v3437 = vmul.f32 %v3405, %v754
        %v3438 = vmul.f32 %v3406, %v754
        %v3439 = vmul.f32 %v3407, %v754
        %v3440 = vmul.f32 %v3408, %v754
        %v3441 = vmul.f32 %v3409, %v754
        %v3442 = vmul.f32 %v3410, %v754
        %v3443 = vmul.f32 %v3411, %v754
        %v3444 = vmul.f32 %v3412, %v754
        %v3445 = vmul.f32 %v3413, %v754
        %v3446 = vadd.f32 %v3414, %v792
        %v3447 = vadd.f32 %v3415, %v792
        %v3448 = vadd.f32 %v3416, %v792
        %v3449 = vadd.f32 %v3417, %v792
        %v3450 = vadd.f32 %v3418, %v792
        %v3451 = vadd.f32 %v3419, %v792
        %v3452 = vadd.f32 %v3420, %v792
        %v3453 = vadd.f32 %v3421, %v792
        %v3454 = vadd.f32 %v3422, %v792
        %v3455 = vadd.f32 %v3423, %v792
        %v3456 = vadd.f32 %v3424, %v792
        %v3457 = vadd.f32 %v3425, %v792
        %v3458 = vadd.f32 %v3426, %v792
        %v3459 = vadd.f32 %v3427, %v792
        %v3460 = vadd.f32 %v3428, %v792
        %v3461 = vadd.f32 %v3429, %v792
        %v3462 = vadd.f32 %v3430, %v792
        %v3463 = vadd.f32 %v3431, %v792
        %v3464 = vadd.f32 %v3432, %v792
        %v3465 = vadd.f32 %v3433, %v792
        %v3466 = vadd.f32 %v3434, %v792
        %v3467 = vadd.f32 %v3435, %v792
        %v3468 = vadd.f32 %v3436, %v792
        %v3469 = vadd.f32 %v3437, %v792
        %v3470 = vadd.f32 %v3438, %v792
        %v3471 = vadd.f32 %v3439, %v792
        %v3472 = vadd.f32 %v3440, %v792
        %v3473 = vadd.f32 %v3441, %v792
        %v3474 = vadd.f32 %v3442, %v792
        %v3475 = vadd.f32 %v3443, %v792
        %v3476 = vadd.f32 %v3444, %v792
        %v3477 = vadd.f32 %v3445, %v792
        %s3478 = scalar_lea.vmem %s5, 384
        %v3479 = vld [vmem:[%s3478] sm:$0xff]
        %v3480 = vld [vmem:[%s3478 + $0x8] sm:$0xff]
        %v3481 = vld [vmem:[%s3478 + $0x10] sm:$0xff]
        %v3482 = vld [vmem:[%s3478 + $0x18] sm:$0xff]
        %v3483 = vld [vmem:[%s3478 + $0x20] sm:$0xff]
        %v3484 = vld [vmem:[%s3478 + $0x28] sm:$0xff]
        %v3485 = vld [vmem:[%s3478 + $0x30] sm:$0xff]
        %v3486 = vld [vmem:[%s3478 + $0x38] sm:$0xff]
        %v3488 = vsel %vm384, %v3446, 0
        %v3491 = vsel %vm384, %v3447, 0
        %v3494 = vsel %vm384, %v3448, 0
        %v3497 = vsel %vm384, %v3449, 0
        %v3500 = vsel %vm384, %v3450, 0
        %v3503 = vsel %vm384, %v3451, 0
        %v3506 = vsel %vm384, %v3452, 0
        %v3509 = vsel %vm384, %v3453, 0
        %v3512 = vsel %vm384, %v3454, 0
        %v3515 = vsel %vm384, %v3455, 0
        %v3518 = vsel %vm384, %v3456, 0
        %v3521 = vsel %vm384, %v3457, 0
        %v3524 = vsel %vm384, %v3458, 0
        %v3527 = vsel %vm384, %v3459, 0
        %v3530 = vsel %vm384, %v3460, 0
        %v3533 = vsel %vm384, %v3461, 0
        %v3536 = vsel %vm384, %v3462, 0
        %v3539 = vsel %vm384, %v3463, 0
        %v3542 = vsel %vm384, %v3464, 0
        %v3545 = vsel %vm384, %v3465, 0
        %v3548 = vsel %vm384, %v3466, 0
        %v3551 = vsel %vm384, %v3467, 0
        %v3554 = vsel %vm384, %v3468, 0
        %v3557 = vsel %vm384, %v3469, 0
        %v3560 = vsel %vm384, %v3470, 0
        %v3563 = vsel %vm384, %v3471, 0
        %v3566 = vsel %vm384, %v3472, 0
        %v3569 = vsel %vm384, %v3473, 0
        %v3572 = vsel %vm384, %v3474, 0
        %v3575 = vsel %vm384, %v3475, 0
        %v3578 = vsel %vm384, %v3476, 0
        %v3581 = vsel %vm384, %v3477, 0
        %3583 = vmatprep.subr.mxu0 0.0
        %3584 = vmatpush1.msra.mxu0 %v3479
        %3585 = vmatprep.subr.mxu0 0.0
        %3586 = vmatpush1.msra.mxu0 %v3480
        %3587 = vmatprep.subr.mxu0 0.0
        %3588 = vmatpush1.msra.mxu0 %v3481
        %3589 = vmatprep.subr.mxu0 0.0
        %3590 = vmatpush1.msra.mxu0 %v3482
        %3591 = vmatprep.subr.mxu0 0.0
        %3592 = vmatpush1.msra.mxu0 %v3483
        %3593 = vmatprep.subr.mxu0 0.0
        %3594 = vmatpush1.msra.mxu0 %v3484
        %3595 = vmatprep.subr.mxu0 0.0
        %3596 = vmatpush1.msra.mxu0 %v3485
        %3597 = vmatprep.subr.mxu0 0.0
        %3598 = vmatpush1.msra.mxu0 %v3486
        %3599 = vmatprep.subr.mxu0 0.0
        %3600 = vmatpush1.msra.mxu0 0.0
        %3601 = vmatprep.subr.mxu0 0.0
        %3602 = vmatpush1.msra.mxu0 0.0
        %3603 = vmatprep.subr.mxu0 0.0
        %3604 = vmatpush1.msra.mxu0 0.0
        %3605 = vmatprep.subr.mxu0 0.0
        %3606 = vmatpush1.msra.mxu0 0.0
        %3607 = vmatprep.subr.mxu0 0.0
        %3608 = vmatpush1.msra.mxu0 0.0
        %3609 = vmatprep.subr.mxu0 0.0
        %3610 = vmatpush1.msra.mxu0 0.0
        %3611 = vmatprep.subr.mxu0 0.0
        %3612 = vmatpush1.msra.mxu0 0.0
        %3613 = vmatprep.subr.mxu0 0.0
        %3614 = vmatpush1.msra.mxu0 0.0
        %3615 = vmatprep.subr.mxu0 0.0
        %3616 = vmatpush1.msra.mxu0 0.0
        %3617 = vmatprep.subr.mxu0 0.0
        %3618 = vmatpush1.msra.mxu0 0.0
        %3619 = vmatprep.subr.mxu0 0.0
        %3620 = vmatpush1.msra.mxu0 0.0
        %3621 = vmatprep.subr.mxu0 0.0
        %3622 = vmatpush1.msra.mxu0 0.0
        %3623 = vmatprep.subr.mxu0 0.0
        %3624 = vmatpush1.msra.mxu0 0.0
        %3625 = vmatprep.subr.mxu0 0.0
        %3626 = vmatpush1.msra.mxu0 0.0
        %3627 = vmatprep.subr.mxu0 0.0
        %3628 = vmatpush1.msra.mxu0 0.0
        %3629 = vmatprep.subr.mxu0 0.0
        %3630 = vmatpush1.msra.mxu0 0.0
        %3631 = vmatprep.subr.mxu0 0.0
        %3632 = vmatpush1.msra.mxu0 0.0
        %3633 = vmatprep.subr.mxu0 0.0
        %3634 = vmatpush1.msra.mxu0 0.0
        %3635 = vmatprep.subr.mxu0 0.0
        %3636 = vmatpush1.msra.mxu0 0.0
        %3637 = vmatprep.subr.mxu0 0.0
        %3638 = vmatpush1.msra.mxu0 0.0
        %3639 = vmatprep.subr.mxu0 0.0
        %3640 = vmatpush1.msra.mxu0 0.0
        %3641 = vmatprep.subr.mxu0 0.0
        %3642 = vmatpush1.msra.mxu0 0.0
        %3643 = vmatprep.subr.mxu0 0.0
        %3644 = vmatpush1.msra.mxu0 0.0
        %3645 = vmatprep.subr.mxu0 0.0
        %3646 = vmatpush1.msra.mxu0 0.0
        %3647 = vmatprep.mubr.f32.mxu0 0.0
        %3648 = vmatmul.mubr.f32.gmra.mrb[0].mxu0 %v3488
        %v3649 = vpop.f32.mrb[0].mxu0
        %v3650 = vadd.f32 0.0, %v3649
        %v3651 = vpop.f32.mrb[0].mxu0
        %3652 = vmatprep.mubr.f32.mxu0 0.0
        %3653 = vmatmul.mubr.f32.gmra.mrb[0].mxu0 %v3491
        %v3654 = vpop.f32.mrb[0].mxu0
        %v3655 = vadd.f32 0.0, %v3654
        %v3656 = vpop.f32.mrb[0].mxu0
        %3657 = vmatprep.mubr.f32.mxu0 0.0
        %3658 = vmatmul.mubr.f32.gmra.mrb[0].mxu0 %v3494
        %v3659 = vpop.f32.mrb[0].mxu0
        %v3660 = vadd.f32 0.0, %v3659
        %v3661 = vpop.f32.mrb[0].mxu0
        %3662 = vmatprep.mubr.f32.mxu0 0.0
        %3663 = vmatmul.mubr.f32.gmra.mrb[0].mxu0 %v3497
        %v3664 = vpop.f32.mrb[0].mxu0
        %v3665 = vadd.f32 0.0, %v3664
        %v3666 = vpop.f32.mrb[0].mxu0
        %3667 = vmatprep.mubr.f32.mxu0 0.0
        %3668 = vmatmul.mubr.f32.gmra.mrb[0].mxu0 %v3500
        %v3669 = vpop.f32.mrb[0].mxu0
        %v3670 = vadd.f32 0.0, %v3669
        %v3671 = vpop.f32.mrb[0].mxu0
        %3672 = vmatprep.mubr.f32.mxu0 0.0
        %3673 = vmatmul.mubr.f32.gmra.mrb[0].mxu0 %v3503
        %v3674 = vpop.f32.mrb[0].mxu0
        %v3675 = vadd.f32 0.0, %v3674
        %v3676 = vpop.f32.mrb[0].mxu0
        %3677 = vmatprep.mubr.f32.mxu0 0.0
        %3678 = vmatmul.mubr.f32.gmra.mrb[0].mxu0 %v3506
        %v3679 = vpop.f32.mrb[0].mxu0
        %v3680 = vadd.f32 0.0, %v3679
        %v3681 = vpop.f32.mrb[0].mxu0
        %3682 = vmatprep.mubr.f32.mxu0 0.0
        %3683 = vmatmul.mubr.f32.gmra.mrb[0].mxu0 %v3509
        %v3684 = vpop.f32.mrb[0].mxu0
        %v3685 = vadd.f32 0.0, %v3684
        %v3686 = vpop.f32.mrb[0].mxu0
        %3687 = vmatprep.mubr.f32.mxu0 0.0
        %3688 = vmatmul.mubr.f32.gmra.mrb[0].mxu0 %v3512
        %v3689 = vpop.f32.mrb[0].mxu0
        %v3690 = vadd.f32 0.0, %v3689
        %v3691 = vpop.f32.mrb[0].mxu0
        %3692 = vmatprep.mubr.f32.mxu0 0.0
        %3693 = vmatmul.mubr.f32.gmra.mrb[0].mxu0 %v3515
        %v3694 = vpop.f32.mrb[0].mxu0
        %v3695 = vadd.f32 0.0, %v3694
        %v3696 = vpop.f32.mrb[0].mxu0
        %3697 = vmatprep.mubr.f32.mxu0 0.0
        %3698 = vmatmul.mubr.f32.gmra.mrb[0].mxu0 %v3518
        %v3699 = vpop.f32.mrb[0].mxu0
        %v3700 = vadd.f32 0.0, %v3699
        %v3701 = vpop.f32.mrb[0].mxu0
        %3702 = vmatprep.mubr.f32.mxu0 0.0
        %3703 = vmatmul.mubr.f32.gmra.mrb[0].mxu0 %v3521
        %v3704 = vpop.f32.mrb[0].mxu0
        %v3705 = vadd.f32 0.0, %v3704
        %v3706 = vpop.f32.mrb[0].mxu0
        %3707 = vmatprep.mubr.f32.mxu0 0.0
        %3708 = vmatmul.mubr.f32.gmra.mrb[0].mxu0 %v3524
        %v3709 = vpop.f32.mrb[0].mxu0
        %v3710 = vadd.f32 0.0, %v3709
        %v3711 = vpop.f32.mrb[0].mxu0
        %3712 = vmatprep.mubr.f32.mxu0 0.0
        %3713 = vmatmul.mubr.f32.gmra.mrb[0].mxu0 %v3527
        %v3714 = vpop.f32.mrb[0].mxu0
        %v3715 = vadd.f32 0.0, %v3714
        %v3716 = vpop.f32.mrb[0].mxu0
        %3717 = vmatprep.mubr.f32.mxu0 0.0
        %3718 = vmatmul.mubr.f32.gmra.mrb[0].mxu0 %v3530
        %v3719 = vpop.f32.mrb[0].mxu0
        %v3720 = vadd.f32 0.0, %v3719
        %v3721 = vpop.f32.mrb[0].mxu0
        %3722 = vmatprep.mubr.f32.mxu0 0.0
        %3723 = vmatmul.mubr.f32.gmra.mrb[0].mxu0 %v3533
        %v3724 = vpop.f32.mrb[0].mxu0
        %v3725 = vadd.f32 0.0, %v3724
        %v3726 = vpop.f32.mrb[0].mxu0
        %3727 = vmatprep.mubr.f32.mxu0 0.0
        %3728 = vmatmul.mubr.f32.gmra.mrb[0].mxu0 %v3536
        %v3729 = vpop.f32.mrb[0].mxu0
        %v3730 = vadd.f32 0.0, %v3729
        %v3731 = vpop.f32.mrb[0].mxu0
        %3732 = vmatprep.mubr.f32.mxu0 0.0
        %3733 = vmatmul.mubr.f32.gmra.mrb[0].mxu0 %v3539
        %v3734 = vpop.f32.mrb[0].mxu0
        %v3735 = vadd.f32 0.0, %v3734
        %v3736 = vpop.f32.mrb[0].mxu0
        %3737 = vmatprep.mubr.f32.mxu0 0.0
        %3738 = vmatmul.mubr.f32.gmra.mrb[0].mxu0 %v3542
        %v3739 = vpop.f32.mrb[0].mxu0
        %v3740 = vadd.f32 0.0, %v3739
        %v3741 = vpop.f32.mrb[0].mxu0
        %3742 = vmatprep.mubr.f32.mxu0 0.0
        %3743 = vmatmul.mubr.f32.gmra.mrb[0].mxu0 %v3545
        %v3744 = vpop.f32.mrb[0].mxu0
        %v3745 = vadd.f32 0.0, %v3744
        %v3746 = vpop.f32.mrb[0].mxu0
        %3747 = vmatprep.mubr.f32.mxu0 0.0
        %3748 = vmatmul.mubr.f32.gmra.mrb[0].mxu0 %v3548
        %v3749 = vpop.f32.mrb[0].mxu0
        %v3750 = vadd.f32 0.0, %v3749
        %v3751 = vpop.f32.mrb[0].mxu0
        %3752 = vmatprep.mubr.f32.mxu0 0.0
        %3753 = vmatmul.mubr.f32.gmra.mrb[0].mxu0 %v3551
        %v3754 = vpop.f32.mrb[0].mxu0
        %v3755 = vadd.f32 0.0, %v3754
        %v3756 = vpop.f32.mrb[0].mxu0
        %3757 = vmatprep.mubr.f32.mxu0 0.0
        %3758 = vmatmul.mubr.f32.gmra.mrb[0].mxu0 %v3554
        %v3759 = vpop.f32.mrb[0].mxu0
        %v3760 = vadd.f32 0.0, %v3759
        %v3761 = vpop.f32.mrb[0].mxu0
        %3762 = vmatprep.mubr.f32.mxu0 0.0
        %3763 = vmatmul.mubr.f32.gmra.mrb[0].mxu0 %v3557
        %v3764 = vpop.f32.mrb[0].mxu0
        %v3765 = vadd.f32 0.0, %v3764
        %v3766 = vpop.f32.mrb[0].mxu0
        %3767 = vmatprep.mubr.f32.mxu0 0.0
        %3768 = vmatmul.mubr.f32.gmra.mrb[0].mxu0 %v3560
        %v3769 = vpop.f32.mrb[0].mxu0
        %v3770 = vadd.f32 0.0, %v3769
        %v3771 = vpop.f32.mrb[0].mxu0
        %3772 = vmatprep.mubr.f32.mxu0 0.0
        %3773 = vmatmul.mubr.f32.gmra.mrb[0].mxu0 %v3563
        %v3774 = vpop.f32.mrb[0].mxu0
        %v3775 = vadd.f32 0.0, %v3774
        %v3776 = vpop.f32.mrb[0].mxu0
        %3777 = vmatprep.mubr.f32.mxu0 0.0
        %3778 = vmatmul.mubr.f32.gmra.mrb[0].mxu0 %v3566
        %v3779 = vpop.f32.mrb[0].mxu0
        %v3780 = vadd.f32 0.0, %v3779
        %v3781 = vpop.f32.mrb[0].mxu0
        %3782 = vmatprep.mubr.f32.mxu0 0.0
        %3783 = vmatmul.mubr.f32.gmra.mrb[0].mxu0 %v3569
        %v3784 = vpop.f32.mrb[0].mxu0
        %v3785 = vadd.f32 0.0, %v3784
        %v3786 = vpop.f32.mrb[0].mxu0
        %3787 = vmatprep.mubr.f32.mxu0 0.0
        %3788 = vmatmul.mubr.f32.gmra.mrb[0].mxu0 %v3572
        %v3789 = vpop.f32.mrb[0].mxu0
        %v3790 = vadd.f32 0.0, %v3789
        %v3791 = vpop.f32.mrb[0].mxu0
        %3792 = vmatprep.mubr.f32.mxu0 0.0
        %3793 = vmatmul.mubr.f32.gmra.mrb[0].mxu0 %v3575
        %v3794 = vpop.f32.mrb[0].mxu0
        %v3795 = vadd.f32 0.0, %v3794
        %v3796 = vpop.f32.mrb[0].mxu0
        %3797 = vmatprep.mubr.f32.mxu0 0.0
        %3798 = vmatmul.mubr.f32.gmra.mrb[0].mxu0 %v3578
        %v3799 = vpop.f32.mrb[0].mxu0
        %v3800 = vadd.f32 0.0, %v3799
        %v3801 = vpop.f32.mrb[0].mxu0
        %3802 = vmatprep.mubr.f32.mxu0 0.0
        %3803 = vmatmul.mubr.f32.gmra.mrb[0].mxu0 %v3581
        %v3804 = vpop.f32.mrb[0].mxu0
        %v3805 = vadd.f32 0.0, %v3804
        %v3806 = vpop.f32.mrb[0].mxu0
        %3807 = vdwg.mxu0
        %v3808 = vadd.f32 %v3349, %v3650
        %v3809 = vadd.f32 %v3350, %v3655
        %v3810 = vadd.f32 %v3351, %v3660
        %v3811 = vadd.f32 %v3352, %v3665
        %v3812 = vadd.f32 %v3353, %v3670
        %v3813 = vadd.f32 %v3354, %v3675
        %v3814 = vadd.f32 %v3355, %v3680
        %v3815 = vadd.f32 %v3356, %v3685
        %v3816 = vadd.f32 %v3357, %v3690
        %v3817 = vadd.f32 %v3358, %v3695
        %v3818 = vadd.f32 %v3359, %v3700
        %v3819 = vadd.f32 %v3360, %v3705
        %v3820 = vadd.f32 %v3361, %v3710
        %v3821 = vadd.f32 %v3362, %v3715
        %v3822 = vadd.f32 %v3363, %v3720
        %v3823 = vadd.f32 %v3364, %v3725
        %v3824 = vadd.f32 %v3365, %v3730
        %v3825 = vadd.f32 %v3366, %v3735
        %v3826 = vadd.f32 %v3367, %v3740
        %v3827 = vadd.f32 %v3368, %v3745
        %v3828 = vadd.f32 %v3369, %v3750
        %v3829 = vadd.f32 %v3370, %v3755
        %v3830 = vadd.f32 %v3371, %v3760
        %v3831 = vadd.f32 %v3372, %v3765
        %v3832 = vadd.f32 %v3373, %v3770
        %v3833 = vadd.f32 %v3374, %v3775
        %v3834 = vadd.f32 %v3375, %v3780
        %v3835 = vadd.f32 %v3376, %v3785
        %v3836 = vadd.f32 %v3377, %v3790
        %v3837 = vadd.f32 %v3378, %v3795
        %v3838 = vadd.f32 %v3379, %v3800
        %v3839 = vadd.f32 %v3380, %v3805
        %v3840 = vld [vmem:[%s3381 + $0x1] sm:$0xff]
        %v3841 = vld [vmem:[%s3381 + $0x9] sm:$0xff]
        %v3842 = vld [vmem:[%s3381 + $0x19] sm:$0xff]
        %v3843 = vld [vmem:[%s3381 + $0x21] sm:$0xff]
        %v3844 = vld [vmem:[%s3381 + $0x31] sm:$0xff]
        %v3845 = vld [vmem:[%s3381 + $0x39] sm:$0xff]
        %v3846 = vld [vmem:[%s3381 + $0x49] sm:$0xff]
        %v3847 = vld [vmem:[%s3381 + $0x51] sm:$0xff]
        %v3848 = vld [vmem:[%s3381 + $0x61] sm:$0xff]
        %v3849 = vld [vmem:[%s3381 + $0x69] sm:$0xff]
        %v3850 = vld [vmem:[%s3381 + $0x79] sm:$0xff]
        %v3851 = vld [vmem:[%s3381 + $0x81] sm:$0xff]
        %v3852 = vld [vmem:[%s3381 + $0x91] sm:$0xff]
        %v3853 = vld [vmem:[%s3381 + $0x99] sm:$0xff]
        %v3854 = vld [vmem:[%s3381 + $0xa9] sm:$0xff]
        %v3855 = vld [vmem:[%s3381 + $0xb1] sm:$0xff]
        %v3856 = vld [vmem:[%s3381 + $0xc1] sm:$0xff]
        %v3857 = vld [vmem:[%s3381 + $0xc9] sm:$0xff]
        %v3858 = vld [vmem:[%s3381 + $0xd9] sm:$0xff]
        %v3859 = vld [vmem:[%s3381 + $0xe1] sm:$0xff]
        %v3860 = vld [vmem:[%s3381 + $0xf1] sm:$0xff]
        %v3861 = vld [vmem:[%s3381 + $0xf9] sm:$0xff]
        %v3862 = vld [vmem:[%s3381 + $0x109] sm:$0xff]
        %v3863 = vld [vmem:[%s3381 + $0x111] sm:$0xff]
        %v3864 = vld [vmem:[%s3381 + $0x121] sm:$0xff]
        %v3865 = vld [vmem:[%s3381 + $0x129] sm:$0xff]
        %v3866 = vld [vmem:[%s3381 + $0x139] sm:$0xff]
        %v3867 = vld [vmem:[%s3381 + $0x141] sm:$0xff]
        %v3868 = vld [vmem:[%s3381 + $0x151] sm:$0xff]
        %v3869 = vld [vmem:[%s3381 + $0x159] sm:$0xff]
        %v3870 = vld [vmem:[%s3381 + $0x169] sm:$0xff]
        %v3871 = vld [vmem:[%s3381 + $0x171] sm:$0xff]
        %v3872 = vmul.f32 %v3840, %v754
        %v3873 = vmul.f32 %v3841, %v754
        %v3874 = vmul.f32 %v3842, %v754
        %v3875 = vmul.f32 %v3843, %v754
        %v3876 = vmul.f32 %v3844, %v754
        %v3877 = vmul.f32 %v3845, %v754
        %v3878 = vmul.f32 %v3846, %v754
        %v3879 = vmul.f32 %v3847, %v754
        %v3880 = vmul.f32 %v3848, %v754
        %v3881 = vmul.f32 %v3849, %v754
        %v3882 = vmul.f32 %v3850, %v754
        %v3883 = vmul.f32 %v3851, %v754
        %v3884 = vmul.f32 %v3852, %v754
        %v3885 = vmul.f32 %v3853, %v754
        %v3886 = vmul.f32 %v3854, %v754
        %v3887 = vmul.f32 %v3855, %v754
        %v3888 = vmul.f32 %v3856, %v754
        %v3889 = vmul.f32 %v3857, %v754
        %v3890 = vmul.f32 %v3858, %v754
        %v3891 = vmul.f32 %v3859, %v754
        %v3892 = vmul.f32 %v3860, %v754
        %v3893 = vmul.f32 %v3861, %v754
        %v3894 = vmul.f32 %v3862, %v754
        %v3895 = vmul.f32 %v3863, %v754
        %v3896 = vmul.f32 %v3864, %v754
        %v3897 = vmul.f32 %v3865, %v754
        %v3898 = vmul.f32 %v3866, %v754
        %v3899 = vmul.f32 %v3867, %v754
        %v3900 = vmul.f32 %v3868, %v754
        %v3901 = vmul.f32 %v3869, %v754
        %v3902 = vmul.f32 %v3870, %v754
        %v3903 = vmul.f32 %v3871, %v754
        %v3904 = vadd.f32 %v3872, %v792
        %v3905 = vadd.f32 %v3873, %v792
        %v3906 = vadd.f32 %v3874, %v792
        %v3907 = vadd.f32 %v3875, %v792
        %v3908 = vadd.f32 %v3876, %v792
        %v3909 = vadd.f32 %v3877, %v792
        %v3910 = vadd.f32 %v3878, %v792
        %v3911 = vadd.f32 %v3879, %v792
        %v3912 = vadd.f32 %v3880, %v792
        %v3913 = vadd.f32 %v3881, %v792
        %v3914 = vadd.f32 %v3882, %v792
        %v3915 = vadd.f32 %v3883, %v792
        %v3916 = vadd.f32 %v3884, %v792
        %v3917 = vadd.f32 %v3885, %v792
        %v3918 = vadd.f32 %v3886, %v792
        %v3919 = vadd.f32 %v3887, %v792
        %v3920 = vadd.f32 %v3888, %v792
        %v3921 = vadd.f32 %v3889, %v792
        %v3922 = vadd.f32 %v3890, %v792
        %v3923 = vadd.f32 %v3891, %v792
        %v3924 = vadd.f32 %v3892, %v792
        %v3925 = vadd.f32 %v3893, %v792
        %v3926 = vadd.f32 %v3894, %v792
        %v3927 = vadd.f32 %v3895, %v792
        %v3928 = vadd.f32 %v3896, %v792
        %v3929 = vadd.f32 %v3897, %v792
        %v3930 = vadd.f32 %v3898, %v792
        %v3931 = vadd.f32 %v3899, %v792
        %v3932 = vadd.f32 %v3900, %v792
        %v3933 = vadd.f32 %v3901, %v792
        %v3934 = vadd.f32 %v3902, %v792
        %v3935 = vadd.f32 %v3903, %v792
        %s3936 = scalar_lea.vmem %s5, 448
        %v3937 = vld [vmem:[%s3936] sm:$0xff]
        %v3938 = vld [vmem:[%s3936 + $0x8] sm:$0xff]
        %v3939 = vld [vmem:[%s3936 + $0x10] sm:$0xff]
        %v3940 = vld [vmem:[%s3936 + $0x18] sm:$0xff]
        %v3941 = vld [vmem:[%s3936 + $0x20] sm:$0xff]
        %v3942 = vld [vmem:[%s3936 + $0x28] sm:$0xff]
        %v3943 = vld [vmem:[%s3936 + $0x30] sm:$0xff]
        %v3944 = vld [vmem:[%s3936 + $0x38] sm:$0xff]
        %v3946 = vsel %vm384, %v3904, 0
        %v3949 = vsel %vm384, %v3905, 0
        %v3952 = vsel %vm384, %v3906, 0
        %v3955 = vsel %vm384, %v3907, 0
        %v3958 = vsel %vm384, %v3908, 0
        %v3961 = vsel %vm384, %v3909, 0
        %v3964 = vsel %vm384, %v3910, 0
        %v3967 = vsel %vm384, %v3911, 0
        %v3970 = vsel %vm384, %v3912, 0
        %v3973 = vsel %vm384, %v3913, 0
        %v3976 = vsel %vm384, %v3914, 0
        %v3979 = vsel %vm384, %v3915, 0
        %v3982 = vsel %vm384, %v3916, 0
        %v3985 = vsel %vm384, %v3917, 0
        %v3988 = vsel %vm384, %v3918, 0
        %v3991 = vsel %vm384, %v3919, 0
        %v3994 = vsel %vm384, %v3920, 0
        %v3997 = vsel %vm384, %v3921, 0
        %v4000 = vsel %vm384, %v3922, 0
        %v4003 = vsel %vm384, %v3923, 0
        %v4006 = vsel %vm384, %v3924, 0
        %v4009 = vsel %vm384, %v3925, 0
        %v4012 = vsel %vm384, %v3926, 0
        %v4015 = vsel %vm384, %v3927, 0
        %v4018 = vsel %vm384, %v3928, 0
        %v4021 = vsel %vm384, %v3929, 0
        %v4024 = vsel %vm384, %v3930, 0
        %v4027 = vsel %vm384, %v3931, 0
        %v4030 = vsel %vm384, %v3932, 0
        %v4033 = vsel %vm384, %v3933, 0
        %v4036 = vsel %vm384, %v3934, 0
        %v4039 = vsel %vm384, %v3935, 0
        %4041 = vmatprep.subr.mxu0 0.0
        %4042 = vmatpush1.msra.mxu0 %v3937
        %4043 = vmatprep.subr.mxu0 0.0
        %4044 = vmatpush1.msra.mxu0 %v3938
        %4045 = vmatprep.subr.mxu0 0.0
        %4046 = vmatpush1.msra.mxu0 %v3939
        %4047 = vmatprep.subr.mxu0 0.0
        %4048 = vmatpush1.msra.mxu0 %v3940
        %4049 = vmatprep.subr.mxu0 0.0
        %4050 = vmatpush1.msra.mxu0 %v3941
        %4051 = vmatprep.subr.mxu0 0.0
        %4052 = vmatpush1.msra.mxu0 %v3942
        %4053 = vmatprep.subr.mxu0 0.0
        %4054 = vmatpush1.msra.mxu0 %v3943
        %4055 = vmatprep.subr.mxu0 0.0
        %4056 = vmatpush1.msra.mxu0 %v3944
        %4057 = vmatprep.subr.mxu0 0.0
        %4058 = vmatpush1.msra.mxu0 0.0
        %4059 = vmatprep.subr.mxu0 0.0
        %4060 = vmatpush1.msra.mxu0 0.0
        %4061 = vmatprep.subr.mxu0 0.0
        %4062 = vmatpush1.msra.mxu0 0.0
        %4063 = vmatprep.subr.mxu0 0.0
        %4064 = vmatpush1.msra.mxu0 0.0
        %4065 = vmatprep.subr.mxu0 0.0
        %4066 = vmatpush1.msra.mxu0 0.0
        %4067 = vmatprep.subr.mxu0 0.0
        %4068 = vmatpush1.msra.mxu0 0.0
        %4069 = vmatprep.subr.mxu0 0.0
        %4070 = vmatpush1.msra.mxu0 0.0
        %4071 = vmatprep.subr.mxu0 0.0
        %4072 = vmatpush1.msra.mxu0 0.0
        %4073 = vmatprep.subr.mxu0 0.0
        %4074 = vmatpush1.msra.mxu0 0.0
        %4075 = vmatprep.subr.mxu0 0.0
        %4076 = vmatpush1.msra.mxu0 0.0
        %4077 = vmatprep.subr.mxu0 0.0
        %4078 = vmatpush1.msra.mxu0 0.0
        %4079 = vmatprep.subr.mxu0 0.0
        %4080 = vmatpush1.msra.mxu0 0.0
        %4081 = vmatprep.subr.mxu0 0.0
        %4082 = vmatpush1.msra.mxu0 0.0
        %4083 = vmatprep.subr.mxu0 0.0
        %4084 = vmatpush1.msra.mxu0 0.0
        %4085 = vmatprep.subr.mxu0 0.0
        %4086 = vmatpush1.msra.mxu0 0.0
        %4087 = vmatprep.subr.mxu0 0.0
        %4088 = vmatpush1.msra.mxu0 0.0
        %4089 = vmatprep.subr.mxu0 0.0
        %4090 = vmatpush1.msra.mxu0 0.0
        %4091 = vmatprep.subr.mxu0 0.0
        %4092 = vmatpush1.msra.mxu0 0.0
        %4093 = vmatprep.subr.mxu0 0.0
        %4094 = vmatpush1.msra.mxu0 0.0
        %4095 = vmatprep.subr.mxu0 0.0
        %4096 = vmatpush1.msra.mxu0 0.0
        %4097 = vmatprep.subr.mxu0 0.0
        %4098 = vmatpush1.msra.mxu0 0.0
        %4099 = vmatprep.subr.mxu0 0.0
        %4100 = vmatpush1.msra.mxu0 0.0
        %4101 = vmatprep.subr.mxu0 0.0
        %4102 = vmatpush1.msra.mxu0 0.0
        %4103 = vmatprep.subr.mxu0 0.0
        %4104 = vmatpush1.msra.mxu0 0.0
        %4105 = vmatprep.mubr.f32.mxu0 0.0
        %4106 = vmatmul.mubr.f32.gmra.mrb[0].mxu0 %v3946
        %v4107 = vpop.f32.mrb[0].mxu0
        %v4108 = vadd.f32 0.0, %v4107
        %v4109 = vpop.f32.mrb[0].mxu0
        %4110 = vmatprep.mubr.f32.mxu0 0.0
        %4111 = vmatmul.mubr.f32.gmra.mrb[0].mxu0 %v3949
        %v4112 = vpop.f32.mrb[0].mxu0
        %v4113 = vadd.f32 0.0, %v4112
        %v4114 = vpop.f32.mrb[0].mxu0
        %4115 = vmatprep.mubr.f32.mxu0 0.0
        %4116 = vmatmul.mubr.f32.gmra.mrb[0].mxu0 %v3952
        %v4117 = vpop.f32.mrb[0].mxu0
        %v4118 = vadd.f32 0.0, %v4117
        %v4119 = vpop.f32.mrb[0].mxu0
        %4120 = vmatprep.mubr.f32.mxu0 0.0
        %4121 = vmatmul.mubr.f32.gmra.mrb[0].mxu0 %v3955
        %v4122 = vpop.f32.mrb[0].mxu0
        %v4123 = vadd.f32 0.0, %v4122
        %v4124 = vpop.f32.mrb[0].mxu0
        %4125 = vmatprep.mubr.f32.mxu0 0.0
        %4126 = vmatmul.mubr.f32.gmra.mrb[0].mxu0 %v3958
        %v4127 = vpop.f32.mrb[0].mxu0
        %v4128 = vadd.f32 0.0, %v4127
        %v4129 = vpop.f32.mrb[0].mxu0
        %4130 = vmatprep.mubr.f32.mxu0 0.0
        %4131 = vmatmul.mubr.f32.gmra.mrb[0].mxu0 %v3961
        %v4132 = vpop.f32.mrb[0].mxu0
        %v4133 = vadd.f32 0.0, %v4132
        %v4134 = vpop.f32.mrb[0].mxu0
        %4135 = vmatprep.mubr.f32.mxu0 0.0
        %4136 = vmatmul.mubr.f32.gmra.mrb[0].mxu0 %v3964
        %v4137 = vpop.f32.mrb[0].mxu0
        %v4138 = vadd.f32 0.0, %v4137
        %v4139 = vpop.f32.mrb[0].mxu0
        %4140 = vmatprep.mubr.f32.mxu0 0.0
        %4141 = vmatmul.mubr.f32.gmra.mrb[0].mxu0 %v3967
        %v4142 = vpop.f32.mrb[0].mxu0
        %v4143 = vadd.f32 0.0, %v4142
        %v4144 = vpop.f32.mrb[0].mxu0
        %4145 = vmatprep.mubr.f32.mxu0 0.0
        %4146 = vmatmul.mubr.f32.gmra.mrb[0].mxu0 %v3970
        %v4147 = vpop.f32.mrb[0].mxu0
        %v4148 = vadd.f32 0.0, %v4147
        %v4149 = vpop.f32.mrb[0].mxu0
        %4150 = vmatprep.mubr.f32.mxu0 0.0
        %4151 = vmatmul.mubr.f32.gmra.mrb[0].mxu0 %v3973
        %v4152 = vpop.f32.mrb[0].mxu0
        %v4153 = vadd.f32 0.0, %v4152
        %v4154 = vpop.f32.mrb[0].mxu0
        %4155 = vmatprep.mubr.f32.mxu0 0.0
        %4156 = vmatmul.mubr.f32.gmra.mrb[0].mxu0 %v3976
        %v4157 = vpop.f32.mrb[0].mxu0
        %v4158 = vadd.f32 0.0, %v4157
        %v4159 = vpop.f32.mrb[0].mxu0
        %4160 = vmatprep.mubr.f32.mxu0 0.0
        %4161 = vmatmul.mubr.f32.gmra.mrb[0].mxu0 %v3979
        %v4162 = vpop.f32.mrb[0].mxu0
        %v4163 = vadd.f32 0.0, %v4162
        %v4164 = vpop.f32.mrb[0].mxu0
        %4165 = vmatprep.mubr.f32.mxu0 0.0
        %4166 = vmatmul.mubr.f32.gmra.mrb[0].mxu0 %v3982
        %v4167 = vpop.f32.mrb[0].mxu0
        %v4168 = vadd.f32 0.0, %v4167
        %v4169 = vpop.f32.mrb[0].mxu0
        %4170 = vmatprep.mubr.f32.mxu0 0.0
        %4171 = vmatmul.mubr.f32.gmra.mrb[0].mxu0 %v3985
        %v4172 = vpop.f32.mrb[0].mxu0
        %v4173 = vadd.f32 0.0, %v4172
        %v4174 = vpop.f32.mrb[0].mxu0
        %4175 = vmatprep.mubr.f32.mxu0 0.0
        %4176 = vmatmul.mubr.f32.gmra.mrb[0].mxu0 %v3988
        %v4177 = vpop.f32.mrb[0].mxu0
        %v4178 = vadd.f32 0.0, %v4177
        %v4179 = vpop.f32.mrb[0].mxu0
        %4180 = vmatprep.mubr.f32.mxu0 0.0
        %4181 = vmatmul.mubr.f32.gmra.mrb[0].mxu0 %v3991
        %v4182 = vpop.f32.mrb[0].mxu0
        %v4183 = vadd.f32 0.0, %v4182
        %v4184 = vpop.f32.mrb[0].mxu0
        %4185 = vmatprep.mubr.f32.mxu0 0.0
        %4186 = vmatmul.mubr.f32.gmra.mrb[0].mxu0 %v3994
        %v4187 = vpop.f32.mrb[0].mxu0
        %v4188 = vadd.f32 0.0, %v4187
        %v4189 = vpop.f32.mrb[0].mxu0
        %4190 = vmatprep.mubr.f32.mxu0 0.0
        %4191 = vmatmul.mubr.f32.gmra.mrb[0].mxu0 %v3997
        %v4192 = vpop.f32.mrb[0].mxu0
        %v4193 = vadd.f32 0.0, %v4192
        %v4194 = vpop.f32.mrb[0].mxu0
        %4195 = vmatprep.mubr.f32.mxu0 0.0
        %4196 = vmatmul.mubr.f32.gmra.mrb[0].mxu0 %v4000
        %v4197 = vpop.f32.mrb[0].mxu0
        %v4198 = vadd.f32 0.0, %v4197
        %v4199 = vpop.f32.mrb[0].mxu0
        %4200 = vmatprep.mubr.f32.mxu0 0.0
        %4201 = vmatmul.mubr.f32.gmra.mrb[0].mxu0 %v4003
        %v4202 = vpop.f32.mrb[0].mxu0
        %v4203 = vadd.f32 0.0, %v4202
        %v4204 = vpop.f32.mrb[0].mxu0
        %4205 = vmatprep.mubr.f32.mxu0 0.0
        %4206 = vmatmul.mubr.f32.gmra.mrb[0].mxu0 %v4006
        %v4207 = vpop.f32.mrb[0].mxu0
        %v4208 = vadd.f32 0.0, %v4207
        %v4209 = vpop.f32.mrb[0].mxu0
        %4210 = vmatprep.mubr.f32.mxu0 0.0
        %4211 = vmatmul.mubr.f32.gmra.mrb[0].mxu0 %v4009
        %v4212 = vpop.f32.mrb[0].mxu0
        %v4213 = vadd.f32 0.0, %v4212
        %v4214 = vpop.f32.mrb[0].mxu0
        %4215 = vmatprep.mubr.f32.mxu0 0.0
        %4216 = vmatmul.mubr.f32.gmra.mrb[0].mxu0 %v4012
        %v4217 = vpop.f32.mrb[0].mxu0
        %v4218 = vadd.f32 0.0, %v4217
        %v4219 = vpop.f32.mrb[0].mxu0
        %4220 = vmatprep.mubr.f32.mxu0 0.0
        %4221 = vmatmul.mubr.f32.gmra.mrb[0].mxu0 %v4015
        %v4222 = vpop.f32.mrb[0].mxu0
        %v4223 = vadd.f32 0.0, %v4222
        %v4224 = vpop.f32.mrb[0].mxu0
        %4225 = vmatprep.mubr.f32.mxu0 0.0
        %4226 = vmatmul.mubr.f32.gmra.mrb[0].mxu0 %v4018
        %v4227 = vpop.f32.mrb[0].mxu0
        %v4228 = vadd.f32 0.0, %v4227
        %v4229 = vpop.f32.mrb[0].mxu0
        %4230 = vmatprep.mubr.f32.mxu0 0.0
        %4231 = vmatmul.mubr.f32.gmra.mrb[0].mxu0 %v4021
        %v4232 = vpop.f32.mrb[0].mxu0
        %v4233 = vadd.f32 0.0, %v4232
        %v4234 = vpop.f32.mrb[0].mxu0
        %4235 = vmatprep.mubr.f32.mxu0 0.0
        %4236 = vmatmul.mubr.f32.gmra.mrb[0].mxu0 %v4024
        %v4237 = vpop.f32.mrb[0].mxu0
        %v4238 = vadd.f32 0.0, %v4237
        %v4239 = vpop.f32.mrb[0].mxu0
        %4240 = vmatprep.mubr.f32.mxu0 0.0
        %4241 = vmatmul.mubr.f32.gmra.mrb[0].mxu0 %v4027
        %v4242 = vpop.f32.mrb[0].mxu0
        %v4243 = vadd.f32 0.0, %v4242
        %v4244 = vpop.f32.mrb[0].mxu0
        %4245 = vmatprep.mubr.f32.mxu0 0.0
        %4246 = vmatmul.mubr.f32.gmra.mrb[0].mxu0 %v4030
        %v4247 = vpop.f32.mrb[0].mxu0
        %v4248 = vadd.f32 0.0, %v4247
        %v4249 = vpop.f32.mrb[0].mxu0
        %4250 = vmatprep.mubr.f32.mxu0 0.0
        %4251 = vmatmul.mubr.f32.gmra.mrb[0].mxu0 %v4033
        %v4252 = vpop.f32.mrb[0].mxu0
        %v4253 = vadd.f32 0.0, %v4252
        %v4254 = vpop.f32.mrb[0].mxu0
        %4255 = vmatprep.mubr.f32.mxu0 0.0
        %4256 = vmatmul.mubr.f32.gmra.mrb[0].mxu0 %v4036
        %v4257 = vpop.f32.mrb[0].mxu0
        %v4258 = vadd.f32 0.0, %v4257
        %v4259 = vpop.f32.mrb[0].mxu0
        %4260 = vmatprep.mubr.f32.mxu0 0.0
        %4261 = vmatmul.mubr.f32.gmra.mrb[0].mxu0 %v4039
        %v4262 = vpop.f32.mrb[0].mxu0
        %v4263 = vadd.f32 0.0, %v4262
        %v4264 = vpop.f32.mrb[0].mxu0
        %4265 = vdwg.mxu0
        %v4266 = vadd.f32 %v3808, %v4108
        %v4267 = vadd.f32 %v3809, %v4113
        %v4268 = vadd.f32 %v3810, %v4118
        %v4269 = vadd.f32 %v3811, %v4123
        %v4270 = vadd.f32 %v3812, %v4128
        %v4271 = vadd.f32 %v3813, %v4133
        %v4272 = vadd.f32 %v3814, %v4138
        %v4273 = vadd.f32 %v3815, %v4143
        %v4274 = vadd.f32 %v3816, %v4148
        %v4275 = vadd.f32 %v3817, %v4153
        %v4276 = vadd.f32 %v3818, %v4158
        %v4277 = vadd.f32 %v3819, %v4163
        %v4278 = vadd.f32 %v3820, %v4168
        %v4279 = vadd.f32 %v3821, %v4173
        %v4280 = vadd.f32 %v3822, %v4178
        %v4281 = vadd.f32 %v3823, %v4183
        %v4282 = vadd.f32 %v3824, %v4188
        %v4283 = vadd.f32 %v3825, %v4193
        %v4284 = vadd.f32 %v3826, %v4198
        %v4285 = vadd.f32 %v3827, %v4203
        %v4286 = vadd.f32 %v3828, %v4208
        %v4287 = vadd.f32 %v3829, %v4213
        %v4288 = vadd.f32 %v3830, %v4218
        %v4289 = vadd.f32 %v3831, %v4223
        %v4290 = vadd.f32 %v3832, %v4228
        %v4291 = vadd.f32 %v3833, %v4233
        %v4292 = vadd.f32 %v3834, %v4238
        %v4293 = vadd.f32 %v3835, %v4243
        %v4294 = vadd.f32 %v3836, %v4248
        %v4295 = vadd.f32 %v3837, %v4253
        %v4296 = vadd.f32 %v3838, %v4258
        %v4297 = vadd.f32 %v3839, %v4263
        %v4298 = vld [vmem:[%s3381 + $0x2] sm:$0xff]
        %v4299 = vld [vmem:[%s3381 + $0xa] sm:$0xff]
        %v4300 = vld [vmem:[%s3381 + $0x1a] sm:$0xff]
        %v4301 = vld [vmem:[%s3381 + $0x22] sm:$0xff]
        %v4302 = vld [vmem:[%s3381 + $0x32] sm:$0xff]
        %v4303 = vld [vmem:[%s3381 + $0x3a] sm:$0xff]
        %v4304 = vld [vmem:[%s3381 + $0x4a] sm:$0xff]
        %v4305 = vld [vmem:[%s3381 + $0x52] sm:$0xff]
        %v4306 = vld [vmem:[%s3381 + $0x62] sm:$0xff]
        %v4307 = vld [vmem:[%s3381 + $0x6a] sm:$0xff]
        %v4308 = vld [vmem:[%s3381 + $0x7a] sm:$0xff]
        %v4309 = vld [vmem:[%s3381 + $0x82] sm:$0xff]
        %v4310 = vld [vmem:[%s3381 + $0x92] sm:$0xff]
        %v4311 = vld [vmem:[%s3381 + $0x9a] sm:$0xff]
        %v4312 = vld [vmem:[%s3381 + $0xaa] sm:$0xff]
        %v4313 = vld [vmem:[%s3381 + $0xb2] sm:$0xff]
        %v4314 = vld [vmem:[%s3381 + $0xc2] sm:$0xff]
        %v4315 = vld [vmem:[%s3381 + $0xca] sm:$0xff]
        %v4316 = vld [vmem:[%s3381 + $0xda] sm:$0xff]
        %v4317 = vld [vmem:[%s3381 + $0xe2] sm:$0xff]
        %v4318 = vld [vmem:[%s3381 + $0xf2] sm:$0xff]
        %v4319 = vld [vmem:[%s3381 + $0xfa] sm:$0xff]
        %v4320 = vld [vmem:[%s3381 + $0x10a] sm:$0xff]
        %v4321 = vld [vmem:[%s3381 + $0x112] sm:$0xff]
        %v4322 = vld [vmem:[%s3381 + $0x122] sm:$0xff]
        %v4323 = vld [vmem:[%s3381 + $0x12a] sm:$0xff]
        %v4324 = vld [vmem:[%s3381 + $0x13a] sm:$0xff]
        %v4325 = vld [vmem:[%s3381 + $0x142] sm:$0xff]
        %v4326 = vld [vmem:[%s3381 + $0x152] sm:$0xff]
        %v4327 = vld [vmem:[%s3381 + $0x15a] sm:$0xff]
        %v4328 = vld [vmem:[%s3381 + $0x16a] sm:$0xff]
        %v4329 = vld [vmem:[%s3381 + $0x172] sm:$0xff]
        %v4330 = vmul.f32 %v4298, %v754
        %v4331 = vmul.f32 %v4299, %v754
        %v4332 = vmul.f32 %v4300, %v754
        %v4333 = vmul.f32 %v4301, %v754
        %v4334 = vmul.f32 %v4302, %v754
        %v4335 = vmul.f32 %v4303, %v754
        %v4336 = vmul.f32 %v4304, %v754
        %v4337 = vmul.f32 %v4305, %v754
        %v4338 = vmul.f32 %v4306, %v754
        %v4339 = vmul.f32 %v4307, %v754
        %v4340 = vmul.f32 %v4308, %v754
        %v4341 = vmul.f32 %v4309, %v754
        %v4342 = vmul.f32 %v4310, %v754
        %v4343 = vmul.f32 %v4311, %v754
        %v4344 = vmul.f32 %v4312, %v754
        %v4345 = vmul.f32 %v4313, %v754
        %v4346 = vmul.f32 %v4314, %v754
        %v4347 = vmul.f32 %v4315, %v754
        %v4348 = vmul.f32 %v4316, %v754
        %v4349 = vmul.f32 %v4317, %v754
        %v4350 = vmul.f32 %v4318, %v754
        %v4351 = vmul.f32 %v4319, %v754
        %v4352 = vmul.f32 %v4320, %v754
        %v4353 = vmul.f32 %v4321, %v754
        %v4354 = vmul.f32 %v4322, %v754
        %v4355 = vmul.f32 %v4323, %v754
        %v4356 = vmul.f32 %v4324, %v754
        %v4357 = vmul.f32 %v4325, %v754
        %v4358 = vmul.f32 %v4326, %v754
        %v4359 = vmul.f32 %v4327, %v754
        %v4360 = vmul.f32 %v4328, %v754
        %v4361 = vmul.f32 %v4329, %v754
        %v4362 = vadd.f32 %v4330, %v792
        %v4363 = vadd.f32 %v4331, %v792
        %v4364 = vadd.f32 %v4332, %v792
        %v4365 = vadd.f32 %v4333, %v792
        %v4366 = vadd.f32 %v4334, %v792
        %v4367 = vadd.f32 %v4335, %v792
        %v4368 = vadd.f32 %v4336, %v792
        %v4369 = vadd.f32 %v4337, %v792
        %v4370 = vadd.f32 %v4338, %v792
        %v4371 = vadd.f32 %v4339, %v792
        %v4372 = vadd.f32 %v4340, %v792
        %v4373 = vadd.f32 %v4341, %v792
        %v4374 = vadd.f32 %v4342, %v792
        %v4375 = vadd.f32 %v4343, %v792
        %v4376 = vadd.f32 %v4344, %v792
        %v4377 = vadd.f32 %v4345, %v792
        %v4378 = vadd.f32 %v4346, %v792
        %v4379 = vadd.f32 %v4347, %v792
        %v4380 = vadd.f32 %v4348, %v792
        %v4381 = vadd.f32 %v4349, %v792
        %v4382 = vadd.f32 %v4350, %v792
        %v4383 = vadd.f32 %v4351, %v792
        %v4384 = vadd.f32 %v4352, %v792
        %v4385 = vadd.f32 %v4353, %v792
        %v4386 = vadd.f32 %v4354, %v792
        %v4387 = vadd.f32 %v4355, %v792
        %v4388 = vadd.f32 %v4356, %v792
        %v4389 = vadd.f32 %v4357, %v792
        %v4390 = vadd.f32 %v4358, %v792
        %v4391 = vadd.f32 %v4359, %v792
        %v4392 = vadd.f32 %v4360, %v792
        %v4393 = vadd.f32 %v4361, %v792
        %s4394 = scalar_lea.vmem %s5, 512
        %v4395 = vld [vmem:[%s4394] sm:$0xff]
        %v4396 = vld [vmem:[%s4394 + $0x8] sm:$0xff]
        %v4397 = vld [vmem:[%s4394 + $0x10] sm:$0xff]
        %v4398 = vld [vmem:[%s4394 + $0x18] sm:$0xff]
        %v4399 = vld [vmem:[%s4394 + $0x20] sm:$0xff]
        %v4400 = vld [vmem:[%s4394 + $0x28] sm:$0xff]
        %v4401 = vld [vmem:[%s4394 + $0x30] sm:$0xff]
        %v4402 = vld [vmem:[%s4394 + $0x38] sm:$0xff]
        %v4404 = vsel %vm384, %v4362, 0
        %v4407 = vsel %vm384, %v4363, 0
        %v4410 = vsel %vm384, %v4364, 0
        %v4413 = vsel %vm384, %v4365, 0
        %v4416 = vsel %vm384, %v4366, 0
        %v4419 = vsel %vm384, %v4367, 0
        %v4422 = vsel %vm384, %v4368, 0
        %v4425 = vsel %vm384, %v4369, 0
        %v4428 = vsel %vm384, %v4370, 0
        %v4431 = vsel %vm384, %v4371, 0
        %v4434 = vsel %vm384, %v4372, 0
        %v4437 = vsel %vm384, %v4373, 0
        %v4440 = vsel %vm384, %v4374, 0
        %v4443 = vsel %vm384, %v4375, 0
        %v4446 = vsel %vm384, %v4376, 0
        %v4449 = vsel %vm384, %v4377, 0
        %v4452 = vsel %vm384, %v4378, 0
        %v4455 = vsel %vm384, %v4379, 0
        %v4458 = vsel %vm384, %v4380, 0
        %v4461 = vsel %vm384, %v4381, 0
        %v4464 = vsel %vm384, %v4382, 0
        %v4467 = vsel %vm384, %v4383, 0
        %v4470 = vsel %vm384, %v4384, 0
        %v4473 = vsel %vm384, %v4385, 0
        %v4476 = vsel %vm384, %v4386, 0
        %v4479 = vsel %vm384, %v4387, 0
        %v4482 = vsel %vm384, %v4388, 0
        %v4485 = vsel %vm384, %v4389, 0
        %v4488 = vsel %vm384, %v4390, 0
        %v4491 = vsel %vm384, %v4391, 0
        %v4494 = vsel %vm384, %v4392, 0
        %v4497 = vsel %vm384, %v4393, 0
        %4499 = vmatprep.subr.mxu0 0.0
        %4500 = vmatpush1.msra.mxu0 %v4395
        %4501 = vmatprep.subr.mxu0 0.0
        %4502 = vmatpush1.msra.mxu0 %v4396
        %4503 = vmatprep.subr.mxu0 0.0
        %4504 = vmatpush1.msra.mxu0 %v4397
        %4505 = vmatprep.subr.mxu0 0.0
        %4506 = vmatpush1.msra.mxu0 %v4398
        %4507 = vmatprep.subr.mxu0 0.0
        %4508 = vmatpush1.msra.mxu0 %v4399
        %4509 = vmatprep.subr.mxu0 0.0
        %4510 = vmatpush1.msra.mxu0 %v4400
        %4511 = vmatprep.subr.mxu0 0.0
        %4512 = vmatpush1.msra.mxu0 %v4401
        %4513 = vmatprep.subr.mxu0 0.0
        %4514 = vmatpush1.msra.mxu0 %v4402
        %4515 = vmatprep.subr.mxu0 0.0
        %4516 = vmatpush1.msra.mxu0 0.0
        %4517 = vmatprep.subr.mxu0 0.0
        %4518 = vmatpush1.msra.mxu0 0.0
        %4519 = vmatprep.subr.mxu0 0.0
        %4520 = vmatpush1.msra.mxu0 0.0
        %4521 = vmatprep.subr.mxu0 0.0
        %4522 = vmatpush1.msra.mxu0 0.0
        %4523 = vmatprep.subr.mxu0 0.0
        %4524 = vmatpush1.msra.mxu0 0.0
        %4525 = vmatprep.subr.mxu0 0.0
        %4526 = vmatpush1.msra.mxu0 0.0
        %4527 = vmatprep.subr.mxu0 0.0
        %4528 = vmatpush1.msra.mxu0 0.0
        %4529 = vmatprep.subr.mxu0 0.0
        %4530 = vmatpush1.msra.mxu0 0.0
        %4531 = vmatprep.subr.mxu0 0.0
        %4532 = vmatpush1.msra.mxu0 0.0
        %4533 = vmatprep.subr.mxu0 0.0
        %4534 = vmatpush1.msra.mxu0 0.0
        %4535 = vmatprep.subr.mxu0 0.0
        %4536 = vmatpush1.msra.mxu0 0.0
        %4537 = vmatprep.subr.mxu0 0.0
        %4538 = vmatpush1.msra.mxu0 0.0
        %4539 = vmatprep.subr.mxu0 0.0
        %4540 = vmatpush1.msra.mxu0 0.0
        %4541 = vmatprep.subr.mxu0 0.0
        %4542 = vmatpush1.msra.mxu0 0.0
        %4543 = vmatprep.subr.mxu0 0.0
        %4544 = vmatpush1.msra.mxu0 0.0
        %4545 = vmatprep.subr.mxu0 0.0
        %4546 = vmatpush1.msra.mxu0 0.0
        %4547 = vmatprep.subr.mxu0 0.0
        %4548 = vmatpush1.msra.mxu0 0.0
        %4549 = vmatprep.subr.mxu0 0.0
        %4550 = vmatpush1.msra.mxu0 0.0
        %4551 = vmatprep.subr.mxu0 0.0
        %4552 = vmatpush1.msra.mxu0 0.0
        %4553 = vmatprep.subr.mxu0 0.0
        %4554 = vmatpush1.msra.mxu0 0.0
        %4555 = vmatprep.subr.mxu0 0.0
        %4556 = vmatpush1.msra.mxu0 0.0
        %4557 = vmatprep.subr.mxu0 0.0
        %4558 = vmatpush1.msra.mxu0 0.0
        %4559 = vmatprep.subr.mxu0 0.0
        %4560 = vmatpush1.msra.mxu0 0.0
        %4561 = vmatprep.subr.mxu0 0.0
        %4562 = vmatpush1.msra.mxu0 0.0
        %4563 = vmatprep.mubr.f32.mxu0 0.0
        %4564 = vmatmul.mubr.f32.gmra.mrb[0].mxu0 %v4404
        %v4565 = vpop.f32.mrb[0].mxu0
        %v4566 = vadd.f32 0.0, %v4565
        %v4567 = vpop.f32.mrb[0].mxu0
        %4568 = vmatprep.mubr.f32.mxu0 0.0
        %4569 = vmatmul.mubr.f32.gmra.mrb[0].mxu0 %v4407
        %v4570 = vpop.f32.mrb[0].mxu0
        %v4571 = vadd.f32 0.0, %v4570
        %v4572 = vpop.f32.mrb[0].mxu0
        %4573 = vmatprep.mubr.f32.mxu0 0.0
        %4574 = vmatmul.mubr.f32.gmra.mrb[0].mxu0 %v4410
        %v4575 = vpop.f32.mrb[0].mxu0
        %v4576 = vadd.f32 0.0, %v4575
        %v4577 = vpop.f32.mrb[0].mxu0
        %4578 = vmatprep.mubr.f32.mxu0 0.0
        %4579 = vmatmul.mubr.f32.gmra.mrb[0].mxu0 %v4413
        %v4580 = vpop.f32.mrb[0].mxu0
        %v4581 = vadd.f32 0.0, %v4580
        %v4582 = vpop.f32.mrb[0].mxu0
        %4583 = vmatprep.mubr.f32.mxu0 0.0
        %4584 = vmatmul.mubr.f32.gmra.mrb[0].mxu0 %v4416
        %v4585 = vpop.f32.mrb[0].mxu0
        %v4586 = vadd.f32 0.0, %v4585
        %v4587 = vpop.f32.mrb[0].mxu0
        %4588 = vmatprep.mubr.f32.mxu0 0.0
        %4589 = vmatmul.mubr.f32.gmra.mrb[0].mxu0 %v4419
        %v4590 = vpop.f32.mrb[0].mxu0
        %v4591 = vadd.f32 0.0, %v4590
        %v4592 = vpop.f32.mrb[0].mxu0
        %4593 = vmatprep.mubr.f32.mxu0 0.0
        %4594 = vmatmul.mubr.f32.gmra.mrb[0].mxu0 %v4422
        %v4595 = vpop.f32.mrb[0].mxu0
        %v4596 = vadd.f32 0.0, %v4595
        %v4597 = vpop.f32.mrb[0].mxu0
        %4598 = vmatprep.mubr.f32.mxu0 0.0
        %4599 = vmatmul.mubr.f32.gmra.mrb[0].mxu0 %v4425
        %v4600 = vpop.f32.mrb[0].mxu0
        %v4601 = vadd.f32 0.0, %v4600
        %v4602 = vpop.f32.mrb[0].mxu0
        %4603 = vmatprep.mubr.f32.mxu0 0.0
        %4604 = vmatmul.mubr.f32.gmra.mrb[0].mxu0 %v4428
        %v4605 = vpop.f32.mrb[0].mxu0
        %v4606 = vadd.f32 0.0, %v4605
        %v4607 = vpop.f32.mrb[0].mxu0
        %4608 = vmatprep.mubr.f32.mxu0 0.0
        %4609 = vmatmul.mubr.f32.gmra.mrb[0].mxu0 %v4431
        %v4610 = vpop.f32.mrb[0].mxu0
        %v4611 = vadd.f32 0.0, %v4610
        %v4612 = vpop.f32.mrb[0].mxu0
        %4613 = vmatprep.mubr.f32.mxu0 0.0
        %4614 = vmatmul.mubr.f32.gmra.mrb[0].mxu0 %v4434
        %v4615 = vpop.f32.mrb[0].mxu0
        %v4616 = vadd.f32 0.0, %v4615
        %v4617 = vpop.f32.mrb[0].mxu0
        %4618 = vmatprep.mubr.f32.mxu0 0.0
        %4619 = vmatmul.mubr.f32.gmra.mrb[0].mxu0 %v4437
        %v4620 = vpop.f32.mrb[0].mxu0
        %v4621 = vadd.f32 0.0, %v4620
        %v4622 = vpop.f32.mrb[0].mxu0
        %4623 = vmatprep.mubr.f32.mxu0 0.0
        %4624 = vmatmul.mubr.f32.gmra.mrb[0].mxu0 %v4440
        %v4625 = vpop.f32.mrb[0].mxu0
        %v4626 = vadd.f32 0.0, %v4625
        %v4627 = vpop.f32.mrb[0].mxu0
        %4628 = vmatprep.mubr.f32.mxu0 0.0
        %4629 = vmatmul.mubr.f32.gmra.mrb[0].mxu0 %v4443
        %v4630 = vpop.f32.mrb[0].mxu0
        %v4631 = vadd.f32 0.0, %v4630
        %v4632 = vpop.f32.mrb[0].mxu0
        %4633 = vmatprep.mubr.f32.mxu0 0.0
        %4634 = vmatmul.mubr.f32.gmra.mrb[0].mxu0 %v4446
        %v4635 = vpop.f32.mrb[0].mxu0
        %v4636 = vadd.f32 0.0, %v4635
        %v4637 = vpop.f32.mrb[0].mxu0
        %4638 = vmatprep.mubr.f32.mxu0 0.0
        %4639 = vmatmul.mubr.f32.gmra.mrb[0].mxu0 %v4449
        %v4640 = vpop.f32.mrb[0].mxu0
        %v4641 = vadd.f32 0.0, %v4640
        %v4642 = vpop.f32.mrb[0].mxu0
        %4643 = vmatprep.mubr.f32.mxu0 0.0
        %4644 = vmatmul.mubr.f32.gmra.mrb[0].mxu0 %v4452
        %v4645 = vpop.f32.mrb[0].mxu0
        %v4646 = vadd.f32 0.0, %v4645
        %v4647 = vpop.f32.mrb[0].mxu0
        %4648 = vmatprep.mubr.f32.mxu0 0.0
        %4649 = vmatmul.mubr.f32.gmra.mrb[0].mxu0 %v4455
        %v4650 = vpop.f32.mrb[0].mxu0
        %v4651 = vadd.f32 0.0, %v4650
        %v4652 = vpop.f32.mrb[0].mxu0
        %4653 = vmatprep.mubr.f32.mxu0 0.0
        %4654 = vmatmul.mubr.f32.gmra.mrb[0].mxu0 %v4458
        %v4655 = vpop.f32.mrb[0].mxu0
        %v4656 = vadd.f32 0.0, %v4655
        %v4657 = vpop.f32.mrb[0].mxu0
        %4658 = vmatprep.mubr.f32.mxu0 0.0
        %4659 = vmatmul.mubr.f32.gmra.mrb[0].mxu0 %v4461
        %v4660 = vpop.f32.mrb[0].mxu0
        %v4661 = vadd.f32 0.0, %v4660
        %v4662 = vpop.f32.mrb[0].mxu0
        %4663 = vmatprep.mubr.f32.mxu0 0.0
        %4664 = vmatmul.mubr.f32.gmra.mrb[0].mxu0 %v4464
        %v4665 = vpop.f32.mrb[0].mxu0
        %v4666 = vadd.f32 0.0, %v4665
        %v4667 = vpop.f32.mrb[0].mxu0
        %4668 = vmatprep.mubr.f32.mxu0 0.0
        %4669 = vmatmul.mubr.f32.gmra.mrb[0].mxu0 %v4467
        %v4670 = vpop.f32.mrb[0].mxu0
        %v4671 = vadd.f32 0.0, %v4670
        %v4672 = vpop.f32.mrb[0].mxu0
        %4673 = vmatprep.mubr.f32.mxu0 0.0
        %4674 = vmatmul.mubr.f32.gmra.mrb[0].mxu0 %v4470
        %v4675 = vpop.f32.mrb[0].mxu0
        %v4676 = vadd.f32 0.0, %v4675
        %v4677 = vpop.f32.mrb[0].mxu0
        %4678 = vmatprep.mubr.f32.mxu0 0.0
        %4679 = vmatmul.mubr.f32.gmra.mrb[0].mxu0 %v4473
        %v4680 = vpop.f32.mrb[0].mxu0
        %v4681 = vadd.f32 0.0, %v4680
        %v4682 = vpop.f32.mrb[0].mxu0
        %4683 = vmatprep.mubr.f32.mxu0 0.0
        %4684 = vmatmul.mubr.f32.gmra.mrb[0].mxu0 %v4476
        %v4685 = vpop.f32.mrb[0].mxu0
        %v4686 = vadd.f32 0.0, %v4685
        %v4687 = vpop.f32.mrb[0].mxu0
        %4688 = vmatprep.mubr.f32.mxu0 0.0
        %4689 = vmatmul.mubr.f32.gmra.mrb[0].mxu0 %v4479
        %v4690 = vpop.f32.mrb[0].mxu0
        %v4691 = vadd.f32 0.0, %v4690
        %v4692 = vpop.f32.mrb[0].mxu0
        %4693 = vmatprep.mubr.f32.mxu0 0.0
        %4694 = vmatmul.mubr.f32.gmra.mrb[0].mxu0 %v4482
        %v4695 = vpop.f32.mrb[0].mxu0
        %v4696 = vadd.f32 0.0, %v4695
        %v4697 = vpop.f32.mrb[0].mxu0
        %4698 = vmatprep.mubr.f32.mxu0 0.0
        %4699 = vmatmul.mubr.f32.gmra.mrb[0].mxu0 %v4485
        %v4700 = vpop.f32.mrb[0].mxu0
        %v4701 = vadd.f32 0.0, %v4700
        %v4702 = vpop.f32.mrb[0].mxu0
        %4703 = vmatprep.mubr.f32.mxu0 0.0
        %4704 = vmatmul.mubr.f32.gmra.mrb[0].mxu0 %v4488
        %v4705 = vpop.f32.mrb[0].mxu0
        %v4706 = vadd.f32 0.0, %v4705
        %v4707 = vpop.f32.mrb[0].mxu0
        %4708 = vmatprep.mubr.f32.mxu0 0.0
        %4709 = vmatmul.mubr.f32.gmra.mrb[0].mxu0 %v4491
        %v4710 = vpop.f32.mrb[0].mxu0
        %v4711 = vadd.f32 0.0, %v4710
        %v4712 = vpop.f32.mrb[0].mxu0
        %4713 = vmatprep.mubr.f32.mxu0 0.0
        %4714 = vmatmul.mubr.f32.gmra.mrb[0].mxu0 %v4494
        %v4715 = vpop.f32.mrb[0].mxu0
        %v4716 = vadd.f32 0.0, %v4715
        %v4717 = vpop.f32.mrb[0].mxu0
        %4718 = vmatprep.mubr.f32.mxu0 0.0
        %4719 = vmatmul.mubr.f32.gmra.mrb[0].mxu0 %v4497
        %v4720 = vpop.f32.mrb[0].mxu0
        %v4721 = vadd.f32 0.0, %v4720
        %v4722 = vpop.f32.mrb[0].mxu0
        %4723 = vdwg.mxu0
        %v4724 = vadd.f32 %v4266, %v4566
        %v4725 = vadd.f32 %v4267, %v4571
        %v4726 = vadd.f32 %v4268, %v4576
        %v4727 = vadd.f32 %v4269, %v4581
        %v4728 = vadd.f32 %v4270, %v4586
        %v4729 = vadd.f32 %v4271, %v4591
        %v4730 = vadd.f32 %v4272, %v4596
        %v4731 = vadd.f32 %v4273, %v4601
        %v4732 = vadd.f32 %v4274, %v4606
        %v4733 = vadd.f32 %v4275, %v4611
        %v4734 = vadd.f32 %v4276, %v4616
        %v4735 = vadd.f32 %v4277, %v4621
        %v4736 = vadd.f32 %v4278, %v4626
        %v4737 = vadd.f32 %v4279, %v4631
        %v4738 = vadd.f32 %v4280, %v4636
        %v4739 = vadd.f32 %v4281, %v4641
        %v4740 = vadd.f32 %v4282, %v4646
        %v4741 = vadd.f32 %v4283, %v4651
        %v4742 = vadd.f32 %v4284, %v4656
        %v4743 = vadd.f32 %v4285, %v4661
        %v4744 = vadd.f32 %v4286, %v4666
        %v4745 = vadd.f32 %v4287, %v4671
        %v4746 = vadd.f32 %v4288, %v4676
        %v4747 = vadd.f32 %v4289, %v4681
        %v4748 = vadd.f32 %v4290, %v4686
        %v4749 = vadd.f32 %v4291, %v4691
        %v4750 = vadd.f32 %v4292, %v4696
        %v4751 = vadd.f32 %v4293, %v4701
        %v4752 = vadd.f32 %v4294, %v4706
        %v4753 = vadd.f32 %v4295, %v4711
        %v4754 = vadd.f32 %v4296, %v4716
        %v4755 = vadd.f32 %v4297, %v4721
        %v4756 = vld [vmem:[%s6] sm:$0x1]
        %v4758 = vlaneseq
        %v4759 = vshrl.u32 %v4758, 7
        %v4760 = vsub.s32 0, %v4759
        %v4761 = vrot.slane %v4756, %v4760
        %v4763 = vadd.f32 %v4724, %v4761
        %v4764 = vadd.f32 %v4725, %v4761
        %v4765 = vadd.f32 %v4726, %v4761
        %v4766 = vadd.f32 %v4727, %v4761
        %v4767 = vadd.f32 %v4728, %v4761
        %v4768 = vadd.f32 %v4729, %v4761
        %v4769 = vadd.f32 %v4730, %v4761
        %v4770 = vadd.f32 %v4731, %v4761
        %v4771 = vadd.f32 %v4732, %v4761
        %v4772 = vadd.f32 %v4733, %v4761
        %v4773 = vadd.f32 %v4734, %v4761
        %v4774 = vadd.f32 %v4735, %v4761
        %v4775 = vadd.f32 %v4736, %v4761
        %v4776 = vadd.f32 %v4737, %v4761
        %v4777 = vadd.f32 %v4738, %v4761
        %v4778 = vadd.f32 %v4739, %v4761
        %v4779 = vadd.f32 %v4740, %v4761
        %v4780 = vadd.f32 %v4741, %v4761
        %v4781 = vadd.f32 %v4742, %v4761
        %v4782 = vadd.f32 %v4743, %v4761
        %v4783 = vadd.f32 %v4744, %v4761
        %v4784 = vadd.f32 %v4745, %v4761
        %v4785 = vadd.f32 %v4746, %v4761
        %v4786 = vadd.f32 %v4747, %v4761
        %v4787 = vadd.f32 %v4748, %v4761
        %v4788 = vadd.f32 %v4749, %v4761
        %v4789 = vadd.f32 %v4750, %v4761
        %v4790 = vadd.f32 %v4751, %v4761
        %v4791 = vadd.f32 %v4752, %v4761
        %v4792 = vadd.f32 %v4753, %v4761
        %v4793 = vadd.f32 %v4754, %v4761
        %v4794 = vadd.f32 %v4755, %v4761
        %v4795 = vxor.u32 %v4763, 2147483648
        %v4796 = vxor.u32 %v4764, 2147483648
        %v4797 = vxor.u32 %v4765, 2147483648
        %v4798 = vxor.u32 %v4766, 2147483648
        %v4799 = vxor.u32 %v4767, 2147483648
        %v4800 = vxor.u32 %v4768, 2147483648
        %v4801 = vxor.u32 %v4769, 2147483648
        %v4802 = vxor.u32 %v4770, 2147483648
        %v4803 = vxor.u32 %v4771, 2147483648
        %v4804 = vxor.u32 %v4772, 2147483648
        %v4805 = vxor.u32 %v4773, 2147483648
        %v4806 = vxor.u32 %v4774, 2147483648
        %v4807 = vxor.u32 %v4775, 2147483648
        %v4808 = vxor.u32 %v4776, 2147483648
        %v4809 = vxor.u32 %v4777, 2147483648
        %v4810 = vxor.u32 %v4778, 2147483648
        %v4811 = vxor.u32 %v4779, 2147483648
        %v4812 = vxor.u32 %v4780, 2147483648
        %v4813 = vxor.u32 %v4781, 2147483648
        %v4814 = vxor.u32 %v4782, 2147483648
        %v4815 = vxor.u32 %v4783, 2147483648
        %v4816 = vxor.u32 %v4784, 2147483648
        %v4817 = vxor.u32 %v4785, 2147483648
        %v4818 = vxor.u32 %v4786, 2147483648
        %v4819 = vxor.u32 %v4787, 2147483648
        %v4820 = vxor.u32 %v4788, 2147483648
        %v4821 = vxor.u32 %v4789, 2147483648
        %v4822 = vxor.u32 %v4790, 2147483648
        %v4823 = vxor.u32 %v4791, 2147483648
        %v4824 = vxor.u32 %v4792, 2147483648
        %v4825 = vxor.u32 %v4793, 2147483648
        %v4826 = vxor.u32 %v4794, 2147483648
        %v4827 = vmul.f32 %v4795, 1.442695
        %v4828 = vpow.pop %v4827
        %v4829 = vmul.f32 %v4796, 1.442695
        %v4830 = vpow.pop %v4829
        %v4831 = vmul.f32 %v4797, 1.442695
        %v4832 = vpow.pop %v4831
        %v4833 = vmul.f32 %v4798, 1.442695
        %v4834 = vpow.pop %v4833
        %v4835 = vmul.f32 %v4799, 1.442695
        %v4836 = vpow.pop %v4835
        %v4837 = vmul.f32 %v4800, 1.442695
        %v4838 = vpow.pop %v4837
        %v4839 = vmul.f32 %v4801, 1.442695
        %v4840 = vpow.pop %v4839
        %v4841 = vmul.f32 %v4802, 1.442695
        %v4842 = vpow.pop %v4841
        %v4843 = vmul.f32 %v4803, 1.442695
        %v4844 = vpow.pop %v4843
        %v4845 = vmul.f32 %v4804, 1.442695
        %v4846 = vpow.pop %v4845
        %v4847 = vmul.f32 %v4805, 1.442695
        %v4848 = vpow.pop %v4847
        %v4849 = vmul.f32 %v4806, 1.442695
        %v4850 = vpow.pop %v4849
        %v4851 = vmul.f32 %v4807, 1.442695
        %v4852 = vpow.pop %v4851
        %v4853 = vmul.f32 %v4808, 1.442695
        %v4854 = vpow.pop %v4853
        %v4855 = vmul.f32 %v4809, 1.442695
        %v4856 = vpow.pop %v4855
        %v4857 = vmul.f32 %v4810, 1.442695
        %v4858 = vpow.pop %v4857
        %v4859 = vmul.f32 %v4811, 1.442695
        %v4860 = vpow.pop %v4859
        %v4861 = vmul.f32 %v4812, 1.442695
        %v4862 = vpow.pop %v4861
        %v4863 = vmul.f32 %v4813, 1.442695
        %v4864 = vpow.pop %v4863
        %v4865 = vmul.f32 %v4814, 1.442695
        %v4866 = vpow.pop %v4865
        %v4867 = vmul.f32 %v4815, 1.442695
        %v4868 = vpow.pop %v4867
        %v4869 = vmul.f32 %v4816, 1.442695
        %v4870 = vpow.pop %v4869
        %v4871 = vmul.f32 %v4817, 1.442695
        %v4872 = vpow.pop %v4871
        %v4873 = vmul.f32 %v4818, 1.442695
        %v4874 = vpow.pop %v4873
        %v4875 = vmul.f32 %v4819, 1.442695
        %v4876 = vpow.pop %v4875
        %v4877 = vmul.f32 %v4820, 1.442695
        %v4878 = vpow.pop %v4877
        %v4879 = vmul.f32 %v4821, 1.442695
        %v4880 = vpow.pop %v4879
        %v4881 = vmul.f32 %v4822, 1.442695
        %v4882 = vpow.pop %v4881
        %v4883 = vmul.f32 %v4823, 1.442695
        %v4884 = vpow.pop %v4883
        %v4885 = vmul.f32 %v4824, 1.442695
        %v4886 = vpow.pop %v4885
        %v4887 = vmul.f32 %v4825, 1.442695
        %v4888 = vpow.pop %v4887
        %v4889 = vmul.f32 %v4826, 1.442695
        %v4890 = vpow.pop %v4889
        %v4891 = vadd.f32 %v4828, 1.0
        %v4892 = vadd.f32 %v4830, 1.0
        %v4893 = vadd.f32 %v4832, 1.0
        %v4894 = vadd.f32 %v4834, 1.0
        %v4895 = vadd.f32 %v4836, 1.0
        %v4896 = vadd.f32 %v4838, 1.0
        %v4897 = vadd.f32 %v4840, 1.0
        %v4898 = vadd.f32 %v4842, 1.0
        %v4899 = vadd.f32 %v4844, 1.0
        %v4900 = vadd.f32 %v4846, 1.0
        %v4901 = vadd.f32 %v4848, 1.0
        %v4902 = vadd.f32 %v4850, 1.0
        %v4903 = vadd.f32 %v4852, 1.0
        %v4904 = vadd.f32 %v4854, 1.0
        %v4905 = vadd.f32 %v4856, 1.0
        %v4906 = vadd.f32 %v4858, 1.0
        %v4907 = vadd.f32 %v4860, 1.0
        %v4908 = vadd.f32 %v4862, 1.0
        %v4909 = vadd.f32 %v4864, 1.0
        %v4910 = vadd.f32 %v4866, 1.0
        %v4911 = vadd.f32 %v4868, 1.0
        %v4912 = vadd.f32 %v4870, 1.0
        %v4913 = vadd.f32 %v4872, 1.0
        %v4914 = vadd.f32 %v4874, 1.0
        %v4915 = vadd.f32 %v4876, 1.0
        %v4916 = vadd.f32 %v4878, 1.0
        %v4917 = vadd.f32 %v4880, 1.0
        %v4918 = vadd.f32 %v4882, 1.0
        %v4919 = vadd.f32 %v4884, 1.0
        %v4920 = vadd.f32 %v4886, 1.0
        %v4921 = vadd.f32 %v4888, 1.0
        %v4922 = vadd.f32 %v4890, 1.0
        %v4923 = vrcp.pop %v4891
        %v4924 = vmul.f32 1.0, %v4923
        %v4925 = vrcp.pop %v4892
        %v4926 = vmul.f32 1.0, %v4925
        %v4927 = vrcp.pop %v4893
        %v4928 = vmul.f32 1.0, %v4927
        %v4929 = vrcp.pop %v4894
        %v4930 = vmul.f32 1.0, %v4929
        %v4931 = vrcp.pop %v4895
        %v4932 = vmul.f32 1.0, %v4931
        %v4933 = vrcp.pop %v4896
        %v4934 = vmul.f32 1.0, %v4933
        %v4935 = vrcp.pop %v4897
        %v4936 = vmul.f32 1.0, %v4935
        %v4937 = vrcp.pop %v4898
        %v4938 = vmul.f32 1.0, %v4937
        %v4939 = vrcp.pop %v4899
        %v4940 = vmul.f32 1.0, %v4939
        %v4941 = vrcp.pop %v4900
        %v4942 = vmul.f32 1.0, %v4941
        %v4943 = vrcp.pop %v4901
        %v4944 = vmul.f32 1.0, %v4943
        %v4945 = vrcp.pop %v4902
        %v4946 = vmul.f32 1.0, %v4945
        %v4947 = vrcp.pop %v4903
        %v4948 = vmul.f32 1.0, %v4947
        %v4949 = vrcp.pop %v4904
        %v4950 = vmul.f32 1.0, %v4949
        %v4951 = vrcp.pop %v4905
        %v4952 = vmul.f32 1.0, %v4951
        %v4953 = vrcp.pop %v4906
        %v4954 = vmul.f32 1.0, %v4953
        %v4955 = vrcp.pop %v4907
        %v4956 = vmul.f32 1.0, %v4955
        %v4957 = vrcp.pop %v4908
        %v4958 = vmul.f32 1.0, %v4957
        %v4959 = vrcp.pop %v4909
        %v4960 = vmul.f32 1.0, %v4959
        %v4961 = vrcp.pop %v4910
        %v4962 = vmul.f32 1.0, %v4961
        %v4963 = vrcp.pop %v4911
        %v4964 = vmul.f32 1.0, %v4963
        %v4965 = vrcp.pop %v4912
        %v4966 = vmul.f32 1.0, %v4965
        %v4967 = vrcp.pop %v4913
        %v4968 = vmul.f32 1.0, %v4967
        %v4969 = vrcp.pop %v4914
        %v4970 = vmul.f32 1.0, %v4969
        %v4971 = vrcp.pop %v4915
        %v4972 = vmul.f32 1.0, %v4971
        %v4973 = vrcp.pop %v4916
        %v4974 = vmul.f32 1.0, %v4973
        %v4975 = vrcp.pop %v4917
        %v4976 = vmul.f32 1.0, %v4975
        %v4977 = vrcp.pop %v4918
        %v4978 = vmul.f32 1.0, %v4977
        %v4979 = vrcp.pop %v4919
        %v4980 = vmul.f32 1.0, %v4979
        %v4981 = vrcp.pop %v4920
        %v4982 = vmul.f32 1.0, %v4981
        %v4983 = vrcp.pop %v4921
        %v4984 = vmul.f32 1.0, %v4983
        %v4985 = vrcp.pop %v4922
        %v4986 = vmul.f32 1.0, %v4985
        %v4987 = vmul.f32 %v4763, %v4924
        %v4988 = vmul.f32 %v4764, %v4926
        %v4989 = vmul.f32 %v4765, %v4928
        %v4990 = vmul.f32 %v4766, %v4930
        %v4991 = vmul.f32 %v4767, %v4932
        %v4992 = vmul.f32 %v4768, %v4934
        %v4993 = vmul.f32 %v4769, %v4936
        %v4994 = vmul.f32 %v4770, %v4938
        %v4995 = vmul.f32 %v4771, %v4940
        %v4996 = vmul.f32 %v4772, %v4942
        %v4997 = vmul.f32 %v4773, %v4944
        %v4998 = vmul.f32 %v4774, %v4946
        %v4999 = vmul.f32 %v4775, %v4948
        %v5000 = vmul.f32 %v4776, %v4950
        %v5001 = vmul.f32 %v4777, %v4952
        %v5002 = vmul.f32 %v4778, %v4954
        %v5003 = vmul.f32 %v4779, %v4956
        %v5004 = vmul.f32 %v4780, %v4958
        %v5005 = vmul.f32 %v4781, %v4960
        %v5006 = vmul.f32 %v4782, %v4962
        %v5007 = vmul.f32 %v4783, %v4964
        %v5008 = vmul.f32 %v4784, %v4966
        %v5009 = vmul.f32 %v4785, %v4968
        %v5010 = vmul.f32 %v4786, %v4970
        %v5011 = vmul.f32 %v4787, %v4972
        %v5012 = vmul.f32 %v4788, %v4974
        %v5013 = vmul.f32 %v4789, %v4976
        %v5014 = vmul.f32 %v4790, %v4978
        %v5015 = vmul.f32 %v4791, %v4980
        %v5016 = vmul.f32 %v4792, %v4982
        %v5017 = vmul.f32 %v4793, %v4984
        %v5018 = vmul.f32 %v4794, %v4986
        %v5019 = vld [vmem:[%s350] sm:$0xff]
        %v5020 = vld [vmem:[%s350 + $0x8] sm:$0xff]
        %v5021 = vld [vmem:[%s350 + $0x10] sm:$0xff]
        %v5022 = vld [vmem:[%s350 + $0x18] sm:$0xff]
        %v5023 = vld [vmem:[%s350 + $0x20] sm:$0xff]
        %v5024 = vld [vmem:[%s350 + $0x28] sm:$0xff]
        %v5025 = vld [vmem:[%s350 + $0x30] sm:$0xff]
        %v5026 = vld [vmem:[%s350 + $0x38] sm:$0xff]
        %v5027 = vld [vmem:[%s350 + $0x40] sm:$0xff]
        %v5028 = vld [vmem:[%s350 + $0x48] sm:$0xff]
        %v5029 = vld [vmem:[%s350 + $0x50] sm:$0xff]
        %v5030 = vld [vmem:[%s350 + $0x58] sm:$0xff]
        %v5031 = vld [vmem:[%s350 + $0x60] sm:$0xff]
        %v5032 = vld [vmem:[%s350 + $0x68] sm:$0xff]
        %v5033 = vld [vmem:[%s350 + $0x70] sm:$0xff]
        %v5034 = vld [vmem:[%s350 + $0x78] sm:$0xff]
        %v5035 = vld [vmem:[%s350 + $0x80] sm:$0xff]
        %v5036 = vld [vmem:[%s350 + $0x88] sm:$0xff]
        %v5037 = vld [vmem:[%s350 + $0x90] sm:$0xff]
        %v5038 = vld [vmem:[%s350 + $0x98] sm:$0xff]
        %v5039 = vld [vmem:[%s350 + $0xa0] sm:$0xff]
        %v5040 = vld [vmem:[%s350 + $0xa8] sm:$0xff]
        %v5041 = vld [vmem:[%s350 + $0xb0] sm:$0xff]
        %v5042 = vld [vmem:[%s350 + $0xb8] sm:$0xff]
        %v5043 = vld [vmem:[%s350 + $0xc0] sm:$0xff]
        %v5044 = vld [vmem:[%s350 + $0xc8] sm:$0xff]
        %v5045 = vld [vmem:[%s350 + $0xd0] sm:$0xff]
        %v5046 = vld [vmem:[%s350 + $0xd8] sm:$0xff]
        %v5047 = vld [vmem:[%s350 + $0xe0] sm:$0xff]
        %v5048 = vld [vmem:[%s350 + $0xe8] sm:$0xff]
        %v5049 = vld [vmem:[%s350 + $0xf0] sm:$0xff]
        %v5050 = vld [vmem:[%s350 + $0xf8] sm:$0xff]
        %v5051 = vld [vmem:[%s7] sm:$0xff]
        %v5052 = vld [vmem:[%s7 + $0x8] sm:$0xff]
        %v5053 = vld [vmem:[%s7 + $0x10] sm:$0xff]
        %v5054 = vld [vmem:[%s7 + $0x18] sm:$0xff]
        %v5055 = vld [vmem:[%s8] sm:$0x1]
        %v5057 = vlaneseq
        %v5058 = vshrl.u32 %v5057, 7
        %v5059 = vsub.s32 0, %v5058
        %v5060 = vrot.slane %v5055, %v5059
        %vm5062 = vcmask 261120
        %v5064 = vsel %vm5062, %v5019, 0
        %v5067 = vsel %vm5062, %v5020, 0
        %v5070 = vsel %vm5062, %v5021, 0
        %v5073 = vsel %vm5062, %v5022, 0
        %v5076 = vsel %vm5062, %v5023, 0
        %v5079 = vsel %vm5062, %v5024, 0
        %v5082 = vsel %vm5062, %v5025, 0
        %v5085 = vsel %vm5062, %v5026, 0
        %v5088 = vsel %vm5062, %v5027, 0
        %v5091 = vsel %vm5062, %v5028, 0
        %v5094 = vsel %vm5062, %v5029, 0
        %v5097 = vsel %vm5062, %v5030, 0
        %v5100 = vsel %vm5062, %v5031, 0
        %v5103 = vsel %vm5062, %v5032, 0
        %v5106 = vsel %vm5062, %v5033, 0
        %v5109 = vsel %vm5062, %v5034, 0
        %v5112 = vsel %vm5062, %v5035, 0
        %v5115 = vsel %vm5062, %v5036, 0
        %v5118 = vsel %vm5062, %v5037, 0
        %v5121 = vsel %vm5062, %v5038, 0
        %v5124 = vsel %vm5062, %v5039, 0
        %v5127 = vsel %vm5062, %v5040, 0
        %v5130 = vsel %vm5062, %v5041, 0
        %v5133 = vsel %vm5062, %v5042, 0
        %v5136 = vsel %vm5062, %v5043, 0
        %v5139 = vsel %vm5062, %v5044, 0
        %v5142 = vsel %vm5062, %v5045, 0
        %v5145 = vsel %vm5062, %v5046, 0
        %v5148 = vsel %vm5062, %v5047, 0
        %v5151 = vsel %vm5062, %v5048, 0
        %v5154 = vsel %vm5062, %v5049, 0
        %v5157 = vsel %vm5062, %v5050, 0
        %5159 = vmatprep.subr.mxu0 0.0
        %5160 = vmatpush1.msra.mxu0 %v5051
        %5161 = vmatprep.subr.mxu0 0.0
        %5162 = vmatpush1.msra.mxu0 %v5052
        %5163 = vmatprep.subr.mxu0 0.0
        %5164 = vmatpush1.msra.mxu0 %v5053
        %5165 = vmatprep.subr.mxu0 0.0
        %5166 = vmatpush1.msra.mxu0 %v5054
        %5167 = vmatprep.subr.mxu0 0.0
        %5168 = vmatpush1.msra.mxu0 0.0
        %5169 = vmatprep.subr.mxu0 0.0
        %5170 = vmatpush1.msra.mxu0 0.0
        %5171 = vmatprep.subr.mxu0 0.0
        %5172 = vmatpush1.msra.mxu0 0.0
        %5173 = vmatprep.subr.mxu0 0.0
        %5174 = vmatpush1.msra.mxu0 0.0
        %5175 = vmatprep.subr.mxu0 0.0
        %5176 = vmatpush1.msra.mxu0 0.0
        %5177 = vmatprep.subr.mxu0 0.0
        %5178 = vmatpush1.msra.mxu0 0.0
        %5179 = vmatprep.subr.mxu0 0.0
        %5180 = vmatpush1.msra.mxu0 0.0
        %5181 = vmatprep.subr.mxu0 0.0
        %5182 = vmatpush1.msra.mxu0 0.0
        %5183 = vmatprep.subr.mxu0 0.0
        %5184 = vmatpush1.msra.mxu0 0.0
        %5185 = vmatprep.subr.mxu0 0.0
        %5186 = vmatpush1.msra.mxu0 0.0
        %5187 = vmatprep.subr.mxu0 0.0
        %5188 = vmatpush1.msra.mxu0 0.0
        %5189 = vmatprep.subr.mxu0 0.0
        %5190 = vmatpush1.msra.mxu0 0.0
        %5191 = vmatprep.subr.mxu0 0.0
        %5192 = vmatpush1.msra.mxu0 0.0
        %5193 = vmatprep.subr.mxu0 0.0
        %5194 = vmatpush1.msra.mxu0 0.0
        %5195 = vmatprep.subr.mxu0 0.0
        %5196 = vmatpush1.msra.mxu0 0.0
        %5197 = vmatprep.subr.mxu0 0.0
        %5198 = vmatpush1.msra.mxu0 0.0
        %5199 = vmatprep.subr.mxu0 0.0
        %5200 = vmatpush1.msra.mxu0 0.0
        %5201 = vmatprep.subr.mxu0 0.0
        %5202 = vmatpush1.msra.mxu0 0.0
        %5203 = vmatprep.subr.mxu0 0.0
        %5204 = vmatpush1.msra.mxu0 0.0
        %5205 = vmatprep.subr.mxu0 0.0
        %5206 = vmatpush1.msra.mxu0 0.0
        %5207 = vmatprep.subr.mxu0 0.0
        %5208 = vmatpush1.msra.mxu0 0.0
        %5209 = vmatprep.subr.mxu0 0.0
        %5210 = vmatpush1.msra.mxu0 0.0
        %5211 = vmatprep.subr.mxu0 0.0
        %5212 = vmatpush1.msra.mxu0 0.0
        %5213 = vmatprep.subr.mxu0 0.0
        %5214 = vmatpush1.msra.mxu0 0.0
        %5215 = vmatprep.subr.mxu0 0.0
        %5216 = vmatpush1.msra.mxu0 0.0
        %5217 = vmatprep.subr.mxu0 0.0
        %5218 = vmatpush1.msra.mxu0 0.0
        %5219 = vmatprep.subr.mxu0 0.0
        %5220 = vmatpush1.msra.mxu0 0.0
        %5221 = vmatprep.subr.mxu0 0.0
        %5222 = vmatpush1.msra.mxu0 0.0
        %5223 = vmatprep.mubr.f32.mxu0 0.0
        %5224 = vmatmul.mubr.f32.gmra.mrb[0].mxu0 %v5064
        %v5225 = vpop.f32.mrb[0].mxu0
        %v5226 = vadd.f32 %v5060, %v5225
        %v5227 = vpop.f32.mrb[0].mxu0
        %5228 = vmatprep.mubr.f32.mxu0 0.0
        %5229 = vmatmul.mubr.f32.gmra.mrb[0].mxu0 %v5067
        %v5230 = vpop.f32.mrb[0].mxu0
        %v5231 = vadd.f32 %v5060, %v5230
        %v5232 = vpop.f32.mrb[0].mxu0
        %5233 = vmatprep.mubr.f32.mxu0 0.0
        %5234 = vmatmul.mubr.f32.gmra.mrb[0].mxu0 %v5070
        %v5235 = vpop.f32.mrb[0].mxu0
        %v5236 = vadd.f32 %v5060, %v5235
        %v5237 = vpop.f32.mrb[0].mxu0
        %5238 = vmatprep.mubr.f32.mxu0 0.0
        %5239 = vmatmul.mubr.f32.gmra.mrb[0].mxu0 %v5073
        %v5240 = vpop.f32.mrb[0].mxu0
        %v5241 = vadd.f32 %v5060, %v5240
        %v5242 = vpop.f32.mrb[0].mxu0
        %5243 = vmatprep.mubr.f32.mxu0 0.0
        %5244 = vmatmul.mubr.f32.gmra.mrb[0].mxu0 %v5076
        %v5245 = vpop.f32.mrb[0].mxu0
        %v5246 = vadd.f32 %v5060, %v5245
        %v5247 = vpop.f32.mrb[0].mxu0
        %5248 = vmatprep.mubr.f32.mxu0 0.0
        %5249 = vmatmul.mubr.f32.gmra.mrb[0].mxu0 %v5079
        %v5250 = vpop.f32.mrb[0].mxu0
        %v5251 = vadd.f32 %v5060, %v5250
        %v5252 = vpop.f32.mrb[0].mxu0
        %5253 = vmatprep.mubr.f32.mxu0 0.0
        %5254 = vmatmul.mubr.f32.gmra.mrb[0].mxu0 %v5082
        %v5255 = vpop.f32.mrb[0].mxu0
        %v5256 = vadd.f32 %v5060, %v5255
        %v5257 = vpop.f32.mrb[0].mxu0
        %5258 = vmatprep.mubr.f32.mxu0 0.0
        %5259 = vmatmul.mubr.f32.gmra.mrb[0].mxu0 %v5085
        %v5260 = vpop.f32.mrb[0].mxu0
        %v5261 = vadd.f32 %v5060, %v5260
        %v5262 = vpop.f32.mrb[0].mxu0
        %5263 = vmatprep.mubr.f32.mxu0 0.0
        %5264 = vmatmul.mubr.f32.gmra.mrb[0].mxu0 %v5088
        %v5265 = vpop.f32.mrb[0].mxu0
        %v5266 = vadd.f32 %v5060, %v5265
        %v5267 = vpop.f32.mrb[0].mxu0
        %5268 = vmatprep.mubr.f32.mxu0 0.0
        %5269 = vmatmul.mubr.f32.gmra.mrb[0].mxu0 %v5091
        %v5270 = vpop.f32.mrb[0].mxu0
        %v5271 = vadd.f32 %v5060, %v5270
        %v5272 = vpop.f32.mrb[0].mxu0
        %5273 = vmatprep.mubr.f32.mxu0 0.0
        %5274 = vmatmul.mubr.f32.gmra.mrb[0].mxu0 %v5094
        %v5275 = vpop.f32.mrb[0].mxu0
        %v5276 = vadd.f32 %v5060, %v5275
        %v5277 = vpop.f32.mrb[0].mxu0
        %5278 = vmatprep.mubr.f32.mxu0 0.0
        %5279 = vmatmul.mubr.f32.gmra.mrb[0].mxu0 %v5097
        %v5280 = vpop.f32.mrb[0].mxu0
        %v5281 = vadd.f32 %v5060, %v5280
        %v5282 = vpop.f32.mrb[0].mxu0
        %5283 = vmatprep.mubr.f32.mxu0 0.0
        %5284 = vmatmul.mubr.f32.gmra.mrb[0].mxu0 %v5100
        %v5285 = vpop.f32.mrb[0].mxu0
        %v5286 = vadd.f32 %v5060, %v5285
        %v5287 = vpop.f32.mrb[0].mxu0
        %5288 = vmatprep.mubr.f32.mxu0 0.0
        %5289 = vmatmul.mubr.f32.gmra.mrb[0].mxu0 %v5103
        %v5290 = vpop.f32.mrb[0].mxu0
        %v5291 = vadd.f32 %v5060, %v5290
        %v5292 = vpop.f32.mrb[0].mxu0
        %5293 = vmatprep.mubr.f32.mxu0 0.0
        %5294 = vmatmul.mubr.f32.gmra.mrb[0].mxu0 %v5106
        %v5295 = vpop.f32.mrb[0].mxu0
        %v5296 = vadd.f32 %v5060, %v5295
        %v5297 = vpop.f32.mrb[0].mxu0
        %5298 = vmatprep.mubr.f32.mxu0 0.0
        %5299 = vmatmul.mubr.f32.gmra.mrb[0].mxu0 %v5109
        %v5300 = vpop.f32.mrb[0].mxu0
        %v5301 = vadd.f32 %v5060, %v5300
        %v5302 = vpop.f32.mrb[0].mxu0
        %5303 = vmatprep.mubr.f32.mxu0 0.0
        %5304 = vmatmul.mubr.f32.gmra.mrb[0].mxu0 %v5112
        %v5305 = vpop.f32.mrb[0].mxu0
        %v5306 = vadd.f32 %v5060, %v5305
        %v5307 = vpop.f32.mrb[0].mxu0
        %5308 = vmatprep.mubr.f32.mxu0 0.0
        %5309 = vmatmul.mubr.f32.gmra.mrb[0].mxu0 %v5115
        %v5310 = vpop.f32.mrb[0].mxu0
        %v5311 = vadd.f32 %v5060, %v5310
        %v5312 = vpop.f32.mrb[0].mxu0
        %5313 = vmatprep.mubr.f32.mxu0 0.0
        %5314 = vmatmul.mubr.f32.gmra.mrb[0].mxu0 %v5118
        %v5315 = vpop.f32.mrb[0].mxu0
        %v5316 = vadd.f32 %v5060, %v5315
        %v5317 = vpop.f32.mrb[0].mxu0
        %5318 = vmatprep.mubr.f32.mxu0 0.0
        %5319 = vmatmul.mubr.f32.gmra.mrb[0].mxu0 %v5121
        %v5320 = vpop.f32.mrb[0].mxu0
        %v5321 = vadd.f32 %v5060, %v5320
        %v5322 = vpop.f32.mrb[0].mxu0
        %5323 = vmatprep.mubr.f32.mxu0 0.0
        %5324 = vmatmul.mubr.f32.gmra.mrb[0].mxu0 %v5124
        %v5325 = vpop.f32.mrb[0].mxu0
        %v5326 = vadd.f32 %v5060, %v5325
        %v5327 = vpop.f32.mrb[0].mxu0
        %5328 = vmatprep.mubr.f32.mxu0 0.0
        %5329 = vmatmul.mubr.f32.gmra.mrb[0].mxu0 %v5127
        %v5330 = vpop.f32.mrb[0].mxu0
        %v5331 = vadd.f32 %v5060, %v5330
        %v5332 = vpop.f32.mrb[0].mxu0
        %5333 = vmatprep.mubr.f32.mxu0 0.0
        %5334 = vmatmul.mubr.f32.gmra.mrb[0].mxu0 %v5130
        %v5335 = vpop.f32.mrb[0].mxu0
        %v5336 = vadd.f32 %v5060, %v5335
        %v5337 = vpop.f32.mrb[0].mxu0
        %5338 = vmatprep.mubr.f32.mxu0 0.0
        %5339 = vmatmul.mubr.f32.gmra.mrb[0].mxu0 %v5133
        %v5340 = vpop.f32.mrb[0].mxu0
        %v5341 = vadd.f32 %v5060, %v5340
        %v5342 = vpop.f32.mrb[0].mxu0
        %5343 = vmatprep.mubr.f32.mxu0 0.0
        %5344 = vmatmul.mubr.f32.gmra.mrb[0].mxu0 %v5136
        %v5345 = vpop.f32.mrb[0].mxu0
        %v5346 = vadd.f32 %v5060, %v5345
        %v5347 = vpop.f32.mrb[0].mxu0
        %5348 = vmatprep.mubr.f32.mxu0 0.0
        %5349 = vmatmul.mubr.f32.gmra.mrb[0].mxu0 %v5139
        %v5350 = vpop.f32.mrb[0].mxu0
        %v5351 = vadd.f32 %v5060, %v5350
        %v5352 = vpop.f32.mrb[0].mxu0
        %5353 = vmatprep.mubr.f32.mxu0 0.0
        %5354 = vmatmul.mubr.f32.gmra.mrb[0].mxu0 %v5142
        %v5355 = vpop.f32.mrb[0].mxu0
        %v5356 = vadd.f32 %v5060, %v5355
        %v5357 = vpop.f32.mrb[0].mxu0
        %5358 = vmatprep.mubr.f32.mxu0 0.0
        %5359 = vmatmul.mubr.f32.gmra.mrb[0].mxu0 %v5145
        %v5360 = vpop.f32.mrb[0].mxu0
        %v5361 = vadd.f32 %v5060, %v5360
        %v5362 = vpop.f32.mrb[0].mxu0
        %5363 = vmatprep.mubr.f32.mxu0 0.0
        %5364 = vmatmul.mubr.f32.gmra.mrb[0].mxu0 %v5148
        %v5365 = vpop.f32.mrb[0].mxu0
        %v5366 = vadd.f32 %v5060, %v5365
        %v5367 = vpop.f32.mrb[0].mxu0
        %5368 = vmatprep.mubr.f32.mxu0 0.0
        %5369 = vmatmul.mubr.f32.gmra.mrb[0].mxu0 %v5151
        %v5370 = vpop.f32.mrb[0].mxu0
        %v5371 = vadd.f32 %v5060, %v5370
        %v5372 = vpop.f32.mrb[0].mxu0
        %5373 = vmatprep.mubr.f32.mxu0 0.0
        %5374 = vmatmul.mubr.f32.gmra.mrb[0].mxu0 %v5154
        %v5375 = vpop.f32.mrb[0].mxu0
        %v5376 = vadd.f32 %v5060, %v5375
        %v5377 = vpop.f32.mrb[0].mxu0
        %5378 = vmatprep.mubr.f32.mxu0 0.0
        %5379 = vmatmul.mubr.f32.gmra.mrb[0].mxu0 %v5157
        %v5380 = vpop.f32.mrb[0].mxu0
        %v5381 = vadd.f32 %v5060, %v5380
        %v5382 = vpop.f32.mrb[0].mxu0
        %5383 = vdwg.mxu0
        %v5384 = vadd.f32 %v4987, %v5226
        %v5385 = vadd.f32 %v4988, %v5231
        %v5386 = vadd.f32 %v4989, %v5236
        %v5387 = vadd.f32 %v4990, %v5241
        %v5388 = vadd.f32 %v4991, %v5246
        %v5389 = vadd.f32 %v4992, %v5251
        %v5390 = vadd.f32 %v4993, %v5256
        %v5391 = vadd.f32 %v4994, %v5261
        %v5392 = vadd.f32 %v4995, %v5266
        %v5393 = vadd.f32 %v4996, %v5271
        %v5394 = vadd.f32 %v4997, %v5276
        %v5395 = vadd.f32 %v4998, %v5281
        %v5396 = vadd.f32 %v4999, %v5286
        %v5397 = vadd.f32 %v5000, %v5291
        %v5398 = vadd.f32 %v5001, %v5296
        %v5399 = vadd.f32 %v5002, %v5301
        %v5400 = vadd.f32 %v5003, %v5306
        %v5401 = vadd.f32 %v5004, %v5311
        %v5402 = vadd.f32 %v5005, %v5316
        %v5403 = vadd.f32 %v5006, %v5321
        %v5404 = vadd.f32 %v5007, %v5326
        %v5405 = vadd.f32 %v5008, %v5331
        %v5406 = vadd.f32 %v5009, %v5336
        %v5407 = vadd.f32 %v5010, %v5341
        %v5408 = vadd.f32 %v5011, %v5346
        %v5409 = vadd.f32 %v5012, %v5351
        %v5410 = vadd.f32 %v5013, %v5356
        %v5411 = vadd.f32 %v5014, %v5361
        %v5412 = vadd.f32 %v5015, %v5366
        %v5413 = vadd.f32 %v5016, %v5371
        %v5414 = vadd.f32 %v5017, %v5376
        %v5415 = vadd.f32 %v5018, %v5381
        %5416 = vst.msk [vmem:[%s340] sm:$0xff] %vm384, %v5384
        %5417 = vst.msk [vmem:[%s340 + $0x8] sm:$0xff] %vm384, %v5385
        %5418 = vst.msk [vmem:[%s340 + $0x10] sm:$0xff] %vm384, %v5386
        %5419 = vst.msk [vmem:[%s340 + $0x18] sm:$0xff] %vm384, %v5387
        %5420 = vst.msk [vmem:[%s340 + $0x20] sm:$0xff] %vm384, %v5388
        %5421 = vst.msk [vmem:[%s340 + $0x28] sm:$0xff] %vm384, %v5389
        %5422 = vst.msk [vmem:[%s340 + $0x30] sm:$0xff] %vm384, %v5390
        %5423 = vst.msk [vmem:[%s340 + $0x38] sm:$0xff] %vm384, %v5391
        %5424 = vst.msk [vmem:[%s340 + $0x40] sm:$0xff] %vm384, %v5392
        %5425 = vst.msk [vmem:[%s340 + $0x48] sm:$0xff] %vm384, %v5393
        %5426 = vst.msk [vmem:[%s340 + $0x50] sm:$0xff] %vm384, %v5394
        %5427 = vst.msk [vmem:[%s340 + $0x58] sm:$0xff] %vm384, %v5395
        %5428 = vst.msk [vmem:[%s340 + $0x60] sm:$0xff] %vm384, %v5396
        %5429 = vst.msk [vmem:[%s340 + $0x68] sm:$0xff] %vm384, %v5397
        %5430 = vst.msk [vmem:[%s340 + $0x70] sm:$0xff] %vm384, %v5398
        %5431 = vst.msk [vmem:[%s340 + $0x78] sm:$0xff] %vm384, %v5399
        %5432 = vst.msk [vmem:[%s340 + $0x80] sm:$0xff] %vm384, %v5400
        %5433 = vst.msk [vmem:[%s340 + $0x88] sm:$0xff] %vm384, %v5401
        %5434 = vst.msk [vmem:[%s340 + $0x90] sm:$0xff] %vm384, %v5402
        %5435 = vst.msk [vmem:[%s340 + $0x98] sm:$0xff] %vm384, %v5403
        %5436 = vst.msk [vmem:[%s340 + $0xa0] sm:$0xff] %vm384, %v5404
        %5437 = vst.msk [vmem:[%s340 + $0xa8] sm:$0xff] %vm384, %v5405
        %5438 = vst.msk [vmem:[%s340 + $0xb0] sm:$0xff] %vm384, %v5406
        %5439 = vst.msk [vmem:[%s340 + $0xb8] sm:$0xff] %vm384, %v5407
        %5440 = vst.msk [vmem:[%s340 + $0xc0] sm:$0xff] %vm384, %v5408
        %5441 = vst.msk [vmem:[%s340 + $0xc8] sm:$0xff] %vm384, %v5409
        %5442 = vst.msk [vmem:[%s340 + $0xd0] sm:$0xff] %vm384, %v5410
        %5443 = vst.msk [vmem:[%s340 + $0xd8] sm:$0xff] %vm384, %v5411
        %5444 = vst.msk [vmem:[%s340 + $0xe0] sm:$0xff] %vm384, %v5412
        %5445 = vst.msk [vmem:[%s340 + $0xe8] sm:$0xff] %vm384, %v5413
        %5446 = vst.msk [vmem:[%s340 + $0xf0] sm:$0xff] %vm384, %v5414
        %5447 = vst.msk [vmem:[%s340 + $0xf8] sm:$0xff] %vm384, %v5415
        %s5448 = sand.u32 %s230, 1
        %s5449 = scalar_lea.sflag [#allocation3], %s5448
        %s5450 = sand.u32 %s230, 1
        %s5451 = smul.addr %s5450, 256
        %s5452 = scalar_lea.vmem [#allocation2], %s5451
        // Predicated region
        $region57: #{residual_block_t_emb.3} parent=55 // pred_check
          %p5453 = pneg %p240
        $region58: #{residual_block_t_emb.3} parent=55 // pred_check_branch
          %5455 = sbr.rel (%p5453) target = $region60
        $region59: #{residual_block_t_emb.3} parent=55 // pred_region
          %s5457 = ssub.s32 4096, 4096
          %5458 = vsyncadd %s5449, %s5457
          %s5459 = smul.addr %s23, 32
          %s5460 = smul.addr %s5459, 128
          %s5461 = scalar_lea.hbm %s9, %s5460
          %s5462 = sshll.u32 %s5452, 4
          %s5463 = int_to_ptr.vmem [resolvable:$true] %s5462
          %5468 = dma.vmem_to_hbm [thread:$0]  %s5463, 4096, %s5461, %s5449, 128, 128, 8
        $region60: #{residual_block_t_emb.3} parent=55 // pred_fallthru
          _
      $region56: #{residual_block_t_emb.3} parent=5 // pred_fallthru
        _
      %p5469 = scmp.le.s32.totalorder 2, %s18
      // Predicated region
      $region61: #{residual_block_t_emb.3} parent=5 // pred_check
        %p5470 = pneg %p5469
      $region62: #{residual_block_t_emb.3} parent=5 // pred_check_branch
        %5472 = sbr.rel (%p5470) target = $region64
      $region63: #{residual_block_t_emb.3} parent=5 // pred_region
        %s5473 = ssub.s32 %s18, 2
        // Predicated region
        $region65: #{residual_block_t_emb.3} parent=63 // pred_check
          %p5474 = pneg %p246
        $region66: #{residual_block_t_emb.3} parent=63 // pred_check_branch
          %5476 = sbr.rel (%p5474) target = $region68
        $region67: #{residual_block_t_emb.3} parent=63 // pred_region
          %s5477 = sand.u32 %s231, 1
          %s5478 = scalar_lea.sflag [#allocation3], %s5477
          %s5479 = sand.u32 %s231, 1
          %s5480 = smul.addr %s5479, 256
          %s5481 = scalar_lea.vmem [#allocation2], %s5480
          %5482 = dma.done %s5478, 4096
        $region68: #{residual_block_t_emb.3} parent=63 // pred_fallthru
          _
      $region64: #{residual_block_t_emb.3} parent=5 // pred_fallthru
        _
    $region6: #{residual_block_t_emb.3} parent=1 // loop_footer
      %s22 = sadd.s32 1, %s18
    $region7: #{residual_block_t_emb.3} parent=1 // loop_footer_branch
      %17 = sbr.rel target = $region3
    $region8: #{residual_block_t_emb.3} parent=1 // loop_exit
      _
    %5483 = vsyncpa [#allocation3], 1
    %s5484 = scalar_lea.sflag [#allocation3], 1
    %5485 = vsyncpa %s5484, 1

</llo_original>
